<compile_context>
chip_gen: v5e
topology: v5e:2x2
jax: 0.10.0
libtpu: 0.0.40
codegen_flags: <defaults>
</compile_context>

<pallas_src>
import functools

import jax
import jax.numpy as jnp
from jax.experimental import pallas as pl
from jax.experimental.pallas import tpu as pltpu


def _bn_fold(p, eps=1e-5):
    """Fold inference BatchNorm into (scale, bias)."""
    scale = p["gamma"] / jnp.sqrt(p["var"] + eps)
    bias = p["beta"] - p["mean"] * scale
    return scale, bias


def _num_tc_splits():
    # v7x has 2 TensorCores per chip: split the stem's M axis there so both get
    # work.  v5e/v6e are single-TC: keep one big block (extra grid steps are
    # pure per-step overhead on a launch-bound net).
    try:
        kind = jax.devices()[0].device_kind.lower()
        return 2 if "v7" in kind else 1
    except Exception:
        return 1


# --------------------------------------------------------------------------
# Stem: 7x7 conv (im2col) as a single-pass MXU matmul with BN+ReLU epilogue
# --------------------------------------------------------------------------

def _stem_kernel(a_ref, b_ref, s_ref, t_ref, o_ref):
    acc = jnp.dot(a_ref[...], b_ref[...], preferred_element_type=jnp.float32)
    o_ref[...] = jnp.maximum(acc * s_ref[...] + t_ref[...], 0.0).astype(o_ref.dtype)


def stem_conv(x_nhwc, w_oihw, bn, cout_pad, *, stride, padding):
    """conv0 + norm0 + relu0.  Output channels zero-padded to `cout_pad` so the
    downstream dense-block slab is lane-dense and needs no XLA pad."""
    N, H, W, C = x_nhwc.shape
    Cout, Cin, kh, kw = w_oihw.shape
    # TODO(synk): im2col stays as one XLA patches op (zero-padded 7x7/s2 window).
    patches = jax.lax.conv_general_dilated_patches(
        x_nhwc.astype(jnp.bfloat16), (kh, kw), (stride, stride),
        padding=((padding, padding), (padding, padding)),
        dimension_numbers=("NHWC", "HWIO", "NHWC"))
    _, Ho, Wo, F = patches.shape                     # feature order = (Cin, kh, kw)
    a = patches.reshape(N * Ho * Wo, F)

    wm = w_oihw.reshape(Cout, F).T                   # (F, Cout), matches patch order
    wm = jnp.pad(wm, ((0, 0), (0, cout_pad - Cout))).astype(jnp.bfloat16)
    scale, bias = _bn_fold(bn)
    s = jnp.pad(scale, (0, cout_pad - Cout)).reshape(1, cout_pad).astype(jnp.float32)
    t = jnp.pad(bias, (0, cout_pad - Cout)).reshape(1, cout_pad).astype(jnp.float32)

    M = N * Ho * Wo
    splits = _num_tc_splits()
    tm = M if (splits == 1 or M % splits or (M // splits) % 8) else M // splits

    out = pl.pallas_call(
        _stem_kernel,
        out_shape=jax.ShapeDtypeStruct((M, cout_pad), jnp.bfloat16),
        grid=(M // tm,),
        in_specs=[pl.BlockSpec((tm, F), lambda i: (i, 0)),
                  pl.BlockSpec((F, cout_pad), lambda i: (0, 0)),
                  pl.BlockSpec((1, cout_pad), lambda i: (0, 0)),
                  pl.BlockSpec((1, cout_pad), lambda i: (0, 0))],
        out_specs=pl.BlockSpec((tm, cout_pad), lambda i: (i, 0)),
        compiler_params=pltpu.CompilerParams(
            dimension_semantics=("parallel",)),
    )(a, wm, s, t)
    return out.reshape(N, Ho, Wo, cout_pad)


# TODO(synk): max does not fuse into the matmul epilogue cheaply; one tiny XLA op.
def max_pool_3x3_s2_p1(x_nhwc):
    return jax.lax.reduce_window(
        x_nhwc, jnp.asarray(-jnp.inf, x_nhwc.dtype), jax.lax.max,
        window_dimensions=(1, 3, 3, 1), window_strides=(1, 2, 2, 1),
        padding=((0, 0), (1, 1), (1, 1), (0, 0)))


# --------------------------------------------------------------------------
# Fused dense block: all layers of a block in ONE pallas_call
# --------------------------------------------------------------------------

def _conv3x3_shift_mats(H, W):
    """(9, HW, HW) 0/1 selection matrices: S_t @ x == x shifted by tap t with
    zero padding at the borders (shift + mask fused into one matmul operand)."""
    HW = H * W
    p = jnp.arange(HW)
    h, w = p // W, p % W
    mats = []
    for t in range(9):
        dh, dw = t // 3 - 1, t % 3 - 1
        src_h, src_w = h + dh, w + dw
        valid = (src_h >= 0) & (src_h < H) & (src_w >= 0) & (src_w < W)
        src = src_h * W + src_w
        m = (p[None, :] == src[:, None]) & valid[:, None]
        mats.append(m.astype(jnp.float32))
    return jnp.stack(mats)


def _dense_block_kernel(x_ref, s1_ref, b1_ref, w1_ref, s2_ref, b2_ref, w2_ref,
                        shift_ref, y_ref, feat_ref, *, c_init, growth):
    """One batch element; the growing feature slab lives in VMEM (feat_ref)."""
    L = w1_ref.shape[0]
    feat_ref[...] = x_ref[0].astype(jnp.float32)          # (HW, Ct) slab

    for i in range(L):                                     # static unroll
        cur = feat_ref[...]
        # norm1 + relu1 (params zero-padded beyond this layer's input channels)
        a = jnp.maximum(cur * s1_ref[i] + b1_ref[i], 0.0)
        # conv1 (1x1 bottleneck) on the MXU
        mid = jnp.dot(a.astype(jnp.bfloat16), w1_ref[i],
                      preferred_element_type=jnp.float32)
        # norm2 + relu2
        bott = jnp.maximum(mid * s2_ref[i] + b2_ref[i], 0.0).astype(jnp.bfloat16)
        # conv2 (3x3, pad 1) == 9 shifted matmuls; S_t handles shift + border zeros
        acc = None
        for t in range(9):
            tap = jnp.dot(shift_ref[t], bott, preferred_element_type=jnp.float32)
            part = jnp.dot(tap.astype(jnp.bfloat16), w2_ref[i, t],
                           preferred_element_type=jnp.float32)
            acc = part if acc is None else acc + part
        # "concat": write this layer's growth channels into the VMEM slab
        c0 = c_init + i * growth
        feat_ref[:, c0:c0 + growth] = acc

    y_ref[...] = feat_ref[...][None].astype(y_ref.dtype)


def dense_block(x, block_params, c_init, growth, cmid, hw_h, hw_w):
    """x: (N, HW, Ct) bf16, Ct == c_init + len(block)*growth; returns same shape."""
    N, HW, Ct = x.shape
    L = len(block_params)

    # Pack per-layer params, zero-padded on the channel axis up to Ct.
    s1 = jnp.zeros((L, 1, Ct), jnp.float32)
    b1 = jnp.zeros((L, 1, Ct), jnp.float32)
    w1 = jnp.zeros((L, Ct, cmid), jnp.float32)
    s2 = jnp.zeros((L, 1, cmid), jnp.float32)
    b2 = jnp.zeros((L, 1, cmid), jnp.float32)
    w2 = jnp.zeros((L, 9, cmid, growth), jnp.float32)
    for i, layer in enumerate(block_params):
        c_cur = c_init + i * growth
        sc, bi = _bn_fold(layer["norm1"])
        s1 = s1.at[i, 0, :c_cur].set(sc)
        b1 = b1.at[i, 0, :c_cur].set(bi)
        w1 = w1.at[i, :c_cur, :].set(layer["conv1"].reshape(cmid, c_cur).T)
        sc2, bi2 = _bn_fold(layer["norm2"])
        s2 = s2.at[i, 0].set(sc2)
        b2 = b2.at[i, 0].set(bi2)
        # torch (G, Cmid, kh, kw) -> (kh, kw, Cmid, G) -> (9, Cmid, G)
        w2 = w2.at[i].set(jnp.transpose(layer["conv2"], (2, 3, 1, 0))
                          .reshape(9, cmid, growth))
    shifts = _conv3x3_shift_mats(hw_h, hw_w).astype(jnp.bfloat16)

    kernel = functools.partial(_dense_block_kernel, c_init=c_init, growth=growth)
    return pl.pallas_call(
        kernel,
        out_shape=jax.ShapeDtypeStruct((N, HW, Ct), jnp.bfloat16),
        grid=(N,),
        in_specs=[pl.BlockSpec((1, HW, Ct), lambda n: (n, 0, 0)),
                  pl.BlockSpec((L, 1, Ct), lambda n: (0, 0, 0)),
                  pl.BlockSpec((L, 1, Ct), lambda n: (0, 0, 0)),
                  pl.BlockSpec((L, Ct, cmid), lambda n: (0, 0, 0)),
                  pl.BlockSpec((L, 1, cmid), lambda n: (0, 0, 0)),
                  pl.BlockSpec((L, 1, cmid), lambda n: (0, 0, 0)),
                  pl.BlockSpec((L, 9, cmid, growth), lambda n: (0, 0, 0, 0)),
                  pl.BlockSpec((9, HW, HW), lambda n: (0, 0, 0))],
        out_specs=pl.BlockSpec((1, HW, Ct), lambda n: (n, 0, 0)),
        scratch_shapes=[pltpu.VMEM((HW, Ct), jnp.float32)],
        compiler_params=pltpu.CompilerParams(
            dimension_semantics=("parallel",)),
    )(x, s1, b1, w1.astype(jnp.bfloat16), s2, b2, w2.astype(jnp.bfloat16), shifts)


# --------------------------------------------------------------------------
# Fused transition: BN + ReLU -> 2x2 avg-pool (pooling matmul) -> 1x1 conv
# --------------------------------------------------------------------------

def _avg_pool_matrix(H, W):
    Ho, Wo = H // 2, W // 2
    oi = jnp.arange(Ho * Wo)
    ii = jnp.arange(H * W)
    oh, ow = oi // Wo, oi % Wo
    ih, iw = ii // W, ii % W
    m = ((ih[None, :] // 2) == oh[:, None]) & ((iw[None, :] // 2) == ow[:, None])
    return m.astype(jnp.float32) * 0.25


def _transition_kernel(x_ref, s_ref, b_ref, p_ref, w_ref, o_ref):
    x = x_ref[0].astype(jnp.float32)                           # (HW, Ct)
    a = jnp.maximum(x * s_ref[...] + b_ref[...], 0.0)          # BN + ReLU
    pooled = jnp.dot(p_ref[...], a.astype(jnp.bfloat16),       # 2x2 avg-pool
                     preferred_element_type=jnp.float32)       # (HoWo, Ct)
    out = jnp.dot(pooled.astype(jnp.bfloat16), w_ref[...],     # 1x1 conv
                  preferred_element_type=jnp.float32)
    o_ref[...] = out[None].astype(o_ref.dtype)


def transition(x, params, hw_h, hw_w, cout_pad):
    """Pool-then-conv (they commute for a 1x1 conv); output channel-padded."""
    N, HW, Ct = x.shape
    Ho, Wo = hw_h // 2, hw_w // 2
    scale, bias = _bn_fold(params["norm"])
    s = scale.reshape(1, Ct).astype(jnp.float32)
    b = bias.reshape(1, Ct).astype(jnp.float32)
    cout = params["conv"].shape[0]
    w = params["conv"].reshape(cout, Ct).T
    w = jnp.pad(w, ((0, 0), (0, cout_pad - cout))).astype(jnp.bfloat16)
    P = _avg_pool_matrix(hw_h, hw_w).astype(jnp.bfloat16)

    return pl.pallas_call(
        _transition_kernel,
        out_shape=jax.ShapeDtypeStruct((N, Ho * Wo, cout_pad), jnp.bfloat16),
        grid=(N,),
        in_specs=[pl.BlockSpec((1, HW, Ct), lambda n: (n, 0, 0)),
                  pl.BlockSpec((1, Ct), lambda n: (0, 0)),
                  pl.BlockSpec((1, Ct), lambda n: (0, 0)),
                  pl.BlockSpec((Ho * Wo, HW), lambda n: (0, 0)),
                  pl.BlockSpec((Ct, cout_pad), lambda n: (0, 0))],
        out_specs=pl.BlockSpec((1, Ho * Wo, cout_pad), lambda n: (n, 0, 0)),
        compiler_params=pltpu.CompilerParams(
            dimension_semantics=("parallel",)),
    )(x, s, b, P, w)


# --------------------------------------------------------------------------
# Fused head: norm5 + ReLU + global avg-pool + last_linear + L2 normalize
# --------------------------------------------------------------------------

def _head_kernel(f_ref, s_ref, b_ref, w_ref, lb_ref, feat_ref, enc_ref, emb_ref):
    f = f_ref[0].astype(jnp.float32)                            # (HW, C)
    feats = jnp.maximum(f * s_ref[...] + b_ref[...], 0.0)       # norm5 + ReLU
    feat_ref[...] = feats[None]                                 # no_avg_feat
    pooled = jnp.mean(feats, axis=0, keepdims=True)             # (1, C)
    enc_ref[...] = pooled[None]                                 # enc_out
    emb = jnp.dot(pooled.astype(jnp.bfloat16), w_ref[...],      # last_linear
                  preferred_element_type=jnp.float32) + lb_ref[...]
    nrm = jnp.sqrt(jnp.sum(emb * emb, axis=-1, keepdims=True))
    emb_ref[...] = (emb / jnp.maximum(nrm, 1e-12))[None]        # F.normalize


def head(x, norm5, lin_w, lin_b, hw_h, hw_w):
    N, HW, C = x.shape
    E = lin_b.shape[0]
    scale, bias = _bn_fold(norm5)
    s = scale.reshape(1, C).astype(jnp.float32)
    b = bias.reshape(1, C).astype(jnp.float32)
    lb = lin_b.reshape(1, E).astype(jnp.float32)

    feats, enc, emb = pl.pallas_call(
        _head_kernel,
        out_shape=(jax.ShapeDtypeStruct((N, HW, C), jnp.float32),
                   jax.ShapeDtypeStruct((N, 1, C), jnp.float32),
                   jax.ShapeDtypeStruct((N, 1, E), jnp.float32)),
        grid=(N,),
        in_specs=[pl.BlockSpec((1, HW, C), lambda n: (n, 0, 0)),
                  pl.BlockSpec((1, C), lambda n: (0, 0)),
                  pl.BlockSpec((1, C), lambda n: (0, 0)),
                  pl.BlockSpec((C, E), lambda n: (0, 0)),
                  pl.BlockSpec((1, E), lambda n: (0, 0))],
        out_specs=(pl.BlockSpec((1, HW, C), lambda n: (n, 0, 0)),
                   pl.BlockSpec((1, 1, C), lambda n: (n, 0, 0)),
                   pl.BlockSpec((1, 1, E), lambda n: (n, 0, 0))),
        compiler_params=pltpu.CompilerParams(
            dimension_semantics=("parallel",)),
    )(x, s, b, lin_w.astype(jnp.bfloat16), lb)

    no_avg_feat = jnp.transpose(feats.reshape(N, hw_h, hw_w, C), (0, 3, 1, 2))
    return emb.reshape(N, E), enc.reshape(N, C), no_avg_feat


# --------------------------------------------------------------------------
# Deterministic parameters (scaled-down DenseNet config)
# --------------------------------------------------------------------------

def make_params(key, in_ch=3, num_init=16, growth=8, bn_size=4,
                block_config=(2, 2), embed_dim=24):
    keys = iter(jax.random.split(key, 256))

    def conv_w(cout, cin, kh, kw):
        fan_in = cin * kh * kw
        return (jax.random.normal(next(keys), (cout, cin, kh, kw), jnp.float32)
                * (2.0 / fan_in) ** 0.5)

    def bn_p(c):
        k1, k2, k3, k4 = jax.random.split(next(keys), 4)
        return dict(
            gamma=1.0 + 0.1 * jax.random.normal(k1, (c,), jnp.float32),
            beta=0.05 * jax.random.normal(k2, (c,), jnp.float32),
            mean=0.1 * jax.random.normal(k3, (c,), jnp.float32),
            var=1.0 + 0.1 * jnp.abs(jax.random.normal(k4, (c,), jnp.float32)))

    params = {
        "conv0": conv_w(num_init, in_ch, 7, 7),
        "norm0": bn_p(num_init),
        "blocks": [],
        "transitions": [],
    }
    c = num_init
    for bi, n_layers in enumerate(block_config):
        block = []
        for _ in range(n_layers):
            layer = {
                "norm1": bn_p(c),
                "conv1": conv_w(bn_size * growth, c, 1, 1),
                "norm2": bn_p(bn_size * growth),
                "conv2": conv_w(growth, bn_size * growth, 3, 3),
            }
            block.append(layer)
            c += growth
        params["blocks"].append(block)
        if bi < len(block_config) - 1:
            params["transitions"].append({
                "norm": bn_p(c),
                "conv": conv_w(c // 2, c, 1, 1),
            })
            c = c // 2
    params["norm5"] = bn_p(c)
    last_in = c
    bound = 1.0 / (last_in ** 0.5)
    params["linear_w"] = jax.random.uniform(
        next(keys), (last_in, embed_dim), jnp.float32, -bound, bound)
    params["linear_b"] = jax.random.uniform(
        next(keys), (embed_dim,), jnp.float32, -bound, bound)
    return params


# --------------------------------------------------------------------------
# Forward pass (mirrors Network.forward)
# --------------------------------------------------------------------------

def densenet_forward(params, x_nchw):
    blocks = params["blocks"]
    growth = blocks[0][0]["conv2"].shape[0]
    cmid = blocks[0][0]["conv2"].shape[1]
    num_init = params["conv0"].shape[0]

    x = jnp.transpose(x_nchw, (0, 2, 3, 1)).astype(jnp.float32)   # NCHW -> NHWC

    # stem: conv0 + norm0 + relu0 (one matmul kernel), then pool0
    c = num_init
    ct0 = c + len(blocks[0]) * growth               # first block's slab width
    x = stem_conv(x, params["conv0"], params["norm0"], ct0, stride=2, padding=3)
    x = max_pool_3x3_s2_p1(x)
    N, H, W, _ = x.shape
    x = x.reshape(N, H * W, ct0)                    # bf16 (N, HW, Ct) slab

    # dense blocks (one fused kernel each) + fused transitions
    for bi, block in enumerate(blocks):
        x = dense_block(x, block, c, growth, cmid, H, W)
        c = c + len(block) * growth
        if bi < len(blocks) - 1:
            t = params["transitions"][bi]
            c_next = c // 2
            ct_next = c_next + len(blocks[bi + 1]) * growth
            x = transition(x, t, H, W, ct_next)
            H, W = H // 2, W // 2
            c = c_next

    # norm5 + F.relu + adaptive_avg_pool2d + flatten + last_linear + normalize
    emb, enc_out, no_avg_feat = head(
        x, params["norm5"], params["linear_w"], params["linear_b"], H, W)
    return emb, (enc_out, no_avg_feat)


if __name__ == "__main__":
    key = jax.random.PRNGKey(0)
    pkey, xkey = jax.random.split(key)
    params = make_params(pkey)
    # small NCHW input, like the PyTorch module's conv input convention
    x = jax.random.normal(xkey, (2, 3, 32, 32), jnp.float32)

    fwd = jax.jit(functools.partial(densenet_forward, params))
    emb, (enc_out, no_avg_feat) = fwd(x)
    jax.block_until_ready((emb, enc_out, no_avg_feat))

    assert emb.shape == (2, 24)
    assert enc_out.shape == (2, 32)
    assert no_avg_feat.shape == (2, 32, 4, 4)
    assert bool(jnp.all(jnp.isfinite(emb)))
    norms = jnp.linalg.norm(emb, axis=-1)
    assert bool(jnp.all(jnp.abs(norms - 1.0) < 1e-3))  # normalized output
    print("KERNEL_OK")
</pallas_src>

<mosaic_0001>
module attributes {stable_mosaic.version = 11 : i64} {
  func.func @_stem_kernel(%arg0: i32, %arg1: memref<512x147xbf16, #tpu.memory_space<vmem>>, %arg2: memref<147x32xbf16, #tpu.memory_space<vmem>>, %arg3: memref<1x32xf32, #tpu.memory_space<vmem>>, %arg4: memref<1x32xf32, #tpu.memory_space<vmem>>, %arg5: memref<512x32xbf16, #tpu.memory_space<vmem>>) attributes {dimension_semantics = [#tpu.dimension_semantics<parallel>], iteration_bounds = array<i64: 1>, scalar_prefetch = 0 : i64, scratch_operands = 0 : i64, tpu.core_type = #tpu.core_type<tc>, window_params = [{transform_indices = @transform_0, window_bounds = array<i64: 512, 147>}, {pipeline_mode = #tpu.pipeline_mode<synchronous>, transform_indices = @transform_1, window_bounds = array<i64: 147, 32>}, {pipeline_mode = #tpu.pipeline_mode<synchronous>, transform_indices = @transform_2, window_bounds = array<i64: 1, 32>}, {pipeline_mode = #tpu.pipeline_mode<synchronous>, transform_indices = @transform_3, window_bounds = array<i64: 1, 32>}, {transform_indices = @transform_4, window_bounds = array<i64: 512, 32>}]} {
    %c0 = arith.constant 0 : index
    %c0_0 = arith.constant 0 : index
    %0 = vector.load %arg1[%c0, %c0_0] : memref<512x147xbf16, #tpu.memory_space<vmem>>, vector<512x147xbf16>
    %c0_1 = arith.constant 0 : index
    %c0_2 = arith.constant 0 : index
    %1 = vector.load %arg2[%c0_1, %c0_2] : memref<147x32xbf16, #tpu.memory_space<vmem>>, vector<147x32xbf16>
    %cst = arith.constant dense<0.000000e+00> : vector<512x32xf32>
    %2 = tpu.matmul %0, %1, %cst {dimension_numbers = #tpu.dot_dimension_numbers<[1], [0], [0], [1], [0, 0, 1, 1], [], []>} : vector<512x147xbf16>, vector<147x32xbf16>, vector<512x32xf32> -> vector<512x32xf32>
    %c0_3 = arith.constant 0 : index
    %c0_4 = arith.constant 0 : index
    %3 = vector.load %arg3[%c0_3, %c0_4] : memref<1x32xf32, #tpu.memory_space<vmem>>, vector<1x32xf32>
    %4 = vector.broadcast %3 : vector<1x32xf32> to vector<512x32xf32>
    %5 = arith.mulf %2, %4 : vector<512x32xf32>
    %c0_5 = arith.constant 0 : index
    %c0_6 = arith.constant 0 : index
    %6 = vector.load %arg4[%c0_5, %c0_6] : memref<1x32xf32, #tpu.memory_space<vmem>>, vector<1x32xf32>
    %7 = vector.broadcast %6 : vector<1x32xf32> to vector<512x32xf32>
    %8 = arith.addf %5, %7 : vector<512x32xf32>
    %cst_7 = arith.constant 0.000000e+00 : f32
    %9 = vector.broadcast %cst_7 : f32 to vector<512x32xf32>
    %10 = arith.maximumf %8, %9 : vector<512x32xf32>
    %11 = arith.truncf %10 : vector<512x32xf32> to vector<512x32xbf16>
    %c0_8 = arith.constant 0 : index
    %c0_9 = arith.constant 0 : index
    %12 = vector.load %arg5[%c0_8, %c0_9] : memref<512x32xbf16, #tpu.memory_space<vmem>>, vector<512x32xbf16>
    tpu.vector_store %arg5[%c0_8, %c0_9], %11 {strides = array<i32>} : memref<512x32xbf16, #tpu.memory_space<vmem>>, vector<512x32xbf16>,
    return
  }
  func.func @transform_0(%arg0: i32) -> (i32, i32) {
    %c0_i32 = arith.constant 0 : i32
    %c0_i32_0 = arith.constant 0 : i32
    return %arg0, %c0_i32 : i32, i32
  }
  func.func @transform_1(%arg0: i32) -> (i32, i32) {
    %c0_i32 = arith.constant 0 : i32
    %c0_i32_0 = arith.constant 0 : i32
    %c0_i32_1 = arith.constant 0 : i32
    return %c0_i32, %c0_i32_0 : i32, i32
  }
  func.func @transform_2(%arg0: i32) -> (i32, i32) {
    %c0_i32 = arith.constant 0 : i32
    %c0_i32_0 = arith.constant 0 : i32
    %c0_i32_1 = arith.constant 0 : i32
    return %c0_i32, %c0_i32_0 : i32, i32
  }
  func.func @transform_3(%arg0: i32) -> (i32, i32) {
    %c0_i32 = arith.constant 0 : i32
    %c0_i32_0 = arith.constant 0 : i32
    %c0_i32_1 = arith.constant 0 : i32
    return %c0_i32, %c0_i32_0 : i32, i32
  }
  func.func @transform_4(%arg0: i32) -> (i32, i32) {
    %c0_i32 = arith.constant 0 : i32
    %c0_i32_0 = arith.constant 0 : i32
    return %arg0, %c0_i32 : i32, i32
  }
}

module attributes {stable_mosaic.version = 11 : i64} {
  func.func @_dense_block_kernel(%arg0: i32, %arg1: memref<1x64x32xbf16, #tpu.memory_space<vmem>>, %arg2: memref<2x1x32xf32, #tpu.memory_space<vmem>>, %arg3: memref<2x1x32xf32, #tpu.memory_space<vmem>>, %arg4: memref<2x32x32xbf16, #tpu.memory_space<vmem>>, %arg5: memref<2x1x32xf32, #tpu.memory_space<vmem>>, %arg6: memref<2x1x32xf32, #tpu.memory_space<vmem>>, %arg7: memref<2x9x32x8xbf16, #tpu.memory_space<vmem>>, %arg8: memref<9x64x64xbf16, #tpu.memory_space<vmem>>, %arg9: memref<1x64x32xbf16, #tpu.memory_space<vmem>>, %arg10: memref<64x32xf32, #tpu.memory_space<vmem>>) attributes {dimension_semantics = [#tpu.dimension_semantics<parallel>], iteration_bounds = array<i64: 2>, scalar_prefetch = 0 : i64, scratch_operands = 1 : i64, tpu.core_type = #tpu.core_type<tc>, window_params = [{transform_indices = @transform_0, window_bounds = array<i64: 1, 64, 32>}, {pipeline_mode = #tpu.pipeline_mode<synchronous>, transform_indices = @transform_1, window_bounds = array<i64: 2, 1, 32>}, {pipeline_mode = #tpu.pipeline_mode<synchronous>, transform_indices = @transform_2, window_bounds = array<i64: 2, 1, 32>}, {pipeline_mode = #tpu.pipeline_mode<synchronous>, transform_indices = @transform_3, window_bounds = array<i64: 2, 32, 32>}, {pipeline_mode = #tpu.pipeline_mode<synchronous>, transform_indices = @transform_4, window_bounds = array<i64: 2, 1, 32>}, {pipeline_mode = #tpu.pipeline_mode<synchronous>, transform_indices = @transform_5, window_bounds = array<i64: 2, 1, 32>}, {pipeline_mode = #tpu.pipeline_mode<synchronous>, transform_indices = @transform_6, window_bounds = array<i64: 2, 9, 32, 8>}, {pipeline_mode = #tpu.pipeline_mode<synchronous>, transform_indices = @transform_7, window_bounds = array<i64: 9, 64, 64>}, {transform_indices = @transform_8, window_bounds = array<i64: 1, 64, 32>}]} {
    %c0 = arith.constant 0 : index
    %c0_0 = arith.constant 0 : index
    %c0_1 = arith.constant 0 : index
    %0 = vector.load %arg1[%c0, %c0_0, %c0_1] : memref<1x64x32xbf16, #tpu.memory_space<vmem>>, vector<1x64x32xbf16>
    %1 = vector.shape_cast %0 : vector<1x64x32xbf16> to vector<64x32xbf16>
    %2 = arith.extf %1 : vector<64x32xbf16> to vector<64x32xf32>
    %c0_2 = arith.constant 0 : index
    %c0_3 = arith.constant 0 : index
    %3 = vector.load %arg10[%c0_2, %c0_3] : memref<64x32xf32, #tpu.memory_space<vmem>>, vector<64x32xf32>
    tpu.vector_store %arg10[%c0_2, %c0_3], %2 {strides = array<i32>} : memref<64x32xf32, #tpu.memory_space<vmem>>, vector<64x32xf32>,
    %c0_4 = arith.constant 0 : index
    %c0_5 = arith.constant 0 : index
    %4 = vector.load %arg10[%c0_4, %c0_5] : memref<64x32xf32, #tpu.memory_space<vmem>>, vector<64x32xf32>
    %c0_6 = arith.constant 0 : index
    %c0_7 = arith.constant 0 : index
    %c0_8 = arith.constant 0 : index
    %5 = vector.load %arg2[%c0_6, %c0_7, %c0_8] : memref<2x1x32xf32, #tpu.memory_space<vmem>>, vector<1x1x32xf32>
    %6 = vector.shape_cast %5 : vector<1x1x32xf32> to vector<1x32xf32>
    %7 = vector.broadcast %6 : vector<1x32xf32> to vector<64x32xf32>
    %8 = arith.mulf %4, %7 : vector<64x32xf32>
    %c0_9 = arith.constant 0 : index
    %c0_10 = arith.constant 0 : index
    %c0_11 = arith.constant 0 : index
    %9 = vector.load %arg3[%c0_9, %c0_10, %c0_11] : memref<2x1x32xf32, #tpu.memory_space<vmem>>, vector<1x1x32xf32>
    %10 = vector.shape_cast %9 : vector<1x1x32xf32> to vector<1x32xf32>
    %11 = vector.broadcast %10 : vector<1x32xf32> to vector<64x32xf32>
    %12 = arith.addf %8, %11 : vector<64x32xf32>
    %cst = arith.constant 0.000000e+00 : f32
    %13 = vector.broadcast %cst : f32 to vector<64x32xf32>
    %14 = arith.maximumf %12, %13 : vector<64x32xf32>
    %15 = arith.truncf %14 : vector<64x32xf32> to vector<64x32xbf16>
    %c0_12 = arith.constant 0 : index
    %c0_13 = arith.constant 0 : index
    %c0_14 = arith.constant 0 : index
    %16 = vector.load %arg4[%c0_12, %c0_13, %c0_14] : memref<2x32x32xbf16, #tpu.memory_space<vmem>>, vector<1x32x32xbf16>
    %17 = vector.shape_cast %16 : vector<1x32x32xbf16> to vector<32x32xbf16>
    %cst_15 = arith.constant dense<0.000000e+00> : vector<64x32xf32>
    %18 = tpu.matmul %15, %17, %cst_15 {dimension_numbers = #tpu.dot_dimension_numbers<[1], [0], [0], [1], [0, 0, 1, 1], [], []>} : vector<64x32xbf16>, vector<32x32xbf16>, vector<64x32xf32> -> vector<64x32xf32>
    %c0_16 = arith.constant 0 : index
    %c0_17 = arith.constant 0 : index
    %c0_18 = arith.constant 0 : index
    %19 = vector.load %arg5[%c0_16, %c0_17, %c0_18] : memref<2x1x32xf32, #tpu.memory_space<vmem>>, vector<1x1x32xf32>
    %20 = vector.shape_cast %19 : vector<1x1x32xf32> to vector<1x32xf32>
    %21 = vector.broadcast %20 : vector<1x32xf32> to vector<64x32xf32>
    %22 = arith.mulf %18, %21 : vector<64x32xf32>
    %c0_19 = arith.constant 0 : index
    %c0_20 = arith.constant 0 : index
    %c0_21 = arith.constant 0 : index
    %23 = vector.load %arg6[%c0_19, %c0_20, %c0_21] : memref<2x1x32xf32, #tpu.memory_space<vmem>>, vector<1x1x32xf32>
    %24 = vector.shape_cast %23 : vector<1x1x32xf32> to vector<1x32xf32>
    %25 = vector.broadcast %24 : vector<1x32xf32> to vector<64x32xf32>
    %26 = arith.addf %22, %25 : vector<64x32xf32>
    %cst_22 = arith.constant 0.000000e+00 : f32
    %27 = vector.broadcast %cst_22 : f32 to vector<64x32xf32>
    %28 = arith.maximumf %26, %27 : vector<64x32xf32>
    %29 = arith.truncf %28 : vector<64x32xf32> to vector<64x32xbf16>
    %c0_23 = arith.constant 0 : index
    %c0_24 = arith.constant 0 : index
    %c0_25 = arith.constant 0 : index
    %30 = vector.load %arg8[%c0_23, %c0_24, %c0_25] : memref<9x64x64xbf16, #tpu.memory_space<vmem>>, vector<1x64x64xbf16>
    %31 = vector.shape_cast %30 : vector<1x64x64xbf16> to vector<64x64xbf16>
    %cst_26 = arith.constant dense<0.000000e+00> : vector<64x32xf32>
    %32 = tpu.matmul %31, %29, %cst_26 {dimension_numbers = #tpu.dot_dimension_numbers<[1], [0], [0], [1], [0, 0, 1, 1], [], []>} : vector<64x64xbf16>, vector<64x32xbf16>, vector<64x32xf32> -> vector<64x32xf32>
    %33 = arith.truncf %32 : vector<64x32xf32> to vector<64x32xbf16>
    %c0_27 = arith.constant 0 : index
    %c0_28 = arith.constant 0 : index
    %c0_29 = arith.constant 0 : index
    %c0_30 = arith.constant 0 : index
    %34 = vector.load %arg7[%c0_27, %c0_28, %c0_29, %c0_30] : memref<2x9x32x8xbf16, #tpu.memory_space<vmem>>, vector<1x1x32x8xbf16>
    %35 = vector.shape_cast %34 : vector<1x1x32x8xbf16> to vector<32x8xbf16>
    %cst_31 = arith.constant dense<0.000000e+00> : vector<64x8xf32>
    %36 = tpu.matmul %33, %35, %cst_31 {dimension_numbers = #tpu.dot_dimension_numbers<[1], [0], [0], [1], [0, 0, 1, 1], [], []>} : vector<64x32xbf16>, vector<32x8xbf16>, vector<64x8xf32> -> vector<64x8xf32>
    %c1 = arith.constant 1 : index
    %c0_32 = arith.constant 0 : index
    %c0_33 = arith.constant 0 : index
    %37 = vector.load %arg8[%c1, %c0_32, %c0_33] : memref<9x64x64xbf16, #tpu.memory_space<vmem>>, vector<1x64x64xbf16>
    %38 = vector.shape_cast %37 : vector<1x64x64xbf16> to vector<64x64xbf16>
    %cst_34 = arith.constant dense<0.000000e+00> : vector<64x32xf32>
    %39 = tpu.matmul %38, %29, %cst_34 {dimension_numbers = #tpu.dot_dimension_numbers<[1], [0], [0], [1], [0, 0, 1, 1], [], []>} : vector<64x64xbf16>, vector<64x32xbf16>, vector<64x32xf32> -> vector<64x32xf32>
    %40 = arith.truncf %39 : vector<64x32xf32> to vector<64x32xbf16>
    %c0_35 = arith.constant 0 : index
    %c1_36 = arith.constant 1 : index
    %c0_37 = arith.constant 0 : index
    %c0_38 = arith.constant 0 : index
    %41 = vector.load %arg7[%c0_35, %c1_36, %c0_37, %c0_38] : memref<2x9x32x8xbf16, #tpu.memory_space<vmem>>, vector<1x1x32x8xbf16>
    %42 = vector.shape_cast %41 : vector<1x1x32x8xbf16> to vector<32x8xbf16>
    %cst_39 = arith.constant dense<0.000000e+00> : vector<64x8xf32>
    %43 = tpu.matmul %40, %42, %cst_39 {dimension_numbers = #tpu.dot_dimension_numbers<[1], [0], [0], [1], [0, 0, 1, 1], [], []>} : vector<64x32xbf16>, vector<32x8xbf16>, vector<64x8xf32> -> vector<64x8xf32>
    %44 = arith.addf %36, %43 : vector<64x8xf32>
    %c2 = arith.constant 2 : index
    %c0_40 = arith.constant 0 : index
    %c0_41 = arith.constant 0 : index
    %45 = vector.load %arg8[%c2, %c0_40, %c0_41] : memref<9x64x64xbf16, #tpu.memory_space<vmem>>, vector<1x64x64xbf16>
    %46 = vector.shape_cast %45 : vector<1x64x64xbf16> to vector<64x64xbf16>
    %cst_42 = arith.constant dense<0.000000e+00> : vector<64x32xf32>
    %47 = tpu.matmul %46, %29, %cst_42 {dimension_numbers = #tpu.dot_dimension_numbers<[1], [0], [0], [1], [0, 0, 1, 1], [], []>} : vector<64x64xbf16>, vector<64x32xbf16>, vector<64x32xf32> -> vector<64x32xf32>
    %48 = arith.truncf %47 : vector<64x32xf32> to vector<64x32xbf16>
    %c0_43 = arith.constant 0 : index
    %c2_44 = arith.constant 2 : index
    %c0_45 = arith.constant 0 : index
    %c0_46 = arith.constant 0 : index
    %49 = vector.load %arg7[%c0_43, %c2_44, %c0_45, %c0_46] : memref<2x9x32x8xbf16, #tpu.memory_space<vmem>>, vector<1x1x32x8xbf16>
    %50 = vector.shape_cast %49 : vector<1x1x32x8xbf16> to vector<32x8xbf16>
    %cst_47 = arith.constant dense<0.000000e+00> : vector<64x8xf32>
    %51 = tpu.matmul %48, %50, %cst_47 {dimension_numbers = #tpu.dot_dimension_numbers<[1], [0], [0], [1], [0, 0, 1, 1], [], []>} : vector<64x32xbf16>, vector<32x8xbf16>, vector<64x8xf32> -> vector<64x8xf32>
    %52 = arith.addf %44, %51 : vector<64x8xf32>
    %c3 = arith.constant 3 : index
    %c0_48 = arith.constant 0 : index
    %c0_49 = arith.constant 0 : index
    %53 = vector.load %arg8[%c3, %c0_48, %c0_49] : memref<9x64x64xbf16, #tpu.memory_space<vmem>>, vector<1x64x64xbf16>
    %54 = vector.shape_cast %53 : vector<1x64x64xbf16> to vector<64x64xbf16>
    %cst_50 = arith.constant dense<0.000000e+00> : vector<64x32xf32>
    %55 = tpu.matmul %54, %29, %cst_50 {dimension_numbers = #tpu.dot_dimension_numbers<[1], [0], [0], [1], [0, 0, 1, 1], [], []>} : vector<64x64xbf16>, vector<64x32xbf16>, vector<64x32xf32> -> vector<64x32xf32>
    %56 = arith.truncf %55 : vector<64x32xf32> to vector<64x32xbf16>
    %c0_51 = arith.constant 0 : index
    %c3_52 = arith.constant 3 : index
    %c0_53 = arith.constant 0 : index
    %c0_54 = arith.constant 0 : index
    %57 = vector.load %arg7[%c0_51, %c3_52, %c0_53, %c0_54] : memref<2x9x32x8xbf16, #tpu.memory_space<vmem>>, vector<1x1x32x8xbf16>
    %58 = vector.shape_cast %57 : vector<1x1x32x8xbf16> to vector<32x8xbf16>
    %cst_55 = arith.constant dense<0.000000e+00> : vector<64x8xf32>
    %59 = tpu.matmul %56, %58, %cst_55 {dimension_numbers = #tpu.dot_dimension_numbers<[1], [0], [0], [1], [0, 0, 1, 1], [], []>} : vector<64x32xbf16>, vector<32x8xbf16>, vector<64x8xf32> -> vector<64x8xf32>
    %60 = arith.addf %52, %59 : vector<64x8xf32>
    %c4 = arith.constant 4 : index
    %c0_56 = arith.constant 0 : index
    %c0_57 = arith.constant 0 : index
    %61 = vector.load %arg8[%c4, %c0_56, %c0_57] : memref<9x64x64xbf16, #tpu.memory_space<vmem>>, vector<1x64x64xbf16>
    %62 = vector.shape_cast %61 : vector<1x64x64xbf16> to vector<64x64xbf16>
    %cst_58 = arith.constant dense<0.000000e+00> : vector<64x32xf32>
    %63 = tpu.matmul %62, %29, %cst_58 {dimension_numbers = #tpu.dot_dimension_numbers<[1], [0], [0], [1], [0, 0, 1, 1], [], []>} : vector<64x64xbf16>, vector<64x32xbf16>, vector<64x32xf32> -> vector<64x32xf32>
    %64 = arith.truncf %63 : vector<64x32xf32> to vector<64x32xbf16>
    %c0_59 = arith.constant 0 : index
    %c4_60 = arith.constant 4 : index
    %c0_61 = arith.constant 0 : index
    %c0_62 = arith.constant 0 : index
    %65 = vector.load %arg7[%c0_59, %c4_60, %c0_61, %c0_62] : memref<2x9x32x8xbf16, #tpu.memory_space<vmem>>, vector<1x1x32x8xbf16>
    %66 = vector.shape_cast %65 : vector<1x1x32x8xbf16> to vector<32x8xbf16>
    %cst_63 = arith.constant dense<0.000000e+00> : vector<64x8xf32>
    %67 = tpu.matmul %64, %66, %cst_63 {dimension_numbers = #tpu.dot_dimension_numbers<[1], [0], [0], [1], [0, 0, 1, 1], [], []>} : vector<64x32xbf16>, vector<32x8xbf16>, vector<64x8xf32> -> vector<64x8xf32>
    %68 = arith.addf %60, %67 : vector<64x8xf32>
    %c5 = arith.constant 5 : index
    %c0_64 = arith.constant 0 : index
    %c0_65 = arith.constant 0 : index
    %69 = vector.load %arg8[%c5, %c0_64, %c0_65] : memref<9x64x64xbf16, #tpu.memory_space<vmem>>, vector<1x64x64xbf16>
    %70 = vector.shape_cast %69 : vector<1x64x64xbf16> to vector<64x64xbf16>
    %cst_66 = arith.constant dense<0.000000e+00> : vector<64x32xf32>
    %71 = tpu.matmul %70, %29, %cst_66 {dimension_numbers = #tpu.dot_dimension_numbers<[1], [0], [0], [1], [0, 0, 1, 1], [], []>} : vector<64x64xbf16>, vector<64x32xbf16>, vector<64x32xf32> -> vector<64x32xf32>
    %72 = arith.truncf %71 : vector<64x32xf32> to vector<64x32xbf16>
    %c0_67 = arith.constant 0 : index
    %c5_68 = arith.constant 5 : index
    %c0_69 = arith.constant 0 : index
    %c0_70 = arith.constant 0 : index
    %73 = vector.load %arg7[%c0_67, %c5_68, %c0_69, %c0_70] : memref<2x9x32x8xbf16, #tpu.memory_space<vmem>>, vector<1x1x32x8xbf16>
    %74 = vector.shape_cast %73 : vector<1x1x32x8xbf16> to vector<32x8xbf16>
    %cst_71 = arith.constant dense<0.000000e+00> : vector<64x8xf32>
    %75 = tpu.matmul %72, %74, %cst_71 {dimension_numbers = #tpu.dot_dimension_numbers<[1], [0], [0], [1], [0, 0, 1, 1], [], []>} : vector<64x32xbf16>, vector<32x8xbf16>, vector<64x8xf32> -> vector<64x8xf32>
    %76 = arith.addf %68, %75 : vector<64x8xf32>
    %c6 = arith.constant 6 : index
    %c0_72 = arith.constant 0 : index
    %c0_73 = arith.constant 0 : index
    %77 = vector.load %arg8[%c6, %c0_72, %c0_73] : memref<9x64x64xbf16, #tpu.memory_space<vmem>>, vector<1x64x64xbf16>
    %78 = vector.shape_cast %77 : vector<1x64x64xbf16> to vector<64x64xbf16>
    %cst_74 = arith.constant dense<0.000000e+00> : vector<64x32xf32>
    %79 = tpu.matmul %78, %29, %cst_74 {dimension_numbers = #tpu.dot_dimension_numbers<[1], [0], [0], [1], [0, 0, 1, 1], [], []>} : vector<64x64xbf16>, vector<64x32xbf16>, vector<64x32xf32> -> vector<64x32xf32>
    %80 = arith.truncf %79 : vector<64x32xf32> to vector<64x32xbf16>
    %c0_75 = arith.constant 0 : index
    %c6_76 = arith.constant 6 : index
    %c0_77 = arith.constant 0 : index
    %c0_78 = arith.constant 0 : index
    %81 = vector.load %arg7[%c0_75, %c6_76, %c0_77, %c0_78] : memref<2x9x32x8xbf16, #tpu.memory_space<vmem>>, vector<1x1x32x8xbf16>
    %82 = vector.shape_cast %81 : vector<1x1x32x8xbf16> to vector<32x8xbf16>
    %cst_79 = arith.constant dense<0.000000e+00> : vector<64x8xf32>
    %83 = tpu.matmul %80, %82, %cst_79 {dimension_numbers = #tpu.dot_dimension_numbers<[1], [0], [0], [1], [0, 0, 1, 1], [], []>} : vector<64x32xbf16>, vector<32x8xbf16>, vector<64x8xf32> -> vector<64x8xf32>
    %84 = arith.addf %76, %83 : vector<64x8xf32>
    %c7 = arith.constant 7 : index
    %c0_80 = arith.constant 0 : index
    %c0_81 = arith.constant 0 : index
    %85 = vector.load %arg8[%c7, %c0_80, %c0_81] : memref<9x64x64xbf16, #tpu.memory_space<vmem>>, vector<1x64x64xbf16>
    %86 = vector.shape_cast %85 : vector<1x64x64xbf16> to vector<64x64xbf16>
    %cst_82 = arith.constant dense<0.000000e+00> : vector<64x32xf32>
    %87 = tpu.matmul %86, %29, %cst_82 {dimension_numbers = #tpu.dot_dimension_numbers<[1], [0], [0], [1], [0, 0, 1, 1], [], []>} : vector<64x64xbf16>, vector<64x32xbf16>, vector<64x32xf32> -> vector<64x32xf32>
    %88 = arith.truncf %87 : vector<64x32xf32> to vector<64x32xbf16>
    %c0_83 = arith.constant 0 : index
    %c7_84 = arith.constant 7 : index
    %c0_85 = arith.constant 0 : index
    %c0_86 = arith.constant 0 : index
    %89 = vector.load %arg7[%c0_83, %c7_84, %c0_85, %c0_86] : memref<2x9x32x8xbf16, #tpu.memory_space<vmem>>, vector<1x1x32x8xbf16>
    %90 = vector.shape_cast %89 : vector<1x1x32x8xbf16> to vector<32x8xbf16>
    %cst_87 = arith.constant dense<0.000000e+00> : vector<64x8xf32>
    %91 = tpu.matmul %88, %90, %cst_87 {dimension_numbers = #tpu.dot_dimension_numbers<[1], [0], [0], [1], [0, 0, 1, 1], [], []>} : vector<64x32xbf16>, vector<32x8xbf16>, vector<64x8xf32> -> vector<64x8xf32>
    %92 = arith.addf %84, %91 : vector<64x8xf32>
    %c8 = arith.constant 8 : index
    %c0_88 = arith.constant 0 : index
    %c0_89 = arith.constant 0 : index
    %93 = vector.load %arg8[%c8, %c0_88, %c0_89] : memref<9x64x64xbf16, #tpu.memory_space<vmem>>, vector<1x64x64xbf16>
    %94 = vector.shape_cast %93 : vector<1x64x64xbf16> to vector<64x64xbf16>
    %cst_90 = arith.constant dense<0.000000e+00> : vector<64x32xf32>
    %95 = tpu.matmul %94, %29, %cst_90 {dimension_numbers = #tpu.dot_dimension_numbers<[1], [0], [0], [1], [0, 0, 1, 1], [], []>} : vector<64x64xbf16>, vector<64x32xbf16>, vector<64x32xf32> -> vector<64x32xf32>
    %96 = arith.truncf %95 : vector<64x32xf32> to vector<64x32xbf16>
    %c0_91 = arith.constant 0 : index
    %c8_92 = arith.constant 8 : index
    %c0_93 = arith.constant 0 : index
    %c0_94 = arith.constant 0 : index
    %97 = vector.load %arg7[%c0_91, %c8_92, %c0_93, %c0_94] : memref<2x9x32x8xbf16, #tpu.memory_space<vmem>>, vector<1x1x32x8xbf16>
    %98 = vector.shape_cast %97 : vector<1x1x32x8xbf16> to vector<32x8xbf16>
    %cst_95 = arith.constant dense<0.000000e+00> : vector<64x8xf32>
    %99 = tpu.matmul %96, %98, %cst_95 {dimension_numbers = #tpu.dot_dimension_numbers<[1], [0], [0], [1], [0, 0, 1, 1], [], []>} : vector<64x32xbf16>, vector<32x8xbf16>, vector<64x8xf32> -> vector<64x8xf32>
    %100 = arith.addf %92, %99 : vector<64x8xf32>
    %c0_96 = arith.constant 0 : index
    %c16 = arith.constant 16 : index
    %101 = vector.load %arg10[%c0_96, %c16] : memref<64x32xf32, #tpu.memory_space<vmem>>, vector<64x8xf32>
    tpu.vector_store %arg10[%c0_96, %c16], %100 {strides = array<i32>} : memref<64x32xf32, #tpu.memory_space<vmem>>, vector<64x8xf32>,
    %c0_97 = arith.constant 0 : index
    %c0_98 = arith.constant 0 : index
    %102 = vector.load %arg10[%c0_97, %c0_98] : memref<64x32xf32, #tpu.memory_space<vmem>>, vector<64x32xf32>
    %c1_99 = arith.constant 1 : index
    %c0_100 = arith.constant 0 : index
    %c0_101 = arith.constant 0 : index
    %103 = vector.load %arg2[%c1_99, %c0_100, %c0_101] : memref<2x1x32xf32, #tpu.memory_space<vmem>>, vector<1x1x32xf32>
    %104 = vector.shape_cast %103 : vector<1x1x32xf32> to vector<1x32xf32>
    %105 = vector.broadcast %104 : vector<1x32xf32> to vector<64x32xf32>
    %106 = arith.mulf %102, %105 : vector<64x32xf32>
    %c1_102 = arith.constant 1 : index
    %c0_103 = arith.constant 0 : index
    %c0_104 = arith.constant 0 : index
    %107 = vector.load %arg3[%c1_102, %c0_103, %c0_104] : memref<2x1x32xf32, #tpu.memory_space<vmem>>, vector<1x1x32xf32>
    %108 = vector.shape_cast %107 : vector<1x1x32xf32> to vector<1x32xf32>
    %109 = vector.broadcast %108 : vector<1x32xf32> to vector<64x32xf32>
    %110 = arith.addf %106, %109 : vector<64x32xf32>
    %cst_105 = arith.constant 0.000000e+00 : f32
    %111 = vector.broadcast %cst_105 : f32 to vector<64x32xf32>
    %112 = arith.maximumf %110, %111 : vector<64x32xf32>
    %113 = arith.truncf %112 : vector<64x32xf32> to vector<64x32xbf16>
    %c1_106 = arith.constant 1 : index
    %c0_107 = arith.constant 0 : index
    %c0_108 = arith.constant 0 : index
    %114 = vector.load %arg4[%c1_106, %c0_107, %c0_108] : memref<2x32x32xbf16, #tpu.memory_space<vmem>>, vector<1x32x32xbf16>
    %115 = vector.shape_cast %114 : vector<1x32x32xbf16> to vector<32x32xbf16>
    %cst_109 = arith.constant dense<0.000000e+00> : vector<64x32xf32>
    %116 = tpu.matmul %113, %115, %cst_109 {dimension_numbers = #tpu.dot_dimension_numbers<[1], [0], [0], [1], [0, 0, 1, 1], [], []>} : vector<64x32xbf16>, vector<32x32xbf16>, vector<64x32xf32> -> vector<64x32xf32>
    %c1_110 = arith.constant 1 : index
    %c0_111 = arith.constant 0 : index
    %c0_112 = arith.constant 0 : index
    %117 = vector.load %arg5[%c1_110, %c0_111, %c0_112] : memref<2x1x32xf32, #tpu.memory_space<vmem>>, vector<1x1x32xf32>
    %118 = vector.shape_cast %117 : vector<1x1x32xf32> to vector<1x32xf32>
    %119 = vector.broadcast %118 : vector<1x32xf32> to vector<64x32xf32>
    %120 = arith.mulf %116, %119 : vector<64x32xf32>
    %c1_113 = arith.constant 1 : index
    %c0_114 = arith.constant 0 : index
    %c0_115 = arith.constant 0 : index
    %121 = vector.load %arg6[%c1_113, %c0_114, %c0_115] : memref<2x1x32xf32, #tpu.memory_space<vmem>>, vector<1x1x32xf32>
    %122 = vector.shape_cast %121 : vector<1x1x32xf32> to vector<1x32xf32>
    %123 = vector.broadcast %122 : vector<1x32xf32> to vector<64x32xf32>
    %124 = arith.addf %120, %123 : vector<64x32xf32>
    %cst_116 = arith.constant 0.000000e+00 : f32
    %125 = vector.broadcast %cst_116 : f32 to vector<64x32xf32>
    %126 = arith.maximumf %124, %125 : vector<64x32xf32>
    %127 = arith.truncf %126 : vector<64x32xf32> to vector<64x32xbf16>
    %c0_117 = arith.constant 0 : index
    %c0_118 = arith.constant 0 : index
    %c0_119 = arith.constant 0 : index
    %128 = vector.load %arg8[%c0_117, %c0_118, %c0_119] : memref<9x64x64xbf16, #tpu.memory_space<vmem>>, vector<1x64x64xbf16>
    %129 = vector.shape_cast %128 : vector<1x64x64xbf16> to vector<64x64xbf16>
    %cst_120 = arith.constant dense<0.000000e+00> : vector<64x32xf32>
    %130 = tpu.matmul %129, %127, %cst_120 {dimension_numbers = #tpu.dot_dimension_numbers<[1], [0], [0], [1], [0, 0, 1, 1], [], []>} : vector<64x64xbf16>, vector<64x32xbf16>, vector<64x32xf32> -> vector<64x32xf32>
    %131 = arith.truncf %130 : vector<64x32xf32> to vector<64x32xbf16>
    %c1_121 = arith.constant 1 : index
    %c0_122 = arith.constant 0 : index
    %c0_123 = arith.constant 0 : index
    %c0_124 = arith.constant 0 : index
    %132 = vector.load %arg7[%c1_121, %c0_122, %c0_123, %c0_124] : memref<2x9x32x8xbf16, #tpu.memory_space<vmem>>, vector<1x1x32x8xbf16>
    %133 = vector.shape_cast %132 : vector<1x1x32x8xbf16> to vector<32x8xbf16>
    %cst_125 = arith.constant dense<0.000000e+00> : vector<64x8xf32>
    %134 = tpu.matmul %131, %133, %cst_125 {dimension_numbers = #tpu.dot_dimension_numbers<[1], [0], [0], [1], [0, 0, 1, 1], [], []>} : vector<64x32xbf16>, vector<32x8xbf16>, vector<64x8xf32> -> vector<64x8xf32>
    %c1_126 = arith.constant 1 : index
    %c0_127 = arith.constant 0 : index
    %c0_128 = arith.constant 0 : index
    %135 = vector.load %arg8[%c1_126, %c0_127, %c0_128] : memref<9x64x64xbf16, #tpu.memory_space<vmem>>, vector<1x64x64xbf16>
    %136 = vector.shape_cast %135 : vector<1x64x64xbf16> to vector<64x64xbf16>
    %cst_129 = arith.constant dense<0.000000e+00> : vector<64x32xf32>
    %137 = tpu.matmul %136, %127, %cst_129 {dimension_numbers = #tpu.dot_dimension_numbers<[1], [0], [0], [1], [0, 0, 1, 1], [], []>} : vector<64x64xbf16>, vector<64x32xbf16>, vector<64x32xf32> -> vector<64x32xf32>
    %138 = arith.truncf %137 : vector<64x32xf32> to vector<64x32xbf16>
    %c1_130 = arith.constant 1 : index
    %c1_131 = arith.constant 1 : index
    %c0_132 = arith.constant 0 : index
    %c0_133 = arith.constant 0 : index
    %139 = vector.load %arg7[%c1_130, %c1_131, %c0_132, %c0_133] : memref<2x9x32x8xbf16, #tpu.memory_space<vmem>>, vector<1x1x32x8xbf16>
    %140 = vector.shape_cast %139 : vector<1x1x32x8xbf16> to vector<32x8xbf16>
    %cst_134 = arith.constant dense<0.000000e+00> : vector<64x8xf32>
    %141 = tpu.matmul %138, %140, %cst_134 {dimension_numbers = #tpu.dot_dimension_numbers<[1], [0], [0], [1], [0, 0, 1, 1], [], []>} : vector<64x32xbf16>, vector<32x8xbf16>, vector<64x8xf32> -> vector<64x8xf32>
    %142 = arith.addf %134, %141 : vector<64x8xf32>
    %c2_135 = arith.constant 2 : index
    %c0_136 = arith.constant 0 : index
    %c0_137 = arith.constant 0 : index
    %143 = vector.load %arg8[%c2_135, %c0_136, %c0_137] : memref<9x64x64xbf16, #tpu.memory_space<vmem>>, vector<1x64x64xbf16>
    %144 = vector.shape_cast %143 : vector<1x64x64xbf16> to vector<64x64xbf16>
    %cst_138 = arith.constant dense<0.000000e+00> : vector<64x32xf32>
    %145 = tpu.matmul %144, %127, %cst_138 {dimension_numbers = #tpu.dot_dimension_numbers<[1], [0], [0], [1], [0, 0, 1, 1], [], []>} : vector<64x64xbf16>, vector<64x32xbf16>, vector<64x32xf32> -> vector<64x32xf32>
    %146 = arith.truncf %145 : vector<64x32xf32> to vector<64x32xbf16>
    %c1_139 = arith.constant 1 : index
    %c2_140 = arith.constant 2 : index
    %c0_141 = arith.constant 0 : index
    %c0_142 = arith.constant 0 : index
    %147 = vector.load %arg7[%c1_139, %c2_140, %c0_141, %c0_142] : memref<2x9x32x8xbf16, #tpu.memory_space<vmem>>, vector<1x1x32x8xbf16>
    %148 = vector.shape_cast %147 : vector<1x1x32x8xbf16> to vector<32x8xbf16>
    %cst_143 = arith.constant dense<0.000000e+00> : vector<64x8xf32>
    %149 = tpu.matmul %146, %148, %cst_143 {dimension_numbers = #tpu.dot_dimension_numbers<[1], [0], [0], [1], [0, 0, 1, 1], [], []>} : vector<64x32xbf16>, vector<32x8xbf16>, vector<64x8xf32> -> vector<64x8xf32>
    %150 = arith.addf %142, %149 : vector<64x8xf32>
    %c3_144 = arith.constant 3 : index
    %c0_145 = arith.constant 0 : index
    %c0_146 = arith.constant 0 : index
    %151 = vector.load %arg8[%c3_144, %c0_145, %c0_146] : memref<9x64x64xbf16, #tpu.memory_space<vmem>>, vector<1x64x64xbf16>
    %152 = vector.shape_cast %151 : vector<1x64x64xbf16> to vector<64x64xbf16>
    %cst_147 = arith.constant dense<0.000000e+00> : vector<64x32xf32>
    %153 = tpu.matmul %152, %127, %cst_147 {dimension_numbers = #tpu.dot_dimension_numbers<[1], [0], [0], [1], [0, 0, 1, 1], [], []>} : vector<64x64xbf16>, vector<64x32xbf16>, vector<64x32xf32> -> vector<64x32xf32>
    %154 = arith.truncf %153 : vector<64x32xf32> to vector<64x32xbf16>
    %c1_148 = arith.constant 1 : index
    %c3_149 = arith.constant 3 : index
    %c0_150 = arith.constant 0 : index
    %c0_151 = arith.constant 0 : index
    %155 = vector.load %arg7[%c1_148, %c3_149, %c0_150, %c0_151] : memref<2x9x32x8xbf16, #tpu.memory_space<vmem>>, vector<1x1x32x8xbf16>
    %156 = vector.shape_cast %155 : vector<1x1x32x8xbf16> to vector<32x8xbf16>
    %cst_152 = arith.constant dense<0.000000e+00> : vector<64x8xf32>
    %157 = tpu.matmul %154, %156, %cst_152 {dimension_numbers = #tpu.dot_dimension_numbers<[1], [0], [0], [1], [0, 0, 1, 1], [], []>} : vector<64x32xbf16>, vector<32x8xbf16>, vector<64x8xf32> -> vector<64x8xf32>
    %158 = arith.addf %150, %157 : vector<64x8xf32>
    %c4_153 = arith.constant 4 : index
    %c0_154 = arith.constant 0 : index
    %c0_155 = arith.constant 0 : index
    %159 = vector.load %arg8[%c4_153, %c0_154, %c0_155] : memref<9x64x64xbf16, #tpu.memory_space<vmem>>, vector<1x64x64xbf16>
    %160 = vector.shape_cast %159 : vector<1x64x64xbf16> to vector<64x64xbf16>
    %cst_156 = arith.constant dense<0.000000e+00> : vector<64x32xf32>
    %161 = tpu.matmul %160, %127, %cst_156 {dimension_numbers = #tpu.dot_dimension_numbers<[1], [0], [0], [1], [0, 0, 1, 1], [], []>} : vector<64x64xbf16>, vector<64x32xbf16>, vector<64x32xf32> -> vector<64x32xf32>
    %162 = arith.truncf %161 : vector<64x32xf32> to vector<64x32xbf16>
    %c1_157 = arith.constant 1 : index
    %c4_158 = arith.constant 4 : index
    %c0_159 = arith.constant 0 : index
    %c0_160 = arith.constant 0 : index
    %163 = vector.load %arg7[%c1_157, %c4_158, %c0_159, %c0_160] : memref<2x9x32x8xbf16, #tpu.memory_space<vmem>>, vector<1x1x32x8xbf16>
    %164 = vector.shape_cast %163 : vector<1x1x32x8xbf16> to vector<32x8xbf16>
    %cst_161 = arith.constant dense<0.000000e+00> : vector<64x8xf32>
    %165 = tpu.matmul %162, %164, %cst_161 {dimension_numbers = #tpu.dot_dimension_numbers<[1], [0], [0], [1], [0, 0, 1, 1], [], []>} : vector<64x32xbf16>, vector<32x8xbf16>, vector<64x8xf32> -> vector<64x8xf32>
    %166 = arith.addf %158, %165 : vector<64x8xf32>
    %c5_162 = arith.constant 5 : index
    %c0_163 = arith.constant 0 : index
    %c0_164 = arith.constant 0 : index
    %167 = vector.load %arg8[%c5_162, %c0_163, %c0_164] : memref<9x64x64xbf16, #tpu.memory_space<vmem>>, vector<1x64x64xbf16>
    %168 = vector.shape_cast %167 : vector<1x64x64xbf16> to vector<64x64xbf16>
    %cst_165 = arith.constant dense<0.000000e+00> : vector<64x32xf32>
    %169 = tpu.matmul %168, %127, %cst_165 {dimension_numbers = #tpu.dot_dimension_numbers<[1], [0], [0], [1], [0, 0, 1, 1], [], []>} : vector<64x64xbf16>, vector<64x32xbf16>, vector<64x32xf32> -> vector<64x32xf32>
    %170 = arith.truncf %169 : vector<64x32xf32> to vector<64x32xbf16>
    %c1_166 = arith.constant 1 : index
    %c5_167 = arith.constant 5 : index
    %c0_168 = arith.constant 0 : index
    %c0_169 = arith.constant 0 : index
    %171 = vector.load %arg7[%c1_166, %c5_167, %c0_168, %c0_169] : memref<2x9x32x8xbf16, #tpu.memory_space<vmem>>, vector<1x1x32x8xbf16>
    %172 = vector.shape_cast %171 : vector<1x1x32x8xbf16> to vector<32x8xbf16>
    %cst_170 = arith.constant dense<0.000000e+00> : vector<64x8xf32>
    %173 = tpu.matmul %170, %172, %cst_170 {dimension_numbers = #tpu.dot_dimension_numbers<[1], [0], [0], [1], [0, 0, 1, 1], [], []>} : vector<64x32xbf16>, vector<32x8xbf16>, vector<64x8xf32> -> vector<64x8xf32>
    %174 = arith.addf %166, %173 : vector<64x8xf32>
    %c6_171 = arith.constant 6 : index
    %c0_172 = arith.constant 0 : index
    %c0_173 = arith.constant 0 : index
    %175 = vector.load %arg8[%c6_171, %c0_172, %c0_173] : memref<9x64x64xbf16, #tpu.memory_space<vmem>>, vector<1x64x64xbf16>
    %176 = vector.shape_cast %175 : vector<1x64x64xbf16> to vector<64x64xbf16>
    %cst_174 = arith.constant dense<0.000000e+00> : vector<64x32xf32>
    %177 = tpu.matmul %176, %127, %cst_174 {dimension_numbers = #tpu.dot_dimension_numbers<[1], [0], [0], [1], [0, 0, 1, 1], [], []>} : vector<64x64xbf16>, vector<64x32xbf16>, vector<64x32xf32> -> vector<64x32xf32>
    %178 = arith.truncf %177 : vector<64x32xf32> to vector<64x32xbf16>
    %c1_175 = arith.constant 1 : index
    %c6_176 = arith.constant 6 : index
    %c0_177 = arith.constant 0 : index
    %c0_178 = arith.constant 0 : index
    %179 = vector.load %arg7[%c1_175, %c6_176, %c0_177, %c0_178] : memref<2x9x32x8xbf16, #tpu.memory_space<vmem>>, vector<1x1x32x8xbf16>
    %180 = vector.shape_cast %179 : vector<1x1x32x8xbf16> to vector<32x8xbf16>
    %cst_179 = arith.constant dense<0.000000e+00> : vector<64x8xf32>
    %181 = tpu.matmul %178, %180, %cst_179 {dimension_numbers = #tpu.dot_dimension_numbers<[1], [0], [0], [1], [0, 0, 1, 1], [], []>} : vector<64x32xbf16>, vector<32x8xbf16>, vector<64x8xf32> -> vector<64x8xf32>
    %182 = arith.addf %174, %181 : vector<64x8xf32>
    %c7_180 = arith.constant 7 : index
    %c0_181 = arith.constant 0 : index
    %c0_182 = arith.constant 0 : index
    %183 = vector.load %arg8[%c7_180, %c0_181, %c0_182] : memref<9x64x64xbf16, #tpu.memory_space<vmem>>, vector<1x64x64xbf16>
    %184 = vector.shape_cast %183 : vector<1x64x64xbf16> to vector<64x64xbf16>
    %cst_183 = arith.constant dense<0.000000e+00> : vector<64x32xf32>
    %185 = tpu.matmul %184, %127, %cst_183 {dimension_numbers = #tpu.dot_dimension_numbers<[1], [0], [0], [1], [0, 0, 1, 1], [], []>} : vector<64x64xbf16>, vector<64x32xbf16>, vector<64x32xf32> -> vector<64x32xf32>
    %186 = arith.truncf %185 : vector<64x32xf32> to vector<64x32xbf16>
    %c1_184 = arith.constant 1 : index
    %c7_185 = arith.constant 7 : index
    %c0_186 = arith.constant 0 : index
    %c0_187 = arith.constant 0 : index
    %187 = vector.load %arg7[%c1_184, %c7_185, %c0_186, %c0_187] : memref<2x9x32x8xbf16, #tpu.memory_space<vmem>>, vector<1x1x32x8xbf16>
    %188 = vector.shape_cast %187 : vector<1x1x32x8xbf16> to vector<32x8xbf16>
    %cst_188 = arith.constant dense<0.000000e+00> : vector<64x8xf32>
    %189 = tpu.matmul %186, %188, %cst_188 {dimension_numbers = #tpu.dot_dimension_numbers<[1], [0], [0], [1], [0, 0, 1, 1], [], []>} : vector<64x32xbf16>, vector<32x8xbf16>, vector<64x8xf32> -> vector<64x8xf32>
    %190 = arith.addf %182, %189 : vector<64x8xf32>
    %c8_189 = arith.constant 8 : index
    %c0_190 = arith.constant 0 : index
    %c0_191 = arith.constant 0 : index
    %191 = vector.load %arg8[%c8_189, %c0_190, %c0_191] : memref<9x64x64xbf16, #tpu.memory_space<vmem>>, vector<1x64x64xbf16>
    %192 = vector.shape_cast %191 : vector<1x64x64xbf16> to vector<64x64xbf16>
    %cst_192 = arith.constant dense<0.000000e+00> : vector<64x32xf32>
    %193 = tpu.matmul %192, %127, %cst_192 {dimension_numbers = #tpu.dot_dimension_numbers<[1], [0], [0], [1], [0, 0, 1, 1], [], []>} : vector<64x64xbf16>, vector<64x32xbf16>, vector<64x32xf32> -> vector<64x32xf32>
    %194 = arith.truncf %193 : vector<64x32xf32> to vector<64x32xbf16>
    %c1_193 = arith.constant 1 : index
    %c8_194 = arith.constant 8 : index
    %c0_195 = arith.constant 0 : index
    %c0_196 = arith.constant 0 : index
    %195 = vector.load %arg7[%c1_193, %c8_194, %c0_195, %c0_196] : memref<2x9x32x8xbf16, #tpu.memory_space<vmem>>, vector<1x1x32x8xbf16>
    %196 = vector.shape_cast %195 : vector<1x1x32x8xbf16> to vector<32x8xbf16>
    %cst_197 = arith.constant dense<0.000000e+00> : vector<64x8xf32>
    %197 = tpu.matmul %194, %196, %cst_197 {dimension_numbers = #tpu.dot_dimension_numbers<[1], [0], [0], [1], [0, 0, 1, 1], [], []>} : vector<64x32xbf16>, vector<32x8xbf16>, vector<64x8xf32> -> vector<64x8xf32>
    %198 = arith.addf %190, %197 : vector<64x8xf32>
    %c0_198 = arith.constant 0 : index
    %c24 = arith.constant 24 : index
    %199 = vector.load %arg10[%c0_198, %c24] : memref<64x32xf32, #tpu.memory_space<vmem>>, vector<64x8xf32>
    tpu.vector_store %arg10[%c0_198, %c24], %198 {strides = array<i32>} : memref<64x32xf32, #tpu.memory_space<vmem>>, vector<64x8xf32>,
    %c0_199 = arith.constant 0 : index
    %c0_200 = arith.constant 0 : index
    %200 = vector.load %arg10[%c0_199, %c0_200] : memref<64x32xf32, #tpu.memory_space<vmem>>, vector<64x32xf32>
    %201 = vector.shape_cast %200 : vector<64x32xf32> to vector<1x64x32xf32>
    %202 = arith.truncf %201 : vector<1x64x32xf32> to vector<1x64x32xbf16>
    %c0_201 = arith.constant 0 : index
    %c0_202 = arith.constant 0 : index
    %c0_203 = arith.constant 0 : index
    %203 = vector.load %arg9[%c0_201, %c0_202, %c0_203] : memref<1x64x32xbf16, #tpu.memory_space<vmem>>, vector<1x64x32xbf16>
    tpu.vector_store %arg9[%c0_201, %c0_202, %c0_203], %202 {strides = array<i32>} : memref<1x64x32xbf16, #tpu.memory_space<vmem>>, vector<1x64x32xbf16>,
    return
  }
  func.func @transform_0(%arg0: i32) -> (i32, i32, i32) {
    %c0_i32 = arith.constant 0 : i32
    %c0_i32_0 = arith.constant 0 : i32
    %c0_i32_1 = arith.constant 0 : i32
    return %arg0, %c0_i32, %c0_i32_0 : i32, i32, i32
  }
  func.func @transform_1(%arg0: i32) -> (i32, i32, i32) {
    %c0_i32 = arith.constant 0 : i32
    %c0_i32_0 = arith.constant 0 : i32
    %c0_i32_1 = arith.constant 0 : i32
    %c0_i32_2 = arith.constant 0 : i32
    return %c0_i32, %c0_i32_0, %c0_i32_1 : i32, i32, i32
  }
  func.func @transform_2(%arg0: i32) -> (i32, i32, i32) {
    %c0_i32 = arith.constant 0 : i32
    %c0_i32_0 = arith.constant 0 : i32
    %c0_i32_1 = arith.constant 0 : i32
    %c0_i32_2 = arith.constant 0 : i32
    return %c0_i32, %c0_i32_0, %c0_i32_1 : i32, i32, i32
  }
  func.func @transform_3(%arg0: i32) -> (i32, i32, i32) {
    %c0_i32 = arith.constant 0 : i32
    %c0_i32_0 = arith.constant 0 : i32
    %c0_i32_1 = arith.constant 0 : i32
    %c0_i32_2 = arith.constant 0 : i32
    return %c0_i32, %c0_i32_0, %c0_i32_1 : i32, i32, i32
  }
  func.func @transform_4(%arg0: i32) -> (i32, i32, i32) {
    %c0_i32 = arith.constant 0 : i32
    %c0_i32_0 = arith.constant 0 : i32
    %c0_i32_1 = arith.constant 0 : i32
    %c0_i32_2 = arith.constant 0 : i32
    return %c0_i32, %c0_i32_0, %c0_i32_1 : i32, i32, i32
  }
  func.func @transform_5(%arg0: i32) -> (i32, i32, i32) {
    %c0_i32 = arith.constant 0 : i32
    %c0_i32_0 = arith.constant 0 : i32
    %c0_i32_1 = arith.constant 0 : i32
    %c0_i32_2 = arith.constant 0 : i32
    return %c0_i32, %c0_i32_0, %c0_i32_1 : i32, i32, i32
  }
  func.func @transform_6(%arg0: i32) -> (i32, i32, i32, i32) {
    %c0_i32 = arith.constant 0 : i32
    %c0_i32_0 = arith.constant 0 : i32
    %c0_i32_1 = arith.constant 0 : i32
    %c0_i32_2 = arith.constant 0 : i32
    %c0_i32_3 = arith.constant 0 : i32
    return %c0_i32, %c0_i32_0, %c0_i32_1, %c0_i32_2 : i32, i32, i32, i32
  }
  func.func @transform_7(%arg0: i32) -> (i32, i32, i32) {
    %c0_i32 = arith.constant 0 : i32
    %c0_i32_0 = arith.constant 0 : i32
    %c0_i32_1 = arith.constant 0 : i32
    %c0_i32_2 = arith.constant 0 : i32
    return %c0_i32, %c0_i32_0, %c0_i32_1 : i32, i32, i32
  }
  func.func @transform_8(%arg0: i32) -> (i32, i32, i32) {
    %c0_i32 = arith.constant 0 : i32
    %c0_i32_0 = arith.constant 0 : i32
    %c0_i32_1 = arith.constant 0 : i32
    return %arg0, %c0_i32, %c0_i32_0 : i32, i32, i32
  }
}

module attributes {stable_mosaic.version = 11 : i64} {
  func.func @_transition_kernel(%arg0: i32, %arg1: memref<1x64x32xbf16, #tpu.memory_space<vmem>>, %arg2: memref<1x32xf32, #tpu.memory_space<vmem>>, %arg3: memref<1x32xf32, #tpu.memory_space<vmem>>, %arg4: memref<16x64xbf16, #tpu.memory_space<vmem>>, %arg5: memref<32x32xbf16, #tpu.memory_space<vmem>>, %arg6: memref<1x16x32xbf16, #tpu.memory_space<vmem>>) attributes {dimension_semantics = [#tpu.dimension_semantics<parallel>], iteration_bounds = array<i64: 2>, scalar_prefetch = 0 : i64, scratch_operands = 0 : i64, tpu.core_type = #tpu.core_type<tc>, window_params = [{transform_indices = @transform_0, window_bounds = array<i64: 1, 64, 32>}, {pipeline_mode = #tpu.pipeline_mode<synchronous>, transform_indices = @transform_1, window_bounds = array<i64: 1, 32>}, {pipeline_mode = #tpu.pipeline_mode<synchronous>, transform_indices = @transform_2, window_bounds = array<i64: 1, 32>}, {pipeline_mode = #tpu.pipeline_mode<synchronous>, transform_indices = @transform_3, window_bounds = array<i64: 16, 64>}, {pipeline_mode = #tpu.pipeline_mode<synchronous>, transform_indices = @transform_4, window_bounds = array<i64: 32, 32>}, {transform_indices = @transform_5, window_bounds = array<i64: 1, 16, 32>}]} {
    %c0 = arith.constant 0 : index
    %c0_0 = arith.constant 0 : index
    %c0_1 = arith.constant 0 : index
    %0 = vector.load %arg1[%c0, %c0_0, %c0_1] : memref<1x64x32xbf16, #tpu.memory_space<vmem>>, vector<1x64x32xbf16>
    %1 = vector.shape_cast %0 : vector<1x64x32xbf16> to vector<64x32xbf16>
    %2 = arith.extf %1 : vector<64x32xbf16> to vector<64x32xf32>
    %c0_2 = arith.constant 0 : index
    %c0_3 = arith.constant 0 : index
    %3 = vector.load %arg2[%c0_2, %c0_3] : memref<1x32xf32, #tpu.memory_space<vmem>>, vector<1x32xf32>
    %4 = vector.broadcast %3 : vector<1x32xf32> to vector<64x32xf32>
    %5 = arith.mulf %2, %4 : vector<64x32xf32>
    %c0_4 = arith.constant 0 : index
    %c0_5 = arith.constant 0 : index
    %6 = vector.load %arg3[%c0_4, %c0_5] : memref<1x32xf32, #tpu.memory_space<vmem>>, vector<1x32xf32>
    %7 = vector.broadcast %6 : vector<1x32xf32> to vector<64x32xf32>
    %8 = arith.addf %5, %7 : vector<64x32xf32>
    %cst = arith.constant 0.000000e+00 : f32
    %9 = vector.broadcast %cst : f32 to vector<64x32xf32>
    %10 = arith.maximumf %8, %9 : vector<64x32xf32>
    %c0_6 = arith.constant 0 : index
    %c0_7 = arith.constant 0 : index
    %11 = vector.load %arg4[%c0_6, %c0_7] : memref<16x64xbf16, #tpu.memory_space<vmem>>, vector<16x64xbf16>
    %12 = arith.truncf %10 : vector<64x32xf32> to vector<64x32xbf16>
    %cst_8 = arith.constant dense<0.000000e+00> : vector<16x32xf32>
    %13 = tpu.matmul %11, %12, %cst_8 {dimension_numbers = #tpu.dot_dimension_numbers<[1], [0], [0], [1], [0, 0, 1, 1], [], []>} : vector<16x64xbf16>, vector<64x32xbf16>, vector<16x32xf32> -> vector<16x32xf32>
    %14 = arith.truncf %13 : vector<16x32xf32> to vector<16x32xbf16>
    %c0_9 = arith.constant 0 : index
    %c0_10 = arith.constant 0 : index
    %15 = vector.load %arg5[%c0_9, %c0_10] : memref<32x32xbf16, #tpu.memory_space<vmem>>, vector<32x32xbf16>
    %cst_11 = arith.constant dense<0.000000e+00> : vector<16x32xf32>
    %16 = tpu.matmul %14, %15, %cst_11 {dimension_numbers = #tpu.dot_dimension_numbers<[1], [0], [0], [1], [0, 0, 1, 1], [], []>} : vector<16x32xbf16>, vector<32x32xbf16>, vector<16x32xf32> -> vector<16x32xf32>
    %17 = vector.shape_cast %16 : vector<16x32xf32> to vector<1x16x32xf32>
    %18 = arith.truncf %17 : vector<1x16x32xf32> to vector<1x16x32xbf16>
    %c0_12 = arith.constant 0 : index
    %c0_13 = arith.constant 0 : index
    %c0_14 = arith.constant 0 : index
    %19 = vector.load %arg6[%c0_12, %c0_13, %c0_14] : memref<1x16x32xbf16, #tpu.memory_space<vmem>>, vector<1x16x32xbf16>
    tpu.vector_store %arg6[%c0_12, %c0_13, %c0_14], %18 {strides = array<i32>} : memref<1x16x32xbf16, #tpu.memory_space<vmem>>, vector<1x16x32xbf16>,
    return
  }
  func.func @transform_0(%arg0: i32) -> (i32, i32, i32) {
    %c0_i32 = arith.constant 0 : i32
    %c0_i32_0 = arith.constant 0 : i32
    %c0_i32_1 = arith.constant 0 : i32
    return %arg0, %c0_i32, %c0_i32_0 : i32, i32, i32
  }
  func.func @transform_1(%arg0: i32) -> (i32, i32) {
    %c0_i32 = arith.constant 0 : i32
    %c0_i32_0 = arith.constant 0 : i32
    %c0_i32_1 = arith.constant 0 : i32
    return %c0_i32, %c0_i32_0 : i32, i32
  }
  func.func @transform_2(%arg0: i32) -> (i32, i32) {
    %c0_i32 = arith.constant 0 : i32
    %c0_i32_0 = arith.constant 0 : i32
    %c0_i32_1 = arith.constant 0 : i32
    return %c0_i32, %c0_i32_0 : i32, i32
  }
  func.func @transform_3(%arg0: i32) -> (i32, i32) {
    %c0_i32 = arith.constant 0 : i32
    %c0_i32_0 = arith.constant 0 : i32
    %c0_i32_1 = arith.constant 0 : i32
    return %c0_i32, %c0_i32_0 : i32, i32
  }
  func.func @transform_4(%arg0: i32) -> (i32, i32) {
    %c0_i32 = arith.constant 0 : i32
    %c0_i32_0 = arith.constant 0 : i32
    %c0_i32_1 = arith.constant 0 : i32
    return %c0_i32, %c0_i32_0 : i32, i32
  }
  func.func @transform_5(%arg0: i32) -> (i32, i32, i32) {
    %c0_i32 = arith.constant 0 : i32
    %c0_i32_0 = arith.constant 0 : i32
    %c0_i32_1 = arith.constant 0 : i32
    return %arg0, %c0_i32, %c0_i32_0 : i32, i32, i32
  }
}

module attributes {stable_mosaic.version = 11 : i64} {
  func.func @_head_kernel(%arg0: i32, %arg1: memref<1x16x32xbf16, #tpu.memory_space<vmem>>, %arg2: memref<1x32xf32, #tpu.memory_space<vmem>>, %arg3: memref<1x32xf32, #tpu.memory_space<vmem>>, %arg4: memref<32x24xbf16, #tpu.memory_space<vmem>>, %arg5: memref<1x24xf32, #tpu.memory_space<vmem>>, %arg6: memref<1x16x32xf32, #tpu.memory_space<vmem>>, %arg7: memref<1x1x32xf32, #tpu.memory_space<vmem>>, %arg8: memref<1x1x24xf32, #tpu.memory_space<vmem>>) attributes {dimension_semantics = [#tpu.dimension_semantics<parallel>], iteration_bounds = array<i64: 2>, scalar_prefetch = 0 : i64, scratch_operands = 0 : i64, tpu.core_type = #tpu.core_type<tc>, window_params = [{transform_indices = @transform_0, window_bounds = array<i64: 1, 16, 32>}, {pipeline_mode = #tpu.pipeline_mode<synchronous>, transform_indices = @transform_1, window_bounds = array<i64: 1, 32>}, {pipeline_mode = #tpu.pipeline_mode<synchronous>, transform_indices = @transform_2, window_bounds = array<i64: 1, 32>}, {pipeline_mode = #tpu.pipeline_mode<synchronous>, transform_indices = @transform_3, window_bounds = array<i64: 32, 24>}, {pipeline_mode = #tpu.pipeline_mode<synchronous>, transform_indices = @transform_4, window_bounds = array<i64: 1, 24>}, {transform_indices = @transform_5, window_bounds = array<i64: 1, 16, 32>}, {transform_indices = @transform_6, window_bounds = array<i64: 1, 1, 32>}, {transform_indices = @transform_7, window_bounds = array<i64: 1, 1, 24>}]} {
    %c0 = arith.constant 0 : index
    %c0_0 = arith.constant 0 : index
    %c0_1 = arith.constant 0 : index
    %0 = vector.load %arg1[%c0, %c0_0, %c0_1] : memref<1x16x32xbf16, #tpu.memory_space<vmem>>, vector<1x16x32xbf16>
    %1 = vector.shape_cast %0 : vector<1x16x32xbf16> to vector<16x32xbf16>
    %2 = arith.extf %1 : vector<16x32xbf16> to vector<16x32xf32>
    %c0_2 = arith.constant 0 : index
    %c0_3 = arith.constant 0 : index
    %3 = vector.load %arg2[%c0_2, %c0_3] : memref<1x32xf32, #tpu.memory_space<vmem>>, vector<1x32xf32>
    %4 = vector.broadcast %3 : vector<1x32xf32> to vector<16x32xf32>
    %5 = arith.mulf %2, %4 : vector<16x32xf32>
    %c0_4 = arith.constant 0 : index
    %c0_5 = arith.constant 0 : index
    %6 = vector.load %arg3[%c0_4, %c0_5] : memref<1x32xf32, #tpu.memory_space<vmem>>, vector<1x32xf32>
    %7 = vector.broadcast %6 : vector<1x32xf32> to vector<16x32xf32>
    %8 = arith.addf %5, %7 : vector<16x32xf32>
    %cst = arith.constant 0.000000e+00 : f32
    %9 = vector.broadcast %cst : f32 to vector<16x32xf32>
    %10 = arith.maximumf %8, %9 : vector<16x32xf32>
    %11 = vector.shape_cast %10 : vector<16x32xf32> to vector<1x16x32xf32>
    %c0_6 = arith.constant 0 : index
    %c0_7 = arith.constant 0 : index
    %c0_8 = arith.constant 0 : index
    %12 = vector.load %arg6[%c0_6, %c0_7, %c0_8] : memref<1x16x32xf32, #tpu.memory_space<vmem>>, vector<1x16x32xf32>
    tpu.vector_store %arg6[%c0_6, %c0_7, %c0_8], %11 {strides = array<i32>} : memref<1x16x32xf32, #tpu.memory_space<vmem>>, vector<1x16x32xf32>,
    %cst_9 = arith.constant dense<0.000000e+00> : vector<32xf32>
    %13 = vector.multi_reduction <add>, %10, %cst_9 [0] : vector<16x32xf32> to vector<32xf32>
    %14 = vector.shape_cast %13 : vector<32xf32> to vector<1x32xf32>
    %cst_10 = arith.constant 1.600000e+01 : f32
    %15 = vector.broadcast %cst_10 : f32 to vector<1x32xf32>
    %16 = arith.divf %14, %15 : vector<1x32xf32>
    %17 = vector.shape_cast %16 : vector<1x32xf32> to vector<1x1x32xf32>
    %c0_11 = arith.constant 0 : index
    %c0_12 = arith.constant 0 : index
    %c0_13 = arith.constant 0 : index
    %18 = vector.load %arg7[%c0_11, %c0_12, %c0_13] : memref<1x1x32xf32, #tpu.memory_space<vmem>>, vector<1x1x32xf32>
    tpu.vector_store %arg7[%c0_11, %c0_12, %c0_13], %17 {strides = array<i32>} : memref<1x1x32xf32, #tpu.memory_space<vmem>>, vector<1x1x32xf32>,
    %19 = arith.truncf %16 : vector<1x32xf32> to vector<1x32xbf16>
    %c0_14 = arith.constant 0 : index
    %c0_15 = arith.constant 0 : index
    %20 = vector.load %arg4[%c0_14, %c0_15] : memref<32x24xbf16, #tpu.memory_space<vmem>>, vector<32x24xbf16>
    %cst_16 = arith.constant dense<0.000000e+00> : vector<1x24xf32>
    %21 = tpu.matmul %19, %20, %cst_16 {dimension_numbers = #tpu.dot_dimension_numbers<[1], [0], [0], [1], [0, 0, 1, 1], [], []>} : vector<1x32xbf16>, vector<32x24xbf16>, vector<1x24xf32> -> vector<1x24xf32>
    %c0_17 = arith.constant 0 : index
    %c0_18 = arith.constant 0 : index
    %22 = vector.load %arg5[%c0_17, %c0_18] : memref<1x24xf32, #tpu.memory_space<vmem>>, vector<1x24xf32>
    %23 = arith.addf %21, %22 : vector<1x24xf32>
    %24 = arith.mulf %23, %23 : vector<1x24xf32>
    %cst_19 = arith.constant dense<0.000000e+00> : vector<1xf32>
    %25 = vector.multi_reduction <add>, %24, %cst_19 [1] : vector<1x24xf32> to vector<1xf32>
    %26 = vector.shape_cast %25 : vector<1xf32> to vector<1x1xf32>
    %27 = math.sqrt %26 : vector<1x1xf32>
    %cst_20 = arith.constant 9.99999996E-13 : f32
    %28 = vector.broadcast %cst_20 : f32 to vector<1x1xf32>
    %29 = arith.maximumf %27, %28 : vector<1x1xf32>
    %30 = vector.broadcast %29 : vector<1x1xf32> to vector<1x24xf32>
    %31 = arith.divf %23, %30 : vector<1x24xf32>
    %32 = vector.shape_cast %31 : vector<1x24xf32> to vector<1x1x24xf32>
    %c0_21 = arith.constant 0 : index
    %c0_22 = arith.constant 0 : index
    %c0_23 = arith.constant 0 : index
    %33 = vector.load %arg8[%c0_21, %c0_22, %c0_23] : memref<1x1x24xf32, #tpu.memory_space<vmem>>, vector<1x1x24xf32>
    tpu.vector_store %arg8[%c0_21, %c0_22, %c0_23], %32 {strides = array<i32>} : memref<1x1x24xf32, #tpu.memory_space<vmem>>, vector<1x1x24xf32>,
    return
  }
  func.func @transform_0(%arg0: i32) -> (i32, i32, i32) {
    %c0_i32 = arith.constant 0 : i32
    %c0_i32_0 = arith.constant 0 : i32
    %c0_i32_1 = arith.constant 0 : i32
    return %arg0, %c0_i32, %c0_i32_0 : i32, i32, i32
  }
  func.func @transform_1(%arg0: i32) -> (i32, i32) {
    %c0_i32 = arith.constant 0 : i32
    %c0_i32_0 = arith.constant 0 : i32
    %c0_i32_1 = arith.constant 0 : i32
    return %c0_i32, %c0_i32_0 : i32, i32
  }
  func.func @transform_2(%arg0: i32) -> (i32, i32) {
    %c0_i32 = arith.constant 0 : i32
    %c0_i32_0 = arith.constant 0 : i32
    %c0_i32_1 = arith.constant 0 : i32
    return %c0_i32, %c0_i32_0 : i32, i32
  }
  func.func @transform_3(%arg0: i32) -> (i32, i32) {
    %c0_i32 = arith.constant 0 : i32
    %c0_i32_0 = arith.constant 0 : i32
    %c0_i32_1 = arith.constant 0 : i32
    return %c0_i32, %c0_i32_0 : i32, i32
  }
  func.func @transform_4(%arg0: i32) -> (i32, i32) {
    %c0_i32 = arith.constant 0 : i32
    %c0_i32_0 = arith.constant 0 : i32
    %c0_i32_1 = arith.constant 0 : i32
    return %c0_i32, %c0_i32_0 : i32, i32
  }
  func.func @transform_5(%arg0: i32) -> (i32, i32, i32) {
    %c0_i32 = arith.constant 0 : i32
    %c0_i32_0 = arith.constant 0 : i32
    %c0_i32_1 = arith.constant 0 : i32
    return %arg0, %c0_i32, %c0_i32_0 : i32, i32, i32
  }
  func.func @transform_6(%arg0: i32) -> (i32, i32, i32) {
    %c0_i32 = arith.constant 0 : i32
    %c0_i32_0 = arith.constant 0 : i32
    %c0_i32_1 = arith.constant 0 : i32
    return %arg0, %c0_i32, %c0_i32_0 : i32, i32, i32
  }
  func.func @transform_7(%arg0: i32) -> (i32, i32, i32) {
    %c0_i32 = arith.constant 0 : i32
    %c0_i32_0 = arith.constant 0 : i32
    %c0_i32_1 = arith.constant 0 : i32
    return %arg0, %c0_i32, %c0_i32_0 : i32, i32, i32
  }
}

module attributes {stable_mosaic.version = 11 : i64} {
  func.func @_dense_block_kernel(%arg0: i32, %arg1: memref<1x16x32xbf16, #tpu.memory_space<vmem>>, %arg2: memref<2x1x32xf32, #tpu.memory_space<vmem>>, %arg3: memref<2x1x32xf32, #tpu.memory_space<vmem>>, %arg4: memref<2x32x32xbf16, #tpu.memory_space<vmem>>, %arg5: memref<2x1x32xf32, #tpu.memory_space<vmem>>, %arg6: memref<2x1x32xf32, #tpu.memory_space<vmem>>, %arg7: memref<2x9x32x8xbf16, #tpu.memory_space<vmem>>, %arg8: memref<9x16x16xbf16, #tpu.memory_space<vmem>>, %arg9: memref<1x16x32xbf16, #tpu.memory_space<vmem>>, %arg10: memref<16x32xf32, #tpu.memory_space<vmem>>) attributes {dimension_semantics = [#tpu.dimension_semantics<parallel>], iteration_bounds = array<i64: 2>, scalar_prefetch = 0 : i64, scratch_operands = 1 : i64, tpu.core_type = #tpu.core_type<tc>, window_params = [{transform_indices = @transform_0, window_bounds = array<i64: 1, 16, 32>}, {pipeline_mode = #tpu.pipeline_mode<synchronous>, transform_indices = @transform_1, window_bounds = array<i64: 2, 1, 32>}, {pipeline_mode = #tpu.pipeline_mode<synchronous>, transform_indices = @transform_2, window_bounds = array<i64: 2, 1, 32>}, {pipeline_mode = #tpu.pipeline_mode<synchronous>, transform_indices = @transform_3, window_bounds = array<i64: 2, 32, 32>}, {pipeline_mode = #tpu.pipeline_mode<synchronous>, transform_indices = @transform_4, window_bounds = array<i64: 2, 1, 32>}, {pipeline_mode = #tpu.pipeline_mode<synchronous>, transform_indices = @transform_5, window_bounds = array<i64: 2, 1, 32>}, {pipeline_mode = #tpu.pipeline_mode<synchronous>, transform_indices = @transform_6, window_bounds = array<i64: 2, 9, 32, 8>}, {pipeline_mode = #tpu.pipeline_mode<synchronous>, transform_indices = @transform_7, window_bounds = array<i64: 9, 16, 16>}, {transform_indices = @transform_8, window_bounds = array<i64: 1, 16, 32>}]} {
    %c0 = arith.constant 0 : index
    %c0_0 = arith.constant 0 : index
    %c0_1 = arith.constant 0 : index
    %0 = vector.load %arg1[%c0, %c0_0, %c0_1] : memref<1x16x32xbf16, #tpu.memory_space<vmem>>, vector<1x16x32xbf16>
    %1 = vector.shape_cast %0 : vector<1x16x32xbf16> to vector<16x32xbf16>
    %2 = arith.extf %1 : vector<16x32xbf16> to vector<16x32xf32>
    %c0_2 = arith.constant 0 : index
    %c0_3 = arith.constant 0 : index
    %3 = vector.load %arg10[%c0_2, %c0_3] : memref<16x32xf32, #tpu.memory_space<vmem>>, vector<16x32xf32>
    tpu.vector_store %arg10[%c0_2, %c0_3], %2 {strides = array<i32>} : memref<16x32xf32, #tpu.memory_space<vmem>>, vector<16x32xf32>,
    %c0_4 = arith.constant 0 : index
    %c0_5 = arith.constant 0 : index
    %4 = vector.load %arg10[%c0_4, %c0_5] : memref<16x32xf32, #tpu.memory_space<vmem>>, vector<16x32xf32>
    %c0_6 = arith.constant 0 : index
    %c0_7 = arith.constant 0 : index
    %c0_8 = arith.constant 0 : index
    %5 = vector.load %arg2[%c0_6, %c0_7, %c0_8] : memref<2x1x32xf32, #tpu.memory_space<vmem>>, vector<1x1x32xf32>
    %6 = vector.shape_cast %5 : vector<1x1x32xf32> to vector<1x32xf32>
    %7 = vector.broadcast %6 : vector<1x32xf32> to vector<16x32xf32>
    %8 = arith.mulf %4, %7 : vector<16x32xf32>
    %c0_9 = arith.constant 0 : index
    %c0_10 = arith.constant 0 : index
    %c0_11 = arith.constant 0 : index
    %9 = vector.load %arg3[%c0_9, %c0_10, %c0_11] : memref<2x1x32xf32, #tpu.memory_space<vmem>>, vector<1x1x32xf32>
    %10 = vector.shape_cast %9 : vector<1x1x32xf32> to vector<1x32xf32>
    %11 = vector.broadcast %10 : vector<1x32xf32> to vector<16x32xf32>
    %12 = arith.addf %8, %11 : vector<16x32xf32>
    %cst = arith.constant 0.000000e+00 : f32
    %13 = vector.broadcast %cst : f32 to vector<16x32xf32>
    %14 = arith.maximumf %12, %13 : vector<16x32xf32>
    %15 = arith.truncf %14 : vector<16x32xf32> to vector<16x32xbf16>
    %c0_12 = arith.constant 0 : index
    %c0_13 = arith.constant 0 : index
    %c0_14 = arith.constant 0 : index
    %16 = vector.load %arg4[%c0_12, %c0_13, %c0_14] : memref<2x32x32xbf16, #tpu.memory_space<vmem>>, vector<1x32x32xbf16>
    %17 = vector.shape_cast %16 : vector<1x32x32xbf16> to vector<32x32xbf16>
    %cst_15 = arith.constant dense<0.000000e+00> : vector<16x32xf32>
    %18 = tpu.matmul %15, %17, %cst_15 {dimension_numbers = #tpu.dot_dimension_numbers<[1], [0], [0], [1], [0, 0, 1, 1], [], []>} : vector<16x32xbf16>, vector<32x32xbf16>, vector<16x32xf32> -> vector<16x32xf32>
    %c0_16 = arith.constant 0 : index
    %c0_17 = arith.constant 0 : index
    %c0_18 = arith.constant 0 : index
    %19 = vector.load %arg5[%c0_16, %c0_17, %c0_18] : memref<2x1x32xf32, #tpu.memory_space<vmem>>, vector<1x1x32xf32>
    %20 = vector.shape_cast %19 : vector<1x1x32xf32> to vector<1x32xf32>
    %21 = vector.broadcast %20 : vector<1x32xf32> to vector<16x32xf32>
    %22 = arith.mulf %18, %21 : vector<16x32xf32>
    %c0_19 = arith.constant 0 : index
    %c0_20 = arith.constant 0 : index
    %c0_21 = arith.constant 0 : index
    %23 = vector.load %arg6[%c0_19, %c0_20, %c0_21] : memref<2x1x32xf32, #tpu.memory_space<vmem>>, vector<1x1x32xf32>
    %24 = vector.shape_cast %23 : vector<1x1x32xf32> to vector<1x32xf32>
    %25 = vector.broadcast %24 : vector<1x32xf32> to vector<16x32xf32>
    %26 = arith.addf %22, %25 : vector<16x32xf32>
    %cst_22 = arith.constant 0.000000e+00 : f32
    %27 = vector.broadcast %cst_22 : f32 to vector<16x32xf32>
    %28 = arith.maximumf %26, %27 : vector<16x32xf32>
    %29 = arith.truncf %28 : vector<16x32xf32> to vector<16x32xbf16>
    %c0_23 = arith.constant 0 : index
    %c0_24 = arith.constant 0 : index
    %c0_25 = arith.constant 0 : index
    %30 = vector.load %arg8[%c0_23, %c0_24, %c0_25] : memref<9x16x16xbf16, #tpu.memory_space<vmem>>, vector<1x16x16xbf16>
    %31 = vector.shape_cast %30 : vector<1x16x16xbf16> to vector<16x16xbf16>
    %cst_26 = arith.constant dense<0.000000e+00> : vector<16x32xf32>
    %32 = tpu.matmul %31, %29, %cst_26 {dimension_numbers = #tpu.dot_dimension_numbers<[1], [0], [0], [1], [0, 0, 1, 1], [], []>} : vector<16x16xbf16>, vector<16x32xbf16>, vector<16x32xf32> -> vector<16x32xf32>
    %33 = arith.truncf %32 : vector<16x32xf32> to vector<16x32xbf16>
    %c0_27 = arith.constant 0 : index
    %c0_28 = arith.constant 0 : index
    %c0_29 = arith.constant 0 : index
    %c0_30 = arith.constant 0 : index
    %34 = vector.load %arg7[%c0_27, %c0_28, %c0_29, %c0_30] : memref<2x9x32x8xbf16, #tpu.memory_space<vmem>>, vector<1x1x32x8xbf16>
    %35 = vector.shape_cast %34 : vector<1x1x32x8xbf16> to vector<32x8xbf16>
    %cst_31 = arith.constant dense<0.000000e+00> : vector<16x8xf32>
    %36 = tpu.matmul %33, %35, %cst_31 {dimension_numbers = #tpu.dot_dimension_numbers<[1], [0], [0], [1], [0, 0, 1, 1], [], []>} : vector<16x32xbf16>, vector<32x8xbf16>, vector<16x8xf32> -> vector<16x8xf32>
    %c1 = arith.constant 1 : index
    %c0_32 = arith.constant 0 : index
    %c0_33 = arith.constant 0 : index
    %37 = vector.load %arg8[%c1, %c0_32, %c0_33] : memref<9x16x16xbf16, #tpu.memory_space<vmem>>, vector<1x16x16xbf16>
    %38 = vector.shape_cast %37 : vector<1x16x16xbf16> to vector<16x16xbf16>
    %cst_34 = arith.constant dense<0.000000e+00> : vector<16x32xf32>
    %39 = tpu.matmul %38, %29, %cst_34 {dimension_numbers = #tpu.dot_dimension_numbers<[1], [0], [0], [1], [0, 0, 1, 1], [], []>} : vector<16x16xbf16>, vector<16x32xbf16>, vector<16x32xf32> -> vector<16x32xf32>
    %40 = arith.truncf %39 : vector<16x32xf32> to vector<16x32xbf16>
    %c0_35 = arith.constant 0 : index
    %c1_36 = arith.constant 1 : index
    %c0_37 = arith.constant 0 : index
    %c0_38 = arith.constant 0 : index
    %41 = vector.load %arg7[%c0_35, %c1_36, %c0_37, %c0_38] : memref<2x9x32x8xbf16, #tpu.memory_space<vmem>>, vector<1x1x32x8xbf16>
    %42 = vector.shape_cast %41 : vector<1x1x32x8xbf16> to vector<32x8xbf16>
    %cst_39 = arith.constant dense<0.000000e+00> : vector<16x8xf32>
    %43 = tpu.matmul %40, %42, %cst_39 {dimension_numbers = #tpu.dot_dimension_numbers<[1], [0], [0], [1], [0, 0, 1, 1], [], []>} : vector<16x32xbf16>, vector<32x8xbf16>, vector<16x8xf32> -> vector<16x8xf32>
    %44 = arith.addf %36, %43 : vector<16x8xf32>
    %c2 = arith.constant 2 : index
    %c0_40 = arith.constant 0 : index
    %c0_41 = arith.constant 0 : index
    %45 = vector.load %arg8[%c2, %c0_40, %c0_41] : memref<9x16x16xbf16, #tpu.memory_space<vmem>>, vector<1x16x16xbf16>
    %46 = vector.shape_cast %45 : vector<1x16x16xbf16> to vector<16x16xbf16>
    %cst_42 = arith.constant dense<0.000000e+00> : vector<16x32xf32>
    %47 = tpu.matmul %46, %29, %cst_42 {dimension_numbers = #tpu.dot_dimension_numbers<[1], [0], [0], [1], [0, 0, 1, 1], [], []>} : vector<16x16xbf16>, vector<16x32xbf16>, vector<16x32xf32> -> vector<16x32xf32>
    %48 = arith.truncf %47 : vector<16x32xf32> to vector<16x32xbf16>
    %c0_43 = arith.constant 0 : index
    %c2_44 = arith.constant 2 : index
    %c0_45 = arith.constant 0 : index
    %c0_46 = arith.constant 0 : index
    %49 = vector.load %arg7[%c0_43, %c2_44, %c0_45, %c0_46] : memref<2x9x32x8xbf16, #tpu.memory_space<vmem>>, vector<1x1x32x8xbf16>
    %50 = vector.shape_cast %49 : vector<1x1x32x8xbf16> to vector<32x8xbf16>
    %cst_47 = arith.constant dense<0.000000e+00> : vector<16x8xf32>
    %51 = tpu.matmul %48, %50, %cst_47 {dimension_numbers = #tpu.dot_dimension_numbers<[1], [0], [0], [1], [0, 0, 1, 1], [], []>} : vector<16x32xbf16>, vector<32x8xbf16>, vector<16x8xf32> -> vector<16x8xf32>
    %52 = arith.addf %44, %51 : vector<16x8xf32>
    %c3 = arith.constant 3 : index
    %c0_48 = arith.constant 0 : index
    %c0_49 = arith.constant 0 : index
    %53 = vector.load %arg8[%c3, %c0_48, %c0_49] : memref<9x16x16xbf16, #tpu.memory_space<vmem>>, vector<1x16x16xbf16>
    %54 = vector.shape_cast %53 : vector<1x16x16xbf16> to vector<16x16xbf16>
    %cst_50 = arith.constant dense<0.000000e+00> : vector<16x32xf32>
    %55 = tpu.matmul %54, %29, %cst_50 {dimension_numbers = #tpu.dot_dimension_numbers<[1], [0], [0], [1], [0, 0, 1, 1], [], []>} : vector<16x16xbf16>, vector<16x32xbf16>, vector<16x32xf32> -> vector<16x32xf32>
    %56 = arith.truncf %55 : vector<16x32xf32> to vector<16x32xbf16>
    %c0_51 = arith.constant 0 : index
    %c3_52 = arith.constant 3 : index
    %c0_53 = arith.constant 0 : index
    %c0_54 = arith.constant 0 : index
    %57 = vector.load %arg7[%c0_51, %c3_52, %c0_53, %c0_54] : memref<2x9x32x8xbf16, #tpu.memory_space<vmem>>, vector<1x1x32x8xbf16>
    %58 = vector.shape_cast %57 : vector<1x1x32x8xbf16> to vector<32x8xbf16>
    %cst_55 = arith.constant dense<0.000000e+00> : vector<16x8xf32>
    %59 = tpu.matmul %56, %58, %cst_55 {dimension_numbers = #tpu.dot_dimension_numbers<[1], [0], [0], [1], [0, 0, 1, 1], [], []>} : vector<16x32xbf16>, vector<32x8xbf16>, vector<16x8xf32> -> vector<16x8xf32>
    %60 = arith.addf %52, %59 : vector<16x8xf32>
    %c4 = arith.constant 4 : index
    %c0_56 = arith.constant 0 : index
    %c0_57 = arith.constant 0 : index
    %61 = vector.load %arg8[%c4, %c0_56, %c0_57] : memref<9x16x16xbf16, #tpu.memory_space<vmem>>, vector<1x16x16xbf16>
    %62 = vector.shape_cast %61 : vector<1x16x16xbf16> to vector<16x16xbf16>
    %cst_58 = arith.constant dense<0.000000e+00> : vector<16x32xf32>
    %63 = tpu.matmul %62, %29, %cst_58 {dimension_numbers = #tpu.dot_dimension_numbers<[1], [0], [0], [1], [0, 0, 1, 1], [], []>} : vector<16x16xbf16>, vector<16x32xbf16>, vector<16x32xf32> -> vector<16x32xf32>
    %64 = arith.truncf %63 : vector<16x32xf32> to vector<16x32xbf16>
    %c0_59 = arith.constant 0 : index
    %c4_60 = arith.constant 4 : index
    %c0_61 = arith.constant 0 : index
    %c0_62 = arith.constant 0 : index
    %65 = vector.load %arg7[%c0_59, %c4_60, %c0_61, %c0_62] : memref<2x9x32x8xbf16, #tpu.memory_space<vmem>>, vector<1x1x32x8xbf16>
    %66 = vector.shape_cast %65 : vector<1x1x32x8xbf16> to vector<32x8xbf16>
    %cst_63 = arith.constant dense<0.000000e+00> : vector<16x8xf32>
    %67 = tpu.matmul %64, %66, %cst_63 {dimension_numbers = #tpu.dot_dimension_numbers<[1], [0], [0], [1], [0, 0, 1, 1], [], []>} : vector<16x32xbf16>, vector<32x8xbf16>, vector<16x8xf32> -> vector<16x8xf32>
    %68 = arith.addf %60, %67 : vector<16x8xf32>
    %c5 = arith.constant 5 : index
    %c0_64 = arith.constant 0 : index
    %c0_65 = arith.constant 0 : index
    %69 = vector.load %arg8[%c5, %c0_64, %c0_65] : memref<9x16x16xbf16, #tpu.memory_space<vmem>>, vector<1x16x16xbf16>
    %70 = vector.shape_cast %69 : vector<1x16x16xbf16> to vector<16x16xbf16>
    %cst_66 = arith.constant dense<0.000000e+00> : vector<16x32xf32>
    %71 = tpu.matmul %70, %29, %cst_66 {dimension_numbers = #tpu.dot_dimension_numbers<[1], [0], [0], [1], [0, 0, 1, 1], [], []>} : vector<16x16xbf16>, vector<16x32xbf16>, vector<16x32xf32> -> vector<16x32xf32>
    %72 = arith.truncf %71 : vector<16x32xf32> to vector<16x32xbf16>
    %c0_67 = arith.constant 0 : index
    %c5_68 = arith.constant 5 : index
    %c0_69 = arith.constant 0 : index
    %c0_70 = arith.constant 0 : index
    %73 = vector.load %arg7[%c0_67, %c5_68, %c0_69, %c0_70] : memref<2x9x32x8xbf16, #tpu.memory_space<vmem>>, vector<1x1x32x8xbf16>
    %74 = vector.shape_cast %73 : vector<1x1x32x8xbf16> to vector<32x8xbf16>
    %cst_71 = arith.constant dense<0.000000e+00> : vector<16x8xf32>
    %75 = tpu.matmul %72, %74, %cst_71 {dimension_numbers = #tpu.dot_dimension_numbers<[1], [0], [0], [1], [0, 0, 1, 1], [], []>} : vector<16x32xbf16>, vector<32x8xbf16>, vector<16x8xf32> -> vector<16x8xf32>
    %76 = arith.addf %68, %75 : vector<16x8xf32>
    %c6 = arith.constant 6 : index
    %c0_72 = arith.constant 0 : index
    %c0_73 = arith.constant 0 : index
    %77 = vector.load %arg8[%c6, %c0_72, %c0_73] : memref<9x16x16xbf16, #tpu.memory_space<vmem>>, vector<1x16x16xbf16>
    %78 = vector.shape_cast %77 : vector<1x16x16xbf16> to vector<16x16xbf16>
    %cst_74 = arith.constant dense<0.000000e+00> : vector<16x32xf32>
    %79 = tpu.matmul %78, %29, %cst_74 {dimension_numbers = #tpu.dot_dimension_numbers<[1], [0], [0], [1], [0, 0, 1, 1], [], []>} : vector<16x16xbf16>, vector<16x32xbf16>, vector<16x32xf32> -> vector<16x32xf32>
    %80 = arith.truncf %79 : vector<16x32xf32> to vector<16x32xbf16>
    %c0_75 = arith.constant 0 : index
    %c6_76 = arith.constant 6 : index
    %c0_77 = arith.constant 0 : index
    %c0_78 = arith.constant 0 : index
    %81 = vector.load %arg7[%c0_75, %c6_76, %c0_77, %c0_78] : memref<2x9x32x8xbf16, #tpu.memory_space<vmem>>, vector<1x1x32x8xbf16>
    %82 = vector.shape_cast %81 : vector<1x1x32x8xbf16> to vector<32x8xbf16>
    %cst_79 = arith.constant dense<0.000000e+00> : vector<16x8xf32>
    %83 = tpu.matmul %80, %82, %cst_79 {dimension_numbers = #tpu.dot_dimension_numbers<[1], [0], [0], [1], [0, 0, 1, 1], [], []>} : vector<16x32xbf16>, vector<32x8xbf16>, vector<16x8xf32> -> vector<16x8xf32>
    %84 = arith.addf %76, %83 : vector<16x8xf32>
    %c7 = arith.constant 7 : index
    %c0_80 = arith.constant 0 : index
    %c0_81 = arith.constant 0 : index
    %85 = vector.load %arg8[%c7, %c0_80, %c0_81] : memref<9x16x16xbf16, #tpu.memory_space<vmem>>, vector<1x16x16xbf16>
    %86 = vector.shape_cast %85 : vector<1x16x16xbf16> to vector<16x16xbf16>
    %cst_82 = arith.constant dense<0.000000e+00> : vector<16x32xf32>
    %87 = tpu.matmul %86, %29, %cst_82 {dimension_numbers = #tpu.dot_dimension_numbers<[1], [0], [0], [1], [0, 0, 1, 1], [], []>} : vector<16x16xbf16>, vector<16x32xbf16>, vector<16x32xf32> -> vector<16x32xf32>
    %88 = arith.truncf %87 : vector<16x32xf32> to vector<16x32xbf16>
    %c0_83 = arith.constant 0 : index
    %c7_84 = arith.constant 7 : index
    %c0_85 = arith.constant 0 : index
    %c0_86 = arith.constant 0 : index
    %89 = vector.load %arg7[%c0_83, %c7_84, %c0_85, %c0_86] : memref<2x9x32x8xbf16, #tpu.memory_space<vmem>>, vector<1x1x32x8xbf16>
    %90 = vector.shape_cast %89 : vector<1x1x32x8xbf16> to vector<32x8xbf16>
    %cst_87 = arith.constant dense<0.000000e+00> : vector<16x8xf32>
    %91 = tpu.matmul %88, %90, %cst_87 {dimension_numbers = #tpu.dot_dimension_numbers<[1], [0], [0], [1], [0, 0, 1, 1], [], []>} : vector<16x32xbf16>, vector<32x8xbf16>, vector<16x8xf32> -> vector<16x8xf32>
    %92 = arith.addf %84, %91 : vector<16x8xf32>
    %c8 = arith.constant 8 : index
    %c0_88 = arith.constant 0 : index
    %c0_89 = arith.constant 0 : index
    %93 = vector.load %arg8[%c8, %c0_88, %c0_89] : memref<9x16x16xbf16, #tpu.memory_space<vmem>>, vector<1x16x16xbf16>
    %94 = vector.shape_cast %93 : vector<1x16x16xbf16> to vector<16x16xbf16>
    %cst_90 = arith.constant dense<0.000000e+00> : vector<16x32xf32>
    %95 = tpu.matmul %94, %29, %cst_90 {dimension_numbers = #tpu.dot_dimension_numbers<[1], [0], [0], [1], [0, 0, 1, 1], [], []>} : vector<16x16xbf16>, vector<16x32xbf16>, vector<16x32xf32> -> vector<16x32xf32>
    %96 = arith.truncf %95 : vector<16x32xf32> to vector<16x32xbf16>
    %c0_91 = arith.constant 0 : index
    %c8_92 = arith.constant 8 : index
    %c0_93 = arith.constant 0 : index
    %c0_94 = arith.constant 0 : index
    %97 = vector.load %arg7[%c0_91, %c8_92, %c0_93, %c0_94] : memref<2x9x32x8xbf16, #tpu.memory_space<vmem>>, vector<1x1x32x8xbf16>
    %98 = vector.shape_cast %97 : vector<1x1x32x8xbf16> to vector<32x8xbf16>
    %cst_95 = arith.constant dense<0.000000e+00> : vector<16x8xf32>
    %99 = tpu.matmul %96, %98, %cst_95 {dimension_numbers = #tpu.dot_dimension_numbers<[1], [0], [0], [1], [0, 0, 1, 1], [], []>} : vector<16x32xbf16>, vector<32x8xbf16>, vector<16x8xf32> -> vector<16x8xf32>
    %100 = arith.addf %92, %99 : vector<16x8xf32>
    %c0_96 = arith.constant 0 : index
    %c16 = arith.constant 16 : index
    %101 = vector.load %arg10[%c0_96, %c16] : memref<16x32xf32, #tpu.memory_space<vmem>>, vector<16x8xf32>
    tpu.vector_store %arg10[%c0_96, %c16], %100 {strides = array<i32>} : memref<16x32xf32, #tpu.memory_space<vmem>>, vector<16x8xf32>,
    %c0_97 = arith.constant 0 : index
    %c0_98 = arith.constant 0 : index
    %102 = vector.load %arg10[%c0_97, %c0_98] : memref<16x32xf32, #tpu.memory_space<vmem>>, vector<16x32xf32>
    %c1_99 = arith.constant 1 : index
    %c0_100 = arith.constant 0 : index
    %c0_101 = arith.constant 0 : index
    %103 = vector.load %arg2[%c1_99, %c0_100, %c0_101] : memref<2x1x32xf32, #tpu.memory_space<vmem>>, vector<1x1x32xf32>
    %104 = vector.shape_cast %103 : vector<1x1x32xf32> to vector<1x32xf32>
    %105 = vector.broadcast %104 : vector<1x32xf32> to vector<16x32xf32>
    %106 = arith.mulf %102, %105 : vector<16x32xf32>
    %c1_102 = arith.constant 1 : index
    %c0_103 = arith.constant 0 : index
    %c0_104 = arith.constant 0 : index
    %107 = vector.load %arg3[%c1_102, %c0_103, %c0_104] : memref<2x1x32xf32, #tpu.memory_space<vmem>>, vector<1x1x32xf32>
    %108 = vector.shape_cast %107 : vector<1x1x32xf32> to vector<1x32xf32>
    %109 = vector.broadcast %108 : vector<1x32xf32> to vector<16x32xf32>
    %110 = arith.addf %106, %109 : vector<16x32xf32>
    %cst_105 = arith.constant 0.000000e+00 : f32
    %111 = vector.broadcast %cst_105 : f32 to vector<16x32xf32>
    %112 = arith.maximumf %110, %111 : vector<16x32xf32>
    %113 = arith.truncf %112 : vector<16x32xf32> to vector<16x32xbf16>
    %c1_106 = arith.constant 1 : index
    %c0_107 = arith.constant 0 : index
    %c0_108 = arith.constant 0 : index
    %114 = vector.load %arg4[%c1_106, %c0_107, %c0_108] : memref<2x32x32xbf16, #tpu.memory_space<vmem>>, vector<1x32x32xbf16>
    %115 = vector.shape_cast %114 : vector<1x32x32xbf16> to vector<32x32xbf16>
    %cst_109 = arith.constant dense<0.000000e+00> : vector<16x32xf32>
    %116 = tpu.matmul %113, %115, %cst_109 {dimension_numbers = #tpu.dot_dimension_numbers<[1], [0], [0], [1], [0, 0, 1, 1], [], []>} : vector<16x32xbf16>, vector<32x32xbf16>, vector<16x32xf32> -> vector<16x32xf32>
    %c1_110 = arith.constant 1 : index
    %c0_111 = arith.constant 0 : index
    %c0_112 = arith.constant 0 : index
    %117 = vector.load %arg5[%c1_110, %c0_111, %c0_112] : memref<2x1x32xf32, #tpu.memory_space<vmem>>, vector<1x1x32xf32>
    %118 = vector.shape_cast %117 : vector<1x1x32xf32> to vector<1x32xf32>
    %119 = vector.broadcast %118 : vector<1x32xf32> to vector<16x32xf32>
    %120 = arith.mulf %116, %119 : vector<16x32xf32>
    %c1_113 = arith.constant 1 : index
    %c0_114 = arith.constant 0 : index
    %c0_115 = arith.constant 0 : index
    %121 = vector.load %arg6[%c1_113, %c0_114, %c0_115] : memref<2x1x32xf32, #tpu.memory_space<vmem>>, vector<1x1x32xf32>
    %122 = vector.shape_cast %121 : vector<1x1x32xf32> to vector<1x32xf32>
    %123 = vector.broadcast %122 : vector<1x32xf32> to vector<16x32xf32>
    %124 = arith.addf %120, %123 : vector<16x32xf32>
    %cst_116 = arith.constant 0.000000e+00 : f32
    %125 = vector.broadcast %cst_116 : f32 to vector<16x32xf32>
    %126 = arith.maximumf %124, %125 : vector<16x32xf32>
    %127 = arith.truncf %126 : vector<16x32xf32> to vector<16x32xbf16>
    %c0_117 = arith.constant 0 : index
    %c0_118 = arith.constant 0 : index
    %c0_119 = arith.constant 0 : index
    %128 = vector.load %arg8[%c0_117, %c0_118, %c0_119] : memref<9x16x16xbf16, #tpu.memory_space<vmem>>, vector<1x16x16xbf16>
    %129 = vector.shape_cast %128 : vector<1x16x16xbf16> to vector<16x16xbf16>
    %cst_120 = arith.constant dense<0.000000e+00> : vector<16x32xf32>
    %130 = tpu.matmul %129, %127, %cst_120 {dimension_numbers = #tpu.dot_dimension_numbers<[1], [0], [0], [1], [0, 0, 1, 1], [], []>} : vector<16x16xbf16>, vector<16x32xbf16>, vector<16x32xf32> -> vector<16x32xf32>
    %131 = arith.truncf %130 : vector<16x32xf32> to vector<16x32xbf16>
    %c1_121 = arith.constant 1 : index
    %c0_122 = arith.constant 0 : index
    %c0_123 = arith.constant 0 : index
    %c0_124 = arith.constant 0 : index
    %132 = vector.load %arg7[%c1_121, %c0_122, %c0_123, %c0_124] : memref<2x9x32x8xbf16, #tpu.memory_space<vmem>>, vector<1x1x32x8xbf16>
    %133 = vector.shape_cast %132 : vector<1x1x32x8xbf16> to vector<32x8xbf16>
    %cst_125 = arith.constant dense<0.000000e+00> : vector<16x8xf32>
    %134 = tpu.matmul %131, %133, %cst_125 {dimension_numbers = #tpu.dot_dimension_numbers<[1], [0], [0], [1], [0, 0, 1, 1], [], []>} : vector<16x32xbf16>, vector<32x8xbf16>, vector<16x8xf32> -> vector<16x8xf32>
    %c1_126 = arith.constant 1 : index
    %c0_127 = arith.constant 0 : index
    %c0_128 = arith.constant 0 : index
    %135 = vector.load %arg8[%c1_126, %c0_127, %c0_128] : memref<9x16x16xbf16, #tpu.memory_space<vmem>>, vector<1x16x16xbf16>
    %136 = vector.shape_cast %135 : vector<1x16x16xbf16> to vector<16x16xbf16>
    %cst_129 = arith.constant dense<0.000000e+00> : vector<16x32xf32>
    %137 = tpu.matmul %136, %127, %cst_129 {dimension_numbers = #tpu.dot_dimension_numbers<[1], [0], [0], [1], [0, 0, 1, 1], [], []>} : vector<16x16xbf16>, vector<16x32xbf16>, vector<16x32xf32> -> vector<16x32xf32>
    %138 = arith.truncf %137 : vector<16x32xf32> to vector<16x32xbf16>
    %c1_130 = arith.constant 1 : index
    %c1_131 = arith.constant 1 : index
    %c0_132 = arith.constant 0 : index
    %c0_133 = arith.constant 0 : index
    %139 = vector.load %arg7[%c1_130, %c1_131, %c0_132, %c0_133] : memref<2x9x32x8xbf16, #tpu.memory_space<vmem>>, vector<1x1x32x8xbf16>
    %140 = vector.shape_cast %139 : vector<1x1x32x8xbf16> to vector<32x8xbf16>
    %cst_134 = arith.constant dense<0.000000e+00> : vector<16x8xf32>
    %141 = tpu.matmul %138, %140, %cst_134 {dimension_numbers = #tpu.dot_dimension_numbers<[1], [0], [0], [1], [0, 0, 1, 1], [], []>} : vector<16x32xbf16>, vector<32x8xbf16>, vector<16x8xf32> -> vector<16x8xf32>
    %142 = arith.addf %134, %141 : vector<16x8xf32>
    %c2_135 = arith.constant 2 : index
    %c0_136 = arith.constant 0 : index
    %c0_137 = arith.constant 0 : index
    %143 = vector.load %arg8[%c2_135, %c0_136, %c0_137] : memref<9x16x16xbf16, #tpu.memory_space<vmem>>, vector<1x16x16xbf16>
    %144 = vector.shape_cast %143 : vector<1x16x16xbf16> to vector<16x16xbf16>
    %cst_138 = arith.constant dense<0.000000e+00> : vector<16x32xf32>
    %145 = tpu.matmul %144, %127, %cst_138 {dimension_numbers = #tpu.dot_dimension_numbers<[1], [0], [0], [1], [0, 0, 1, 1], [], []>} : vector<16x16xbf16>, vector<16x32xbf16>, vector<16x32xf32> -> vector<16x32xf32>
    %146 = arith.truncf %145 : vector<16x32xf32> to vector<16x32xbf16>
    %c1_139 = arith.constant 1 : index
    %c2_140 = arith.constant 2 : index
    %c0_141 = arith.constant 0 : index
    %c0_142 = arith.constant 0 : index
    %147 = vector.load %arg7[%c1_139, %c2_140, %c0_141, %c0_142] : memref<2x9x32x8xbf16, #tpu.memory_space<vmem>>, vector<1x1x32x8xbf16>
    %148 = vector.shape_cast %147 : vector<1x1x32x8xbf16> to vector<32x8xbf16>
    %cst_143 = arith.constant dense<0.000000e+00> : vector<16x8xf32>
    %149 = tpu.matmul %146, %148, %cst_143 {dimension_numbers = #tpu.dot_dimension_numbers<[1], [0], [0], [1], [0, 0, 1, 1], [], []>} : vector<16x32xbf16>, vector<32x8xbf16>, vector<16x8xf32> -> vector<16x8xf32>
    %150 = arith.addf %142, %149 : vector<16x8xf32>
    %c3_144 = arith.constant 3 : index
    %c0_145 = arith.constant 0 : index
    %c0_146 = arith.constant 0 : index
    %151 = vector.load %arg8[%c3_144, %c0_145, %c0_146] : memref<9x16x16xbf16, #tpu.memory_space<vmem>>, vector<1x16x16xbf16>
    %152 = vector.shape_cast %151 : vector<1x16x16xbf16> to vector<16x16xbf16>
    %cst_147 = arith.constant dense<0.000000e+00> : vector<16x32xf32>
    %153 = tpu.matmul %152, %127, %cst_147 {dimension_numbers = #tpu.dot_dimension_numbers<[1], [0], [0], [1], [0, 0, 1, 1], [], []>} : vector<16x16xbf16>, vector<16x32xbf16>, vector<16x32xf32> -> vector<16x32xf32>
    %154 = arith.truncf %153 : vector<16x32xf32> to vector<16x32xbf16>
    %c1_148 = arith.constant 1 : index
    %c3_149 = arith.constant 3 : index
    %c0_150 = arith.constant 0 : index
    %c0_151 = arith.constant 0 : index
    %155 = vector.load %arg7[%c1_148, %c3_149, %c0_150, %c0_151] : memref<2x9x32x8xbf16, #tpu.memory_space<vmem>>, vector<1x1x32x8xbf16>
    %156 = vector.shape_cast %155 : vector<1x1x32x8xbf16> to vector<32x8xbf16>
    %cst_152 = arith.constant dense<0.000000e+00> : vector<16x8xf32>
    %157 = tpu.matmul %154, %156, %cst_152 {dimension_numbers = #tpu.dot_dimension_numbers<[1], [0], [0], [1], [0, 0, 1, 1], [], []>} : vector<16x32xbf16>, vector<32x8xbf16>, vector<16x8xf32> -> vector<16x8xf32>
    %158 = arith.addf %150, %157 : vector<16x8xf32>
    %c4_153 = arith.constant 4 : index
    %c0_154 = arith.constant 0 : index
    %c0_155 = arith.constant 0 : index
    %159 = vector.load %arg8[%c4_153, %c0_154, %c0_155] : memref<9x16x16xbf16, #tpu.memory_space<vmem>>, vector<1x16x16xbf16>
    %160 = vector.shape_cast %159 : vector<1x16x16xbf16> to vector<16x16xbf16>
    %cst_156 = arith.constant dense<0.000000e+00> : vector<16x32xf32>
    %161 = tpu.matmul %160, %127, %cst_156 {dimension_numbers = #tpu.dot_dimension_numbers<[1], [0], [0], [1], [0, 0, 1, 1], [], []>} : vector<16x16xbf16>, vector<16x32xbf16>, vector<16x32xf32> -> vector<16x32xf32>
    %162 = arith.truncf %161 : vector<16x32xf32> to vector<16x32xbf16>
    %c1_157 = arith.constant 1 : index
    %c4_158 = arith.constant 4 : index
    %c0_159 = arith.constant 0 : index
    %c0_160 = arith.constant 0 : index
    %163 = vector.load %arg7[%c1_157, %c4_158, %c0_159, %c0_160] : memref<2x9x32x8xbf16, #tpu.memory_space<vmem>>, vector<1x1x32x8xbf16>
    %164 = vector.shape_cast %163 : vector<1x1x32x8xbf16> to vector<32x8xbf16>
    %cst_161 = arith.constant dense<0.000000e+00> : vector<16x8xf32>
    %165 = tpu.matmul %162, %164, %cst_161 {dimension_numbers = #tpu.dot_dimension_numbers<[1], [0], [0], [1], [0, 0, 1, 1], [], []>} : vector<16x32xbf16>, vector<32x8xbf16>, vector<16x8xf32> -> vector<16x8xf32>
    %166 = arith.addf %158, %165 : vector<16x8xf32>
    %c5_162 = arith.constant 5 : index
    %c0_163 = arith.constant 0 : index
    %c0_164 = arith.constant 0 : index
    %167 = vector.load %arg8[%c5_162, %c0_163, %c0_164] : memref<9x16x16xbf16, #tpu.memory_space<vmem>>, vector<1x16x16xbf16>
    %168 = vector.shape_cast %167 : vector<1x16x16xbf16> to vector<16x16xbf16>
    %cst_165 = arith.constant dense<0.000000e+00> : vector<16x32xf32>
    %169 = tpu.matmul %168, %127, %cst_165 {dimension_numbers = #tpu.dot_dimension_numbers<[1], [0], [0], [1], [0, 0, 1, 1], [], []>} : vector<16x16xbf16>, vector<16x32xbf16>, vector<16x32xf32> -> vector<16x32xf32>
    %170 = arith.truncf %169 : vector<16x32xf32> to vector<16x32xbf16>
    %c1_166 = arith.constant 1 : index
    %c5_167 = arith.constant 5 : index
    %c0_168 = arith.constant 0 : index
    %c0_169 = arith.constant 0 : index
    %171 = vector.load %arg7[%c1_166, %c5_167, %c0_168, %c0_169] : memref<2x9x32x8xbf16, #tpu.memory_space<vmem>>, vector<1x1x32x8xbf16>
    %172 = vector.shape_cast %171 : vector<1x1x32x8xbf16> to vector<32x8xbf16>
    %cst_170 = arith.constant dense<0.000000e+00> : vector<16x8xf32>
    %173 = tpu.matmul %170, %172, %cst_170 {dimension_numbers = #tpu.dot_dimension_numbers<[1], [0], [0], [1], [0, 0, 1, 1], [], []>} : vector<16x32xbf16>, vector<32x8xbf16>, vector<16x8xf32> -> vector<16x8xf32>
    %174 = arith.addf %166, %173 : vector<16x8xf32>
    %c6_171 = arith.constant 6 : index
    %c0_172 = arith.constant 0 : index
    %c0_173 = arith.constant 0 : index
    %175 = vector.load %arg8[%c6_171, %c0_172, %c0_173] : memref<9x16x16xbf16, #tpu.memory_space<vmem>>, vector<1x16x16xbf16>
    %176 = vector.shape_cast %175 : vector<1x16x16xbf16> to vector<16x16xbf16>
    %cst_174 = arith.constant dense<0.000000e+00> : vector<16x32xf32>
    %177 = tpu.matmul %176, %127, %cst_174 {dimension_numbers = #tpu.dot_dimension_numbers<[1], [0], [0], [1], [0, 0, 1, 1], [], []>} : vector<16x16xbf16>, vector<16x32xbf16>, vector<16x32xf32> -> vector<16x32xf32>
    %178 = arith.truncf %177 : vector<16x32xf32> to vector<16x32xbf16>
    %c1_175 = arith.constant 1 : index
    %c6_176 = arith.constant 6 : index
    %c0_177 = arith.constant 0 : index
    %c0_178 = arith.constant 0 : index
    %179 = vector.load %arg7[%c1_175, %c6_176, %c0_177, %c0_178] : memref<2x9x32x8xbf16, #tpu.memory_space<vmem>>, vector<1x1x32x8xbf16>
    %180 = vector.shape_cast %179 : vector<1x1x32x8xbf16> to vector<32x8xbf16>
    %cst_179 = arith.constant dense<0.000000e+00> : vector<16x8xf32>
    %181 = tpu.matmul %178, %180, %cst_179 {dimension_numbers = #tpu.dot_dimension_numbers<[1], [0], [0], [1], [0, 0, 1, 1], [], []>} : vector<16x32xbf16>, vector<32x8xbf16>, vector<16x8xf32> -> vector<16x8xf32>
    %182 = arith.addf %174, %181 : vector<16x8xf32>
    %c7_180 = arith.constant 7 : index
    %c0_181 = arith.constant 0 : index
    %c0_182 = arith.constant 0 : index
    %183 = vector.load %arg8[%c7_180, %c0_181, %c0_182] : memref<9x16x16xbf16, #tpu.memory_space<vmem>>, vector<1x16x16xbf16>
    %184 = vector.shape_cast %183 : vector<1x16x16xbf16> to vector<16x16xbf16>
    %cst_183 = arith.constant dense<0.000000e+00> : vector<16x32xf32>
    %185 = tpu.matmul %184, %127, %cst_183 {dimension_numbers = #tpu.dot_dimension_numbers<[1], [0], [0], [1], [0, 0, 1, 1], [], []>} : vector<16x16xbf16>, vector<16x32xbf16>, vector<16x32xf32> -> vector<16x32xf32>
    %186 = arith.truncf %185 : vector<16x32xf32> to vector<16x32xbf16>
    %c1_184 = arith.constant 1 : index
    %c7_185 = arith.constant 7 : index
    %c0_186 = arith.constant 0 : index
    %c0_187 = arith.constant 0 : index
    %187 = vector.load %arg7[%c1_184, %c7_185, %c0_186, %c0_187] : memref<2x9x32x8xbf16, #tpu.memory_space<vmem>>, vector<1x1x32x8xbf16>
    %188 = vector.shape_cast %187 : vector<1x1x32x8xbf16> to vector<32x8xbf16>
    %cst_188 = arith.constant dense<0.000000e+00> : vector<16x8xf32>
    %189 = tpu.matmul %186, %188, %cst_188 {dimension_numbers = #tpu.dot_dimension_numbers<[1], [0], [0], [1], [0, 0, 1, 1], [], []>} : vector<16x32xbf16>, vector<32x8xbf16>, vector<16x8xf32> -> vector<16x8xf32>
    %190 = arith.addf %182, %189 : vector<16x8xf32>
    %c8_189 = arith.constant 8 : index
    %c0_190 = arith.constant 0 : index
    %c0_191 = arith.constant 0 : index
    %191 = vector.load %arg8[%c8_189, %c0_190, %c0_191] : memref<9x16x16xbf16, #tpu.memory_space<vmem>>, vector<1x16x16xbf16>
    %192 = vector.shape_cast %191 : vector<1x16x16xbf16> to vector<16x16xbf16>
    %cst_192 = arith.constant dense<0.000000e+00> : vector<16x32xf32>
    %193 = tpu.matmul %192, %127, %cst_192 {dimension_numbers = #tpu.dot_dimension_numbers<[1], [0], [0], [1], [0, 0, 1, 1], [], []>} : vector<16x16xbf16>, vector<16x32xbf16>, vector<16x32xf32> -> vector<16x32xf32>
    %194 = arith.truncf %193 : vector<16x32xf32> to vector<16x32xbf16>
    %c1_193 = arith.constant 1 : index
    %c8_194 = arith.constant 8 : index
    %c0_195 = arith.constant 0 : index
    %c0_196 = arith.constant 0 : index
    %195 = vector.load %arg7[%c1_193, %c8_194, %c0_195, %c0_196] : memref<2x9x32x8xbf16, #tpu.memory_space<vmem>>, vector<1x1x32x8xbf16>
    %196 = vector.shape_cast %195 : vector<1x1x32x8xbf16> to vector<32x8xbf16>
    %cst_197 = arith.constant dense<0.000000e+00> : vector<16x8xf32>
    %197 = tpu.matmul %194, %196, %cst_197 {dimension_numbers = #tpu.dot_dimension_numbers<[1], [0], [0], [1], [0, 0, 1, 1], [], []>} : vector<16x32xbf16>, vector<32x8xbf16>, vector<16x8xf32> -> vector<16x8xf32>
    %198 = arith.addf %190, %197 : vector<16x8xf32>
    %c0_198 = arith.constant 0 : index
    %c24 = arith.constant 24 : index
    %199 = vector.load %arg10[%c0_198, %c24] : memref<16x32xf32, #tpu.memory_space<vmem>>, vector<16x8xf32>
    tpu.vector_store %arg10[%c0_198, %c24], %198 {strides = array<i32>} : memref<16x32xf32, #tpu.memory_space<vmem>>, vector<16x8xf32>,
    %c0_199 = arith.constant 0 : index
    %c0_200 = arith.constant 0 : index
    %200 = vector.load %arg10[%c0_199, %c0_200] : memref<16x32xf32, #tpu.memory_space<vmem>>, vector<16x32xf32>
    %201 = vector.shape_cast %200 : vector<16x32xf32> to vector<1x16x32xf32>
    %202 = arith.truncf %201 : vector<1x16x32xf32> to vector<1x16x32xbf16>
    %c0_201 = arith.constant 0 : index
    %c0_202 = arith.constant 0 : index
    %c0_203 = arith.constant 0 : index
    %203 = vector.load %arg9[%c0_201, %c0_202, %c0_203] : memref<1x16x32xbf16, #tpu.memory_space<vmem>>, vector<1x16x32xbf16>
    tpu.vector_store %arg9[%c0_201, %c0_202, %c0_203], %202 {strides = array<i32>} : memref<1x16x32xbf16, #tpu.memory_space<vmem>>, vector<1x16x32xbf16>,
    return
  }
  func.func @transform_0(%arg0: i32) -> (i32, i32, i32) {
    %c0_i32 = arith.constant 0 : i32
    %c0_i32_0 = arith.constant 0 : i32
    %c0_i32_1 = arith.constant 0 : i32
    return %arg0, %c0_i32, %c0_i32_0 : i32, i32, i32
  }
  func.func @transform_1(%arg0: i32) -> (i32, i32, i32) {
    %c0_i32 = arith.constant 0 : i32
    %c0_i32_0 = arith.constant 0 : i32
    %c0_i32_1 = arith.constant 0 : i32
    %c0_i32_2 = arith.constant 0 : i32
    return %c0_i32, %c0_i32_0, %c0_i32_1 : i32, i32, i32
  }
  func.func @transform_2(%arg0: i32) -> (i32, i32, i32) {
    %c0_i32 = arith.constant 0 : i32
    %c0_i32_0 = arith.constant 0 : i32
    %c0_i32_1 = arith.constant 0 : i32
    %c0_i32_2 = arith.constant 0 : i32
    return %c0_i32, %c0_i32_0, %c0_i32_1 : i32, i32, i32
  }
  func.func @transform_3(%arg0: i32) -> (i32, i32, i32) {
    %c0_i32 = arith.constant 0 : i32
    %c0_i32_0 = arith.constant 0 : i32
    %c0_i32_1 = arith.constant 0 : i32
    %c0_i32_2 = arith.constant 0 : i32
    return %c0_i32, %c0_i32_0, %c0_i32_1 : i32, i32, i32
  }
  func.func @transform_4(%arg0: i32) -> (i32, i32, i32) {
    %c0_i32 = arith.constant 0 : i32
    %c0_i32_0 = arith.constant 0 : i32
    %c0_i32_1 = arith.constant 0 : i32
    %c0_i32_2 = arith.constant 0 : i32
    return %c0_i32, %c0_i32_0, %c0_i32_1 : i32, i32, i32
  }
  func.func @transform_5(%arg0: i32) -> (i32, i32, i32) {
    %c0_i32 = arith.constant 0 : i32
    %c0_i32_0 = arith.constant 0 : i32
    %c0_i32_1 = arith.constant 0 : i32
    %c0_i32_2 = arith.constant 0 : i32
    return %c0_i32, %c0_i32_0, %c0_i32_1 : i32, i32, i32
  }
  func.func @transform_6(%arg0: i32) -> (i32, i32, i32, i32) {
    %c0_i32 = arith.constant 0 : i32
    %c0_i32_0 = arith.constant 0 : i32
    %c0_i32_1 = arith.constant 0 : i32
    %c0_i32_2 = arith.constant 0 : i32
    %c0_i32_3 = arith.constant 0 : i32
    return %c0_i32, %c0_i32_0, %c0_i32_1, %c0_i32_2 : i32, i32, i32, i32
  }
  func.func @transform_7(%arg0: i32) -> (i32, i32, i32) {
    %c0_i32 = arith.constant 0 : i32
    %c0_i32_0 = arith.constant 0 : i32
    %c0_i32_1 = arith.constant 0 : i32
    %c0_i32_2 = arith.constant 0 : i32
    return %c0_i32, %c0_i32_0, %c0_i32_1 : i32, i32, i32
  }
  func.func @transform_8(%arg0: i32) -> (i32, i32, i32) {
    %c0_i32 = arith.constant 0 : i32
    %c0_i32_0 = arith.constant 0 : i32
    %c0_i32_1 = arith.constant 0 : i32
    return %arg0, %c0_i32, %c0_i32_0 : i32, i32, i32
  }
}

</mosaic_0001>

<llo_original>
// kernel: densenet_forward.5
$region0: #{densenet_forward.5}
  #allocation0 [shape = 'u32[]', space=smem, size = 0x4, offset = 0x4, fixed_abs, tag = 'smem constant byte address 0x4 - core index']
  #allocation1 [shape = 'u32[72,128]{1,0:T(1,128)}', space=vmem, size = 0x9000, scoped, tag = 'internal scratch']
  %s0 = inlined_call_operand.vmem [shape: bf16[512,147], index: 0, kind: input, shape index: {}]
  %s1 = inlined_call_operand.vmem [shape: bf16[147,32], index: 1, kind: input, shape index: {}]
  %s2 = inlined_call_operand.vmem [shape: f32[1,32], index: 2, kind: input, shape index: {}]
  %s3 = inlined_call_operand.vmem [shape: f32[1,32], index: 3, kind: input, shape index: {}]
  %s4 = inlined_call_operand.vmem [shape: bf16[512,32], index: 4, kind: output, shape index: {}]
  %s5 = sld [smem:[#allocation0]]
  $region26: #{densenet_forward.5} parent=0
    _
  %s7 = ssub.s32 1, %s5
  %s8 = scalar_select 0, %s7, %s5
  // Predicated region
  $region2: #{densenet_forward.5} parent=0 // pred_check
    _
  $region3: #{densenet_forward.5} parent=0 // pred_check_branch
    %10 = sbr.rel (0) target = $region5
  $region4: #{densenet_forward.5} parent=0 // pred_region
    _
  $region5: #{densenet_forward.5} parent=0 // pred_fallthru
    _
  // Predicated region
  $region6: #{densenet_forward.5} parent=0 // pred_check
    _
  $region7: #{densenet_forward.5} parent=0 // pred_check_branch
    %12 = sbr.rel (0) target = $region9
  $region8: #{densenet_forward.5} parent=0 // pred_region
    _
  $region9: #{densenet_forward.5} parent=0 // pred_fallthru
    _
  // Predicated region
  $region10: #{densenet_forward.5} parent=0 // pred_check
    _
  $region11: #{densenet_forward.5} parent=0 // pred_check_branch
    %14 = sbr.rel (0) target = $region13
  $region12: #{densenet_forward.5} parent=0 // pred_region
    _
  $region13: #{densenet_forward.5} parent=0 // pred_fallthru
    _
  // Predicated region
  $region14: #{densenet_forward.5} parent=0 // pred_check
    _
  $region15: #{densenet_forward.5} parent=0 // pred_check_branch
    %16 = sbr.rel (0) target = $region17
  $region16: #{densenet_forward.5} parent=0 // pred_region
    _
  $region17: #{densenet_forward.5} parent=0 // pred_fallthru
    _
  %v18 = vld [vmem:[%s0] sm:$0xff]
  %v19 = vld [vmem:[%s0 + $0x8] sm:$0xff]
  %v20 = vld [vmem:[%s0 + $0x10] sm:$0xff]
  %v21 = vld [vmem:[%s0 + $0x18] sm:$0xff]
  %v22 = vld [vmem:[%s0 + $0x20] sm:$0xff]
  %v23 = vld [vmem:[%s0 + $0x28] sm:$0xff]
  %v24 = vld [vmem:[%s0 + $0x30] sm:$0xff]
  %v25 = vld [vmem:[%s0 + $0x38] sm:$0xff]
  %v26 = vld [vmem:[%s0 + $0x40] sm:$0xff]
  %v27 = vld [vmem:[%s0 + $0x48] sm:$0xff]
  %v28 = vld [vmem:[%s0 + $0x50] sm:$0xff]
  %v29 = vld [vmem:[%s0 + $0x58] sm:$0xff]
  %v30 = vld [vmem:[%s0 + $0x60] sm:$0xff]
  %v31 = vld [vmem:[%s0 + $0x68] sm:$0xff]
  %v32 = vld [vmem:[%s0 + $0x70] sm:$0xff]
  %v33 = vld [vmem:[%s0 + $0x78] sm:$0xff]
  %v34 = vld [vmem:[%s0 + $0x80] sm:$0xff]
  %v35 = vld [vmem:[%s0 + $0x88] sm:$0xff]
  %v36 = vld [vmem:[%s0 + $0x90] sm:$0xff]
  %v37 = vld [vmem:[%s0 + $0x98] sm:$0xff]
  %v38 = vld [vmem:[%s0 + $0xa0] sm:$0xff]
  %v39 = vld [vmem:[%s0 + $0xa8] sm:$0xff]
  %v40 = vld [vmem:[%s0 + $0xb0] sm:$0xff]
  %v41 = vld [vmem:[%s0 + $0xb8] sm:$0xff]
  %v42 = vld [vmem:[%s0 + $0xc0] sm:$0xff]
  %v43 = vld [vmem:[%s0 + $0xc8] sm:$0xff]
  %v44 = vld [vmem:[%s0 + $0xd0] sm:$0xff]
  %v45 = vld [vmem:[%s0 + $0xd8] sm:$0xff]
  %v46 = vld [vmem:[%s0 + $0xe0] sm:$0xff]
  %v47 = vld [vmem:[%s0 + $0xe8] sm:$0xff]
  %v48 = vld [vmem:[%s0 + $0xf0] sm:$0xff]
  %v49 = vld [vmem:[%s0 + $0xf8] sm:$0xff]
  %v50 = vld [vmem:[%s0 + $0x100] sm:$0xff]
  %v51 = vld [vmem:[%s0 + $0x108] sm:$0xff]
  %v52 = vld [vmem:[%s0 + $0x110] sm:$0xff]
  %v53 = vld [vmem:[%s0 + $0x118] sm:$0xff]
  %v54 = vld [vmem:[%s0 + $0x120] sm:$0xff]
  %v55 = vld [vmem:[%s0 + $0x128] sm:$0xff]
  %v56 = vld [vmem:[%s0 + $0x130] sm:$0xff]
  %v57 = vld [vmem:[%s0 + $0x138] sm:$0xff]
  %v58 = vld [vmem:[%s0 + $0x140] sm:$0xff]
  %v59 = vld [vmem:[%s0 + $0x148] sm:$0xff]
  %v60 = vld [vmem:[%s0 + $0x150] sm:$0xff]
  %v61 = vld [vmem:[%s0 + $0x158] sm:$0xff]
  %v62 = vld [vmem:[%s0 + $0x160] sm:$0xff]
  %v63 = vld [vmem:[%s0 + $0x168] sm:$0xff]
  %v64 = vld [vmem:[%s0 + $0x170] sm:$0xff]
  %v65 = vld [vmem:[%s0 + $0x178] sm:$0xff]
  %v66 = vld [vmem:[%s0 + $0x180] sm:$0xff]
  %v67 = vld [vmem:[%s0 + $0x188] sm:$0xff]
  %v68 = vld [vmem:[%s0 + $0x190] sm:$0xff]
  %v69 = vld [vmem:[%s0 + $0x198] sm:$0xff]
  %v70 = vld [vmem:[%s0 + $0x1a0] sm:$0xff]
  %v71 = vld [vmem:[%s0 + $0x1a8] sm:$0xff]
  %v72 = vld [vmem:[%s0 + $0x1b0] sm:$0xff]
  %v73 = vld [vmem:[%s0 + $0x1b8] sm:$0xff]
  %v74 = vld [vmem:[%s0 + $0x1c0] sm:$0xff]
  %v75 = vld [vmem:[%s0 + $0x1c8] sm:$0xff]
  %v76 = vld [vmem:[%s0 + $0x1d0] sm:$0xff]
  %v77 = vld [vmem:[%s0 + $0x1d8] sm:$0xff]
  %v78 = vld [vmem:[%s0 + $0x1e0] sm:$0xff]
  %v79 = vld [vmem:[%s0 + $0x1e8] sm:$0xff]
  %v80 = vld [vmem:[%s0 + $0x1f0] sm:$0xff]
  %v81 = vld [vmem:[%s0 + $0x1f8] sm:$0xff]
  %v82 = vld [vmem:[%s1] sm:$0xf]
  %v83 = vld [vmem:[%s1 + $0x4] sm:$0xf]
  %v84 = vld [vmem:[%s1 + $0x8] sm:$0xf]
  %v85 = vld [vmem:[%s1 + $0xc] sm:$0xf]
  %v86 = vld [vmem:[%s1 + $0x10] sm:$0xf]
  %v87 = vld [vmem:[%s1 + $0x14] sm:$0xf]
  %v88 = vld [vmem:[%s1 + $0x18] sm:$0xf]
  %v89 = vld [vmem:[%s1 + $0x1c] sm:$0xf]
  %v90 = vld [vmem:[%s1 + $0x20] sm:$0xf]
  %v91 = vld [vmem:[%s1 + $0x24] sm:$0xf]
  %v92 = vld [vmem:[%s1 + $0x28] sm:$0xf]
  %v93 = vld [vmem:[%s1 + $0x2c] sm:$0xf]
  %v94 = vld [vmem:[%s1 + $0x30] sm:$0xf]
  %v95 = vld [vmem:[%s1 + $0x34] sm:$0xf]
  %v96 = vld [vmem:[%s1 + $0x38] sm:$0xf]
  %v97 = vld [vmem:[%s1 + $0x3c] sm:$0xf]
  %v98 = vld [vmem:[%s1 + $0x40] sm:$0xf]
  %v99 = vld [vmem:[%s1 + $0x44] sm:$0xf]
  %v100 = vld [vmem:[%s1 + $0x48] sm:$0x3]
  %v165 = vunpack.c.l.b16 %v18
  %v166 = vunpack.c.h.b16 %v18
  %v167 = vunpack.c.l.b16 %v19
  %v168 = vunpack.c.h.b16 %v19
  %v169 = vunpack.c.l.b16 %v20
  %v170 = vunpack.c.h.b16 %v20
  %v171 = vunpack.c.l.b16 %v21
  %v172 = vunpack.c.h.b16 %v21
  %v173 = vunpack.c.l.b16 %v22
  %v174 = vunpack.c.h.b16 %v22
  %v175 = vunpack.c.l.b16 %v23
  %v176 = vunpack.c.h.b16 %v23
  %v177 = vunpack.c.l.b16 %v24
  %v178 = vunpack.c.h.b16 %v24
  %v179 = vunpack.c.l.b16 %v25
  %v180 = vunpack.c.h.b16 %v25
  %v181 = vunpack.c.l.b16 %v26
  %v182 = vunpack.c.h.b16 %v26
  %v183 = vunpack.c.l.b16 %v27
  %v184 = vunpack.c.h.b16 %v27
  %v185 = vunpack.c.l.b16 %v28
  %v186 = vunpack.c.h.b16 %v28
  %v187 = vunpack.c.l.b16 %v29
  %v188 = vunpack.c.h.b16 %v29
  %v189 = vunpack.c.l.b16 %v30
  %v190 = vunpack.c.h.b16 %v30
  %v191 = vunpack.c.l.b16 %v31
  %v192 = vunpack.c.h.b16 %v31
  %v193 = vunpack.c.l.b16 %v32
  %v194 = vunpack.c.h.b16 %v32
  %v195 = vunpack.c.l.b16 %v33
  %v196 = vunpack.c.h.b16 %v33
  %v197 = vunpack.c.l.b16 %v34
  %v198 = vunpack.c.h.b16 %v34
  %v199 = vunpack.c.l.b16 %v35
  %v200 = vunpack.c.h.b16 %v35
  %v201 = vunpack.c.l.b16 %v36
  %v202 = vunpack.c.h.b16 %v36
  %v203 = vunpack.c.l.b16 %v37
  %v204 = vunpack.c.h.b16 %v37
  %v205 = vunpack.c.l.b16 %v38
  %v206 = vunpack.c.h.b16 %v38
  %v207 = vunpack.c.l.b16 %v39
  %v208 = vunpack.c.h.b16 %v39
  %v209 = vunpack.c.l.b16 %v40
  %v210 = vunpack.c.h.b16 %v40
  %v211 = vunpack.c.l.b16 %v41
  %v212 = vunpack.c.h.b16 %v41
  %v213 = vunpack.c.l.b16 %v42
  %v214 = vunpack.c.h.b16 %v42
  %v215 = vunpack.c.l.b16 %v43
  %v216 = vunpack.c.h.b16 %v43
  %v217 = vunpack.c.l.b16 %v44
  %v218 = vunpack.c.h.b16 %v44
  %v219 = vunpack.c.l.b16 %v45
  %v220 = vunpack.c.h.b16 %v45
  %v221 = vunpack.c.l.b16 %v46
  %v222 = vunpack.c.h.b16 %v46
  %v223 = vunpack.c.l.b16 %v47
  %v224 = vunpack.c.h.b16 %v47
  %v225 = vunpack.c.l.b16 %v48
  %v226 = vunpack.c.h.b16 %v48
  %v227 = vunpack.c.l.b16 %v49
  %v228 = vunpack.c.h.b16 %v49
  %v229 = vunpack.c.l.b16 %v50
  %v230 = vunpack.c.h.b16 %v50
  %v231 = vunpack.c.l.b16 %v51
  %v232 = vunpack.c.h.b16 %v51
  %v233 = vunpack.c.l.b16 %v52
  %v234 = vunpack.c.h.b16 %v52
  %v235 = vunpack.c.l.b16 %v53
  %v236 = vunpack.c.h.b16 %v53
  %v237 = vunpack.c.l.b16 %v54
  %v238 = vunpack.c.h.b16 %v54
  %v239 = vunpack.c.l.b16 %v55
  %v240 = vunpack.c.h.b16 %v55
  %v241 = vunpack.c.l.b16 %v56
  %v242 = vunpack.c.h.b16 %v56
  %v243 = vunpack.c.l.b16 %v57
  %v244 = vunpack.c.h.b16 %v57
  %v245 = vunpack.c.l.b16 %v58
  %v246 = vunpack.c.h.b16 %v58
  %v247 = vunpack.c.l.b16 %v59
  %v248 = vunpack.c.h.b16 %v59
  %v249 = vunpack.c.l.b16 %v60
  %v250 = vunpack.c.h.b16 %v60
  %v251 = vunpack.c.l.b16 %v61
  %v252 = vunpack.c.h.b16 %v61
  %v253 = vunpack.c.l.b16 %v62
  %v254 = vunpack.c.h.b16 %v62
  %v255 = vunpack.c.l.b16 %v63
  %v256 = vunpack.c.h.b16 %v63
  %v257 = vunpack.c.l.b16 %v64
  %v258 = vunpack.c.h.b16 %v64
  %v259 = vunpack.c.l.b16 %v65
  %v260 = vunpack.c.h.b16 %v65
  %v261 = vunpack.c.l.b16 %v66
  %v262 = vunpack.c.h.b16 %v66
  %v263 = vunpack.c.l.b16 %v67
  %v264 = vunpack.c.h.b16 %v67
  %v265 = vunpack.c.l.b16 %v68
  %v266 = vunpack.c.h.b16 %v68
  %v267 = vunpack.c.l.b16 %v69
  %v268 = vunpack.c.h.b16 %v69
  %v269 = vunpack.c.l.b16 %v70
  %v270 = vunpack.c.h.b16 %v70
  %v271 = vunpack.c.l.b16 %v71
  %v272 = vunpack.c.h.b16 %v71
  %v273 = vunpack.c.l.b16 %v72
  %v274 = vunpack.c.h.b16 %v72
  %v275 = vunpack.c.l.b16 %v73
  %v276 = vunpack.c.h.b16 %v73
  %v277 = vunpack.c.l.b16 %v74
  %v278 = vunpack.c.h.b16 %v74
  %v279 = vunpack.c.l.b16 %v75
  %v280 = vunpack.c.h.b16 %v75
  %v281 = vunpack.c.l.b16 %v76
  %v282 = vunpack.c.h.b16 %v76
  %v283 = vunpack.c.l.b16 %v77
  %v284 = vunpack.c.h.b16 %v77
  %v285 = vunpack.c.l.b16 %v78
  %v286 = vunpack.c.h.b16 %v78
  %v287 = vunpack.c.l.b16 %v79
  %v288 = vunpack.c.h.b16 %v79
  %v289 = vunpack.c.l.b16 %v80
  %v290 = vunpack.c.h.b16 %v80
  %v291 = vunpack.c.l.b16 %v81
  %v292 = vunpack.c.h.b16 %v81
  %v293 = vpack.c.b16 %v167, %v165
  %v294 = vpack.c.b16 %v168, %v166
  %v295 = vpack.c.b16 %v171, %v169
  %v296 = vpack.c.b16 %v172, %v170
  %v297 = vpack.c.b16 %v175, %v173
  %v298 = vpack.c.b16 %v176, %v174
  %v299 = vpack.c.b16 %v179, %v177
  %v300 = vpack.c.b16 %v180, %v178
  %v301 = vpack.c.b16 %v183, %v181
  %v302 = vpack.c.b16 %v184, %v182
  %v303 = vpack.c.b16 %v187, %v185
  %v304 = vpack.c.b16 %v188, %v186
  %v305 = vpack.c.b16 %v191, %v189
  %v306 = vpack.c.b16 %v192, %v190
  %v307 = vpack.c.b16 %v195, %v193
  %v308 = vpack.c.b16 %v196, %v194
  %v309 = vpack.c.b16 %v199, %v197
  %v310 = vpack.c.b16 %v200, %v198
  %v311 = vpack.c.b16 %v203, %v201
  %v312 = vpack.c.b16 %v204, %v202
  %v313 = vpack.c.b16 %v207, %v205
  %v314 = vpack.c.b16 %v208, %v206
  %v315 = vpack.c.b16 %v211, %v209
  %v316 = vpack.c.b16 %v212, %v210
  %v317 = vpack.c.b16 %v215, %v213
  %v318 = vpack.c.b16 %v216, %v214
  %v319 = vpack.c.b16 %v219, %v217
  %v320 = vpack.c.b16 %v220, %v218
  %v321 = vpack.c.b16 %v223, %v221
  %v322 = vpack.c.b16 %v224, %v222
  %v323 = vpack.c.b16 %v227, %v225
  %v324 = vpack.c.b16 %v228, %v226
  %v325 = vpack.c.b16 %v231, %v229
  %v326 = vpack.c.b16 %v232, %v230
  %v327 = vpack.c.b16 %v235, %v233
  %v328 = vpack.c.b16 %v236, %v234
  %v329 = vpack.c.b16 %v239, %v237
  %v330 = vpack.c.b16 %v240, %v238
  %v331 = vpack.c.b16 %v243, %v241
  %v332 = vpack.c.b16 %v244, %v242
  %v333 = vpack.c.b16 %v247, %v245
  %v334 = vpack.c.b16 %v248, %v246
  %v335 = vpack.c.b16 %v251, %v249
  %v336 = vpack.c.b16 %v252, %v250
  %v337 = vpack.c.b16 %v255, %v253
  %v338 = vpack.c.b16 %v256, %v254
  %v339 = vpack.c.b16 %v259, %v257
  %v340 = vpack.c.b16 %v260, %v258
  %v341 = vpack.c.b16 %v263, %v261
  %v342 = vpack.c.b16 %v264, %v262
  %v343 = vpack.c.b16 %v267, %v265
  %v344 = vpack.c.b16 %v268, %v266
  %v345 = vpack.c.b16 %v271, %v269
  %v346 = vpack.c.b16 %v272, %v270
  %v347 = vpack.c.b16 %v275, %v273
  %v348 = vpack.c.b16 %v276, %v274
  %v349 = vpack.c.b16 %v279, %v277
  %v350 = vpack.c.b16 %v280, %v278
  %v351 = vpack.c.b16 %v283, %v281
  %v352 = vpack.c.b16 %v284, %v282
  %v353 = vpack.c.b16 %v287, %v285
  %v354 = vpack.c.b16 %v288, %v286
  %v355 = vpack.c.b16 %v291, %v289
  %v356 = vpack.c.b16 %v292, %v290
  %v408 = vunpack.c.l.b16 %v82
  %v409 = vunpack.c.l.b16 %v83
  %v410 = vunpack.c.l.b16 %v84
  %v411 = vunpack.c.l.b16 %v85
  %v412 = vunpack.c.l.b16 %v86
  %v413 = vunpack.c.l.b16 %v87
  %v414 = vunpack.c.l.b16 %v88
  %v415 = vunpack.c.l.b16 %v89
  %v416 = vunpack.c.l.b16 %v90
  %v417 = vunpack.c.l.b16 %v91
  %v418 = vunpack.c.l.b16 %v92
  %v419 = vunpack.c.l.b16 %v93
  %v420 = vunpack.c.l.b16 %v94
  %v421 = vunpack.c.l.b16 %v95
  %v422 = vunpack.c.l.b16 %v96
  %v423 = vunpack.c.l.b16 %v97
  %v424 = vunpack.c.l.b16 %v98
  %v425 = vunpack.c.l.b16 %v99
  %v426 = vunpack.c.l.b16 %v100
  %v427 = vpack.c.b16 %v409, %v408
  %v428 = vpack.c.b16 %v411, %v410
  %v429 = vpack.c.b16 %v413, %v412
  %v430 = vpack.c.b16 %v415, %v414
  %v431 = vpack.c.b16 %v417, %v416
  %v432 = vpack.c.b16 %v419, %v418
  %v433 = vpack.c.b16 %v421, %v420
  %v434 = vpack.c.b16 %v423, %v422
  %v435 = vpack.c.b16 %v425, %v424
  %v436 = vpack.c.b16 %v426, %v426
  %vm446 = vcmask 154624
  %v448 = vsel %vm446, %v294, 0
  %v451 = vsel %vm446, %v296, 0
  %v454 = vsel %vm446, %v298, 0
  %v457 = vsel %vm446, %v300, 0
  %v460 = vsel %vm446, %v302, 0
  %v463 = vsel %vm446, %v304, 0
  %v466 = vsel %vm446, %v306, 0
  %v469 = vsel %vm446, %v308, 0
  %v472 = vsel %vm446, %v310, 0
  %v475 = vsel %vm446, %v312, 0
  %v478 = vsel %vm446, %v314, 0
  %v481 = vsel %vm446, %v316, 0
  %v484 = vsel %vm446, %v318, 0
  %v487 = vsel %vm446, %v320, 0
  %v490 = vsel %vm446, %v322, 0
  %v493 = vsel %vm446, %v324, 0
  %v496 = vsel %vm446, %v326, 0
  %v499 = vsel %vm446, %v328, 0
  %v502 = vsel %vm446, %v330, 0
  %v505 = vsel %vm446, %v332, 0
  %v508 = vsel %vm446, %v334, 0
  %v511 = vsel %vm446, %v336, 0
  %v514 = vsel %vm446, %v338, 0
  %v517 = vsel %vm446, %v340, 0
  %v520 = vsel %vm446, %v342, 0
  %v523 = vsel %vm446, %v344, 0
  %v526 = vsel %vm446, %v346, 0
  %v529 = vsel %vm446, %v348, 0
  %v532 = vsel %vm446, %v350, 0
  %v535 = vsel %vm446, %v352, 0
  %v538 = vsel %vm446, %v354, 0
  %v541 = vsel %vm446, %v356, 0
  %vm543 = vcmask 1040384
  %vm544 = vcmask 1041408
  %v545 = vsel %vm543, 4294967295, 65535
  %v546 = vsel %vm544, %v545, 0
  %v548 = vand.u32 %v436, %v546
  %550 = vmatpush.bf16.msra.mxu0 %v434
  %551 = vmatpush.bf16.msra.mxu0 %v433
  %552 = vmatpush.bf16.msra.mxu0 %v432
  %553 = vmatpush.bf16.msra.mxu0 %v431
  %554 = vmatpush.bf16.msra.mxu0 %v430
  %555 = vmatpush.bf16.msra.mxu0 %v429
  %556 = vmatpush.bf16.msra.mxu0 %v428
  %557 = vmatpush.bf16.msra.mxu0 %v427
  %558 = vmatmul.bf16.gmra.mxu0 %v293
  %v559 = vpop.f32.mrf.mxu0
  %v560 = vadd.f32 0.0, %v559
  %v561 = vpop.f32.mrf.mxu0
  %v562 = vadd.f32 0.0, %v561
  %563 = vmatmul.bf16.gmra.mxu0 %v295
  %v564 = vpop.f32.mrf.mxu0
  %v565 = vadd.f32 0.0, %v564
  %v566 = vpop.f32.mrf.mxu0
  %v567 = vadd.f32 0.0, %v566
  %568 = vmatmul.bf16.gmra.mxu0 %v297
  %v569 = vpop.f32.mrf.mxu0
  %v570 = vadd.f32 0.0, %v569
  %v571 = vpop.f32.mrf.mxu0
  %v572 = vadd.f32 0.0, %v571
  %573 = vmatmul.bf16.gmra.mxu0 %v299
  %v574 = vpop.f32.mrf.mxu0
  %v575 = vadd.f32 0.0, %v574
  %v576 = vpop.f32.mrf.mxu0
  %v577 = vadd.f32 0.0, %v576
  %578 = vmatmul.bf16.gmra.mxu0 %v301
  %v579 = vpop.f32.mrf.mxu0
  %v580 = vadd.f32 0.0, %v579
  %v581 = vpop.f32.mrf.mxu0
  %v582 = vadd.f32 0.0, %v581
  %583 = vmatmul.bf16.gmra.mxu0 %v303
  %v584 = vpop.f32.mrf.mxu0
  %v585 = vadd.f32 0.0, %v584
  %v586 = vpop.f32.mrf.mxu0
  %v587 = vadd.f32 0.0, %v586
  %588 = vmatmul.bf16.gmra.mxu0 %v305
  %v589 = vpop.f32.mrf.mxu0
  %v590 = vadd.f32 0.0, %v589
  %v591 = vpop.f32.mrf.mxu0
  %v592 = vadd.f32 0.0, %v591
  %593 = vmatmul.bf16.gmra.mxu0 %v307
  %v594 = vpop.f32.mrf.mxu0
  %v595 = vadd.f32 0.0, %v594
  %v596 = vpop.f32.mrf.mxu0
  %v597 = vadd.f32 0.0, %v596
  %598 = vmatmul.bf16.gmra.mxu0 %v309
  %v599 = vpop.f32.mrf.mxu0
  %v600 = vadd.f32 0.0, %v599
  %v601 = vpop.f32.mrf.mxu0
  %v602 = vadd.f32 0.0, %v601
  %603 = vmatmul.bf16.gmra.mxu0 %v311
  %v604 = vpop.f32.mrf.mxu0
  %v605 = vadd.f32 0.0, %v604
  %v606 = vpop.f32.mrf.mxu0
  %v607 = vadd.f32 0.0, %v606
  %608 = vmatmul.bf16.gmra.mxu0 %v313
  %v609 = vpop.f32.mrf.mxu0
  %v610 = vadd.f32 0.0, %v609
  %v611 = vpop.f32.mrf.mxu0
  %v612 = vadd.f32 0.0, %v611
  %613 = vmatmul.bf16.gmra.mxu0 %v315
  %v614 = vpop.f32.mrf.mxu0
  %v615 = vadd.f32 0.0, %v614
  %v616 = vpop.f32.mrf.mxu0
  %v617 = vadd.f32 0.0, %v616
  %618 = vmatmul.bf16.gmra.mxu0 %v317
  %v619 = vpop.f32.mrf.mxu0
  %v620 = vadd.f32 0.0, %v619
  %v621 = vpop.f32.mrf.mxu0
  %v622 = vadd.f32 0.0, %v621
  %623 = vmatmul.bf16.gmra.mxu0 %v319
  %v624 = vpop.f32.mrf.mxu0
  %v625 = vadd.f32 0.0, %v624
  %v626 = vpop.f32.mrf.mxu0
  %v627 = vadd.f32 0.0, %v626
  %628 = vmatmul.bf16.gmra.mxu0 %v321
  %v629 = vpop.f32.mrf.mxu0
  %v630 = vadd.f32 0.0, %v629
  %v631 = vpop.f32.mrf.mxu0
  %v632 = vadd.f32 0.0, %v631
  %633 = vmatmul.bf16.gmra.mxu0 %v323
  %v634 = vpop.f32.mrf.mxu0
  %v635 = vadd.f32 0.0, %v634
  %v636 = vpop.f32.mrf.mxu0
  %v637 = vadd.f32 0.0, %v636
  %638 = vmatmul.bf16.gmra.mxu0 %v325
  %v639 = vpop.f32.mrf.mxu0
  %v640 = vadd.f32 0.0, %v639
  %v641 = vpop.f32.mrf.mxu0
  %v642 = vadd.f32 0.0, %v641
  %643 = vmatmul.bf16.gmra.mxu0 %v327
  %v644 = vpop.f32.mrf.mxu0
  %v645 = vadd.f32 0.0, %v644
  %v646 = vpop.f32.mrf.mxu0
  %v647 = vadd.f32 0.0, %v646
  %648 = vmatmul.bf16.gmra.mxu0 %v329
  %v649 = vpop.f32.mrf.mxu0
  %v650 = vadd.f32 0.0, %v649
  %v651 = vpop.f32.mrf.mxu0
  %v652 = vadd.f32 0.0, %v651
  %653 = vmatmul.bf16.gmra.mxu0 %v331
  %v654 = vpop.f32.mrf.mxu0
  %v655 = vadd.f32 0.0, %v654
  %v656 = vpop.f32.mrf.mxu0
  %v657 = vadd.f32 0.0, %v656
  %658 = vmatmul.bf16.gmra.mxu0 %v333
  %v659 = vpop.f32.mrf.mxu0
  %v660 = vadd.f32 0.0, %v659
  %v661 = vpop.f32.mrf.mxu0
  %v662 = vadd.f32 0.0, %v661
  %663 = vmatmul.bf16.gmra.mxu0 %v335
  %v664 = vpop.f32.mrf.mxu0
  %v665 = vadd.f32 0.0, %v664
  %v666 = vpop.f32.mrf.mxu0
  %v667 = vadd.f32 0.0, %v666
  %668 = vmatmul.bf16.gmra.mxu0 %v337
  %v669 = vpop.f32.mrf.mxu0
  %v670 = vadd.f32 0.0, %v669
  %v671 = vpop.f32.mrf.mxu0
  %v672 = vadd.f32 0.0, %v671
  %673 = vmatmul.bf16.gmra.mxu0 %v339
  %v674 = vpop.f32.mrf.mxu0
  %v675 = vadd.f32 0.0, %v674
  %v676 = vpop.f32.mrf.mxu0
  %v677 = vadd.f32 0.0, %v676
  %678 = vmatmul.bf16.gmra.mxu0 %v341
  %v679 = vpop.f32.mrf.mxu0
  %v680 = vadd.f32 0.0, %v679
  %v681 = vpop.f32.mrf.mxu0
  %v682 = vadd.f32 0.0, %v681
  %683 = vmatmul.bf16.gmra.mxu0 %v343
  %v684 = vpop.f32.mrf.mxu0
  %v685 = vadd.f32 0.0, %v684
  %v686 = vpop.f32.mrf.mxu0
  %v687 = vadd.f32 0.0, %v686
  %688 = vmatmul.bf16.gmra.mxu0 %v345
  %v689 = vpop.f32.mrf.mxu0
  %v690 = vadd.f32 0.0, %v689
  %v691 = vpop.f32.mrf.mxu0
  %v692 = vadd.f32 0.0, %v691
  %693 = vmatmul.bf16.gmra.mxu0 %v347
  %v694 = vpop.f32.mrf.mxu0
  %v695 = vadd.f32 0.0, %v694
  %v696 = vpop.f32.mrf.mxu0
  %v697 = vadd.f32 0.0, %v696
  %698 = vmatmul.bf16.gmra.mxu0 %v349
  %v699 = vpop.f32.mrf.mxu0
  %v700 = vadd.f32 0.0, %v699
  %v701 = vpop.f32.mrf.mxu0
  %v702 = vadd.f32 0.0, %v701
  %703 = vmatmul.bf16.gmra.mxu0 %v351
  %v704 = vpop.f32.mrf.mxu0
  %v705 = vadd.f32 0.0, %v704
  %v706 = vpop.f32.mrf.mxu0
  %v707 = vadd.f32 0.0, %v706
  %708 = vmatmul.bf16.gmra.mxu0 %v353
  %v709 = vpop.f32.mrf.mxu0
  %v710 = vadd.f32 0.0, %v709
  %v711 = vpop.f32.mrf.mxu0
  %v712 = vadd.f32 0.0, %v711
  %713 = vmatmul.bf16.gmra.mxu0 %v355
  %v714 = vpop.f32.mrf.mxu0
  %v715 = vadd.f32 0.0, %v714
  %v716 = vpop.f32.mrf.mxu0
  %v717 = vadd.f32 0.0, %v716
  %718 = vdwg.mxu0
  %719 = vmatpush.bf16.msra.mxu0 0
  %720 = vmatpush.bf16.msra.mxu0 0
  %721 = vmatpush.bf16.msra.mxu0 0
  %722 = vmatpush.bf16.msra.mxu0 0
  %723 = vmatpush.bf16.msra.mxu0 0
  %724 = vmatpush.bf16.msra.mxu0 0
  %725 = vmatpush.bf16.msra.mxu0 %v548
  %726 = vmatpush.bf16.msra.mxu0 %v435
  %727 = vmatmul.bf16.gmra.mxu0 %v448
  %v728 = vpop.f32.mrf.mxu0
  %v729 = vadd.f32 %v560, %v728
  %v730 = vpop.f32.mrf.mxu0
  %v731 = vadd.f32 %v562, %v730
  %732 = vmatmul.bf16.gmra.mxu0 %v451
  %v733 = vpop.f32.mrf.mxu0
  %v734 = vadd.f32 %v565, %v733
  %v735 = vpop.f32.mrf.mxu0
  %v736 = vadd.f32 %v567, %v735
  %737 = vmatmul.bf16.gmra.mxu0 %v454
  %v738 = vpop.f32.mrf.mxu0
  %v739 = vadd.f32 %v570, %v738
  %v740 = vpop.f32.mrf.mxu0
  %v741 = vadd.f32 %v572, %v740
  %742 = vmatmul.bf16.gmra.mxu0 %v457
  %v743 = vpop.f32.mrf.mxu0
  %v744 = vadd.f32 %v575, %v743
  %v745 = vpop.f32.mrf.mxu0
  %v746 = vadd.f32 %v577, %v745
  %747 = vmatmul.bf16.gmra.mxu0 %v460
  %v748 = vpop.f32.mrf.mxu0
  %v749 = vadd.f32 %v580, %v748
  %v750 = vpop.f32.mrf.mxu0
  %v751 = vadd.f32 %v582, %v750
  %752 = vmatmul.bf16.gmra.mxu0 %v463
  %v753 = vpop.f32.mrf.mxu0
  %v754 = vadd.f32 %v585, %v753
  %v755 = vpop.f32.mrf.mxu0
  %v756 = vadd.f32 %v587, %v755
  %757 = vmatmul.bf16.gmra.mxu0 %v466
  %v758 = vpop.f32.mrf.mxu0
  %v759 = vadd.f32 %v590, %v758
  %v760 = vpop.f32.mrf.mxu0
  %v761 = vadd.f32 %v592, %v760
  %762 = vmatmul.bf16.gmra.mxu0 %v469
  %v763 = vpop.f32.mrf.mxu0
  %v764 = vadd.f32 %v595, %v763
  %v765 = vpop.f32.mrf.mxu0
  %v766 = vadd.f32 %v597, %v765
  %767 = vmatmul.bf16.gmra.mxu0 %v472
  %v768 = vpop.f32.mrf.mxu0
  %v769 = vadd.f32 %v600, %v768
  %v770 = vpop.f32.mrf.mxu0
  %v771 = vadd.f32 %v602, %v770
  %772 = vmatmul.bf16.gmra.mxu0 %v475
  %v773 = vpop.f32.mrf.mxu0
  %v774 = vadd.f32 %v605, %v773
  %v775 = vpop.f32.mrf.mxu0
  %v776 = vadd.f32 %v607, %v775
  %777 = vmatmul.bf16.gmra.mxu0 %v478
  %v778 = vpop.f32.mrf.mxu0
  %v779 = vadd.f32 %v610, %v778
  %v780 = vpop.f32.mrf.mxu0
  %v781 = vadd.f32 %v612, %v780
  %782 = vmatmul.bf16.gmra.mxu0 %v481
  %v783 = vpop.f32.mrf.mxu0
  %v784 = vadd.f32 %v615, %v783
  %v785 = vpop.f32.mrf.mxu0
  %v786 = vadd.f32 %v617, %v785
  %787 = vmatmul.bf16.gmra.mxu0 %v484
  %v788 = vpop.f32.mrf.mxu0
  %v789 = vadd.f32 %v620, %v788
  %v790 = vpop.f32.mrf.mxu0
  %v791 = vadd.f32 %v622, %v790
  %792 = vmatmul.bf16.gmra.mxu0 %v487
  %v793 = vpop.f32.mrf.mxu0
  %v794 = vadd.f32 %v625, %v793
  %v795 = vpop.f32.mrf.mxu0
  %v796 = vadd.f32 %v627, %v795
  %797 = vmatmul.bf16.gmra.mxu0 %v490
  %v798 = vpop.f32.mrf.mxu0
  %v799 = vadd.f32 %v630, %v798
  %v800 = vpop.f32.mrf.mxu0
  %v801 = vadd.f32 %v632, %v800
  %802 = vmatmul.bf16.gmra.mxu0 %v493
  %v803 = vpop.f32.mrf.mxu0
  %v804 = vadd.f32 %v635, %v803
  %v805 = vpop.f32.mrf.mxu0
  %v806 = vadd.f32 %v637, %v805
  %807 = vmatmul.bf16.gmra.mxu0 %v496
  %v808 = vpop.f32.mrf.mxu0
  %v809 = vadd.f32 %v640, %v808
  %v810 = vpop.f32.mrf.mxu0
  %v811 = vadd.f32 %v642, %v810
  %812 = vmatmul.bf16.gmra.mxu0 %v499
  %v813 = vpop.f32.mrf.mxu0
  %v814 = vadd.f32 %v645, %v813
  %v815 = vpop.f32.mrf.mxu0
  %v816 = vadd.f32 %v647, %v815
  %817 = vmatmul.bf16.gmra.mxu0 %v502
  %v818 = vpop.f32.mrf.mxu0
  %v819 = vadd.f32 %v650, %v818
  %v820 = vpop.f32.mrf.mxu0
  %v821 = vadd.f32 %v652, %v820
  %822 = vmatmul.bf16.gmra.mxu0 %v505
  %v823 = vpop.f32.mrf.mxu0
  %v824 = vadd.f32 %v655, %v823
  %v825 = vpop.f32.mrf.mxu0
  %v826 = vadd.f32 %v657, %v825
  %827 = vmatmul.bf16.gmra.mxu0 %v508
  %v828 = vpop.f32.mrf.mxu0
  %v829 = vadd.f32 %v660, %v828
  %v830 = vpop.f32.mrf.mxu0
  %v831 = vadd.f32 %v662, %v830
  %832 = vmatmul.bf16.gmra.mxu0 %v511
  %v833 = vpop.f32.mrf.mxu0
  %v834 = vadd.f32 %v665, %v833
  %v835 = vpop.f32.mrf.mxu0
  %v836 = vadd.f32 %v667, %v835
  %837 = vmatmul.bf16.gmra.mxu0 %v514
  %v838 = vpop.f32.mrf.mxu0
  %v839 = vadd.f32 %v670, %v838
  %v840 = vpop.f32.mrf.mxu0
  %v841 = vadd.f32 %v672, %v840
  %842 = vmatmul.bf16.gmra.mxu0 %v517
  %v843 = vpop.f32.mrf.mxu0
  %v844 = vadd.f32 %v675, %v843
  %v845 = vpop.f32.mrf.mxu0
  %v846 = vadd.f32 %v677, %v845
  %847 = vmatmul.bf16.gmra.mxu0 %v520
  %v848 = vpop.f32.mrf.mxu0
  %v849 = vadd.f32 %v680, %v848
  %v850 = vpop.f32.mrf.mxu0
  %v851 = vadd.f32 %v682, %v850
  %852 = vmatmul.bf16.gmra.mxu0 %v523
  %v853 = vpop.f32.mrf.mxu0
  %v854 = vadd.f32 %v685, %v853
  %v855 = vpop.f32.mrf.mxu0
  %v856 = vadd.f32 %v687, %v855
  %857 = vmatmul.bf16.gmra.mxu0 %v526
  %v858 = vpop.f32.mrf.mxu0
  %v859 = vadd.f32 %v690, %v858
  %v860 = vpop.f32.mrf.mxu0
  %v861 = vadd.f32 %v692, %v860
  %862 = vmatmul.bf16.gmra.mxu0 %v529
  %v863 = vpop.f32.mrf.mxu0
  %v864 = vadd.f32 %v695, %v863
  %v865 = vpop.f32.mrf.mxu0
  %v866 = vadd.f32 %v697, %v865
  %867 = vmatmul.bf16.gmra.mxu0 %v532
  %v868 = vpop.f32.mrf.mxu0
  %v869 = vadd.f32 %v700, %v868
  %v870 = vpop.f32.mrf.mxu0
  %v871 = vadd.f32 %v702, %v870
  %872 = vmatmul.bf16.gmra.mxu0 %v535
  %v873 = vpop.f32.mrf.mxu0
  %v874 = vadd.f32 %v705, %v873
  %v875 = vpop.f32.mrf.mxu0
  %v876 = vadd.f32 %v707, %v875
  %877 = vmatmul.bf16.gmra.mxu0 %v538
  %v878 = vpop.f32.mrf.mxu0
  %v879 = vadd.f32 %v710, %v878
  %v880 = vpop.f32.mrf.mxu0
  %v881 = vadd.f32 %v712, %v880
  %882 = vmatmul.bf16.gmra.mxu0 %v541
  %v883 = vpop.f32.mrf.mxu0
  %v884 = vadd.f32 %v715, %v883
  %v885 = vpop.f32.mrf.mxu0
  %v886 = vadd.f32 %v717, %v885
  %887 = vdwg.mxu0
  %v888 = vld [vmem:[%s2] sm:$0x1]
  %v890 = vperm.slane %v888, 0
  %v892 = vmul.f32 %v729, %v890
  %v893 = vmul.f32 %v731, %v890
  %v894 = vmul.f32 %v734, %v890
  %v895 = vmul.f32 %v736, %v890
  %v896 = vmul.f32 %v739, %v890
  %v897 = vmul.f32 %v741, %v890
  %v898 = vmul.f32 %v744, %v890
  %v899 = vmul.f32 %v746, %v890
  %v900 = vmul.f32 %v749, %v890
  %v901 = vmul.f32 %v751, %v890
  %v902 = vmul.f32 %v754, %v890
  %v903 = vmul.f32 %v756, %v890
  %v904 = vmul.f32 %v759, %v890
  %v905 = vmul.f32 %v761, %v890
  %v906 = vmul.f32 %v764, %v890
  %v907 = vmul.f32 %v766, %v890
  %v908 = vmul.f32 %v769, %v890
  %v909 = vmul.f32 %v771, %v890
  %v910 = vmul.f32 %v774, %v890
  %v911 = vmul.f32 %v776, %v890
  %v912 = vmul.f32 %v779, %v890
  %v913 = vmul.f32 %v781, %v890
  %v914 = vmul.f32 %v784, %v890
  %v915 = vmul.f32 %v786, %v890
  %v916 = vmul.f32 %v789, %v890
  %v917 = vmul.f32 %v791, %v890
  %v918 = vmul.f32 %v794, %v890
  %v919 = vmul.f32 %v796, %v890
  %v920 = vmul.f32 %v799, %v890
  %v921 = vmul.f32 %v801, %v890
  %v922 = vmul.f32 %v804, %v890
  %v923 = vmul.f32 %v806, %v890
  %v924 = vmul.f32 %v809, %v890
  %v925 = vmul.f32 %v811, %v890
  %v926 = vmul.f32 %v814, %v890
  %v927 = vmul.f32 %v816, %v890
  %v928 = vmul.f32 %v819, %v890
  %v929 = vmul.f32 %v821, %v890
  %v930 = vmul.f32 %v824, %v890
  %v931 = vmul.f32 %v826, %v890
  %v932 = vmul.f32 %v829, %v890
  %v933 = vmul.f32 %v831, %v890
  %v934 = vmul.f32 %v834, %v890
  %v935 = vmul.f32 %v836, %v890
  %v936 = vmul.f32 %v839, %v890
  %v937 = vmul.f32 %v841, %v890
  %v938 = vmul.f32 %v844, %v890
  %v939 = vmul.f32 %v846, %v890
  %v940 = vmul.f32 %v849, %v890
  %v941 = vmul.f32 %v851, %v890
  %v942 = vmul.f32 %v854, %v890
  %v943 = vmul.f32 %v856, %v890
  %v944 = vmul.f32 %v859, %v890
  %v945 = vmul.f32 %v861, %v890
  %v946 = vmul.f32 %v864, %v890
  %v947 = vmul.f32 %v866, %v890
  %v948 = vmul.f32 %v869, %v890
  %v949 = vmul.f32 %v871, %v890
  %v950 = vmul.f32 %v874, %v890
  %v951 = vmul.f32 %v876, %v890
  %v952 = vmul.f32 %v879, %v890
  %v953 = vmul.f32 %v881, %v890
  %v954 = vmul.f32 %v884, %v890
  %v955 = vmul.f32 %v886, %v890
  %v956 = vld [vmem:[%s3] sm:$0x1]
  %v958 = vperm.slane %v956, 0
  %v960 = vadd.f32 %v892, %v958
  %v961 = vadd.f32 %v893, %v958
  %v962 = vadd.f32 %v894, %v958
  %v963 = vadd.f32 %v895, %v958
  %v964 = vadd.f32 %v896, %v958
  %v965 = vadd.f32 %v897, %v958
  %v966 = vadd.f32 %v898, %v958
  %v967 = vadd.f32 %v899, %v958
  %v968 = vadd.f32 %v900, %v958
  %v969 = vadd.f32 %v901, %v958
  %v970 = vadd.f32 %v902, %v958
  %v971 = vadd.f32 %v903, %v958
  %v972 = vadd.f32 %v904, %v958
  %v973 = vadd.f32 %v905, %v958
  %v974 = vadd.f32 %v906, %v958
  %v975 = vadd.f32 %v907, %v958
  %v976 = vadd.f32 %v908, %v958
  %v977 = vadd.f32 %v909, %v958
  %v978 = vadd.f32 %v910, %v958
  %v979 = vadd.f32 %v911, %v958
  %v980 = vadd.f32 %v912, %v958
  %v981 = vadd.f32 %v913, %v958
  %v982 = vadd.f32 %v914, %v958
  %v983 = vadd.f32 %v915, %v958
  %v984 = vadd.f32 %v916, %v958
  %v985 = vadd.f32 %v917, %v958
  %v986 = vadd.f32 %v918, %v958
  %v987 = vadd.f32 %v919, %v958
  %v988 = vadd.f32 %v920, %v958
  %v989 = vadd.f32 %v921, %v958
  %v990 = vadd.f32 %v922, %v958
  %v991 = vadd.f32 %v923, %v958
  %v992 = vadd.f32 %v924, %v958
  %v993 = vadd.f32 %v925, %v958
  %v994 = vadd.f32 %v926, %v958
  %v995 = vadd.f32 %v927, %v958
  %v996 = vadd.f32 %v928, %v958
  %v997 = vadd.f32 %v929, %v958
  %v998 = vadd.f32 %v930, %v958
  %v999 = vadd.f32 %v931, %v958
  %v1000 = vadd.f32 %v932, %v958
  %v1001 = vadd.f32 %v933, %v958
  %v1002 = vadd.f32 %v934, %v958
  %v1003 = vadd.f32 %v935, %v958
  %v1004 = vadd.f32 %v936, %v958
  %v1005 = vadd.f32 %v937, %v958
  %v1006 = vadd.f32 %v938, %v958
  %v1007 = vadd.f32 %v939, %v958
  %v1008 = vadd.f32 %v940, %v958
  %v1009 = vadd.f32 %v941, %v958
  %v1010 = vadd.f32 %v942, %v958
  %v1011 = vadd.f32 %v943, %v958
  %v1012 = vadd.f32 %v944, %v958
  %v1013 = vadd.f32 %v945, %v958
  %v1014 = vadd.f32 %v946, %v958
  %v1015 = vadd.f32 %v947, %v958
  %v1016 = vadd.f32 %v948, %v958
  %v1017 = vadd.f32 %v949, %v958
  %v1018 = vadd.f32 %v950, %v958
  %v1019 = vadd.f32 %v951, %v958
  %v1020 = vadd.f32 %v952, %v958
  %v1021 = vadd.f32 %v953, %v958
  %v1022 = vadd.f32 %v954, %v958
  %v1023 = vadd.f32 %v955, %v958
  %v1024 = vmax.f32 %v960, 0.0
  %v1025 = vmax.f32 %v961, 0.0
  %v1026 = vmax.f32 %v962, 0.0
  %v1027 = vmax.f32 %v963, 0.0
  %v1028 = vmax.f32 %v964, 0.0
  %v1029 = vmax.f32 %v965, 0.0
  %v1030 = vmax.f32 %v966, 0.0
  %v1031 = vmax.f32 %v967, 0.0
  %v1032 = vmax.f32 %v968, 0.0
  %v1033 = vmax.f32 %v969, 0.0
  %v1034 = vmax.f32 %v970, 0.0
  %v1035 = vmax.f32 %v971, 0.0
  %v1036 = vmax.f32 %v972, 0.0
  %v1037 = vmax.f32 %v973, 0.0
  %v1038 = vmax.f32 %v974, 0.0
  %v1039 = vmax.f32 %v975, 0.0
  %v1040 = vmax.f32 %v976, 0.0
  %v1041 = vmax.f32 %v977, 0.0
  %v1042 = vmax.f32 %v978, 0.0
  %v1043 = vmax.f32 %v979, 0.0
  %v1044 = vmax.f32 %v980, 0.0
  %v1045 = vmax.f32 %v981, 0.0
  %v1046 = vmax.f32 %v982, 0.0
  %v1047 = vmax.f32 %v983, 0.0
  %v1048 = vmax.f32 %v984, 0.0
  %v1049 = vmax.f32 %v985, 0.0
  %v1050 = vmax.f32 %v986, 0.0
  %v1051 = vmax.f32 %v987, 0.0
  %v1052 = vmax.f32 %v988, 0.0
  %v1053 = vmax.f32 %v989, 0.0
  %v1054 = vmax.f32 %v990, 0.0
  %v1055 = vmax.f32 %v991, 0.0
  %v1056 = vmax.f32 %v992, 0.0
  %v1057 = vmax.f32 %v993, 0.0
  %v1058 = vmax.f32 %v994, 0.0
  %v1059 = vmax.f32 %v995, 0.0
  %v1060 = vmax.f32 %v996, 0.0
  %v1061 = vmax.f32 %v997, 0.0
  %v1062 = vmax.f32 %v998, 0.0
  %v1063 = vmax.f32 %v999, 0.0
  %v1064 = vmax.f32 %v1000, 0.0
  %v1065 = vmax.f32 %v1001, 0.0
  %v1066 = vmax.f32 %v1002, 0.0
  %v1067 = vmax.f32 %v1003, 0.0
  %v1068 = vmax.f32 %v1004, 0.0
  %v1069 = vmax.f32 %v1005, 0.0
  %v1070 = vmax.f32 %v1006, 0.0
  %v1071 = vmax.f32 %v1007, 0.0
  %v1072 = vmax.f32 %v1008, 0.0
  %v1073 = vmax.f32 %v1009, 0.0
  %v1074 = vmax.f32 %v1010, 0.0
  %v1075 = vmax.f32 %v1011, 0.0
  %v1076 = vmax.f32 %v1012, 0.0
  %v1077 = vmax.f32 %v1013, 0.0
  %v1078 = vmax.f32 %v1014, 0.0
  %v1079 = vmax.f32 %v1015, 0.0
  %v1080 = vmax.f32 %v1016, 0.0
  %v1081 = vmax.f32 %v1017, 0.0
  %v1082 = vmax.f32 %v1018, 0.0
  %v1083 = vmax.f32 %v1019, 0.0
  %v1084 = vmax.f32 %v1020, 0.0
  %v1085 = vmax.f32 %v1021, 0.0
  %v1086 = vmax.f32 %v1022, 0.0
  %v1087 = vmax.f32 %v1023, 0.0
  %v1088 = vpack.c.bf16 %v1024, %v1024
  %v1089 = vpack.c.bf16 %v1025, %v1025
  %v1090 = vpack.c.bf16 %v1026, %v1026
  %v1091 = vpack.c.bf16 %v1027, %v1027
  %v1092 = vpack.c.bf16 %v1028, %v1028
  %v1093 = vpack.c.bf16 %v1029, %v1029
  %v1094 = vpack.c.bf16 %v1030, %v1030
  %v1095 = vpack.c.bf16 %v1031, %v1031
  %v1096 = vpack.c.bf16 %v1032, %v1032
  %v1097 = vpack.c.bf16 %v1033, %v1033
  %v1098 = vpack.c.bf16 %v1034, %v1034
  %v1099 = vpack.c.bf16 %v1035, %v1035
  %v1100 = vpack.c.bf16 %v1036, %v1036
  %v1101 = vpack.c.bf16 %v1037, %v1037
  %v1102 = vpack.c.bf16 %v1038, %v1038
  %v1103 = vpack.c.bf16 %v1039, %v1039
  %v1104 = vpack.c.bf16 %v1040, %v1040
  %v1105 = vpack.c.bf16 %v1041, %v1041
  %v1106 = vpack.c.bf16 %v1042, %v1042
  %v1107 = vpack.c.bf16 %v1043, %v1043
  %v1108 = vpack.c.bf16 %v1044, %v1044
  %v1109 = vpack.c.bf16 %v1045, %v1045
  %v1110 = vpack.c.bf16 %v1046, %v1046
  %v1111 = vpack.c.bf16 %v1047, %v1047
  %v1112 = vpack.c.bf16 %v1048, %v1048
  %v1113 = vpack.c.bf16 %v1049, %v1049
  %v1114 = vpack.c.bf16 %v1050, %v1050
  %v1115 = vpack.c.bf16 %v1051, %v1051
  %v1116 = vpack.c.bf16 %v1052, %v1052
  %v1117 = vpack.c.bf16 %v1053, %v1053
  %v1118 = vpack.c.bf16 %v1054, %v1054
  %v1119 = vpack.c.bf16 %v1055, %v1055
  %v1120 = vpack.c.bf16 %v1056, %v1056
  %v1121 = vpack.c.bf16 %v1057, %v1057
  %v1122 = vpack.c.bf16 %v1058, %v1058
  %v1123 = vpack.c.bf16 %v1059, %v1059
  %v1124 = vpack.c.bf16 %v1060, %v1060
  %v1125 = vpack.c.bf16 %v1061, %v1061
  %v1126 = vpack.c.bf16 %v1062, %v1062
  %v1127 = vpack.c.bf16 %v1063, %v1063
  %v1128 = vpack.c.bf16 %v1064, %v1064
  %v1129 = vpack.c.bf16 %v1065, %v1065
  %v1130 = vpack.c.bf16 %v1066, %v1066
  %v1131 = vpack.c.bf16 %v1067, %v1067
  %v1132 = vpack.c.bf16 %v1068, %v1068
  %v1133 = vpack.c.bf16 %v1069, %v1069
  %v1134 = vpack.c.bf16 %v1070, %v1070
  %v1135 = vpack.c.bf16 %v1071, %v1071
  %v1136 = vpack.c.bf16 %v1072, %v1072
  %v1137 = vpack.c.bf16 %v1073, %v1073
  %v1138 = vpack.c.bf16 %v1074, %v1074
  %v1139 = vpack.c.bf16 %v1075, %v1075
  %v1140 = vpack.c.bf16 %v1076, %v1076
  %v1141 = vpack.c.bf16 %v1077, %v1077
  %v1142 = vpack.c.bf16 %v1078, %v1078
  %v1143 = vpack.c.bf16 %v1079, %v1079
  %v1144 = vpack.c.bf16 %v1080, %v1080
  %v1145 = vpack.c.bf16 %v1081, %v1081
  %v1146 = vpack.c.bf16 %v1082, %v1082
  %v1147 = vpack.c.bf16 %v1083, %v1083
  %v1148 = vpack.c.bf16 %v1084, %v1084
  %v1149 = vpack.c.bf16 %v1085, %v1085
  %v1150 = vpack.c.bf16 %v1086, %v1086
  %v1151 = vpack.c.bf16 %v1087, %v1087
  %vm1152 = vcmask 257024
  %1153 = vst.msk [vmem:[%s4] sm:$0xf] %vm1152, %v1088
  %1154 = vst.msk [vmem:[%s4 + $0x4] sm:$0xf] %vm1152, %v1089
  %1155 = vst.msk [vmem:[%s4 + $0x8] sm:$0xf] %vm1152, %v1090
  %1156 = vst.msk [vmem:[%s4 + $0xc] sm:$0xf] %vm1152, %v1091
  %1157 = vst.msk [vmem:[%s4 + $0x10] sm:$0xf] %vm1152, %v1092
  %1158 = vst.msk [vmem:[%s4 + $0x14] sm:$0xf] %vm1152, %v1093
  %1159 = vst.msk [vmem:[%s4 + $0x18] sm:$0xf] %vm1152, %v1094
  %1160 = vst.msk [vmem:[%s4 + $0x1c] sm:$0xf] %vm1152, %v1095
  %1161 = vst.msk [vmem:[%s4 + $0x20] sm:$0xf] %vm1152, %v1096
  %1162 = vst.msk [vmem:[%s4 + $0x24] sm:$0xf] %vm1152, %v1097
  %1163 = vst.msk [vmem:[%s4 + $0x28] sm:$0xf] %vm1152, %v1098
  %1164 = vst.msk [vmem:[%s4 + $0x2c] sm:$0xf] %vm1152, %v1099
  %1165 = vst.msk [vmem:[%s4 + $0x30] sm:$0xf] %vm1152, %v1100
  %1166 = vst.msk [vmem:[%s4 + $0x34] sm:$0xf] %vm1152, %v1101
  %1167 = vst.msk [vmem:[%s4 + $0x38] sm:$0xf] %vm1152, %v1102
  %1168 = vst.msk [vmem:[%s4 + $0x3c] sm:$0xf] %vm1152, %v1103
  %1169 = vst.msk [vmem:[%s4 + $0x40] sm:$0xf] %vm1152, %v1104
  %1170 = vst.msk [vmem:[%s4 + $0x44] sm:$0xf] %vm1152, %v1105
  %1171 = vst.msk [vmem:[%s4 + $0x48] sm:$0xf] %vm1152, %v1106
  %1172 = vst.msk [vmem:[%s4 + $0x4c] sm:$0xf] %vm1152, %v1107
  %1173 = vst.msk [vmem:[%s4 + $0x50] sm:$0xf] %vm1152, %v1108
  %1174 = vst.msk [vmem:[%s4 + $0x54] sm:$0xf] %vm1152, %v1109
  %1175 = vst.msk [vmem:[%s4 + $0x58] sm:$0xf] %vm1152, %v1110
  %1176 = vst.msk [vmem:[%s4 + $0x5c] sm:$0xf] %vm1152, %v1111
  %1177 = vst.msk [vmem:[%s4 + $0x60] sm:$0xf] %vm1152, %v1112
  %1178 = vst.msk [vmem:[%s4 + $0x64] sm:$0xf] %vm1152, %v1113
  %1179 = vst.msk [vmem:[%s4 + $0x68] sm:$0xf] %vm1152, %v1114
  %1180 = vst.msk [vmem:[%s4 + $0x6c] sm:$0xf] %vm1152, %v1115
  %1181 = vst.msk [vmem:[%s4 + $0x70] sm:$0xf] %vm1152, %v1116
  %1182 = vst.msk [vmem:[%s4 + $0x74] sm:$0xf] %vm1152, %v1117
  %1183 = vst.msk [vmem:[%s4 + $0x78] sm:$0xf] %vm1152, %v1118
  %1184 = vst.msk [vmem:[%s4 + $0x7c] sm:$0xf] %vm1152, %v1119
  %1185 = vst.msk [vmem:[%s4 + $0x80] sm:$0xf] %vm1152, %v1120
  %1186 = vst.msk [vmem:[%s4 + $0x84] sm:$0xf] %vm1152, %v1121
  %1187 = vst.msk [vmem:[%s4 + $0x88] sm:$0xf] %vm1152, %v1122
  %1188 = vst.msk [vmem:[%s4 + $0x8c] sm:$0xf] %vm1152, %v1123
  %1189 = vst.msk [vmem:[%s4 + $0x90] sm:$0xf] %vm1152, %v1124
  %1190 = vst.msk [vmem:[%s4 + $0x94] sm:$0xf] %vm1152, %v1125
  %1191 = vst.msk [vmem:[%s4 + $0x98] sm:$0xf] %vm1152, %v1126
  %1192 = vst.msk [vmem:[%s4 + $0x9c] sm:$0xf] %vm1152, %v1127
  %1193 = vst.msk [vmem:[%s4 + $0xa0] sm:$0xf] %vm1152, %v1128
  %1194 = vst.msk [vmem:[%s4 + $0xa4] sm:$0xf] %vm1152, %v1129
  %1195 = vst.msk [vmem:[%s4 + $0xa8] sm:$0xf] %vm1152, %v1130
  %1196 = vst.msk [vmem:[%s4 + $0xac] sm:$0xf] %vm1152, %v1131
  %1197 = vst.msk [vmem:[%s4 + $0xb0] sm:$0xf] %vm1152, %v1132
  %1198 = vst.msk [vmem:[%s4 + $0xb4] sm:$0xf] %vm1152, %v1133
  %1199 = vst.msk [vmem:[%s4 + $0xb8] sm:$0xf] %vm1152, %v1134
  %1200 = vst.msk [vmem:[%s4 + $0xbc] sm:$0xf] %vm1152, %v1135
  %1201 = vst.msk [vmem:[%s4 + $0xc0] sm:$0xf] %vm1152, %v1136
  %1202 = vst.msk [vmem:[%s4 + $0xc4] sm:$0xf] %vm1152, %v1137
  %1203 = vst.msk [vmem:[%s4 + $0xc8] sm:$0xf] %vm1152, %v1138
  %1204 = vst.msk [vmem:[%s4 + $0xcc] sm:$0xf] %vm1152, %v1139
  %1205 = vst.msk [vmem:[%s4 + $0xd0] sm:$0xf] %vm1152, %v1140
  %1206 = vst.msk [vmem:[%s4 + $0xd4] sm:$0xf] %vm1152, %v1141
  %1207 = vst.msk [vmem:[%s4 + $0xd8] sm:$0xf] %vm1152, %v1142
  %1208 = vst.msk [vmem:[%s4 + $0xdc] sm:$0xf] %vm1152, %v1143
  %1209 = vst.msk [vmem:[%s4 + $0xe0] sm:$0xf] %vm1152, %v1144
  %1210 = vst.msk [vmem:[%s4 + $0xe4] sm:$0xf] %vm1152, %v1145
  %1211 = vst.msk [vmem:[%s4 + $0xe8] sm:$0xf] %vm1152, %v1146
  %1212 = vst.msk [vmem:[%s4 + $0xec] sm:$0xf] %vm1152, %v1147
  %1213 = vst.msk [vmem:[%s4 + $0xf0] sm:$0xf] %vm1152, %v1148
  %1214 = vst.msk [vmem:[%s4 + $0xf4] sm:$0xf] %vm1152, %v1149
  %1215 = vst.msk [vmem:[%s4 + $0xf8] sm:$0xf] %vm1152, %v1150
  %1216 = vst.msk [vmem:[%s4 + $0xfc] sm:$0xf] %vm1152, %v1151
  // Predicated region
  $region18: #{densenet_forward.5} parent=0 // pred_check
    _
  $region19: #{densenet_forward.5} parent=0 // pred_check_branch
    %1218 = sbr.rel (0) target = $region21
  $region20: #{densenet_forward.5} parent=0 // pred_region
    _
  $region21: #{densenet_forward.5} parent=0 // pred_fallthru
    _
  // Predicated region
  $region22: #{densenet_forward.5} parent=0 // pred_check
    _
  $region23: #{densenet_forward.5} parent=0 // pred_check_branch
    %1220 = sbr.rel (0) target = $region25
  $region24: #{densenet_forward.5} parent=0 // pred_region
    _
  $region25: #{densenet_forward.5} parent=0 // pred_fallthru
    _

// kernel: densenet_forward.7
$region0: #{densenet_forward.7}
  #allocation0 [shape = 'u32[]', space=smem, size = 0x4, offset = 0x4, fixed_abs, tag = 'smem constant byte address 0x4 - core index']
  #allocation1 [shape = 'u32[72,128]{1,0:T(1,128)}', space=vmem, size = 0x9000, scoped, tag = 'internal scratch']
  %s0 = inlined_call_operand.vmem [shape: bf16[2,64,32], index: 0, kind: input, shape index: {}]
  %s1 = inlined_call_operand.vmem [shape: f32[1,32], index: 1, kind: input, shape index: {}]
  %s2 = inlined_call_operand.vmem [shape: f32[1,32], index: 2, kind: input, shape index: {}]
  %s3 = inlined_call_operand.vmem [shape: bf16[16,64], index: 3, kind: input, shape index: {}]
  %s4 = inlined_call_operand.vmem [shape: bf16[32,32], index: 4, kind: input, shape index: {}]
  %s5 = inlined_call_operand.vmem [shape: bf16[2,16,32], index: 5, kind: output, shape index: {}]
  %s6 = sld [smem:[#allocation0]]
  $region53: #{densenet_forward.7} parent=0
    _
  %s8 = ssub.s32 1, %s6
  %s9 = scalar_select 0, %s8, %s6
  loop: start=0, step=1, limit=4
  $region2: #{densenet_forward.7} parent=0 // loop_pre_header
    _
  $region3: #{densenet_forward.7} parent=0 // loop_header
    %s11 = sphi 0, %s15
    %p12 = scmp.ge.s32.totalorder %s11, 4
    %s21 = sphi 0, %s23
    %s24 = sphi 0, %s21
    %s25 = sphi 0, %s24
    %s41 = sphi 0, %s25
    %s45 = sphi 0, %s45
    %s47 = sphi 0, %s45
    %s48 = sphi 0, %s47
    %s62 = sphi 0, %s48
    %s66 = sphi 0, %s66
    %s68 = sphi 0, %s66
    %s69 = sphi 0, %s68
    %s83 = sphi 0, %s69
    %s87 = sphi 0, %s87
    %s89 = sphi 0, %s87
    %s90 = sphi 0, %s89
    %s104 = sphi 0, %s90
    %s108 = sphi 0, %s108
    %s110 = sphi 0, %s108
    %s111 = sphi 0, %s110
    %s125 = sphi 0, %s111
    %s131 = sphi 0, %s133
    %s134 = sphi 0, %s131
    %s135 = sphi 0, %s134
    %s151 = sphi 0, %s135
  $region4: #{densenet_forward.7} parent=0 // loop_header_branch
    %14 = sbr.rel (%p12) target = $region8
  $region5: #{densenet_forward.7} parent=0 // loop_body
    %s16 = ssub.s32 %s11, 1
    %s17 = ssub.s32 %s11, 2
    %s18 = sadd.s32 %s11, 1
    %s19 = ssub.s32 %s11, %s18
    %p20 = scmp.eq.s32.totalorder %s19, 0
    %s22 = sadd.s32 %s21, 1
    %s23 = scalar_select %p20, %s21, %s22
    %p26 = pneg %p20
    %p27 = scmp.eq.s32.totalorder %s11, 1
    %p28 = por %p26, %p27
    %p29 = scmp.ne.s32.totalorder %s21, %s24
    %p30 = scmp.eq.s32.totalorder %s11, 0
    %p31 = por %p29, %p30
    %p32 = scmp.ne.s32.totalorder %s21, %s24
    %p33 = scmp.eq.s32.totalorder %s16, 1
    %p34 = por %p32, %p33
    %p35 = scmp.ne.s32.totalorder %s24, %s25
    %p36 = scmp.eq.s32.totalorder %s16, 0
    %p37 = por %p35, %p36
    %p38 = scmp.ne.s32.totalorder %s24, %s25
    %p39 = scmp.eq.s32.totalorder %s17, 1
    %p40 = por %p38, %p39
    %p42 = scmp.ne.s32.totalorder %s25, %s41
    %p43 = scmp.eq.s32.totalorder %s17, 0
    %p44 = por %p42, %p43
    %s46 = sadd.s32 %s45, 1
    %p49 = scmp.eq.s32.totalorder %s11, 1
    %p50 = scmp.ne.s32.totalorder %s45, %s47
    %p51 = scmp.eq.s32.totalorder %s11, 0
    %p52 = por %p50, %p51
    %p53 = scmp.ne.s32.totalorder %s45, %s47
    %p54 = scmp.eq.s32.totalorder %s16, 1
    %p55 = por %p53, %p54
    %p56 = scmp.ne.s32.totalorder %s47, %s48
    %p57 = scmp.eq.s32.totalorder %s16, 0
    %p58 = por %p56, %p57
    %p59 = scmp.ne.s32.totalorder %s47, %s48
    %p60 = scmp.eq.s32.totalorder %s17, 1
    %p61 = por %p59, %p60
    %p63 = scmp.ne.s32.totalorder %s48, %s62
    %p64 = scmp.eq.s32.totalorder %s17, 0
    %p65 = por %p63, %p64
    %s67 = sadd.s32 %s66, 1
    %p70 = scmp.eq.s32.totalorder %s11, 1
    %p71 = scmp.ne.s32.totalorder %s66, %s68
    %p72 = scmp.eq.s32.totalorder %s11, 0
    %p73 = por %p71, %p72
    %p74 = scmp.ne.s32.totalorder %s66, %s68
    %p75 = scmp.eq.s32.totalorder %s16, 1
    %p76 = por %p74, %p75
    %p77 = scmp.ne.s32.totalorder %s68, %s69
    %p78 = scmp.eq.s32.totalorder %s16, 0
    %p79 = por %p77, %p78
    %p80 = scmp.ne.s32.totalorder %s68, %s69
    %p81 = scmp.eq.s32.totalorder %s17, 1
    %p82 = por %p80, %p81
    %p84 = scmp.ne.s32.totalorder %s69, %s83
    %p85 = scmp.eq.s32.totalorder %s17, 0
    %p86 = por %p84, %p85
    %s88 = sadd.s32 %s87, 1
    %p91 = scmp.eq.s32.totalorder %s11, 1
    %p92 = scmp.ne.s32.totalorder %s87, %s89
    %p93 = scmp.eq.s32.totalorder %s11, 0
    %p94 = por %p92, %p93
    %p95 = scmp.ne.s32.totalorder %s87, %s89
    %p96 = scmp.eq.s32.totalorder %s16, 1
    %p97 = por %p95, %p96
    %p98 = scmp.ne.s32.totalorder %s89, %s90
    %p99 = scmp.eq.s32.totalorder %s16, 0
    %p100 = por %p98, %p99
    %p101 = scmp.ne.s32.totalorder %s89, %s90
    %p102 = scmp.eq.s32.totalorder %s17, 1
    %p103 = por %p101, %p102
    %p105 = scmp.ne.s32.totalorder %s90, %s104
    %p106 = scmp.eq.s32.totalorder %s17, 0
    %p107 = por %p105, %p106
    %s109 = sadd.s32 %s108, 1
    %p112 = scmp.eq.s32.totalorder %s11, 1
    %p113 = scmp.ne.s32.totalorder %s108, %s110
    %p114 = scmp.eq.s32.totalorder %s11, 0
    %p115 = por %p113, %p114
    %p116 = scmp.ne.s32.totalorder %s108, %s110
    %p117 = scmp.eq.s32.totalorder %s16, 1
    %p118 = por %p116, %p117
    %p119 = scmp.ne.s32.totalorder %s110, %s111
    %p120 = scmp.eq.s32.totalorder %s16, 0
    %p121 = por %p119, %p120
    %p122 = scmp.ne.s32.totalorder %s110, %s111
    %p123 = scmp.eq.s32.totalorder %s17, 1
    %p124 = por %p122, %p123
    %p126 = scmp.ne.s32.totalorder %s111, %s125
    %p127 = scmp.eq.s32.totalorder %s17, 0
    %p128 = por %p126, %p127
    %s129 = ssub.s32 %s11, %s18
    %p130 = scmp.eq.s32.totalorder %s129, 0
    %s132 = sadd.s32 %s131, 1
    %s133 = scalar_select %p130, %s131, %s132
    %p136 = pneg %p130
    %p137 = scmp.eq.s32.totalorder %s11, 1
    %p138 = por %p136, %p137
    %p139 = scmp.ne.s32.totalorder %s131, %s134
    %p140 = scmp.eq.s32.totalorder %s11, 0
    %p141 = por %p139, %p140
    %p142 = scmp.ne.s32.totalorder %s131, %s134
    %p143 = scmp.eq.s32.totalorder %s16, 1
    %p144 = por %p142, %p143
    %p145 = scmp.ne.s32.totalorder %s134, %s135
    %p146 = scmp.eq.s32.totalorder %s16, 0
    %p147 = por %p145, %p146
    %p148 = scmp.ne.s32.totalorder %s134, %s135
    %p149 = scmp.eq.s32.totalorder %s17, 1
    %p150 = por %p148, %p149
    %p152 = scmp.ne.s32.totalorder %s135, %s151
    %p153 = scmp.eq.s32.totalorder %s17, 0
    %p154 = por %p152, %p153
    %p155 = scmp.le.s32.totalorder 1, %s11
    %p156 = scmp.lt.s32.totalorder %s11, 3
    %p157 = pnand %p155, %p156
    %p158 = pneg %p157
    // Predicated region
    $region9: #{densenet_forward.7} parent=5 // pred_check
      _
    $region10: #{densenet_forward.7} parent=5 // pred_check_branch
      %160 = sbr.rel (%p157) target = $region12
    $region11: #{densenet_forward.7} parent=5 // pred_region
      %s161 = ssub.s32 %s11, 1
      // Predicated region
      $region13: #{densenet_forward.7} parent=11 // pred_check
        %p162 = pneg %p58
      $region14: #{densenet_forward.7} parent=11 // pred_check_branch
        %164 = sbr.rel (%p162) target = $region16
      $region15: #{densenet_forward.7} parent=11 // pred_region
        _
      $region16: #{densenet_forward.7} parent=11 // pred_fallthru
        _
      // Predicated region
      $region17: #{densenet_forward.7} parent=11 // pred_check
        %p165 = pneg %p79
      $region18: #{densenet_forward.7} parent=11 // pred_check_branch
        %167 = sbr.rel (%p165) target = $region20
      $region19: #{densenet_forward.7} parent=11 // pred_region
        _
      $region20: #{densenet_forward.7} parent=11 // pred_fallthru
        _
      // Predicated region
      $region21: #{densenet_forward.7} parent=11 // pred_check
        %p168 = pneg %p100
      $region22: #{densenet_forward.7} parent=11 // pred_check_branch
        %170 = sbr.rel (%p168) target = $region24
      $region23: #{densenet_forward.7} parent=11 // pred_region
        _
      $region24: #{densenet_forward.7} parent=11 // pred_fallthru
        _
      // Predicated region
      $region25: #{densenet_forward.7} parent=11 // pred_check
        %p171 = pneg %p121
      $region26: #{densenet_forward.7} parent=11 // pred_check_branch
        %173 = sbr.rel (%p171) target = $region28
      $region27: #{densenet_forward.7} parent=11 // pred_region
        _
      $region28: #{densenet_forward.7} parent=11 // pred_fallthru
        _
    $region12: #{densenet_forward.7} parent=5 // pred_fallthru
      _
    %p174 = scmp.lt.s32.totalorder %s11, 2
    // Predicated region
    $region29: #{densenet_forward.7} parent=5 // pred_check
      %p175 = pneg %p174
    $region30: #{densenet_forward.7} parent=5 // pred_check_branch
      %177 = sbr.rel (%p175) target = $region32
    $region31: #{densenet_forward.7} parent=5 // pred_region
      // Predicated region
      $region33: #{densenet_forward.7} parent=31 // pred_check
        %p178 = pneg %p31
      $region34: #{densenet_forward.7} parent=31 // pred_check_branch
        %180 = sbr.rel (%p178) target = $region36
      $region35: #{densenet_forward.7} parent=31 // pred_region
        %p181 = scmp.lt.s32.totalorder %s11, 1
        %s182 = scalar_select %p181, %s11, 1
        %s183 = smul.addr %s182, 8
        %s184 = smul.addr %s183, 4
        %s185 = scalar_lea.vmem %s0, %s184
      $region36: #{densenet_forward.7} parent=31 // pred_fallthru
        _
    $region32: #{densenet_forward.7} parent=5 // pred_fallthru
      _
    %p186 = scmp.le.s32.totalorder 1, %s11
    %p187 = scmp.lt.s32.totalorder %s11, 3
    %p188 = pnand %p186, %p187
    %p189 = pneg %p188
    // Predicated region
    $region37: #{densenet_forward.7} parent=5 // pred_check
      _
    $region38: #{densenet_forward.7} parent=5 // pred_check_branch
      %191 = sbr.rel (%p188) target = $region40
    $region39: #{densenet_forward.7} parent=5 // pred_region
      %s192 = ssub.s32 %s11, 1
      %p193 = scmp.lt.s32.totalorder %s16, 1
      %s194 = scalar_select %p193, %s16, 1
      %s195 = smul.addr %s194, 8
      %s196 = smul.addr %s195, 4
      %s197 = scalar_lea.vmem %s0, %s196
      %p198 = pneg %p37
      %p199 = pneg %p34
      %p200 = pneg %p58
      %p201 = pneg %p55
      %p202 = pneg %p79
      %p203 = pneg %p76
      %p204 = pneg %p100
      %p205 = pneg %p97
      %p206 = pneg %p121
      %p207 = pneg %p118
      %p208 = pneg %p147
      %p209 = pneg %p144
      %p210 = scmp.lt.s32.totalorder %s16, 1
      %s211 = scalar_select %p210, %s16, 1
      %s212 = smul.addr %s211, 2
      %s213 = smul.addr %s212, 4
      %s214 = scalar_lea.vmem %s5, %s213
      %p215 = scmp.lt.s32.totalorder %s16, 1
      %s216 = scalar_select %p215, %s16, 1
      %s217 = smul.addr %s216, 8
      %s218 = smul.addr %s217, 4
      %s219 = scalar_lea.vmem %s0, %s218
      %p220 = scmp.lt.s32.totalorder %s16, 1
      %s221 = scalar_select %p220, %s16, 1
      %s222 = smul.addr %s221, 2
      %s223 = smul.addr %s222, 4
      %s224 = scalar_lea.vmem %s5, %s223
      %v226 = vld [vmem:[%s219] sm:$0xf]
      %v227 = vld [vmem:[%s219 + $0x4] sm:$0xf]
      %v228 = vld [vmem:[%s219 + $0x8] sm:$0xf]
      %v229 = vld [vmem:[%s219 + $0xc] sm:$0xf]
      %v230 = vld [vmem:[%s219 + $0x10] sm:$0xf]
      %v231 = vld [vmem:[%s219 + $0x14] sm:$0xf]
      %v232 = vld [vmem:[%s219 + $0x18] sm:$0xf]
      %v233 = vld [vmem:[%s219 + $0x1c] sm:$0xf]
      %v234 = vunpack.c.l.bf16 %v226
      %v235 = vunpack.c.l.bf16 %v227
      %v236 = vunpack.c.l.bf16 %v228
      %v237 = vunpack.c.l.bf16 %v229
      %v238 = vunpack.c.l.bf16 %v230
      %v239 = vunpack.c.l.bf16 %v231
      %v240 = vunpack.c.l.bf16 %v232
      %v241 = vunpack.c.l.bf16 %v233
      %v242 = vld [vmem:[%s1] sm:$0x1]
      %v244 = vperm.slane %v242, 0
      %v246 = vmul.f32 %v234, %v244
      %v247 = vmul.f32 %v235, %v244
      %v248 = vmul.f32 %v236, %v244
      %v249 = vmul.f32 %v237, %v244
      %v250 = vmul.f32 %v238, %v244
      %v251 = vmul.f32 %v239, %v244
      %v252 = vmul.f32 %v240, %v244
      %v253 = vmul.f32 %v241, %v244
      %v254 = vld [vmem:[%s2] sm:$0x1]
      %v256 = vperm.slane %v254, 0
      %v258 = vadd.f32 %v246, %v256
      %v259 = vadd.f32 %v247, %v256
      %v260 = vadd.f32 %v248, %v256
      %v261 = vadd.f32 %v249, %v256
      %v262 = vadd.f32 %v250, %v256
      %v263 = vadd.f32 %v251, %v256
      %v264 = vadd.f32 %v252, %v256
      %v265 = vadd.f32 %v253, %v256
      %v266 = vmax.f32 %v258, 0.0
      %v267 = vmax.f32 %v259, 0.0
      %v268 = vmax.f32 %v260, 0.0
      %v269 = vmax.f32 %v261, 0.0
      %v270 = vmax.f32 %v262, 0.0
      %v271 = vmax.f32 %v263, 0.0
      %v272 = vmax.f32 %v264, 0.0
      %v273 = vmax.f32 %v265, 0.0
      %v274 = vld [vmem:[%s3] sm:$0xf]
      %v275 = vld [vmem:[%s3 + $0x4] sm:$0xf]
      %v276 = vpack.c.bf16 %v267, %v266
      %v277 = vpack.c.bf16 %v269, %v268
      %v278 = vpack.c.bf16 %v271, %v270
      %v279 = vpack.c.bf16 %v273, %v272
      %v282 = vunpack.c.l.b16 %v274
      %v283 = vunpack.c.l.b16 %v275
      %v284 = vpack.c.b16 %v283, %v282
      %vm285 = vcmask 523264
      %v287 = vsel %vm285, %v284, 0
      %289 = vmatpush.bf16.msra.mxu0 0
      %290 = vmatpush.bf16.msra.mxu0 0
      %291 = vmatpush.bf16.msra.mxu0 0
      %292 = vmatpush.bf16.msra.mxu0 0
      %293 = vmatpush.bf16.msra.mxu0 %v279
      %294 = vmatpush.bf16.msra.mxu0 %v278
      %295 = vmatpush.bf16.msra.mxu0 %v277
      %296 = vmatpush.bf16.msra.mxu0 %v276
      %297 = vmatmul.bf16.gmra.mxu0 %v287
      %v298 = vpop.f32.mrf.mxu0
      %v299 = vadd.f32 0.0, %v298
      %v300 = vpop.f32.mrf.mxu0
      %v301 = vadd.f32 0.0, %v300
      %302 = vdwg.mxu0
      %v303 = vpack.c.bf16 %v301, %v299
      %v304 = vld [vmem:[%s4] sm:$0xf]
      %v305 = vld [vmem:[%s4 + $0x4] sm:$0xf]
      %v306 = vld [vmem:[%s4 + $0x8] sm:$0xf]
      %v307 = vld [vmem:[%s4 + $0xc] sm:$0xf]
      %v312 = vunpack.c.l.b16 %v304
      %v313 = vunpack.c.l.b16 %v305
      %v314 = vunpack.c.l.b16 %v306
      %v315 = vunpack.c.l.b16 %v307
      %v316 = vpack.c.b16 %v313, %v312
      %v317 = vpack.c.b16 %v315, %v314
      %vm320 = vcmask 261120
      %v322 = vsel %vm320, %v303, 0
      %324 = vmatpush.bf16.msra.mxu0 0
      %325 = vmatpush.bf16.msra.mxu0 0
      %326 = vmatpush.bf16.msra.mxu0 0
      %327 = vmatpush.bf16.msra.mxu0 0
      %328 = vmatpush.bf16.msra.mxu0 0
      %329 = vmatpush.bf16.msra.mxu0 0
      %330 = vmatpush.bf16.msra.mxu0 %v317
      %331 = vmatpush.bf16.msra.mxu0 %v316
      %332 = vmatmul.bf16.gmra.mxu0 %v322
      %v333 = vpop.f32.mrf.mxu0
      %v334 = vadd.f32 0.0, %v333
      %v335 = vpop.f32.mrf.mxu0
      %v336 = vadd.f32 0.0, %v335
      %337 = vdwg.mxu0
      %v338 = vpack.c.bf16 %v334, %v334
      %v339 = vpack.c.bf16 %v336, %v336
      %vm340 = vcmask 257024
      %341 = vst.msk [vmem:[%s224] sm:$0xf] %vm340, %v338
      %342 = vst.msk [vmem:[%s224 + $0x4] sm:$0xf] %vm340, %v339
      %p343 = scmp.lt.s32.totalorder %s16, 1
      %s344 = scalar_select %p343, %s16, 1
      %s345 = smul.addr %s344, 2
      %s346 = smul.addr %s345, 4
      %s347 = scalar_lea.vmem %s5, %s346
      // Predicated region
      $region41: #{densenet_forward.7} parent=39 // pred_check
        %p348 = pneg %p144
      $region42: #{densenet_forward.7} parent=39 // pred_check_branch
        %350 = sbr.rel (%p348) target = $region44
      $region43: #{densenet_forward.7} parent=39 // pred_region
        _
      $region44: #{densenet_forward.7} parent=39 // pred_fallthru
        _
    $region40: #{densenet_forward.7} parent=5 // pred_fallthru
      _
    %p351 = scmp.le.s32.totalorder 2, %s11
    // Predicated region
    $region45: #{densenet_forward.7} parent=5 // pred_check
      %p352 = pneg %p351
    $region46: #{densenet_forward.7} parent=5 // pred_check_branch
      %354 = sbr.rel (%p352) target = $region48
    $region47: #{densenet_forward.7} parent=5 // pred_region
      %s355 = ssub.s32 %s11, 2
      // Predicated region
      $region49: #{densenet_forward.7} parent=47 // pred_check
        %p356 = pneg %p150
      $region50: #{densenet_forward.7} parent=47 // pred_check_branch
        %358 = sbr.rel (%p356) target = $region52
      $region51: #{densenet_forward.7} parent=47 // pred_region
        %p359 = scmp.lt.s32.totalorder %s17, 1
        %s360 = scalar_select %p359, %s17, 1
        %s361 = smul.addr %s360, 2
        %s362 = smul.addr %s361, 4
        %s363 = scalar_lea.vmem %s5, %s362
      $region52: #{densenet_forward.7} parent=47 // pred_fallthru
        _
    $region48: #{densenet_forward.7} parent=5 // pred_fallthru
      _
  $region6: #{densenet_forward.7} parent=0 // loop_footer
    %s15 = sadd.s32 1, %s11
  $region7: #{densenet_forward.7} parent=0 // loop_footer_branch
    %10 = sbr.rel target = $region3
  $region8: #{densenet_forward.7} parent=0 // loop_exit
    _

// kernel: densenet_forward.6
$region0: #{densenet_forward.6}
  #allocation0 [shape = 'u32[]', space=smem, size = 0x4, offset = 0x4, fixed_abs, tag = 'smem constant byte address 0x4 - core index']
  #allocation1 [shape = 'u32[72,128]{1,0:T(1,128)}', space=vmem, size = 0x9000, scoped, tag = 'internal scratch']
  #allocation2 [shape = 'f32[64,32]{1,0:T(8,128)}', space=vmem, size = 0x8000, scoped, tag = 'scratch operand']
  %s0 = inlined_call_operand.vmem [shape: bf16[2,64,32], index: 0, kind: input, shape index: {}]
  %s1 = inlined_call_operand.vmem [shape: f32[2,1,32], index: 1, kind: input, shape index: {}]
  %s2 = inlined_call_operand.vmem [shape: f32[2,1,32], index: 2, kind: input, shape index: {}]
  %s3 = inlined_call_operand.vmem [shape: bf16[2,32,32], index: 3, kind: input, shape index: {}]
  %s4 = inlined_call_operand.vmem [shape: f32[2,1,32], index: 4, kind: input, shape index: {}]
  %s5 = inlined_call_operand.vmem [shape: f32[2,1,32], index: 5, kind: input, shape index: {}]
  %s6 = inlined_call_operand.vmem [shape: bf16[2,9,32,8], index: 6, kind: input, shape index: {}]
  %s7 = inlined_call_operand.vmem [shape: bf16[9,64,64], index: 7, kind: input, shape index: {}]
  %s8 = inlined_call_operand.vmem [shape: bf16[2,64,32], index: 8, kind: output, shape index: {}]
  %s9 = sld [smem:[#allocation0]]
  $region65: #{densenet_forward.6} parent=0
    _
  %s11 = ssub.s32 1, %s9
  %s12 = scalar_select 0, %s11, %s9
  loop: start=0, step=1, limit=4
  $region2: #{densenet_forward.6} parent=0 // loop_pre_header
    _
  $region3: #{densenet_forward.6} parent=0 // loop_header
    %s14 = sphi 0, %s18
    %p15 = scmp.ge.s32.totalorder %s14, 4
    %s24 = sphi 0, %s26
    %s27 = sphi 0, %s24
    %s28 = sphi 0, %s27
    %s44 = sphi 0, %s28
    %s48 = sphi 0, %s48
    %s50 = sphi 0, %s48
    %s51 = sphi 0, %s50
    %s65 = sphi 0, %s51
    %s69 = sphi 0, %s69
    %s71 = sphi 0, %s69
    %s72 = sphi 0, %s71
    %s86 = sphi 0, %s72
    %s90 = sphi 0, %s90
    %s92 = sphi 0, %s90
    %s93 = sphi 0, %s92
    %s107 = sphi 0, %s93
    %s111 = sphi 0, %s111
    %s113 = sphi 0, %s111
    %s114 = sphi 0, %s113
    %s128 = sphi 0, %s114
    %s132 = sphi 0, %s132
    %s134 = sphi 0, %s132
    %s135 = sphi 0, %s134
    %s149 = sphi 0, %s135
    %s153 = sphi 0, %s153
    %s155 = sphi 0, %s153
    %s156 = sphi 0, %s155
    %s170 = sphi 0, %s156
    %s174 = sphi 0, %s174
    %s176 = sphi 0, %s174
    %s177 = sphi 0, %s176
    %s191 = sphi 0, %s177
    %s197 = sphi 0, %s199
    %s200 = sphi 0, %s197
    %s201 = sphi 0, %s200
    %s217 = sphi 0, %s201
  $region4: #{densenet_forward.6} parent=0 // loop_header_branch
    %17 = sbr.rel (%p15) target = $region8
  $region5: #{densenet_forward.6} parent=0 // loop_body
    %s19 = ssub.s32 %s14, 1
    %s20 = ssub.s32 %s14, 2
    %s21 = sadd.s32 %s14, 1
    %s22 = ssub.s32 %s14, %s21
    %p23 = scmp.eq.s32.totalorder %s22, 0
    %s25 = sadd.s32 %s24, 1
    %s26 = scalar_select %p23, %s24, %s25
    %p29 = pneg %p23
    %p30 = scmp.eq.s32.totalorder %s14, 1
    %p31 = por %p29, %p30
    %p32 = scmp.ne.s32.totalorder %s24, %s27
    %p33 = scmp.eq.s32.totalorder %s14, 0
    %p34 = por %p32, %p33
    %p35 = scmp.ne.s32.totalorder %s24, %s27
    %p36 = scmp.eq.s32.totalorder %s19, 1
    %p37 = por %p35, %p36
    %p38 = scmp.ne.s32.totalorder %s27, %s28
    %p39 = scmp.eq.s32.totalorder %s19, 0
    %p40 = por %p38, %p39
    %p41 = scmp.ne.s32.totalorder %s27, %s28
    %p42 = scmp.eq.s32.totalorder %s20, 1
    %p43 = por %p41, %p42
    %p45 = scmp.ne.s32.totalorder %s28, %s44
    %p46 = scmp.eq.s32.totalorder %s20, 0
    %p47 = por %p45, %p46
    %s49 = sadd.s32 %s48, 1
    %p52 = scmp.eq.s32.totalorder %s14, 1
    %p53 = scmp.ne.s32.totalorder %s48, %s50
    %p54 = scmp.eq.s32.totalorder %s14, 0
    %p55 = por %p53, %p54
    %p56 = scmp.ne.s32.totalorder %s48, %s50
    %p57 = scmp.eq.s32.totalorder %s19, 1
    %p58 = por %p56, %p57
    %p59 = scmp.ne.s32.totalorder %s50, %s51
    %p60 = scmp.eq.s32.totalorder %s19, 0
    %p61 = por %p59, %p60
    %p62 = scmp.ne.s32.totalorder %s50, %s51
    %p63 = scmp.eq.s32.totalorder %s20, 1
    %p64 = por %p62, %p63
    %p66 = scmp.ne.s32.totalorder %s51, %s65
    %p67 = scmp.eq.s32.totalorder %s20, 0
    %p68 = por %p66, %p67
    %s70 = sadd.s32 %s69, 1
    %p73 = scmp.eq.s32.totalorder %s14, 1
    %p74 = scmp.ne.s32.totalorder %s69, %s71
    %p75 = scmp.eq.s32.totalorder %s14, 0
    %p76 = por %p74, %p75
    %p77 = scmp.ne.s32.totalorder %s69, %s71
    %p78 = scmp.eq.s32.totalorder %s19, 1
    %p79 = por %p77, %p78
    %p80 = scmp.ne.s32.totalorder %s71, %s72
    %p81 = scmp.eq.s32.totalorder %s19, 0
    %p82 = por %p80, %p81
    %p83 = scmp.ne.s32.totalorder %s71, %s72
    %p84 = scmp.eq.s32.totalorder %s20, 1
    %p85 = por %p83, %p84
    %p87 = scmp.ne.s32.totalorder %s72, %s86
    %p88 = scmp.eq.s32.totalorder %s20, 0
    %p89 = por %p87, %p88
    %s91 = sadd.s32 %s90, 1
    %p94 = scmp.eq.s32.totalorder %s14, 1
    %p95 = scmp.ne.s32.totalorder %s90, %s92
    %p96 = scmp.eq.s32.totalorder %s14, 0
    %p97 = por %p95, %p96
    %p98 = scmp.ne.s32.totalorder %s90, %s92
    %p99 = scmp.eq.s32.totalorder %s19, 1
    %p100 = por %p98, %p99
    %p101 = scmp.ne.s32.totalorder %s92, %s93
    %p102 = scmp.eq.s32.totalorder %s19, 0
    %p103 = por %p101, %p102
    %p104 = scmp.ne.s32.totalorder %s92, %s93
    %p105 = scmp.eq.s32.totalorder %s20, 1
    %p106 = por %p104, %p105
    %p108 = scmp.ne.s32.totalorder %s93, %s107
    %p109 = scmp.eq.s32.totalorder %s20, 0
    %p110 = por %p108, %p109
    %s112 = sadd.s32 %s111, 1
    %p115 = scmp.eq.s32.totalorder %s14, 1
    %p116 = scmp.ne.s32.totalorder %s111, %s113
    %p117 = scmp.eq.s32.totalorder %s14, 0
    %p118 = por %p116, %p117
    %p119 = scmp.ne.s32.totalorder %s111, %s113
    %p120 = scmp.eq.s32.totalorder %s19, 1
    %p121 = por %p119, %p120
    %p122 = scmp.ne.s32.totalorder %s113, %s114
    %p123 = scmp.eq.s32.totalorder %s19, 0
    %p124 = por %p122, %p123
    %p125 = scmp.ne.s32.totalorder %s113, %s114
    %p126 = scmp.eq.s32.totalorder %s20, 1
    %p127 = por %p125, %p126
    %p129 = scmp.ne.s32.totalorder %s114, %s128
    %p130 = scmp.eq.s32.totalorder %s20, 0
    %p131 = por %p129, %p130
    %s133 = sadd.s32 %s132, 1
    %p136 = scmp.eq.s32.totalorder %s14, 1
    %p137 = scmp.ne.s32.totalorder %s132, %s134
    %p138 = scmp.eq.s32.totalorder %s14, 0
    %p139 = por %p137, %p138
    %p140 = scmp.ne.s32.totalorder %s132, %s134
    %p141 = scmp.eq.s32.totalorder %s19, 1
    %p142 = por %p140, %p141
    %p143 = scmp.ne.s32.totalorder %s134, %s135
    %p144 = scmp.eq.s32.totalorder %s19, 0
    %p145 = por %p143, %p144
    %p146 = scmp.ne.s32.totalorder %s134, %s135
    %p147 = scmp.eq.s32.totalorder %s20, 1
    %p148 = por %p146, %p147
    %p150 = scmp.ne.s32.totalorder %s135, %s149
    %p151 = scmp.eq.s32.totalorder %s20, 0
    %p152 = por %p150, %p151
    %s154 = sadd.s32 %s153, 1
    %p157 = scmp.eq.s32.totalorder %s14, 1
    %p158 = scmp.ne.s32.totalorder %s153, %s155
    %p159 = scmp.eq.s32.totalorder %s14, 0
    %p160 = por %p158, %p159
    %p161 = scmp.ne.s32.totalorder %s153, %s155
    %p162 = scmp.eq.s32.totalorder %s19, 1
    %p163 = por %p161, %p162
    %p164 = scmp.ne.s32.totalorder %s155, %s156
    %p165 = scmp.eq.s32.totalorder %s19, 0
    %p166 = por %p164, %p165
    %p167 = scmp.ne.s32.totalorder %s155, %s156
    %p168 = scmp.eq.s32.totalorder %s20, 1
    %p169 = por %p167, %p168
    %p171 = scmp.ne.s32.totalorder %s156, %s170
    %p172 = scmp.eq.s32.totalorder %s20, 0
    %p173 = por %p171, %p172
    %s175 = sadd.s32 %s174, 1
    %p178 = scmp.eq.s32.totalorder %s14, 1
    %p179 = scmp.ne.s32.totalorder %s174, %s176
    %p180 = scmp.eq.s32.totalorder %s14, 0
    %p181 = por %p179, %p180
    %p182 = scmp.ne.s32.totalorder %s174, %s176
    %p183 = scmp.eq.s32.totalorder %s19, 1
    %p184 = por %p182, %p183
    %p185 = scmp.ne.s32.totalorder %s176, %s177
    %p186 = scmp.eq.s32.totalorder %s19, 0
    %p187 = por %p185, %p186
    %p188 = scmp.ne.s32.totalorder %s176, %s177
    %p189 = scmp.eq.s32.totalorder %s20, 1
    %p190 = por %p188, %p189
    %p192 = scmp.ne.s32.totalorder %s177, %s191
    %p193 = scmp.eq.s32.totalorder %s20, 0
    %p194 = por %p192, %p193
    %s195 = ssub.s32 %s14, %s21
    %p196 = scmp.eq.s32.totalorder %s195, 0
    %s198 = sadd.s32 %s197, 1
    %s199 = scalar_select %p196, %s197, %s198
    %p202 = pneg %p196
    %p203 = scmp.eq.s32.totalorder %s14, 1
    %p204 = por %p202, %p203
    %p205 = scmp.ne.s32.totalorder %s197, %s200
    %p206 = scmp.eq.s32.totalorder %s14, 0
    %p207 = por %p205, %p206
    %p208 = scmp.ne.s32.totalorder %s197, %s200
    %p209 = scmp.eq.s32.totalorder %s19, 1
    %p210 = por %p208, %p209
    %p211 = scmp.ne.s32.totalorder %s200, %s201
    %p212 = scmp.eq.s32.totalorder %s19, 0
    %p213 = por %p211, %p212
    %p214 = scmp.ne.s32.totalorder %s200, %s201
    %p215 = scmp.eq.s32.totalorder %s20, 1
    %p216 = por %p214, %p215
    %p218 = scmp.ne.s32.totalorder %s201, %s217
    %p219 = scmp.eq.s32.totalorder %s20, 0
    %p220 = por %p218, %p219
    %p221 = scmp.le.s32.totalorder 1, %s14
    %p222 = scmp.lt.s32.totalorder %s14, 3
    %p223 = pnand %p221, %p222
    %p224 = pneg %p223
    // Predicated region
    $region9: #{densenet_forward.6} parent=5 // pred_check
      _
    $region10: #{densenet_forward.6} parent=5 // pred_check_branch
      %226 = sbr.rel (%p223) target = $region12
    $region11: #{densenet_forward.6} parent=5 // pred_region
      %s227 = ssub.s32 %s14, 1
      // Predicated region
      $region13: #{densenet_forward.6} parent=11 // pred_check
        %p228 = pneg %p61
      $region14: #{densenet_forward.6} parent=11 // pred_check_branch
        %230 = sbr.rel (%p228) target = $region16
      $region15: #{densenet_forward.6} parent=11 // pred_region
        _
      $region16: #{densenet_forward.6} parent=11 // pred_fallthru
        _
      // Predicated region
      $region17: #{densenet_forward.6} parent=11 // pred_check
        %p231 = pneg %p82
      $region18: #{densenet_forward.6} parent=11 // pred_check_branch
        %233 = sbr.rel (%p231) target = $region20
      $region19: #{densenet_forward.6} parent=11 // pred_region
        _
      $region20: #{densenet_forward.6} parent=11 // pred_fallthru
        _
      // Predicated region
      $region21: #{densenet_forward.6} parent=11 // pred_check
        %p234 = pneg %p103
      $region22: #{densenet_forward.6} parent=11 // pred_check_branch
        %236 = sbr.rel (%p234) target = $region24
      $region23: #{densenet_forward.6} parent=11 // pred_region
        _
      $region24: #{densenet_forward.6} parent=11 // pred_fallthru
        _
      // Predicated region
      $region25: #{densenet_forward.6} parent=11 // pred_check
        %p237 = pneg %p124
      $region26: #{densenet_forward.6} parent=11 // pred_check_branch
        %239 = sbr.rel (%p237) target = $region28
      $region27: #{densenet_forward.6} parent=11 // pred_region
        _
      $region28: #{densenet_forward.6} parent=11 // pred_fallthru
        _
      // Predicated region
      $region29: #{densenet_forward.6} parent=11 // pred_check
        %p240 = pneg %p145
      $region30: #{densenet_forward.6} parent=11 // pred_check_branch
        %242 = sbr.rel (%p240) target = $region32
      $region31: #{densenet_forward.6} parent=11 // pred_region
        _
      $region32: #{densenet_forward.6} parent=11 // pred_fallthru
        _
      // Predicated region
      $region33: #{densenet_forward.6} parent=11 // pred_check
        %p243 = pneg %p166
      $region34: #{densenet_forward.6} parent=11 // pred_check_branch
        %245 = sbr.rel (%p243) target = $region36
      $region35: #{densenet_forward.6} parent=11 // pred_region
        _
      $region36: #{densenet_forward.6} parent=11 // pred_fallthru
        _
      // Predicated region
      $region37: #{densenet_forward.6} parent=11 // pred_check
        %p246 = pneg %p187
      $region38: #{densenet_forward.6} parent=11 // pred_check_branch
        %248 = sbr.rel (%p246) target = $region40
      $region39: #{densenet_forward.6} parent=11 // pred_region
        _
      $region40: #{densenet_forward.6} parent=11 // pred_fallthru
        _
    $region12: #{densenet_forward.6} parent=5 // pred_fallthru
      _
    %p249 = scmp.lt.s32.totalorder %s14, 2
    // Predicated region
    $region41: #{densenet_forward.6} parent=5 // pred_check
      %p250 = pneg %p249
    $region42: #{densenet_forward.6} parent=5 // pred_check_branch
      %252 = sbr.rel (%p250) target = $region44
    $region43: #{densenet_forward.6} parent=5 // pred_region
      // Predicated region
      $region45: #{densenet_forward.6} parent=43 // pred_check
        %p253 = pneg %p34
      $region46: #{densenet_forward.6} parent=43 // pred_check_branch
        %255 = sbr.rel (%p253) target = $region48
      $region47: #{densenet_forward.6} parent=43 // pred_region
        %p256 = scmp.lt.s32.totalorder %s14, 1
        %s257 = scalar_select %p256, %s14, 1
        %s258 = smul.addr %s257, 8
        %s259 = smul.addr %s258, 4
        %s260 = scalar_lea.vmem %s0, %s259
      $region48: #{densenet_forward.6} parent=43 // pred_fallthru
        _
    $region44: #{densenet_forward.6} parent=5 // pred_fallthru
      _
    %p261 = scmp.le.s32.totalorder 1, %s14
    %p262 = scmp.lt.s32.totalorder %s14, 3
    %p263 = pnand %p261, %p262
    %p264 = pneg %p263
    // Predicated region
    $region49: #{densenet_forward.6} parent=5 // pred_check
      _
    $region50: #{densenet_forward.6} parent=5 // pred_check_branch
      %266 = sbr.rel (%p263) target = $region52
    $region51: #{densenet_forward.6} parent=5 // pred_region
      %s267 = ssub.s32 %s14, 1
      %p268 = scmp.lt.s32.totalorder %s19, 1
      %s269 = scalar_select %p268, %s19, 1
      %s270 = smul.addr %s269, 8
      %s271 = smul.addr %s270, 4
      %s272 = scalar_lea.vmem %s0, %s271
      %p273 = pneg %p40
      %p274 = pneg %p37
      %p275 = pneg %p61
      %p276 = pneg %p58
      %p277 = pneg %p82
      %p278 = pneg %p79
      %p279 = pneg %p103
      %p280 = pneg %p100
      %p281 = pneg %p124
      %p282 = pneg %p121
      %p283 = pneg %p145
      %p284 = pneg %p142
      %p285 = pneg %p166
      %p286 = pneg %p163
      %p287 = pneg %p187
      %p288 = pneg %p184
      %p289 = pneg %p213
      %p290 = pneg %p210
      %p291 = scmp.lt.s32.totalorder %s19, 1
      %s292 = scalar_select %p291, %s19, 1
      %s293 = smul.addr %s292, 8
      %s294 = smul.addr %s293, 4
      %s295 = scalar_lea.vmem %s8, %s294
      %p296 = scmp.lt.s32.totalorder %s19, 1
      %s297 = scalar_select %p296, %s19, 1
      %s298 = smul.addr %s297, 8
      %s299 = smul.addr %s298, 4
      %s300 = scalar_lea.vmem %s0, %s299
      %p301 = scmp.lt.s32.totalorder %s19, 1
      %s302 = scalar_select %p301, %s19, 1
      %s303 = smul.addr %s302, 8
      %s304 = smul.addr %s303, 4
      %s305 = scalar_lea.vmem %s8, %s304
      %v307 = vld [vmem:[%s300] sm:$0xf]
      %v308 = vld [vmem:[%s300 + $0x4] sm:$0xf]
      %v309 = vld [vmem:[%s300 + $0x8] sm:$0xf]
      %v310 = vld [vmem:[%s300 + $0xc] sm:$0xf]
      %v311 = vld [vmem:[%s300 + $0x10] sm:$0xf]
      %v312 = vld [vmem:[%s300 + $0x14] sm:$0xf]
      %v313 = vld [vmem:[%s300 + $0x18] sm:$0xf]
      %v314 = vld [vmem:[%s300 + $0x1c] sm:$0xf]
      %v315 = vunpack.c.l.bf16 %v307
      %v316 = vunpack.c.l.bf16 %v308
      %v317 = vunpack.c.l.bf16 %v309
      %v318 = vunpack.c.l.bf16 %v310
      %v319 = vunpack.c.l.bf16 %v311
      %v320 = vunpack.c.l.bf16 %v312
      %v321 = vunpack.c.l.bf16 %v313
      %v322 = vunpack.c.l.bf16 %v314
      %vm323 = vcmask 261120
      %324 = vst.msk [vmem:[#allocation2] sm:$0xff] %vm323, %v315
      %325 = vst.msk [vmem:[#allocation2 + $0x8] sm:$0xff] %vm323, %v316
      %326 = vst.msk [vmem:[#allocation2 + $0x10] sm:$0xff] %vm323, %v317
      %327 = vst.msk [vmem:[#allocation2 + $0x18] sm:$0xff] %vm323, %v318
      %328 = vst.msk [vmem:[#allocation2 + $0x20] sm:$0xff] %vm323, %v319
      %329 = vst.msk [vmem:[#allocation2 + $0x28] sm:$0xff] %vm323, %v320
      %330 = vst.msk [vmem:[#allocation2 + $0x30] sm:$0xff] %vm323, %v321
      %331 = vst.msk [vmem:[#allocation2 + $0x38] sm:$0xff] %vm323, %v322
      %v332 = vld [vmem:[#allocation2] sm:$0xff]
      %v333 = vld [vmem:[#allocation2 + $0x8] sm:$0xff]
      %v334 = vld [vmem:[#allocation2 + $0x10] sm:$0xff]
      %v335 = vld [vmem:[#allocation2 + $0x18] sm:$0xff]
      %v336 = vld [vmem:[#allocation2 + $0x20] sm:$0xff]
      %v337 = vld [vmem:[#allocation2 + $0x28] sm:$0xff]
      %v338 = vld [vmem:[#allocation2 + $0x30] sm:$0xff]
      %v339 = vld [vmem:[#allocation2 + $0x38] sm:$0xff]
      %v340 = vld [vmem:[%s1] sm:$0x1]
      %v342 = vperm.slane %v340, 0
      %v344 = vmul.f32 %v332, %v342
      %v345 = vmul.f32 %v333, %v342
      %v346 = vmul.f32 %v334, %v342
      %v347 = vmul.f32 %v335, %v342
      %v348 = vmul.f32 %v336, %v342
      %v349 = vmul.f32 %v337, %v342
      %v350 = vmul.f32 %v338, %v342
      %v351 = vmul.f32 %v339, %v342
      %v352 = vld [vmem:[%s2] sm:$0x1]
      %v354 = vperm.slane %v352, 0
      %v356 = vadd.f32 %v344, %v354
      %v357 = vadd.f32 %v345, %v354
      %v358 = vadd.f32 %v346, %v354
      %v359 = vadd.f32 %v347, %v354
      %v360 = vadd.f32 %v348, %v354
      %v361 = vadd.f32 %v349, %v354
      %v362 = vadd.f32 %v350, %v354
      %v363 = vadd.f32 %v351, %v354
      %v364 = vmax.f32 %v356, 0.0
      %v365 = vmax.f32 %v357, 0.0
      %v366 = vmax.f32 %v358, 0.0
      %v367 = vmax.f32 %v359, 0.0
      %v368 = vmax.f32 %v360, 0.0
      %v369 = vmax.f32 %v361, 0.0
      %v370 = vmax.f32 %v362, 0.0
      %v371 = vmax.f32 %v363, 0.0
      %v372 = vpack.c.bf16 %v365, %v364
      %v373 = vpack.c.bf16 %v367, %v366
      %v374 = vpack.c.bf16 %v369, %v368
      %v375 = vpack.c.bf16 %v371, %v370
      %v376 = vld [vmem:[%s3] sm:$0xf]
      %v377 = vld [vmem:[%s3 + $0x4] sm:$0xf]
      %v378 = vld [vmem:[%s3 + $0x8] sm:$0xf]
      %v379 = vld [vmem:[%s3 + $0xc] sm:$0xf]
      %v384 = vunpack.c.l.b16 %v376
      %v385 = vunpack.c.l.b16 %v377
      %v386 = vunpack.c.l.b16 %v378
      %v387 = vunpack.c.l.b16 %v379
      %v388 = vpack.c.b16 %v385, %v384
      %v389 = vpack.c.b16 %v387, %v386
      %v393 = vsel %vm323, %v372, 0
      %v396 = vsel %vm323, %v373, 0
      %v399 = vsel %vm323, %v374, 0
      %v402 = vsel %vm323, %v375, 0
      %404 = vmatpush.bf16.msra.mxu0 0
      %405 = vmatpush.bf16.msra.mxu0 0
      %406 = vmatpush.bf16.msra.mxu0 0
      %407 = vmatpush.bf16.msra.mxu0 0
      %408 = vmatpush.bf16.msra.mxu0 0
      %409 = vmatpush.bf16.msra.mxu0 0
      %410 = vmatpush.bf16.msra.mxu0 %v389
      %411 = vmatpush.bf16.msra.mxu0 %v388
      %412 = vmatmul.bf16.gmra.mxu0 %v393
      %v413 = vpop.f32.mrf.mxu0
      %v414 = vadd.f32 0.0, %v413
      %v415 = vpop.f32.mrf.mxu0
      %v416 = vadd.f32 0.0, %v415
      %417 = vmatmul.bf16.gmra.mxu0 %v396
      %v418 = vpop.f32.mrf.mxu0
      %v419 = vadd.f32 0.0, %v418
      %v420 = vpop.f32.mrf.mxu0
      %v421 = vadd.f32 0.0, %v420
      %422 = vmatmul.bf16.gmra.mxu0 %v399
      %v423 = vpop.f32.mrf.mxu0
      %v424 = vadd.f32 0.0, %v423
      %v425 = vpop.f32.mrf.mxu0
      %v426 = vadd.f32 0.0, %v425
      %427 = vmatmul.bf16.gmra.mxu0 %v402
      %v428 = vpop.f32.mrf.mxu0
      %v429 = vadd.f32 0.0, %v428
      %v430 = vpop.f32.mrf.mxu0
      %v431 = vadd.f32 0.0, %v430
      %432 = vdwg.mxu0
      %v433 = vld [vmem:[%s4] sm:$0x1]
      %v435 = vperm.slane %v433, 0
      %v437 = vmul.f32 %v414, %v435
      %v438 = vmul.f32 %v416, %v435
      %v439 = vmul.f32 %v419, %v435
      %v440 = vmul.f32 %v421, %v435
      %v441 = vmul.f32 %v424, %v435
      %v442 = vmul.f32 %v426, %v435
      %v443 = vmul.f32 %v429, %v435
      %v444 = vmul.f32 %v431, %v435
      %v445 = vld [vmem:[%s5] sm:$0x1]
      %v447 = vperm.slane %v445, 0
      %v449 = vadd.f32 %v437, %v447
      %v450 = vadd.f32 %v438, %v447
      %v451 = vadd.f32 %v439, %v447
      %v452 = vadd.f32 %v440, %v447
      %v453 = vadd.f32 %v441, %v447
      %v454 = vadd.f32 %v442, %v447
      %v455 = vadd.f32 %v443, %v447
      %v456 = vadd.f32 %v444, %v447
      %v457 = vmax.f32 %v449, 0.0
      %v458 = vmax.f32 %v450, 0.0
      %v459 = vmax.f32 %v451, 0.0
      %v460 = vmax.f32 %v452, 0.0
      %v461 = vmax.f32 %v453, 0.0
      %v462 = vmax.f32 %v454, 0.0
      %v463 = vmax.f32 %v455, 0.0
      %v464 = vmax.f32 %v456, 0.0
      %v465 = vpack.c.bf16 %v458, %v457
      %v466 = vpack.c.bf16 %v460, %v459
      %v467 = vpack.c.bf16 %v462, %v461
      %v468 = vpack.c.bf16 %v464, %v463
      %v469 = vld [vmem:[%s7] sm:$0xf]
      %v470 = vld [vmem:[%s7 + $0x4] sm:$0xf]
      %v471 = vld [vmem:[%s7 + $0x8] sm:$0xf]
      %v472 = vld [vmem:[%s7 + $0xc] sm:$0xf]
      %v473 = vld [vmem:[%s7 + $0x10] sm:$0xf]
      %v474 = vld [vmem:[%s7 + $0x14] sm:$0xf]
      %v475 = vld [vmem:[%s7 + $0x18] sm:$0xf]
      %v476 = vld [vmem:[%s7 + $0x1c] sm:$0xf]
      %v485 = vunpack.c.l.b16 %v469
      %v486 = vunpack.c.l.b16 %v470
      %v487 = vunpack.c.l.b16 %v471
      %v488 = vunpack.c.l.b16 %v472
      %v489 = vunpack.c.l.b16 %v473
      %v490 = vunpack.c.l.b16 %v474
      %v491 = vunpack.c.l.b16 %v475
      %v492 = vunpack.c.l.b16 %v476
      %v493 = vpack.c.b16 %v486, %v485
      %v494 = vpack.c.b16 %v488, %v487
      %v495 = vpack.c.b16 %v490, %v489
      %v496 = vpack.c.b16 %v492, %v491
      %vm497 = vcmask 523264
      %v499 = vsel %vm497, %v493, 0
      %v502 = vsel %vm497, %v494, 0
      %v505 = vsel %vm497, %v495, 0
      %v508 = vsel %vm497, %v496, 0
      %510 = vmatpush.bf16.msra.mxu0 0
      %511 = vmatpush.bf16.msra.mxu0 0
      %512 = vmatpush.bf16.msra.mxu0 0
      %513 = vmatpush.bf16.msra.mxu0 0
      %514 = vmatpush.bf16.msra.mxu0 %v468
      %515 = vmatpush.bf16.msra.mxu0 %v467
      %516 = vmatpush.bf16.msra.mxu0 %v466
      %517 = vmatpush.bf16.msra.mxu0 %v465
      %518 = vmatmul.bf16.gmra.mxu0 %v499
      %v519 = vpop.f32.mrf.mxu0
      %v520 = vadd.f32 0.0, %v519
      %v521 = vpop.f32.mrf.mxu0
      %v522 = vadd.f32 0.0, %v521
      %523 = vmatmul.bf16.gmra.mxu0 %v502
      %v524 = vpop.f32.mrf.mxu0
      %v525 = vadd.f32 0.0, %v524
      %v526 = vpop.f32.mrf.mxu0
      %v527 = vadd.f32 0.0, %v526
      %528 = vmatmul.bf16.gmra.mxu0 %v505
      %v529 = vpop.f32.mrf.mxu0
      %v530 = vadd.f32 0.0, %v529
      %v531 = vpop.f32.mrf.mxu0
      %v532 = vadd.f32 0.0, %v531
      %533 = vmatmul.bf16.gmra.mxu0 %v508
      %v534 = vpop.f32.mrf.mxu0
      %v535 = vadd.f32 0.0, %v534
      %v536 = vpop.f32.mrf.mxu0
      %v537 = vadd.f32 0.0, %v536
      %538 = vdwg.mxu0
      %v539 = vpack.c.bf16 %v522, %v520
      %v540 = vpack.c.bf16 %v527, %v525
      %v541 = vpack.c.bf16 %v532, %v530
      %v542 = vpack.c.bf16 %v537, %v535
      %v543 = vld [vmem:[%s6] sm:$0xf]
      %v544 = vld [vmem:[%s6 + $0x4] sm:$0xf]
      %v545 = vld [vmem:[%s6 + $0x8] sm:$0xf]
      %v546 = vld [vmem:[%s6 + $0xc] sm:$0xf]
      %s547 = scalar_lea.vmem %s7, 32
      %v548 = vld [vmem:[%s547] sm:$0xf]
      %v549 = vld [vmem:[%s547 + $0x4] sm:$0xf]
      %v550 = vld [vmem:[%s547 + $0x8] sm:$0xf]
      %v551 = vld [vmem:[%s547 + $0xc] sm:$0xf]
      %v552 = vld [vmem:[%s547 + $0x10] sm:$0xf]
      %v553 = vld [vmem:[%s547 + $0x14] sm:$0xf]
      %v554 = vld [vmem:[%s547 + $0x18] sm:$0xf]
      %v555 = vld [vmem:[%s547 + $0x1c] sm:$0xf]
      %v564 = vunpack.c.l.b16 %v548
      %v565 = vunpack.c.l.b16 %v549
      %v566 = vunpack.c.l.b16 %v550
      %v567 = vunpack.c.l.b16 %v551
      %v568 = vunpack.c.l.b16 %v552
      %v569 = vunpack.c.l.b16 %v553
      %v570 = vunpack.c.l.b16 %v554
      %v571 = vunpack.c.l.b16 %v555
      %v572 = vpack.c.b16 %v565, %v564
      %v573 = vpack.c.b16 %v567, %v566
      %v574 = vpack.c.b16 %v569, %v568
      %v575 = vpack.c.b16 %v571, %v570
      %v577 = vsel %vm497, %v572, 0
      %v580 = vsel %vm497, %v573, 0
      %v583 = vsel %vm497, %v574, 0
      %v586 = vsel %vm497, %v575, 0
      %588 = vmatpush.bf16.msra.mxu0 0
      %589 = vmatpush.bf16.msra.mxu0 0
      %590 = vmatpush.bf16.msra.mxu0 0
      %591 = vmatpush.bf16.msra.mxu0 0
      %592 = vmatpush.bf16.msra.mxu0 %v468
      %593 = vmatpush.bf16.msra.mxu0 %v467
      %594 = vmatpush.bf16.msra.mxu0 %v466
      %595 = vmatpush.bf16.msra.mxu0 %v465
      %596 = vmatmul.bf16.gmra.mxu0 %v577
      %v597 = vpop.f32.mrf.mxu0
      %v598 = vadd.f32 0.0, %v597
      %v599 = vpop.f32.mrf.mxu0
      %v600 = vadd.f32 0.0, %v599
      %601 = vmatmul.bf16.gmra.mxu0 %v580
      %v602 = vpop.f32.mrf.mxu0
      %v603 = vadd.f32 0.0, %v602
      %v604 = vpop.f32.mrf.mxu0
      %v605 = vadd.f32 0.0, %v604
      %606 = vmatmul.bf16.gmra.mxu0 %v583
      %v607 = vpop.f32.mrf.mxu0
      %v608 = vadd.f32 0.0, %v607
      %v609 = vpop.f32.mrf.mxu0
      %v610 = vadd.f32 0.0, %v609
      %611 = vmatmul.bf16.gmra.mxu0 %v586
      %v612 = vpop.f32.mrf.mxu0
      %v613 = vadd.f32 0.0, %v612
      %v614 = vpop.f32.mrf.mxu0
      %v615 = vadd.f32 0.0, %v614
      %616 = vdwg.mxu0
      %v617 = vpack.c.bf16 %v600, %v598
      %v618 = vpack.c.bf16 %v605, %v603
      %v619 = vpack.c.bf16 %v610, %v608
      %v620 = vpack.c.bf16 %v615, %v613
      %s621 = scalar_lea.vmem %s6, 16
      %v622 = vld [vmem:[%s621] sm:$0xf]
      %v623 = vld [vmem:[%s621 + $0x4] sm:$0xf]
      %v624 = vld [vmem:[%s621 + $0x8] sm:$0xf]
      %v625 = vld [vmem:[%s621 + $0xc] sm:$0xf]
      %v630 = vunpack.c.l.b16 %v622
      %v631 = vunpack.c.l.b16 %v623
      %v632 = vunpack.c.l.b16 %v624
      %v633 = vunpack.c.l.b16 %v625
      %v634 = vpack.c.b16 %v631, %v630
      %v635 = vpack.c.b16 %v633, %v632
      %v639 = vsel %vm323, %v617, 0
      %v642 = vsel %vm323, %v618, 0
      %v645 = vsel %vm323, %v619, 0
      %v648 = vsel %vm323, %v620, 0
      %650 = vmatpush.bf16.msra.mxu0 0
      %651 = vmatpush.bf16.msra.mxu0 0
      %652 = vmatpush.bf16.msra.mxu0 0
      %653 = vmatpush.bf16.msra.mxu0 0
      %654 = vmatpush.bf16.msra.mxu0 0
      %655 = vmatpush.bf16.msra.mxu0 0
      %656 = vmatpush.bf16.msra.mxu0 %v635
      %657 = vmatpush.bf16.msra.mxu0 %v634
      %658 = vmatmul.bf16.gmra.mxu0 %v639
      %v659 = vpop.f32.mrf.mxu0
      %v660 = vadd.f32 0.0, %v659
      %v661 = vpop.f32.mrf.mxu0
      %v662 = vadd.f32 0.0, %v661
      %663 = vmatmul.bf16.gmra.mxu0 %v642
      %v664 = vpop.f32.mrf.mxu0
      %v665 = vadd.f32 0.0, %v664
      %v666 = vpop.f32.mrf.mxu0
      %v667 = vadd.f32 0.0, %v666
      %668 = vmatmul.bf16.gmra.mxu0 %v645
      %v669 = vpop.f32.mrf.mxu0
      %v670 = vadd.f32 0.0, %v669
      %v671 = vpop.f32.mrf.mxu0
      %v672 = vadd.f32 0.0, %v671
      %673 = vmatmul.bf16.gmra.mxu0 %v648
      %v674 = vpop.f32.mrf.mxu0
      %v675 = vadd.f32 0.0, %v674
      %v676 = vpop.f32.mrf.mxu0
      %v677 = vadd.f32 0.0, %v676
      %678 = vdwg.mxu0
      %v683 = vunpack.c.l.b16 %v543
      %v684 = vunpack.c.l.b16 %v544
      %v685 = vunpack.c.l.b16 %v545
      %v686 = vunpack.c.l.b16 %v546
      %v687 = vpack.c.b16 %v684, %v683
      %v688 = vpack.c.b16 %v686, %v685
      %v692 = vsel %vm323, %v539, 0
      %v695 = vsel %vm323, %v540, 0
      %v698 = vsel %vm323, %v541, 0
      %v701 = vsel %vm323, %v542, 0
      %703 = vmatpush.bf16.msra.mxu0 0
      %704 = vmatpush.bf16.msra.mxu0 0
      %705 = vmatpush.bf16.msra.mxu0 0
      %706 = vmatpush.bf16.msra.mxu0 0
      %707 = vmatpush.bf16.msra.mxu0 0
      %708 = vmatpush.bf16.msra.mxu0 0
      %709 = vmatpush.bf16.msra.mxu0 %v688
      %710 = vmatpush.bf16.msra.mxu0 %v687
      %711 = vmatmul.bf16.gmra.mxu0 %v692
      %v712 = vpop.f32.mrf.mxu0
      %v713 = vadd.f32 %v660, %v712
      %v714 = vpop.f32.mrf.mxu0
      %v715 = vadd.f32 %v662, %v714
      %716 = vmatmul.bf16.gmra.mxu0 %v695
      %v717 = vpop.f32.mrf.mxu0
      %v718 = vadd.f32 %v665, %v717
      %v719 = vpop.f32.mrf.mxu0
      %v720 = vadd.f32 %v667, %v719
      %721 = vmatmul.bf16.gmra.mxu0 %v698
      %v722 = vpop.f32.mrf.mxu0
      %v723 = vadd.f32 %v670, %v722
      %v724 = vpop.f32.mrf.mxu0
      %v725 = vadd.f32 %v672, %v724
      %726 = vmatmul.bf16.gmra.mxu0 %v701
      %v727 = vpop.f32.mrf.mxu0
      %v728 = vadd.f32 %v675, %v727
      %v729 = vpop.f32.mrf.mxu0
      %v730 = vadd.f32 %v677, %v729
      %731 = vdwg.mxu0
      %s732 = scalar_lea.vmem %s7, 64
      %v733 = vld [vmem:[%s732] sm:$0xf]
      %v734 = vld [vmem:[%s732 + $0x4] sm:$0xf]
      %v735 = vld [vmem:[%s732 + $0x8] sm:$0xf]
      %v736 = vld [vmem:[%s732 + $0xc] sm:$0xf]
      %v737 = vld [vmem:[%s732 + $0x10] sm:$0xf]
      %v738 = vld [vmem:[%s732 + $0x14] sm:$0xf]
      %v739 = vld [vmem:[%s732 + $0x18] sm:$0xf]
      %v740 = vld [vmem:[%s732 + $0x1c] sm:$0xf]
      %v749 = vunpack.c.l.b16 %v733
      %v750 = vunpack.c.l.b16 %v734
      %v751 = vunpack.c.l.b16 %v735
      %v752 = vunpack.c.l.b16 %v736
      %v753 = vunpack.c.l.b16 %v737
      %v754 = vunpack.c.l.b16 %v738
      %v755 = vunpack.c.l.b16 %v739
      %v756 = vunpack.c.l.b16 %v740
      %v757 = vpack.c.b16 %v750, %v749
      %v758 = vpack.c.b16 %v752, %v751
      %v759 = vpack.c.b16 %v754, %v753
      %v760 = vpack.c.b16 %v756, %v755
      %v762 = vsel %vm497, %v757, 0
      %v765 = vsel %vm497, %v758, 0
      %v768 = vsel %vm497, %v759, 0
      %v771 = vsel %vm497, %v760, 0
      %773 = vmatpush.bf16.msra.mxu0 0
      %774 = vmatpush.bf16.msra.mxu0 0
      %775 = vmatpush.bf16.msra.mxu0 0
      %776 = vmatpush.bf16.msra.mxu0 0
      %777 = vmatpush.bf16.msra.mxu0 %v468
      %778 = vmatpush.bf16.msra.mxu0 %v467
      %779 = vmatpush.bf16.msra.mxu0 %v466
      %780 = vmatpush.bf16.msra.mxu0 %v465
      %781 = vmatmul.bf16.gmra.mxu0 %v762
      %v782 = vpop.f32.mrf.mxu0
      %v783 = vadd.f32 0.0, %v782
      %v784 = vpop.f32.mrf.mxu0
      %v785 = vadd.f32 0.0, %v784
      %786 = vmatmul.bf16.gmra.mxu0 %v765
      %v787 = vpop.f32.mrf.mxu0
      %v788 = vadd.f32 0.0, %v787
      %v789 = vpop.f32.mrf.mxu0
      %v790 = vadd.f32 0.0, %v789
      %791 = vmatmul.bf16.gmra.mxu0 %v768
      %v792 = vpop.f32.mrf.mxu0
      %v793 = vadd.f32 0.0, %v792
      %v794 = vpop.f32.mrf.mxu0
      %v795 = vadd.f32 0.0, %v794
      %796 = vmatmul.bf16.gmra.mxu0 %v771
      %v797 = vpop.f32.mrf.mxu0
      %v798 = vadd.f32 0.0, %v797
      %v799 = vpop.f32.mrf.mxu0
      %v800 = vadd.f32 0.0, %v799
      %801 = vdwg.mxu0
      %v802 = vpack.c.bf16 %v785, %v783
      %v803 = vpack.c.bf16 %v790, %v788
      %v804 = vpack.c.bf16 %v795, %v793
      %v805 = vpack.c.bf16 %v800, %v798
      %s806 = scalar_lea.vmem %s6, 32
      %v807 = vld [vmem:[%s806] sm:$0xf]
      %v808 = vld [vmem:[%s806 + $0x4] sm:$0xf]
      %v809 = vld [vmem:[%s806 + $0x8] sm:$0xf]
      %v810 = vld [vmem:[%s806 + $0xc] sm:$0xf]
      %v815 = vunpack.c.l.b16 %v807
      %v816 = vunpack.c.l.b16 %v808
      %v817 = vunpack.c.l.b16 %v809
      %v818 = vunpack.c.l.b16 %v810
      %v819 = vpack.c.b16 %v816, %v815
      %v820 = vpack.c.b16 %v818, %v817
      %v824 = vsel %vm323, %v802, 0
      %v827 = vsel %vm323, %v803, 0
      %v830 = vsel %vm323, %v804, 0
      %v833 = vsel %vm323, %v805, 0
      %835 = vmatpush.bf16.msra.mxu0 0
      %836 = vmatpush.bf16.msra.mxu0 0
      %837 = vmatpush.bf16.msra.mxu0 0
      %838 = vmatpush.bf16.msra.mxu0 0
      %839 = vmatpush.bf16.msra.mxu0 0
      %840 = vmatpush.bf16.msra.mxu0 0
      %841 = vmatpush.bf16.msra.mxu0 %v820
      %842 = vmatpush.bf16.msra.mxu0 %v819
      %843 = vmatmul.bf16.gmra.mxu0 %v824
      %v844 = vpop.f32.mrf.mxu0
      %v845 = vadd.f32 0.0, %v844
      %v846 = vpop.f32.mrf.mxu0
      %v847 = vadd.f32 0.0, %v846
      %848 = vmatmul.bf16.gmra.mxu0 %v827
      %v849 = vpop.f32.mrf.mxu0
      %v850 = vadd.f32 0.0, %v849
      %v851 = vpop.f32.mrf.mxu0
      %v852 = vadd.f32 0.0, %v851
      %853 = vmatmul.bf16.gmra.mxu0 %v830
      %v854 = vpop.f32.mrf.mxu0
      %v855 = vadd.f32 0.0, %v854
      %v856 = vpop.f32.mrf.mxu0
      %v857 = vadd.f32 0.0, %v856
      %858 = vmatmul.bf16.gmra.mxu0 %v833
      %v859 = vpop.f32.mrf.mxu0
      %v860 = vadd.f32 0.0, %v859
      %v861 = vpop.f32.mrf.mxu0
      %v862 = vadd.f32 0.0, %v861
      %863 = vdwg.mxu0
      %v864 = vadd.f32 %v713, %v845
      %v865 = vadd.f32 %v715, %v847
      %v866 = vadd.f32 %v718, %v850
      %v867 = vadd.f32 %v720, %v852
      %v868 = vadd.f32 %v723, %v855
      %v869 = vadd.f32 %v725, %v857
      %v870 = vadd.f32 %v728, %v860
      %v871 = vadd.f32 %v730, %v862
      %s872 = scalar_lea.vmem %s7, 96
      %v873 = vld [vmem:[%s872] sm:$0xf]
      %v874 = vld [vmem:[%s872 + $0x4] sm:$0xf]
      %v875 = vld [vmem:[%s872 + $0x8] sm:$0xf]
      %v876 = vld [vmem:[%s872 + $0xc] sm:$0xf]
      %v877 = vld [vmem:[%s872 + $0x10] sm:$0xf]
      %v878 = vld [vmem:[%s872 + $0x14] sm:$0xf]
      %v879 = vld [vmem:[%s872 + $0x18] sm:$0xf]
      %v880 = vld [vmem:[%s872 + $0x1c] sm:$0xf]
      %v889 = vunpack.c.l.b16 %v873
      %v890 = vunpack.c.l.b16 %v874
      %v891 = vunpack.c.l.b16 %v875
      %v892 = vunpack.c.l.b16 %v876
      %v893 = vunpack.c.l.b16 %v877
      %v894 = vunpack.c.l.b16 %v878
      %v895 = vunpack.c.l.b16 %v879
      %v896 = vunpack.c.l.b16 %v880
      %v897 = vpack.c.b16 %v890, %v889
      %v898 = vpack.c.b16 %v892, %v891
      %v899 = vpack.c.b16 %v894, %v893
      %v900 = vpack.c.b16 %v896, %v895
      %v902 = vsel %vm497, %v897, 0
      %v905 = vsel %vm497, %v898, 0
      %v908 = vsel %vm497, %v899, 0
      %v911 = vsel %vm497, %v900, 0
      %913 = vmatpush.bf16.msra.mxu0 0
      %914 = vmatpush.bf16.msra.mxu0 0
      %915 = vmatpush.bf16.msra.mxu0 0
      %916 = vmatpush.bf16.msra.mxu0 0
      %917 = vmatpush.bf16.msra.mxu0 %v468
      %918 = vmatpush.bf16.msra.mxu0 %v467
      %919 = vmatpush.bf16.msra.mxu0 %v466
      %920 = vmatpush.bf16.msra.mxu0 %v465
      %921 = vmatmul.bf16.gmra.mxu0 %v902
      %v922 = vpop.f32.mrf.mxu0
      %v923 = vadd.f32 0.0, %v922
      %v924 = vpop.f32.mrf.mxu0
      %v925 = vadd.f32 0.0, %v924
      %926 = vmatmul.bf16.gmra.mxu0 %v905
      %v927 = vpop.f32.mrf.mxu0
      %v928 = vadd.f32 0.0, %v927
      %v929 = vpop.f32.mrf.mxu0
      %v930 = vadd.f32 0.0, %v929
      %931 = vmatmul.bf16.gmra.mxu0 %v908
      %v932 = vpop.f32.mrf.mxu0
      %v933 = vadd.f32 0.0, %v932
      %v934 = vpop.f32.mrf.mxu0
      %v935 = vadd.f32 0.0, %v934
      %936 = vmatmul.bf16.gmra.mxu0 %v911
      %v937 = vpop.f32.mrf.mxu0
      %v938 = vadd.f32 0.0, %v937
      %v939 = vpop.f32.mrf.mxu0
      %v940 = vadd.f32 0.0, %v939
      %941 = vdwg.mxu0
      %v942 = vpack.c.bf16 %v925, %v923
      %v943 = vpack.c.bf16 %v930, %v928
      %v944 = vpack.c.bf16 %v935, %v933
      %v945 = vpack.c.bf16 %v940, %v938
      %s946 = scalar_lea.vmem %s6, 48
      %v947 = vld [vmem:[%s946] sm:$0xf]
      %v948 = vld [vmem:[%s946 + $0x4] sm:$0xf]
      %v949 = vld [vmem:[%s946 + $0x8] sm:$0xf]
      %v950 = vld [vmem:[%s946 + $0xc] sm:$0xf]
      %v955 = vunpack.c.l.b16 %v947
      %v956 = vunpack.c.l.b16 %v948
      %v957 = vunpack.c.l.b16 %v949
      %v958 = vunpack.c.l.b16 %v950
      %v959 = vpack.c.b16 %v956, %v955
      %v960 = vpack.c.b16 %v958, %v957
      %v964 = vsel %vm323, %v942, 0
      %v967 = vsel %vm323, %v943, 0
      %v970 = vsel %vm323, %v944, 0
      %v973 = vsel %vm323, %v945, 0
      %975 = vmatpush.bf16.msra.mxu0 0
      %976 = vmatpush.bf16.msra.mxu0 0
      %977 = vmatpush.bf16.msra.mxu0 0
      %978 = vmatpush.bf16.msra.mxu0 0
      %979 = vmatpush.bf16.msra.mxu0 0
      %980 = vmatpush.bf16.msra.mxu0 0
      %981 = vmatpush.bf16.msra.mxu0 %v960
      %982 = vmatpush.bf16.msra.mxu0 %v959
      %983 = vmatmul.bf16.gmra.mxu0 %v964
      %v984 = vpop.f32.mrf.mxu0
      %v985 = vadd.f32 0.0, %v984
      %v986 = vpop.f32.mrf.mxu0
      %v987 = vadd.f32 0.0, %v986
      %988 = vmatmul.bf16.gmra.mxu0 %v967
      %v989 = vpop.f32.mrf.mxu0
      %v990 = vadd.f32 0.0, %v989
      %v991 = vpop.f32.mrf.mxu0
      %v992 = vadd.f32 0.0, %v991
      %993 = vmatmul.bf16.gmra.mxu0 %v970
      %v994 = vpop.f32.mrf.mxu0
      %v995 = vadd.f32 0.0, %v994
      %v996 = vpop.f32.mrf.mxu0
      %v997 = vadd.f32 0.0, %v996
      %998 = vmatmul.bf16.gmra.mxu0 %v973
      %v999 = vpop.f32.mrf.mxu0
      %v1000 = vadd.f32 0.0, %v999
      %v1001 = vpop.f32.mrf.mxu0
      %v1002 = vadd.f32 0.0, %v1001
      %1003 = vdwg.mxu0
      %v1004 = vadd.f32 %v864, %v985
      %v1005 = vadd.f32 %v865, %v987
      %v1006 = vadd.f32 %v866, %v990
      %v1007 = vadd.f32 %v867, %v992
      %v1008 = vadd.f32 %v868, %v995
      %v1009 = vadd.f32 %v869, %v997
      %v1010 = vadd.f32 %v870, %v1000
      %v1011 = vadd.f32 %v871, %v1002
      %s1012 = scalar_lea.vmem %s7, 128
      %v1013 = vld [vmem:[%s1012] sm:$0xf]
      %v1014 = vld [vmem:[%s1012 + $0x4] sm:$0xf]
      %v1015 = vld [vmem:[%s1012 + $0x8] sm:$0xf]
      %v1016 = vld [vmem:[%s1012 + $0xc] sm:$0xf]
      %v1017 = vld [vmem:[%s1012 + $0x10] sm:$0xf]
      %v1018 = vld [vmem:[%s1012 + $0x14] sm:$0xf]
      %v1019 = vld [vmem:[%s1012 + $0x18] sm:$0xf]
      %v1020 = vld [vmem:[%s1012 + $0x1c] sm:$0xf]
      %v1029 = vunpack.c.l.b16 %v1013
      %v1030 = vunpack.c.l.b16 %v1014
      %v1031 = vunpack.c.l.b16 %v1015
      %v1032 = vunpack.c.l.b16 %v1016
      %v1033 = vunpack.c.l.b16 %v1017
      %v1034 = vunpack.c.l.b16 %v1018
      %v1035 = vunpack.c.l.b16 %v1019
      %v1036 = vunpack.c.l.b16 %v1020
      %v1037 = vpack.c.b16 %v1030, %v1029
      %v1038 = vpack.c.b16 %v1032, %v1031
      %v1039 = vpack.c.b16 %v1034, %v1033
      %v1040 = vpack.c.b16 %v1036, %v1035
      %v1042 = vsel %vm497, %v1037, 0
      %v1045 = vsel %vm497, %v1038, 0
      %v1048 = vsel %vm497, %v1039, 0
      %v1051 = vsel %vm497, %v1040, 0
      %1053 = vmatpush.bf16.msra.mxu0 0
      %1054 = vmatpush.bf16.msra.mxu0 0
      %1055 = vmatpush.bf16.msra.mxu0 0
      %1056 = vmatpush.bf16.msra.mxu0 0
      %1057 = vmatpush.bf16.msra.mxu0 %v468
      %1058 = vmatpush.bf16.msra.mxu0 %v467
      %1059 = vmatpush.bf16.msra.mxu0 %v466
      %1060 = vmatpush.bf16.msra.mxu0 %v465
      %1061 = vmatmul.bf16.gmra.mxu0 %v1042
      %v1062 = vpop.f32.mrf.mxu0
      %v1063 = vadd.f32 0.0, %v1062
      %v1064 = vpop.f32.mrf.mxu0
      %v1065 = vadd.f32 0.0, %v1064
      %1066 = vmatmul.bf16.gmra.mxu0 %v1045
      %v1067 = vpop.f32.mrf.mxu0
      %v1068 = vadd.f32 0.0, %v1067
      %v1069 = vpop.f32.mrf.mxu0
      %v1070 = vadd.f32 0.0, %v1069
      %1071 = vmatmul.bf16.gmra.mxu0 %v1048
      %v1072 = vpop.f32.mrf.mxu0
      %v1073 = vadd.f32 0.0, %v1072
      %v1074 = vpop.f32.mrf.mxu0
      %v1075 = vadd.f32 0.0, %v1074
      %1076 = vmatmul.bf16.gmra.mxu0 %v1051
      %v1077 = vpop.f32.mrf.mxu0
      %v1078 = vadd.f32 0.0, %v1077
      %v1079 = vpop.f32.mrf.mxu0
      %v1080 = vadd.f32 0.0, %v1079
      %1081 = vdwg.mxu0
      %v1082 = vpack.c.bf16 %v1065, %v1063
      %v1083 = vpack.c.bf16 %v1070, %v1068
      %v1084 = vpack.c.bf16 %v1075, %v1073
      %v1085 = vpack.c.bf16 %v1080, %v1078
      %s1086 = scalar_lea.vmem %s6, 64
      %v1087 = vld [vmem:[%s1086] sm:$0xf]
      %v1088 = vld [vmem:[%s1086 + $0x4] sm:$0xf]
      %v1089 = vld [vmem:[%s1086 + $0x8] sm:$0xf]
      %v1090 = vld [vmem:[%s1086 + $0xc] sm:$0xf]
      %v1095 = vunpack.c.l.b16 %v1087
      %v1096 = vunpack.c.l.b16 %v1088
      %v1097 = vunpack.c.l.b16 %v1089
      %v1098 = vunpack.c.l.b16 %v1090
      %v1099 = vpack.c.b16 %v1096, %v1095
      %v1100 = vpack.c.b16 %v1098, %v1097
      %v1104 = vsel %vm323, %v1082, 0
      %v1107 = vsel %vm323, %v1083, 0
      %v1110 = vsel %vm323, %v1084, 0
      %v1113 = vsel %vm323, %v1085, 0
      %1115 = vmatpush.bf16.msra.mxu0 0
      %1116 = vmatpush.bf16.msra.mxu0 0
      %1117 = vmatpush.bf16.msra.mxu0 0
      %1118 = vmatpush.bf16.msra.mxu0 0
      %1119 = vmatpush.bf16.msra.mxu0 0
      %1120 = vmatpush.bf16.msra.mxu0 0
      %1121 = vmatpush.bf16.msra.mxu0 %v1100
      %1122 = vmatpush.bf16.msra.mxu0 %v1099
      %1123 = vmatmul.bf16.gmra.mxu0 %v1104
      %v1124 = vpop.f32.mrf.mxu0
      %v1125 = vadd.f32 0.0, %v1124
      %v1126 = vpop.f32.mrf.mxu0
      %v1127 = vadd.f32 0.0, %v1126
      %1128 = vmatmul.bf16.gmra.mxu0 %v1107
      %v1129 = vpop.f32.mrf.mxu0
      %v1130 = vadd.f32 0.0, %v1129
      %v1131 = vpop.f32.mrf.mxu0
      %v1132 = vadd.f32 0.0, %v1131
      %1133 = vmatmul.bf16.gmra.mxu0 %v1110
      %v1134 = vpop.f32.mrf.mxu0
      %v1135 = vadd.f32 0.0, %v1134
      %v1136 = vpop.f32.mrf.mxu0
      %v1137 = vadd.f32 0.0, %v1136
      %1138 = vmatmul.bf16.gmra.mxu0 %v1113
      %v1139 = vpop.f32.mrf.mxu0
      %v1140 = vadd.f32 0.0, %v1139
      %v1141 = vpop.f32.mrf.mxu0
      %v1142 = vadd.f32 0.0, %v1141
      %1143 = vdwg.mxu0
      %v1144 = vadd.f32 %v1004, %v1125
      %v1145 = vadd.f32 %v1005, %v1127
      %v1146 = vadd.f32 %v1006, %v1130
      %v1147 = vadd.f32 %v1007, %v1132
      %v1148 = vadd.f32 %v1008, %v1135
      %v1149 = vadd.f32 %v1009, %v1137
      %v1150 = vadd.f32 %v1010, %v1140
      %v1151 = vadd.f32 %v1011, %v1142
      %s1152 = scalar_lea.vmem %s7, 160
      %v1153 = vld [vmem:[%s1152] sm:$0xf]
      %v1154 = vld [vmem:[%s1152 + $0x4] sm:$0xf]
      %v1155 = vld [vmem:[%s1152 + $0x8] sm:$0xf]
      %v1156 = vld [vmem:[%s1152 + $0xc] sm:$0xf]
      %v1157 = vld [vmem:[%s1152 + $0x10] sm:$0xf]
      %v1158 = vld [vmem:[%s1152 + $0x14] sm:$0xf]
      %v1159 = vld [vmem:[%s1152 + $0x18] sm:$0xf]
      %v1160 = vld [vmem:[%s1152 + $0x1c] sm:$0xf]
      %v1169 = vunpack.c.l.b16 %v1153
      %v1170 = vunpack.c.l.b16 %v1154
      %v1171 = vunpack.c.l.b16 %v1155
      %v1172 = vunpack.c.l.b16 %v1156
      %v1173 = vunpack.c.l.b16 %v1157
      %v1174 = vunpack.c.l.b16 %v1158
      %v1175 = vunpack.c.l.b16 %v1159
      %v1176 = vunpack.c.l.b16 %v1160
      %v1177 = vpack.c.b16 %v1170, %v1169
      %v1178 = vpack.c.b16 %v1172, %v1171
      %v1179 = vpack.c.b16 %v1174, %v1173
      %v1180 = vpack.c.b16 %v1176, %v1175
      %v1182 = vsel %vm497, %v1177, 0
      %v1185 = vsel %vm497, %v1178, 0
      %v1188 = vsel %vm497, %v1179, 0
      %v1191 = vsel %vm497, %v1180, 0
      %1193 = vmatpush.bf16.msra.mxu0 0
      %1194 = vmatpush.bf16.msra.mxu0 0
      %1195 = vmatpush.bf16.msra.mxu0 0
      %1196 = vmatpush.bf16.msra.mxu0 0
      %1197 = vmatpush.bf16.msra.mxu0 %v468
      %1198 = vmatpush.bf16.msra.mxu0 %v467
      %1199 = vmatpush.bf16.msra.mxu0 %v466
      %1200 = vmatpush.bf16.msra.mxu0 %v465
      %1201 = vmatmul.bf16.gmra.mxu0 %v1182
      %v1202 = vpop.f32.mrf.mxu0
      %v1203 = vadd.f32 0.0, %v1202
      %v1204 = vpop.f32.mrf.mxu0
      %v1205 = vadd.f32 0.0, %v1204
      %1206 = vmatmul.bf16.gmra.mxu0 %v1185
      %v1207 = vpop.f32.mrf.mxu0
      %v1208 = vadd.f32 0.0, %v1207
      %v1209 = vpop.f32.mrf.mxu0
      %v1210 = vadd.f32 0.0, %v1209
      %1211 = vmatmul.bf16.gmra.mxu0 %v1188
      %v1212 = vpop.f32.mrf.mxu0
      %v1213 = vadd.f32 0.0, %v1212
      %v1214 = vpop.f32.mrf.mxu0
      %v1215 = vadd.f32 0.0, %v1214
      %1216 = vmatmul.bf16.gmra.mxu0 %v1191
      %v1217 = vpop.f32.mrf.mxu0
      %v1218 = vadd.f32 0.0, %v1217
      %v1219 = vpop.f32.mrf.mxu0
      %v1220 = vadd.f32 0.0, %v1219
      %1221 = vdwg.mxu0
      %v1222 = vpack.c.bf16 %v1205, %v1203
      %v1223 = vpack.c.bf16 %v1210, %v1208
      %v1224 = vpack.c.bf16 %v1215, %v1213
      %v1225 = vpack.c.bf16 %v1220, %v1218
      %s1226 = scalar_lea.vmem %s6, 80
      %v1227 = vld [vmem:[%s1226] sm:$0xf]
      %v1228 = vld [vmem:[%s1226 + $0x4] sm:$0xf]
      %v1229 = vld [vmem:[%s1226 + $0x8] sm:$0xf]
      %v1230 = vld [vmem:[%s1226 + $0xc] sm:$0xf]
      %v1235 = vunpack.c.l.b16 %v1227
      %v1236 = vunpack.c.l.b16 %v1228
      %v1237 = vunpack.c.l.b16 %v1229
      %v1238 = vunpack.c.l.b16 %v1230
      %v1239 = vpack.c.b16 %v1236, %v1235
      %v1240 = vpack.c.b16 %v1238, %v1237
      %v1244 = vsel %vm323, %v1222, 0
      %v1247 = vsel %vm323, %v1223, 0
      %v1250 = vsel %vm323, %v1224, 0
      %v1253 = vsel %vm323, %v1225, 0
      %1255 = vmatpush.bf16.msra.mxu0 0
      %1256 = vmatpush.bf16.msra.mxu0 0
      %1257 = vmatpush.bf16.msra.mxu0 0
      %1258 = vmatpush.bf16.msra.mxu0 0
      %1259 = vmatpush.bf16.msra.mxu0 0
      %1260 = vmatpush.bf16.msra.mxu0 0
      %1261 = vmatpush.bf16.msra.mxu0 %v1240
      %1262 = vmatpush.bf16.msra.mxu0 %v1239
      %1263 = vmatmul.bf16.gmra.mxu0 %v1244
      %v1264 = vpop.f32.mrf.mxu0
      %v1265 = vadd.f32 0.0, %v1264
      %v1266 = vpop.f32.mrf.mxu0
      %v1267 = vadd.f32 0.0, %v1266
      %1268 = vmatmul.bf16.gmra.mxu0 %v1247
      %v1269 = vpop.f32.mrf.mxu0
      %v1270 = vadd.f32 0.0, %v1269
      %v1271 = vpop.f32.mrf.mxu0
      %v1272 = vadd.f32 0.0, %v1271
      %1273 = vmatmul.bf16.gmra.mxu0 %v1250
      %v1274 = vpop.f32.mrf.mxu0
      %v1275 = vadd.f32 0.0, %v1274
      %v1276 = vpop.f32.mrf.mxu0
      %v1277 = vadd.f32 0.0, %v1276
      %1278 = vmatmul.bf16.gmra.mxu0 %v1253
      %v1279 = vpop.f32.mrf.mxu0
      %v1280 = vadd.f32 0.0, %v1279
      %v1281 = vpop.f32.mrf.mxu0
      %v1282 = vadd.f32 0.0, %v1281
      %1283 = vdwg.mxu0
      %v1284 = vadd.f32 %v1144, %v1265
      %v1285 = vadd.f32 %v1145, %v1267
      %v1286 = vadd.f32 %v1146, %v1270
      %v1287 = vadd.f32 %v1147, %v1272
      %v1288 = vadd.f32 %v1148, %v1275
      %v1289 = vadd.f32 %v1149, %v1277
      %v1290 = vadd.f32 %v1150, %v1280
      %v1291 = vadd.f32 %v1151, %v1282
      %s1292 = scalar_lea.vmem %s7, 192
      %v1293 = vld [vmem:[%s1292] sm:$0xf]
      %v1294 = vld [vmem:[%s1292 + $0x4] sm:$0xf]
      %v1295 = vld [vmem:[%s1292 + $0x8] sm:$0xf]
      %v1296 = vld [vmem:[%s1292 + $0xc] sm:$0xf]
      %v1297 = vld [vmem:[%s1292 + $0x10] sm:$0xf]
      %v1298 = vld [vmem:[%s1292 + $0x14] sm:$0xf]
      %v1299 = vld [vmem:[%s1292 + $0x18] sm:$0xf]
      %v1300 = vld [vmem:[%s1292 + $0x1c] sm:$0xf]
      %v1309 = vunpack.c.l.b16 %v1293
      %v1310 = vunpack.c.l.b16 %v1294
      %v1311 = vunpack.c.l.b16 %v1295
      %v1312 = vunpack.c.l.b16 %v1296
      %v1313 = vunpack.c.l.b16 %v1297
      %v1314 = vunpack.c.l.b16 %v1298
      %v1315 = vunpack.c.l.b16 %v1299
      %v1316 = vunpack.c.l.b16 %v1300
      %v1317 = vpack.c.b16 %v1310, %v1309
      %v1318 = vpack.c.b16 %v1312, %v1311
      %v1319 = vpack.c.b16 %v1314, %v1313
      %v1320 = vpack.c.b16 %v1316, %v1315
      %v1322 = vsel %vm497, %v1317, 0
      %v1325 = vsel %vm497, %v1318, 0
      %v1328 = vsel %vm497, %v1319, 0
      %v1331 = vsel %vm497, %v1320, 0
      %1333 = vmatpush.bf16.msra.mxu0 0
      %1334 = vmatpush.bf16.msra.mxu0 0
      %1335 = vmatpush.bf16.msra.mxu0 0
      %1336 = vmatpush.bf16.msra.mxu0 0
      %1337 = vmatpush.bf16.msra.mxu0 %v468
      %1338 = vmatpush.bf16.msra.mxu0 %v467
      %1339 = vmatpush.bf16.msra.mxu0 %v466
      %1340 = vmatpush.bf16.msra.mxu0 %v465
      %1341 = vmatmul.bf16.gmra.mxu0 %v1322
      %v1342 = vpop.f32.mrf.mxu0
      %v1343 = vadd.f32 0.0, %v1342
      %v1344 = vpop.f32.mrf.mxu0
      %v1345 = vadd.f32 0.0, %v1344
      %1346 = vmatmul.bf16.gmra.mxu0 %v1325
      %v1347 = vpop.f32.mrf.mxu0
      %v1348 = vadd.f32 0.0, %v1347
      %v1349 = vpop.f32.mrf.mxu0
      %v1350 = vadd.f32 0.0, %v1349
      %1351 = vmatmul.bf16.gmra.mxu0 %v1328
      %v1352 = vpop.f32.mrf.mxu0
      %v1353 = vadd.f32 0.0, %v1352
      %v1354 = vpop.f32.mrf.mxu0
      %v1355 = vadd.f32 0.0, %v1354
      %1356 = vmatmul.bf16.gmra.mxu0 %v1331
      %v1357 = vpop.f32.mrf.mxu0
      %v1358 = vadd.f32 0.0, %v1357
      %v1359 = vpop.f32.mrf.mxu0
      %v1360 = vadd.f32 0.0, %v1359
      %1361 = vdwg.mxu0
      %v1362 = vpack.c.bf16 %v1345, %v1343
      %v1363 = vpack.c.bf16 %v1350, %v1348
      %v1364 = vpack.c.bf16 %v1355, %v1353
      %v1365 = vpack.c.bf16 %v1360, %v1358
      %s1366 = scalar_lea.vmem %s6, 96
      %v1367 = vld [vmem:[%s1366] sm:$0xf]
      %v1368 = vld [vmem:[%s1366 + $0x4] sm:$0xf]
      %v1369 = vld [vmem:[%s1366 + $0x8] sm:$0xf]
      %v1370 = vld [vmem:[%s1366 + $0xc] sm:$0xf]
      %v1375 = vunpack.c.l.b16 %v1367
      %v1376 = vunpack.c.l.b16 %v1368
      %v1377 = vunpack.c.l.b16 %v1369
      %v1378 = vunpack.c.l.b16 %v1370
      %v1379 = vpack.c.b16 %v1376, %v1375
      %v1380 = vpack.c.b16 %v1378, %v1377
      %v1384 = vsel %vm323, %v1362, 0
      %v1387 = vsel %vm323, %v1363, 0
      %v1390 = vsel %vm323, %v1364, 0
      %v1393 = vsel %vm323, %v1365, 0
      %1395 = vmatpush.bf16.msra.mxu0 0
      %1396 = vmatpush.bf16.msra.mxu0 0
      %1397 = vmatpush.bf16.msra.mxu0 0
      %1398 = vmatpush.bf16.msra.mxu0 0
      %1399 = vmatpush.bf16.msra.mxu0 0
      %1400 = vmatpush.bf16.msra.mxu0 0
      %1401 = vmatpush.bf16.msra.mxu0 %v1380
      %1402 = vmatpush.bf16.msra.mxu0 %v1379
      %1403 = vmatmul.bf16.gmra.mxu0 %v1384
      %v1404 = vpop.f32.mrf.mxu0
      %v1405 = vadd.f32 0.0, %v1404
      %v1406 = vpop.f32.mrf.mxu0
      %v1407 = vadd.f32 0.0, %v1406
      %1408 = vmatmul.bf16.gmra.mxu0 %v1387
      %v1409 = vpop.f32.mrf.mxu0
      %v1410 = vadd.f32 0.0, %v1409
      %v1411 = vpop.f32.mrf.mxu0
      %v1412 = vadd.f32 0.0, %v1411
      %1413 = vmatmul.bf16.gmra.mxu0 %v1390
      %v1414 = vpop.f32.mrf.mxu0
      %v1415 = vadd.f32 0.0, %v1414
      %v1416 = vpop.f32.mrf.mxu0
      %v1417 = vadd.f32 0.0, %v1416
      %1418 = vmatmul.bf16.gmra.mxu0 %v1393
      %v1419 = vpop.f32.mrf.mxu0
      %v1420 = vadd.f32 0.0, %v1419
      %v1421 = vpop.f32.mrf.mxu0
      %v1422 = vadd.f32 0.0, %v1421
      %1423 = vdwg.mxu0
      %v1424 = vadd.f32 %v1284, %v1405
      %v1425 = vadd.f32 %v1285, %v1407
      %v1426 = vadd.f32 %v1286, %v1410
      %v1427 = vadd.f32 %v1287, %v1412
      %v1428 = vadd.f32 %v1288, %v1415
      %v1429 = vadd.f32 %v1289, %v1417
      %v1430 = vadd.f32 %v1290, %v1420
      %v1431 = vadd.f32 %v1291, %v1422
      %s1432 = scalar_lea.vmem %s7, 224
      %v1433 = vld [vmem:[%s1432] sm:$0xf]
      %v1434 = vld [vmem:[%s1432 + $0x4] sm:$0xf]
      %v1435 = vld [vmem:[%s1432 + $0x8] sm:$0xf]
      %v1436 = vld [vmem:[%s1432 + $0xc] sm:$0xf]
      %v1437 = vld [vmem:[%s1432 + $0x10] sm:$0xf]
      %v1438 = vld [vmem:[%s1432 + $0x14] sm:$0xf]
      %v1439 = vld [vmem:[%s1432 + $0x18] sm:$0xf]
      %v1440 = vld [vmem:[%s1432 + $0x1c] sm:$0xf]
      %v1449 = vunpack.c.l.b16 %v1433
      %v1450 = vunpack.c.l.b16 %v1434
      %v1451 = vunpack.c.l.b16 %v1435
      %v1452 = vunpack.c.l.b16 %v1436
      %v1453 = vunpack.c.l.b16 %v1437
      %v1454 = vunpack.c.l.b16 %v1438
      %v1455 = vunpack.c.l.b16 %v1439
      %v1456 = vunpack.c.l.b16 %v1440
      %v1457 = vpack.c.b16 %v1450, %v1449
      %v1458 = vpack.c.b16 %v1452, %v1451
      %v1459 = vpack.c.b16 %v1454, %v1453
      %v1460 = vpack.c.b16 %v1456, %v1455
      %v1462 = vsel %vm497, %v1457, 0
      %v1465 = vsel %vm497, %v1458, 0
      %v1468 = vsel %vm497, %v1459, 0
      %v1471 = vsel %vm497, %v1460, 0
      %1473 = vmatpush.bf16.msra.mxu0 0
      %1474 = vmatpush.bf16.msra.mxu0 0
      %1475 = vmatpush.bf16.msra.mxu0 0
      %1476 = vmatpush.bf16.msra.mxu0 0
      %1477 = vmatpush.bf16.msra.mxu0 %v468
      %1478 = vmatpush.bf16.msra.mxu0 %v467
      %1479 = vmatpush.bf16.msra.mxu0 %v466
      %1480 = vmatpush.bf16.msra.mxu0 %v465
      %1481 = vmatmul.bf16.gmra.mxu0 %v1462
      %v1482 = vpop.f32.mrf.mxu0
      %v1483 = vadd.f32 0.0, %v1482
      %v1484 = vpop.f32.mrf.mxu0
      %v1485 = vadd.f32 0.0, %v1484
      %1486 = vmatmul.bf16.gmra.mxu0 %v1465
      %v1487 = vpop.f32.mrf.mxu0
      %v1488 = vadd.f32 0.0, %v1487
      %v1489 = vpop.f32.mrf.mxu0
      %v1490 = vadd.f32 0.0, %v1489
      %1491 = vmatmul.bf16.gmra.mxu0 %v1468
      %v1492 = vpop.f32.mrf.mxu0
      %v1493 = vadd.f32 0.0, %v1492
      %v1494 = vpop.f32.mrf.mxu0
      %v1495 = vadd.f32 0.0, %v1494
      %1496 = vmatmul.bf16.gmra.mxu0 %v1471
      %v1497 = vpop.f32.mrf.mxu0
      %v1498 = vadd.f32 0.0, %v1497
      %v1499 = vpop.f32.mrf.mxu0
      %v1500 = vadd.f32 0.0, %v1499
      %1501 = vdwg.mxu0
      %v1502 = vpack.c.bf16 %v1485, %v1483
      %v1503 = vpack.c.bf16 %v1490, %v1488
      %v1504 = vpack.c.bf16 %v1495, %v1493
      %v1505 = vpack.c.bf16 %v1500, %v1498
      %s1506 = scalar_lea.vmem %s6, 112
      %v1507 = vld [vmem:[%s1506] sm:$0xf]
      %v1508 = vld [vmem:[%s1506 + $0x4] sm:$0xf]
      %v1509 = vld [vmem:[%s1506 + $0x8] sm:$0xf]
      %v1510 = vld [vmem:[%s1506 + $0xc] sm:$0xf]
      %v1515 = vunpack.c.l.b16 %v1507
      %v1516 = vunpack.c.l.b16 %v1508
      %v1517 = vunpack.c.l.b16 %v1509
      %v1518 = vunpack.c.l.b16 %v1510
      %v1519 = vpack.c.b16 %v1516, %v1515
      %v1520 = vpack.c.b16 %v1518, %v1517
      %v1524 = vsel %vm323, %v1502, 0
      %v1527 = vsel %vm323, %v1503, 0
      %v1530 = vsel %vm323, %v1504, 0
      %v1533 = vsel %vm323, %v1505, 0
      %1535 = vmatpush.bf16.msra.mxu0 0
      %1536 = vmatpush.bf16.msra.mxu0 0
      %1537 = vmatpush.bf16.msra.mxu0 0
      %1538 = vmatpush.bf16.msra.mxu0 0
      %1539 = vmatpush.bf16.msra.mxu0 0
      %1540 = vmatpush.bf16.msra.mxu0 0
      %1541 = vmatpush.bf16.msra.mxu0 %v1520
      %1542 = vmatpush.bf16.msra.mxu0 %v1519
      %1543 = vmatmul.bf16.gmra.mxu0 %v1524
      %v1544 = vpop.f32.mrf.mxu0
      %v1545 = vadd.f32 0.0, %v1544
      %v1546 = vpop.f32.mrf.mxu0
      %v1547 = vadd.f32 0.0, %v1546
      %1548 = vmatmul.bf16.gmra.mxu0 %v1527
      %v1549 = vpop.f32.mrf.mxu0
      %v1550 = vadd.f32 0.0, %v1549
      %v1551 = vpop.f32.mrf.mxu0
      %v1552 = vadd.f32 0.0, %v1551
      %1553 = vmatmul.bf16.gmra.mxu0 %v1530
      %v1554 = vpop.f32.mrf.mxu0
      %v1555 = vadd.f32 0.0, %v1554
      %v1556 = vpop.f32.mrf.mxu0
      %v1557 = vadd.f32 0.0, %v1556
      %1558 = vmatmul.bf16.gmra.mxu0 %v1533
      %v1559 = vpop.f32.mrf.mxu0
      %v1560 = vadd.f32 0.0, %v1559
      %v1561 = vpop.f32.mrf.mxu0
      %v1562 = vadd.f32 0.0, %v1561
      %1563 = vdwg.mxu0
      %v1564 = vadd.f32 %v1424, %v1545
      %v1565 = vadd.f32 %v1425, %v1547
      %v1566 = vadd.f32 %v1426, %v1550
      %v1567 = vadd.f32 %v1427, %v1552
      %v1568 = vadd.f32 %v1428, %v1555
      %v1569 = vadd.f32 %v1429, %v1557
      %v1570 = vadd.f32 %v1430, %v1560
      %v1571 = vadd.f32 %v1431, %v1562
      %s1572 = scalar_lea.vmem %s7, 256
      %v1573 = vld [vmem:[%s1572] sm:$0xf]
      %v1574 = vld [vmem:[%s1572 + $0x4] sm:$0xf]
      %v1575 = vld [vmem:[%s1572 + $0x8] sm:$0xf]
      %v1576 = vld [vmem:[%s1572 + $0xc] sm:$0xf]
      %v1577 = vld [vmem:[%s1572 + $0x10] sm:$0xf]
      %v1578 = vld [vmem:[%s1572 + $0x14] sm:$0xf]
      %v1579 = vld [vmem:[%s1572 + $0x18] sm:$0xf]
      %v1580 = vld [vmem:[%s1572 + $0x1c] sm:$0xf]
      %v1589 = vunpack.c.l.b16 %v1573
      %v1590 = vunpack.c.l.b16 %v1574
      %v1591 = vunpack.c.l.b16 %v1575
      %v1592 = vunpack.c.l.b16 %v1576
      %v1593 = vunpack.c.l.b16 %v1577
      %v1594 = vunpack.c.l.b16 %v1578
      %v1595 = vunpack.c.l.b16 %v1579
      %v1596 = vunpack.c.l.b16 %v1580
      %v1597 = vpack.c.b16 %v1590, %v1589
      %v1598 = vpack.c.b16 %v1592, %v1591
      %v1599 = vpack.c.b16 %v1594, %v1593
      %v1600 = vpack.c.b16 %v1596, %v1595
      %v1602 = vsel %vm497, %v1597, 0
      %v1605 = vsel %vm497, %v1598, 0
      %v1608 = vsel %vm497, %v1599, 0
      %v1611 = vsel %vm497, %v1600, 0
      %1613 = vmatpush.bf16.msra.mxu0 0
      %1614 = vmatpush.bf16.msra.mxu0 0
      %1615 = vmatpush.bf16.msra.mxu0 0
      %1616 = vmatpush.bf16.msra.mxu0 0
      %1617 = vmatpush.bf16.msra.mxu0 %v468
      %1618 = vmatpush.bf16.msra.mxu0 %v467
      %1619 = vmatpush.bf16.msra.mxu0 %v466
      %1620 = vmatpush.bf16.msra.mxu0 %v465
      %1621 = vmatmul.bf16.gmra.mxu0 %v1602
      %v1622 = vpop.f32.mrf.mxu0
      %v1623 = vadd.f32 0.0, %v1622
      %v1624 = vpop.f32.mrf.mxu0
      %v1625 = vadd.f32 0.0, %v1624
      %1626 = vmatmul.bf16.gmra.mxu0 %v1605
      %v1627 = vpop.f32.mrf.mxu0
      %v1628 = vadd.f32 0.0, %v1627
      %v1629 = vpop.f32.mrf.mxu0
      %v1630 = vadd.f32 0.0, %v1629
      %1631 = vmatmul.bf16.gmra.mxu0 %v1608
      %v1632 = vpop.f32.mrf.mxu0
      %v1633 = vadd.f32 0.0, %v1632
      %v1634 = vpop.f32.mrf.mxu0
      %v1635 = vadd.f32 0.0, %v1634
      %1636 = vmatmul.bf16.gmra.mxu0 %v1611
      %v1637 = vpop.f32.mrf.mxu0
      %v1638 = vadd.f32 0.0, %v1637
      %v1639 = vpop.f32.mrf.mxu0
      %v1640 = vadd.f32 0.0, %v1639
      %1641 = vdwg.mxu0
      %v1642 = vpack.c.bf16 %v1625, %v1623
      %v1643 = vpack.c.bf16 %v1630, %v1628
      %v1644 = vpack.c.bf16 %v1635, %v1633
      %v1645 = vpack.c.bf16 %v1640, %v1638
      %s1646 = scalar_lea.vmem %s6, 128
      %v1647 = vld [vmem:[%s1646] sm:$0xf]
      %v1648 = vld [vmem:[%s1646 + $0x4] sm:$0xf]
      %v1649 = vld [vmem:[%s1646 + $0x8] sm:$0xf]
      %v1650 = vld [vmem:[%s1646 + $0xc] sm:$0xf]
      %v1655 = vunpack.c.l.b16 %v1647
      %v1656 = vunpack.c.l.b16 %v1648
      %v1657 = vunpack.c.l.b16 %v1649
      %v1658 = vunpack.c.l.b16 %v1650
      %v1659 = vpack.c.b16 %v1656, %v1655
      %v1660 = vpack.c.b16 %v1658, %v1657
      %v1664 = vsel %vm323, %v1642, 0
      %v1667 = vsel %vm323, %v1643, 0
      %v1670 = vsel %vm323, %v1644, 0
      %v1673 = vsel %vm323, %v1645, 0
      %1675 = vmatpush.bf16.msra.mxu0 0
      %1676 = vmatpush.bf16.msra.mxu0 0
      %1677 = vmatpush.bf16.msra.mxu0 0
      %1678 = vmatpush.bf16.msra.mxu0 0
      %1679 = vmatpush.bf16.msra.mxu0 0
      %1680 = vmatpush.bf16.msra.mxu0 0
      %1681 = vmatpush.bf16.msra.mxu0 %v1660
      %1682 = vmatpush.bf16.msra.mxu0 %v1659
      %1683 = vmatmul.bf16.gmra.mxu0 %v1664
      %v1684 = vpop.f32.mrf.mxu0
      %v1685 = vadd.f32 0.0, %v1684
      %v1686 = vpop.f32.mrf.mxu0
      %v1687 = vadd.f32 0.0, %v1686
      %1688 = vmatmul.bf16.gmra.mxu0 %v1667
      %v1689 = vpop.f32.mrf.mxu0
      %v1690 = vadd.f32 0.0, %v1689
      %v1691 = vpop.f32.mrf.mxu0
      %v1692 = vadd.f32 0.0, %v1691
      %1693 = vmatmul.bf16.gmra.mxu0 %v1670
      %v1694 = vpop.f32.mrf.mxu0
      %v1695 = vadd.f32 0.0, %v1694
      %v1696 = vpop.f32.mrf.mxu0
      %v1697 = vadd.f32 0.0, %v1696
      %1698 = vmatmul.bf16.gmra.mxu0 %v1673
      %v1699 = vpop.f32.mrf.mxu0
      %v1700 = vadd.f32 0.0, %v1699
      %v1701 = vpop.f32.mrf.mxu0
      %v1702 = vadd.f32 0.0, %v1701
      %1703 = vdwg.mxu0
      %v1704 = vadd.f32 %v1564, %v1685
      %v1705 = vadd.f32 %v1565, %v1687
      %v1706 = vadd.f32 %v1566, %v1690
      %v1707 = vadd.f32 %v1567, %v1692
      %v1708 = vadd.f32 %v1568, %v1695
      %v1709 = vadd.f32 %v1569, %v1697
      %v1710 = vadd.f32 %v1570, %v1700
      %v1711 = vadd.f32 %v1571, %v1702
      %1720 = vrot.lane.b32.xlu0 %v1704, 16
      %v1721 = vpop.permute.xlu0 %1720
      %1722 = vrot.lane.b32.xlu0 %v1705, 16
      %v1723 = vpop.permute.xlu0 %1722
      %1724 = vrot.lane.b32.xlu0 %v1706, 16
      %v1725 = vpop.permute.xlu0 %1724
      %1726 = vrot.lane.b32.xlu0 %v1707, 16
      %v1727 = vpop.permute.xlu0 %1726
      %1728 = vrot.lane.b32.xlu0 %v1708, 16
      %v1729 = vpop.permute.xlu0 %1728
      %1730 = vrot.lane.b32.xlu0 %v1709, 16
      %v1731 = vpop.permute.xlu0 %1730
      %1732 = vrot.lane.b32.xlu0 %v1710, 16
      %v1733 = vpop.permute.xlu0 %1732
      %1734 = vrot.lane.b32.xlu0 %v1711, 16
      %v1735 = vpop.permute.xlu0 %1734
      %vm1744 = vcmask 195712
      %1745 = vst.msk [vmem:[#allocation2] sm:$0xff] %vm1744, %v1721
      %1746 = vst.msk [vmem:[#allocation2 + $0x8] sm:$0xff] %vm1744, %v1723
      %1747 = vst.msk [vmem:[#allocation2 + $0x10] sm:$0xff] %vm1744, %v1725
      %1748 = vst.msk [vmem:[#allocation2 + $0x18] sm:$0xff] %vm1744, %v1727
      %1749 = vst.msk [vmem:[#allocation2 + $0x20] sm:$0xff] %vm1744, %v1729
      %1750 = vst.msk [vmem:[#allocation2 + $0x28] sm:$0xff] %vm1744, %v1731
      %1751 = vst.msk [vmem:[#allocation2 + $0x30] sm:$0xff] %vm1744, %v1733
      %1752 = vst.msk [vmem:[#allocation2 + $0x38] sm:$0xff] %vm1744, %v1735
      %v1753 = vld [vmem:[#allocation2] sm:$0xff]
      %v1754 = vld [vmem:[#allocation2 + $0x8] sm:$0xff]
      %v1755 = vld [vmem:[#allocation2 + $0x10] sm:$0xff]
      %v1756 = vld [vmem:[#allocation2 + $0x18] sm:$0xff]
      %v1757 = vld [vmem:[#allocation2 + $0x20] sm:$0xff]
      %v1758 = vld [vmem:[#allocation2 + $0x28] sm:$0xff]
      %v1759 = vld [vmem:[#allocation2 + $0x30] sm:$0xff]
      %v1760 = vld [vmem:[#allocation2 + $0x38] sm:$0xff]
      %s1761 = scalar_lea.vmem %s1, 1
      %v1762 = vld [vmem:[%s1761] sm:$0x1]
      %v1764 = vperm.slane %v1762, 0
      %v1766 = vmul.f32 %v1753, %v1764
      %v1767 = vmul.f32 %v1754, %v1764
      %v1768 = vmul.f32 %v1755, %v1764
      %v1769 = vmul.f32 %v1756, %v1764
      %v1770 = vmul.f32 %v1757, %v1764
      %v1771 = vmul.f32 %v1758, %v1764
      %v1772 = vmul.f32 %v1759, %v1764
      %v1773 = vmul.f32 %v1760, %v1764
      %s1774 = scalar_lea.vmem %s2, 1
      %v1775 = vld [vmem:[%s1774] sm:$0x1]
      %v1777 = vperm.slane %v1775, 0
      %v1779 = vadd.f32 %v1766, %v1777
      %v1780 = vadd.f32 %v1767, %v1777
      %v1781 = vadd.f32 %v1768, %v1777
      %v1782 = vadd.f32 %v1769, %v1777
      %v1783 = vadd.f32 %v1770, %v1777
      %v1784 = vadd.f32 %v1771, %v1777
      %v1785 = vadd.f32 %v1772, %v1777
      %v1786 = vadd.f32 %v1773, %v1777
      %v1787 = vmax.f32 %v1779, 0.0
      %v1788 = vmax.f32 %v1780, 0.0
      %v1789 = vmax.f32 %v1781, 0.0
      %v1790 = vmax.f32 %v1782, 0.0
      %v1791 = vmax.f32 %v1783, 0.0
      %v1792 = vmax.f32 %v1784, 0.0
      %v1793 = vmax.f32 %v1785, 0.0
      %v1794 = vmax.f32 %v1786, 0.0
      %v1795 = vpack.c.bf16 %v1788, %v1787
      %v1796 = vpack.c.bf16 %v1790, %v1789
      %v1797 = vpack.c.bf16 %v1792, %v1791
      %v1798 = vpack.c.bf16 %v1794, %v1793
      %s1799 = scalar_lea.vmem %s3, 16
      %v1800 = vld [vmem:[%s1799] sm:$0xf]
      %v1801 = vld [vmem:[%s1799 + $0x4] sm:$0xf]
      %v1802 = vld [vmem:[%s1799 + $0x8] sm:$0xf]
      %v1803 = vld [vmem:[%s1799 + $0xc] sm:$0xf]
      %v1808 = vunpack.c.l.b16 %v1800
      %v1809 = vunpack.c.l.b16 %v1801
      %v1810 = vunpack.c.l.b16 %v1802
      %v1811 = vunpack.c.l.b16 %v1803
      %v1812 = vpack.c.b16 %v1809, %v1808
      %v1813 = vpack.c.b16 %v1811, %v1810
      %v1817 = vsel %vm323, %v1795, 0
      %v1820 = vsel %vm323, %v1796, 0
      %v1823 = vsel %vm323, %v1797, 0
      %v1826 = vsel %vm323, %v1798, 0
      %1828 = vmatpush.bf16.msra.mxu0 0
      %1829 = vmatpush.bf16.msra.mxu0 0
      %1830 = vmatpush.bf16.msra.mxu0 0
      %1831 = vmatpush.bf16.msra.mxu0 0
      %1832 = vmatpush.bf16.msra.mxu0 0
      %1833 = vmatpush.bf16.msra.mxu0 0
      %1834 = vmatpush.bf16.msra.mxu0 %v1813
      %1835 = vmatpush.bf16.msra.mxu0 %v1812
      %1836 = vmatmul.bf16.gmra.mxu0 %v1817
      %v1837 = vpop.f32.mrf.mxu0
      %v1838 = vadd.f32 0.0, %v1837
      %v1839 = vpop.f32.mrf.mxu0
      %v1840 = vadd.f32 0.0, %v1839
      %1841 = vmatmul.bf16.gmra.mxu0 %v1820
      %v1842 = vpop.f32.mrf.mxu0
      %v1843 = vadd.f32 0.0, %v1842
      %v1844 = vpop.f32.mrf.mxu0
      %v1845 = vadd.f32 0.0, %v1844
      %1846 = vmatmul.bf16.gmra.mxu0 %v1823
      %v1847 = vpop.f32.mrf.mxu0
      %v1848 = vadd.f32 0.0, %v1847
      %v1849 = vpop.f32.mrf.mxu0
      %v1850 = vadd.f32 0.0, %v1849
      %1851 = vmatmul.bf16.gmra.mxu0 %v1826
      %v1852 = vpop.f32.mrf.mxu0
      %v1853 = vadd.f32 0.0, %v1852
      %v1854 = vpop.f32.mrf.mxu0
      %v1855 = vadd.f32 0.0, %v1854
      %1856 = vdwg.mxu0
      %s1857 = scalar_lea.vmem %s4, 1
      %v1858 = vld [vmem:[%s1857] sm:$0x1]
      %v1860 = vperm.slane %v1858, 0
      %v1862 = vmul.f32 %v1838, %v1860
      %v1863 = vmul.f32 %v1840, %v1860
      %v1864 = vmul.f32 %v1843, %v1860
      %v1865 = vmul.f32 %v1845, %v1860
      %v1866 = vmul.f32 %v1848, %v1860
      %v1867 = vmul.f32 %v1850, %v1860
      %v1868 = vmul.f32 %v1853, %v1860
      %v1869 = vmul.f32 %v1855, %v1860
      %s1870 = scalar_lea.vmem %s5, 1
      %v1871 = vld [vmem:[%s1870] sm:$0x1]
      %v1873 = vperm.slane %v1871, 0
      %v1875 = vadd.f32 %v1862, %v1873
      %v1876 = vadd.f32 %v1863, %v1873
      %v1877 = vadd.f32 %v1864, %v1873
      %v1878 = vadd.f32 %v1865, %v1873
      %v1879 = vadd.f32 %v1866, %v1873
      %v1880 = vadd.f32 %v1867, %v1873
      %v1881 = vadd.f32 %v1868, %v1873
      %v1882 = vadd.f32 %v1869, %v1873
      %v1883 = vmax.f32 %v1875, 0.0
      %v1884 = vmax.f32 %v1876, 0.0
      %v1885 = vmax.f32 %v1877, 0.0
      %v1886 = vmax.f32 %v1878, 0.0
      %v1887 = vmax.f32 %v1879, 0.0
      %v1888 = vmax.f32 %v1880, 0.0
      %v1889 = vmax.f32 %v1881, 0.0
      %v1890 = vmax.f32 %v1882, 0.0
      %v1891 = vpack.c.bf16 %v1884, %v1883
      %v1892 = vpack.c.bf16 %v1886, %v1885
      %v1893 = vpack.c.bf16 %v1888, %v1887
      %v1894 = vpack.c.bf16 %v1890, %v1889
      %v1895 = vld [vmem:[%s7] sm:$0xf]
      %v1896 = vld [vmem:[%s7 + $0x4] sm:$0xf]
      %v1897 = vld [vmem:[%s7 + $0x8] sm:$0xf]
      %v1898 = vld [vmem:[%s7 + $0xc] sm:$0xf]
      %v1899 = vld [vmem:[%s7 + $0x10] sm:$0xf]
      %v1900 = vld [vmem:[%s7 + $0x14] sm:$0xf]
      %v1901 = vld [vmem:[%s7 + $0x18] sm:$0xf]
      %v1902 = vld [vmem:[%s7 + $0x1c] sm:$0xf]
      %v1911 = vunpack.c.l.b16 %v1895
      %v1912 = vunpack.c.l.b16 %v1896
      %v1913 = vunpack.c.l.b16 %v1897
      %v1914 = vunpack.c.l.b16 %v1898
      %v1915 = vunpack.c.l.b16 %v1899
      %v1916 = vunpack.c.l.b16 %v1900
      %v1917 = vunpack.c.l.b16 %v1901
      %v1918 = vunpack.c.l.b16 %v1902
      %v1919 = vpack.c.b16 %v1912, %v1911
      %v1920 = vpack.c.b16 %v1914, %v1913
      %v1921 = vpack.c.b16 %v1916, %v1915
      %v1922 = vpack.c.b16 %v1918, %v1917
      %v1924 = vsel %vm497, %v1919, 0
      %v1927 = vsel %vm497, %v1920, 0
      %v1930 = vsel %vm497, %v1921, 0
      %v1933 = vsel %vm497, %v1922, 0
      %1935 = vmatpush.bf16.msra.mxu0 0
      %1936 = vmatpush.bf16.msra.mxu0 0
      %1937 = vmatpush.bf16.msra.mxu0 0
      %1938 = vmatpush.bf16.msra.mxu0 0
      %1939 = vmatpush.bf16.msra.mxu0 %v1894
      %1940 = vmatpush.bf16.msra.mxu0 %v1893
      %1941 = vmatpush.bf16.msra.mxu0 %v1892
      %1942 = vmatpush.bf16.msra.mxu0 %v1891
      %1943 = vmatmul.bf16.gmra.mxu0 %v1924
      %v1944 = vpop.f32.mrf.mxu0
      %v1945 = vadd.f32 0.0, %v1944
      %v1946 = vpop.f32.mrf.mxu0
      %v1947 = vadd.f32 0.0, %v1946
      %1948 = vmatmul.bf16.gmra.mxu0 %v1927
      %v1949 = vpop.f32.mrf.mxu0
      %v1950 = vadd.f32 0.0, %v1949
      %v1951 = vpop.f32.mrf.mxu0
      %v1952 = vadd.f32 0.0, %v1951
      %1953 = vmatmul.bf16.gmra.mxu0 %v1930
      %v1954 = vpop.f32.mrf.mxu0
      %v1955 = vadd.f32 0.0, %v1954
      %v1956 = vpop.f32.mrf.mxu0
      %v1957 = vadd.f32 0.0, %v1956
      %1958 = vmatmul.bf16.gmra.mxu0 %v1933
      %v1959 = vpop.f32.mrf.mxu0
      %v1960 = vadd.f32 0.0, %v1959
      %v1961 = vpop.f32.mrf.mxu0
      %v1962 = vadd.f32 0.0, %v1961
      %1963 = vdwg.mxu0
      %v1964 = vpack.c.bf16 %v1947, %v1945
      %v1965 = vpack.c.bf16 %v1952, %v1950
      %v1966 = vpack.c.bf16 %v1957, %v1955
      %v1967 = vpack.c.bf16 %v1962, %v1960
      %s1968 = scalar_lea.vmem %s6, 144
      %v1969 = vld [vmem:[%s1968] sm:$0xf]
      %v1970 = vld [vmem:[%s1968 + $0x4] sm:$0xf]
      %v1971 = vld [vmem:[%s1968 + $0x8] sm:$0xf]
      %v1972 = vld [vmem:[%s1968 + $0xc] sm:$0xf]
      %v1973 = vld [vmem:[%s547] sm:$0xf]
      %v1974 = vld [vmem:[%s547 + $0x4] sm:$0xf]
      %v1975 = vld [vmem:[%s547 + $0x8] sm:$0xf]
      %v1976 = vld [vmem:[%s547 + $0xc] sm:$0xf]
      %v1977 = vld [vmem:[%s547 + $0x10] sm:$0xf]
      %v1978 = vld [vmem:[%s547 + $0x14] sm:$0xf]
      %v1979 = vld [vmem:[%s547 + $0x18] sm:$0xf]
      %v1980 = vld [vmem:[%s547 + $0x1c] sm:$0xf]
      %v1989 = vunpack.c.l.b16 %v1973
      %v1990 = vunpack.c.l.b16 %v1974
      %v1991 = vunpack.c.l.b16 %v1975
      %v1992 = vunpack.c.l.b16 %v1976
      %v1993 = vunpack.c.l.b16 %v1977
      %v1994 = vunpack.c.l.b16 %v1978
      %v1995 = vunpack.c.l.b16 %v1979
      %v1996 = vunpack.c.l.b16 %v1980
      %v1997 = vpack.c.b16 %v1990, %v1989
      %v1998 = vpack.c.b16 %v1992, %v1991
      %v1999 = vpack.c.b16 %v1994, %v1993
      %v2000 = vpack.c.b16 %v1996, %v1995
      %v2002 = vsel %vm497, %v1997, 0
      %v2005 = vsel %vm497, %v1998, 0
      %v2008 = vsel %vm497, %v1999, 0
      %v2011 = vsel %vm497, %v2000, 0
      %2013 = vmatpush.bf16.msra.mxu0 0
      %2014 = vmatpush.bf16.msra.mxu0 0
      %2015 = vmatpush.bf16.msra.mxu0 0
      %2016 = vmatpush.bf16.msra.mxu0 0
      %2017 = vmatpush.bf16.msra.mxu0 %v1894
      %2018 = vmatpush.bf16.msra.mxu0 %v1893
      %2019 = vmatpush.bf16.msra.mxu0 %v1892
      %2020 = vmatpush.bf16.msra.mxu0 %v1891
      %2021 = vmatmul.bf16.gmra.mxu0 %v2002
      %v2022 = vpop.f32.mrf.mxu0
      %v2023 = vadd.f32 0.0, %v2022
      %v2024 = vpop.f32.mrf.mxu0
      %v2025 = vadd.f32 0.0, %v2024
      %2026 = vmatmul.bf16.gmra.mxu0 %v2005
      %v2027 = vpop.f32.mrf.mxu0
      %v2028 = vadd.f32 0.0, %v2027
      %v2029 = vpop.f32.mrf.mxu0
      %v2030 = vadd.f32 0.0, %v2029
      %2031 = vmatmul.bf16.gmra.mxu0 %v2008
      %v2032 = vpop.f32.mrf.mxu0
      %v2033 = vadd.f32 0.0, %v2032
      %v2034 = vpop.f32.mrf.mxu0
      %v2035 = vadd.f32 0.0, %v2034
      %2036 = vmatmul.bf16.gmra.mxu0 %v2011
      %v2037 = vpop.f32.mrf.mxu0
      %v2038 = vadd.f32 0.0, %v2037
      %v2039 = vpop.f32.mrf.mxu0
      %v2040 = vadd.f32 0.0, %v2039
      %2041 = vdwg.mxu0
      %v2042 = vpack.c.bf16 %v2025, %v2023
      %v2043 = vpack.c.bf16 %v2030, %v2028
      %v2044 = vpack.c.bf16 %v2035, %v2033
      %v2045 = vpack.c.bf16 %v2040, %v2038
      %s2046 = scalar_lea.vmem %s6, 160
      %v2047 = vld [vmem:[%s2046] sm:$0xf]
      %v2048 = vld [vmem:[%s2046 + $0x4] sm:$0xf]
      %v2049 = vld [vmem:[%s2046 + $0x8] sm:$0xf]
      %v2050 = vld [vmem:[%s2046 + $0xc] sm:$0xf]
      %v2055 = vunpack.c.l.b16 %v2047
      %v2056 = vunpack.c.l.b16 %v2048
      %v2057 = vunpack.c.l.b16 %v2049
      %v2058 = vunpack.c.l.b16 %v2050
      %v2059 = vpack.c.b16 %v2056, %v2055
      %v2060 = vpack.c.b16 %v2058, %v2057
      %v2064 = vsel %vm323, %v2042, 0
      %v2067 = vsel %vm323, %v2043, 0
      %v2070 = vsel %vm323, %v2044, 0
      %v2073 = vsel %vm323, %v2045, 0
      %2075 = vmatpush.bf16.msra.mxu0 0
      %2076 = vmatpush.bf16.msra.mxu0 0
      %2077 = vmatpush.bf16.msra.mxu0 0
      %2078 = vmatpush.bf16.msra.mxu0 0
      %2079 = vmatpush.bf16.msra.mxu0 0
      %2080 = vmatpush.bf16.msra.mxu0 0
      %2081 = vmatpush.bf16.msra.mxu0 %v2060
      %2082 = vmatpush.bf16.msra.mxu0 %v2059
      %2083 = vmatmul.bf16.gmra.mxu0 %v2064
      %v2084 = vpop.f32.mrf.mxu0
      %v2085 = vadd.f32 0.0, %v2084
      %v2086 = vpop.f32.mrf.mxu0
      %v2087 = vadd.f32 0.0, %v2086
      %2088 = vmatmul.bf16.gmra.mxu0 %v2067
      %v2089 = vpop.f32.mrf.mxu0
      %v2090 = vadd.f32 0.0, %v2089
      %v2091 = vpop.f32.mrf.mxu0
      %v2092 = vadd.f32 0.0, %v2091
      %2093 = vmatmul.bf16.gmra.mxu0 %v2070
      %v2094 = vpop.f32.mrf.mxu0
      %v2095 = vadd.f32 0.0, %v2094
      %v2096 = vpop.f32.mrf.mxu0
      %v2097 = vadd.f32 0.0, %v2096
      %2098 = vmatmul.bf16.gmra.mxu0 %v2073
      %v2099 = vpop.f32.mrf.mxu0
      %v2100 = vadd.f32 0.0, %v2099
      %v2101 = vpop.f32.mrf.mxu0
      %v2102 = vadd.f32 0.0, %v2101
      %2103 = vdwg.mxu0
      %v2108 = vunpack.c.l.b16 %v1969
      %v2109 = vunpack.c.l.b16 %v1970
      %v2110 = vunpack.c.l.b16 %v1971
      %v2111 = vunpack.c.l.b16 %v1972
      %v2112 = vpack.c.b16 %v2109, %v2108
      %v2113 = vpack.c.b16 %v2111, %v2110
      %v2117 = vsel %vm323, %v1964, 0
      %v2120 = vsel %vm323, %v1965, 0
      %v2123 = vsel %vm323, %v1966, 0
      %v2126 = vsel %vm323, %v1967, 0
      %2128 = vmatpush.bf16.msra.mxu0 0
      %2129 = vmatpush.bf16.msra.mxu0 0
      %2130 = vmatpush.bf16.msra.mxu0 0
      %2131 = vmatpush.bf16.msra.mxu0 0
      %2132 = vmatpush.bf16.msra.mxu0 0
      %2133 = vmatpush.bf16.msra.mxu0 0
      %2134 = vmatpush.bf16.msra.mxu0 %v2113
      %2135 = vmatpush.bf16.msra.mxu0 %v2112
      %2136 = vmatmul.bf16.gmra.mxu0 %v2117
      %v2137 = vpop.f32.mrf.mxu0
      %v2138 = vadd.f32 %v2085, %v2137
      %v2139 = vpop.f32.mrf.mxu0
      %v2140 = vadd.f32 %v2087, %v2139
      %2141 = vmatmul.bf16.gmra.mxu0 %v2120
      %v2142 = vpop.f32.mrf.mxu0
      %v2143 = vadd.f32 %v2090, %v2142
      %v2144 = vpop.f32.mrf.mxu0
      %v2145 = vadd.f32 %v2092, %v2144
      %2146 = vmatmul.bf16.gmra.mxu0 %v2123
      %v2147 = vpop.f32.mrf.mxu0
      %v2148 = vadd.f32 %v2095, %v2147
      %v2149 = vpop.f32.mrf.mxu0
      %v2150 = vadd.f32 %v2097, %v2149
      %2151 = vmatmul.bf16.gmra.mxu0 %v2126
      %v2152 = vpop.f32.mrf.mxu0
      %v2153 = vadd.f32 %v2100, %v2152
      %v2154 = vpop.f32.mrf.mxu0
      %v2155 = vadd.f32 %v2102, %v2154
      %2156 = vdwg.mxu0
      %v2157 = vld [vmem:[%s732] sm:$0xf]
      %v2158 = vld [vmem:[%s732 + $0x4] sm:$0xf]
      %v2159 = vld [vmem:[%s732 + $0x8] sm:$0xf]
      %v2160 = vld [vmem:[%s732 + $0xc] sm:$0xf]
      %v2161 = vld [vmem:[%s732 + $0x10] sm:$0xf]
      %v2162 = vld [vmem:[%s732 + $0x14] sm:$0xf]
      %v2163 = vld [vmem:[%s732 + $0x18] sm:$0xf]
      %v2164 = vld [vmem:[%s732 + $0x1c] sm:$0xf]
      %v2173 = vunpack.c.l.b16 %v2157
      %v2174 = vunpack.c.l.b16 %v2158
      %v2175 = vunpack.c.l.b16 %v2159
      %v2176 = vunpack.c.l.b16 %v2160
      %v2177 = vunpack.c.l.b16 %v2161
      %v2178 = vunpack.c.l.b16 %v2162
      %v2179 = vunpack.c.l.b16 %v2163
      %v2180 = vunpack.c.l.b16 %v2164
      %v2181 = vpack.c.b16 %v2174, %v2173
      %v2182 = vpack.c.b16 %v2176, %v2175
      %v2183 = vpack.c.b16 %v2178, %v2177
      %v2184 = vpack.c.b16 %v2180, %v2179
      %v2186 = vsel %vm497, %v2181, 0
      %v2189 = vsel %vm497, %v2182, 0
      %v2192 = vsel %vm497, %v2183, 0
      %v2195 = vsel %vm497, %v2184, 0
      %2197 = vmatpush.bf16.msra.mxu0 0
      %2198 = vmatpush.bf16.msra.mxu0 0
      %2199 = vmatpush.bf16.msra.mxu0 0
      %2200 = vmatpush.bf16.msra.mxu0 0
      %2201 = vmatpush.bf16.msra.mxu0 %v1894
      %2202 = vmatpush.bf16.msra.mxu0 %v1893
      %2203 = vmatpush.bf16.msra.mxu0 %v1892
      %2204 = vmatpush.bf16.msra.mxu0 %v1891
      %2205 = vmatmul.bf16.gmra.mxu0 %v2186
      %v2206 = vpop.f32.mrf.mxu0
      %v2207 = vadd.f32 0.0, %v2206
      %v2208 = vpop.f32.mrf.mxu0
      %v2209 = vadd.f32 0.0, %v2208
      %2210 = vmatmul.bf16.gmra.mxu0 %v2189
      %v2211 = vpop.f32.mrf.mxu0
      %v2212 = vadd.f32 0.0, %v2211
      %v2213 = vpop.f32.mrf.mxu0
      %v2214 = vadd.f32 0.0, %v2213
      %2215 = vmatmul.bf16.gmra.mxu0 %v2192
      %v2216 = vpop.f32.mrf.mxu0
      %v2217 = vadd.f32 0.0, %v2216
      %v2218 = vpop.f32.mrf.mxu0
      %v2219 = vadd.f32 0.0, %v2218
      %2220 = vmatmul.bf16.gmra.mxu0 %v2195
      %v2221 = vpop.f32.mrf.mxu0
      %v2222 = vadd.f32 0.0, %v2221
      %v2223 = vpop.f32.mrf.mxu0
      %v2224 = vadd.f32 0.0, %v2223
      %2225 = vdwg.mxu0
      %v2226 = vpack.c.bf16 %v2209, %v2207
      %v2227 = vpack.c.bf16 %v2214, %v2212
      %v2228 = vpack.c.bf16 %v2219, %v2217
      %v2229 = vpack.c.bf16 %v2224, %v2222
      %s2230 = scalar_lea.vmem %s6, 176
      %v2231 = vld [vmem:[%s2230] sm:$0xf]
      %v2232 = vld [vmem:[%s2230 + $0x4] sm:$0xf]
      %v2233 = vld [vmem:[%s2230 + $0x8] sm:$0xf]
      %v2234 = vld [vmem:[%s2230 + $0xc] sm:$0xf]
      %v2239 = vunpack.c.l.b16 %v2231
      %v2240 = vunpack.c.l.b16 %v2232
      %v2241 = vunpack.c.l.b16 %v2233
      %v2242 = vunpack.c.l.b16 %v2234
      %v2243 = vpack.c.b16 %v2240, %v2239
      %v2244 = vpack.c.b16 %v2242, %v2241
      %v2248 = vsel %vm323, %v2226, 0
      %v2251 = vsel %vm323, %v2227, 0
      %v2254 = vsel %vm323, %v2228, 0
      %v2257 = vsel %vm323, %v2229, 0
      %2259 = vmatpush.bf16.msra.mxu0 0
      %2260 = vmatpush.bf16.msra.mxu0 0
      %2261 = vmatpush.bf16.msra.mxu0 0
      %2262 = vmatpush.bf16.msra.mxu0 0
      %2263 = vmatpush.bf16.msra.mxu0 0
      %2264 = vmatpush.bf16.msra.mxu0 0
      %2265 = vmatpush.bf16.msra.mxu0 %v2244
      %2266 = vmatpush.bf16.msra.mxu0 %v2243
      %2267 = vmatmul.bf16.gmra.mxu0 %v2248
      %v2268 = vpop.f32.mrf.mxu0
      %v2269 = vadd.f32 0.0, %v2268
      %v2270 = vpop.f32.mrf.mxu0
      %v2271 = vadd.f32 0.0, %v2270
      %2272 = vmatmul.bf16.gmra.mxu0 %v2251
      %v2273 = vpop.f32.mrf.mxu0
      %v2274 = vadd.f32 0.0, %v2273
      %v2275 = vpop.f32.mrf.mxu0
      %v2276 = vadd.f32 0.0, %v2275
      %2277 = vmatmul.bf16.gmra.mxu0 %v2254
      %v2278 = vpop.f32.mrf.mxu0
      %v2279 = vadd.f32 0.0, %v2278
      %v2280 = vpop.f32.mrf.mxu0
      %v2281 = vadd.f32 0.0, %v2280
      %2282 = vmatmul.bf16.gmra.mxu0 %v2257
      %v2283 = vpop.f32.mrf.mxu0
      %v2284 = vadd.f32 0.0, %v2283
      %v2285 = vpop.f32.mrf.mxu0
      %v2286 = vadd.f32 0.0, %v2285
      %2287 = vdwg.mxu0
      %v2288 = vadd.f32 %v2138, %v2269
      %v2289 = vadd.f32 %v2140, %v2271
      %v2290 = vadd.f32 %v2143, %v2274
      %v2291 = vadd.f32 %v2145, %v2276
      %v2292 = vadd.f32 %v2148, %v2279
      %v2293 = vadd.f32 %v2150, %v2281
      %v2294 = vadd.f32 %v2153, %v2284
      %v2295 = vadd.f32 %v2155, %v2286
      %v2296 = vld [vmem:[%s872] sm:$0xf]
      %v2297 = vld [vmem:[%s872 + $0x4] sm:$0xf]
      %v2298 = vld [vmem:[%s872 + $0x8] sm:$0xf]
      %v2299 = vld [vmem:[%s872 + $0xc] sm:$0xf]
      %v2300 = vld [vmem:[%s872 + $0x10] sm:$0xf]
      %v2301 = vld [vmem:[%s872 + $0x14] sm:$0xf]
      %v2302 = vld [vmem:[%s872 + $0x18] sm:$0xf]
      %v2303 = vld [vmem:[%s872 + $0x1c] sm:$0xf]
      %v2312 = vunpack.c.l.b16 %v2296
      %v2313 = vunpack.c.l.b16 %v2297
      %v2314 = vunpack.c.l.b16 %v2298
      %v2315 = vunpack.c.l.b16 %v2299
      %v2316 = vunpack.c.l.b16 %v2300
      %v2317 = vunpack.c.l.b16 %v2301
      %v2318 = vunpack.c.l.b16 %v2302
      %v2319 = vunpack.c.l.b16 %v2303
      %v2320 = vpack.c.b16 %v2313, %v2312
      %v2321 = vpack.c.b16 %v2315, %v2314
      %v2322 = vpack.c.b16 %v2317, %v2316
      %v2323 = vpack.c.b16 %v2319, %v2318
      %v2325 = vsel %vm497, %v2320, 0
      %v2328 = vsel %vm497, %v2321, 0
      %v2331 = vsel %vm497, %v2322, 0
      %v2334 = vsel %vm497, %v2323, 0
      %2336 = vmatpush.bf16.msra.mxu0 0
      %2337 = vmatpush.bf16.msra.mxu0 0
      %2338 = vmatpush.bf16.msra.mxu0 0
      %2339 = vmatpush.bf16.msra.mxu0 0
      %2340 = vmatpush.bf16.msra.mxu0 %v1894
      %2341 = vmatpush.bf16.msra.mxu0 %v1893
      %2342 = vmatpush.bf16.msra.mxu0 %v1892
      %2343 = vmatpush.bf16.msra.mxu0 %v1891
      %2344 = vmatmul.bf16.gmra.mxu0 %v2325
      %v2345 = vpop.f32.mrf.mxu0
      %v2346 = vadd.f32 0.0, %v2345
      %v2347 = vpop.f32.mrf.mxu0
      %v2348 = vadd.f32 0.0, %v2347
      %2349 = vmatmul.bf16.gmra.mxu0 %v2328
      %v2350 = vpop.f32.mrf.mxu0
      %v2351 = vadd.f32 0.0, %v2350
      %v2352 = vpop.f32.mrf.mxu0
      %v2353 = vadd.f32 0.0, %v2352
      %2354 = vmatmul.bf16.gmra.mxu0 %v2331
      %v2355 = vpop.f32.mrf.mxu0
      %v2356 = vadd.f32 0.0, %v2355
      %v2357 = vpop.f32.mrf.mxu0
      %v2358 = vadd.f32 0.0, %v2357
      %2359 = vmatmul.bf16.gmra.mxu0 %v2334
      %v2360 = vpop.f32.mrf.mxu0
      %v2361 = vadd.f32 0.0, %v2360
      %v2362 = vpop.f32.mrf.mxu0
      %v2363 = vadd.f32 0.0, %v2362
      %2364 = vdwg.mxu0
      %v2365 = vpack.c.bf16 %v2348, %v2346
      %v2366 = vpack.c.bf16 %v2353, %v2351
      %v2367 = vpack.c.bf16 %v2358, %v2356
      %v2368 = vpack.c.bf16 %v2363, %v2361
      %s2369 = scalar_lea.vmem %s6, 192
      %v2370 = vld [vmem:[%s2369] sm:$0xf]
      %v2371 = vld [vmem:[%s2369 + $0x4] sm:$0xf]
      %v2372 = vld [vmem:[%s2369 + $0x8] sm:$0xf]
      %v2373 = vld [vmem:[%s2369 + $0xc] sm:$0xf]
      %v2378 = vunpack.c.l.b16 %v2370
      %v2379 = vunpack.c.l.b16 %v2371
      %v2380 = vunpack.c.l.b16 %v2372
      %v2381 = vunpack.c.l.b16 %v2373
      %v2382 = vpack.c.b16 %v2379, %v2378
      %v2383 = vpack.c.b16 %v2381, %v2380
      %v2387 = vsel %vm323, %v2365, 0
      %v2390 = vsel %vm323, %v2366, 0
      %v2393 = vsel %vm323, %v2367, 0
      %v2396 = vsel %vm323, %v2368, 0
      %2398 = vmatpush.bf16.msra.mxu0 0
      %2399 = vmatpush.bf16.msra.mxu0 0
      %2400 = vmatpush.bf16.msra.mxu0 0
      %2401 = vmatpush.bf16.msra.mxu0 0
      %2402 = vmatpush.bf16.msra.mxu0 0
      %2403 = vmatpush.bf16.msra.mxu0 0
      %2404 = vmatpush.bf16.msra.mxu0 %v2383
      %2405 = vmatpush.bf16.msra.mxu0 %v2382
      %2406 = vmatmul.bf16.gmra.mxu0 %v2387
      %v2407 = vpop.f32.mrf.mxu0
      %v2408 = vadd.f32 0.0, %v2407
      %v2409 = vpop.f32.mrf.mxu0
      %v2410 = vadd.f32 0.0, %v2409
      %2411 = vmatmul.bf16.gmra.mxu0 %v2390
      %v2412 = vpop.f32.mrf.mxu0
      %v2413 = vadd.f32 0.0, %v2412
      %v2414 = vpop.f32.mrf.mxu0
      %v2415 = vadd.f32 0.0, %v2414
      %2416 = vmatmul.bf16.gmra.mxu0 %v2393
      %v2417 = vpop.f32.mrf.mxu0
      %v2418 = vadd.f32 0.0, %v2417
      %v2419 = vpop.f32.mrf.mxu0
      %v2420 = vadd.f32 0.0, %v2419
      %2421 = vmatmul.bf16.gmra.mxu0 %v2396
      %v2422 = vpop.f32.mrf.mxu0
      %v2423 = vadd.f32 0.0, %v2422
      %v2424 = vpop.f32.mrf.mxu0
      %v2425 = vadd.f32 0.0, %v2424
      %2426 = vdwg.mxu0
      %v2427 = vadd.f32 %v2288, %v2408
      %v2428 = vadd.f32 %v2289, %v2410
      %v2429 = vadd.f32 %v2290, %v2413
      %v2430 = vadd.f32 %v2291, %v2415
      %v2431 = vadd.f32 %v2292, %v2418
      %v2432 = vadd.f32 %v2293, %v2420
      %v2433 = vadd.f32 %v2294, %v2423
      %v2434 = vadd.f32 %v2295, %v2425
      %v2435 = vld [vmem:[%s1012] sm:$0xf]
      %v2436 = vld [vmem:[%s1012 + $0x4] sm:$0xf]
      %v2437 = vld [vmem:[%s1012 + $0x8] sm:$0xf]
      %v2438 = vld [vmem:[%s1012 + $0xc] sm:$0xf]
      %v2439 = vld [vmem:[%s1012 + $0x10] sm:$0xf]
      %v2440 = vld [vmem:[%s1012 + $0x14] sm:$0xf]
      %v2441 = vld [vmem:[%s1012 + $0x18] sm:$0xf]
      %v2442 = vld [vmem:[%s1012 + $0x1c] sm:$0xf]
      %v2451 = vunpack.c.l.b16 %v2435
      %v2452 = vunpack.c.l.b16 %v2436
      %v2453 = vunpack.c.l.b16 %v2437
      %v2454 = vunpack.c.l.b16 %v2438
      %v2455 = vunpack.c.l.b16 %v2439
      %v2456 = vunpack.c.l.b16 %v2440
      %v2457 = vunpack.c.l.b16 %v2441
      %v2458 = vunpack.c.l.b16 %v2442
      %v2459 = vpack.c.b16 %v2452, %v2451
      %v2460 = vpack.c.b16 %v2454, %v2453
      %v2461 = vpack.c.b16 %v2456, %v2455
      %v2462 = vpack.c.b16 %v2458, %v2457
      %v2464 = vsel %vm497, %v2459, 0
      %v2467 = vsel %vm497, %v2460, 0
      %v2470 = vsel %vm497, %v2461, 0
      %v2473 = vsel %vm497, %v2462, 0
      %2475 = vmatpush.bf16.msra.mxu0 0
      %2476 = vmatpush.bf16.msra.mxu0 0
      %2477 = vmatpush.bf16.msra.mxu0 0
      %2478 = vmatpush.bf16.msra.mxu0 0
      %2479 = vmatpush.bf16.msra.mxu0 %v1894
      %2480 = vmatpush.bf16.msra.mxu0 %v1893
      %2481 = vmatpush.bf16.msra.mxu0 %v1892
      %2482 = vmatpush.bf16.msra.mxu0 %v1891
      %2483 = vmatmul.bf16.gmra.mxu0 %v2464
      %v2484 = vpop.f32.mrf.mxu0
      %v2485 = vadd.f32 0.0, %v2484
      %v2486 = vpop.f32.mrf.mxu0
      %v2487 = vadd.f32 0.0, %v2486
      %2488 = vmatmul.bf16.gmra.mxu0 %v2467
      %v2489 = vpop.f32.mrf.mxu0
      %v2490 = vadd.f32 0.0, %v2489
      %v2491 = vpop.f32.mrf.mxu0
      %v2492 = vadd.f32 0.0, %v2491
      %2493 = vmatmul.bf16.gmra.mxu0 %v2470
      %v2494 = vpop.f32.mrf.mxu0
      %v2495 = vadd.f32 0.0, %v2494
      %v2496 = vpop.f32.mrf.mxu0
      %v2497 = vadd.f32 0.0, %v2496
      %2498 = vmatmul.bf16.gmra.mxu0 %v2473
      %v2499 = vpop.f32.mrf.mxu0
      %v2500 = vadd.f32 0.0, %v2499
      %v2501 = vpop.f32.mrf.mxu0
      %v2502 = vadd.f32 0.0, %v2501
      %2503 = vdwg.mxu0
      %v2504 = vpack.c.bf16 %v2487, %v2485
      %v2505 = vpack.c.bf16 %v2492, %v2490
      %v2506 = vpack.c.bf16 %v2497, %v2495
      %v2507 = vpack.c.bf16 %v2502, %v2500
      %s2508 = scalar_lea.vmem %s6, 208
      %v2509 = vld [vmem:[%s2508] sm:$0xf]
      %v2510 = vld [vmem:[%s2508 + $0x4] sm:$0xf]
      %v2511 = vld [vmem:[%s2508 + $0x8] sm:$0xf]
      %v2512 = vld [vmem:[%s2508 + $0xc] sm:$0xf]
      %v2517 = vunpack.c.l.b16 %v2509
      %v2518 = vunpack.c.l.b16 %v2510
      %v2519 = vunpack.c.l.b16 %v2511
      %v2520 = vunpack.c.l.b16 %v2512
      %v2521 = vpack.c.b16 %v2518, %v2517
      %v2522 = vpack.c.b16 %v2520, %v2519
      %v2526 = vsel %vm323, %v2504, 0
      %v2529 = vsel %vm323, %v2505, 0
      %v2532 = vsel %vm323, %v2506, 0
      %v2535 = vsel %vm323, %v2507, 0
      %2537 = vmatpush.bf16.msra.mxu0 0
      %2538 = vmatpush.bf16.msra.mxu0 0
      %2539 = vmatpush.bf16.msra.mxu0 0
      %2540 = vmatpush.bf16.msra.mxu0 0
      %2541 = vmatpush.bf16.msra.mxu0 0
      %2542 = vmatpush.bf16.msra.mxu0 0
      %2543 = vmatpush.bf16.msra.mxu0 %v2522
      %2544 = vmatpush.bf16.msra.mxu0 %v2521
      %2545 = vmatmul.bf16.gmra.mxu0 %v2526
      %v2546 = vpop.f32.mrf.mxu0
      %v2547 = vadd.f32 0.0, %v2546
      %v2548 = vpop.f32.mrf.mxu0
      %v2549 = vadd.f32 0.0, %v2548
      %2550 = vmatmul.bf16.gmra.mxu0 %v2529
      %v2551 = vpop.f32.mrf.mxu0
      %v2552 = vadd.f32 0.0, %v2551
      %v2553 = vpop.f32.mrf.mxu0
      %v2554 = vadd.f32 0.0, %v2553
      %2555 = vmatmul.bf16.gmra.mxu0 %v2532
      %v2556 = vpop.f32.mrf.mxu0
      %v2557 = vadd.f32 0.0, %v2556
      %v2558 = vpop.f32.mrf.mxu0
      %v2559 = vadd.f32 0.0, %v2558
      %2560 = vmatmul.bf16.gmra.mxu0 %v2535
      %v2561 = vpop.f32.mrf.mxu0
      %v2562 = vadd.f32 0.0, %v2561
      %v2563 = vpop.f32.mrf.mxu0
      %v2564 = vadd.f32 0.0, %v2563
      %2565 = vdwg.mxu0
      %v2566 = vadd.f32 %v2427, %v2547
      %v2567 = vadd.f32 %v2428, %v2549
      %v2568 = vadd.f32 %v2429, %v2552
      %v2569 = vadd.f32 %v2430, %v2554
      %v2570 = vadd.f32 %v2431, %v2557
      %v2571 = vadd.f32 %v2432, %v2559
      %v2572 = vadd.f32 %v2433, %v2562
      %v2573 = vadd.f32 %v2434, %v2564
      %v2574 = vld [vmem:[%s1152] sm:$0xf]
      %v2575 = vld [vmem:[%s1152 + $0x4] sm:$0xf]
      %v2576 = vld [vmem:[%s1152 + $0x8] sm:$0xf]
      %v2577 = vld [vmem:[%s1152 + $0xc] sm:$0xf]
      %v2578 = vld [vmem:[%s1152 + $0x10] sm:$0xf]
      %v2579 = vld [vmem:[%s1152 + $0x14] sm:$0xf]
      %v2580 = vld [vmem:[%s1152 + $0x18] sm:$0xf]
      %v2581 = vld [vmem:[%s1152 + $0x1c] sm:$0xf]
      %v2590 = vunpack.c.l.b16 %v2574
      %v2591 = vunpack.c.l.b16 %v2575
      %v2592 = vunpack.c.l.b16 %v2576
      %v2593 = vunpack.c.l.b16 %v2577
      %v2594 = vunpack.c.l.b16 %v2578
      %v2595 = vunpack.c.l.b16 %v2579
      %v2596 = vunpack.c.l.b16 %v2580
      %v2597 = vunpack.c.l.b16 %v2581
      %v2598 = vpack.c.b16 %v2591, %v2590
      %v2599 = vpack.c.b16 %v2593, %v2592
      %v2600 = vpack.c.b16 %v2595, %v2594
      %v2601 = vpack.c.b16 %v2597, %v2596
      %v2603 = vsel %vm497, %v2598, 0
      %v2606 = vsel %vm497, %v2599, 0
      %v2609 = vsel %vm497, %v2600, 0
      %v2612 = vsel %vm497, %v2601, 0
      %2614 = vmatpush.bf16.msra.mxu0 0
      %2615 = vmatpush.bf16.msra.mxu0 0
      %2616 = vmatpush.bf16.msra.mxu0 0
      %2617 = vmatpush.bf16.msra.mxu0 0
      %2618 = vmatpush.bf16.msra.mxu0 %v1894
      %2619 = vmatpush.bf16.msra.mxu0 %v1893
      %2620 = vmatpush.bf16.msra.mxu0 %v1892
      %2621 = vmatpush.bf16.msra.mxu0 %v1891
      %2622 = vmatmul.bf16.gmra.mxu0 %v2603
      %v2623 = vpop.f32.mrf.mxu0
      %v2624 = vadd.f32 0.0, %v2623
      %v2625 = vpop.f32.mrf.mxu0
      %v2626 = vadd.f32 0.0, %v2625
      %2627 = vmatmul.bf16.gmra.mxu0 %v2606
      %v2628 = vpop.f32.mrf.mxu0
      %v2629 = vadd.f32 0.0, %v2628
      %v2630 = vpop.f32.mrf.mxu0
      %v2631 = vadd.f32 0.0, %v2630
      %2632 = vmatmul.bf16.gmra.mxu0 %v2609
      %v2633 = vpop.f32.mrf.mxu0
      %v2634 = vadd.f32 0.0, %v2633
      %v2635 = vpop.f32.mrf.mxu0
      %v2636 = vadd.f32 0.0, %v2635
      %2637 = vmatmul.bf16.gmra.mxu0 %v2612
      %v2638 = vpop.f32.mrf.mxu0
      %v2639 = vadd.f32 0.0, %v2638
      %v2640 = vpop.f32.mrf.mxu0
      %v2641 = vadd.f32 0.0, %v2640
      %2642 = vdwg.mxu0
      %v2643 = vpack.c.bf16 %v2626, %v2624
      %v2644 = vpack.c.bf16 %v2631, %v2629
      %v2645 = vpack.c.bf16 %v2636, %v2634
      %v2646 = vpack.c.bf16 %v2641, %v2639
      %s2647 = scalar_lea.vmem %s6, 224
      %v2648 = vld [vmem:[%s2647] sm:$0xf]
      %v2649 = vld [vmem:[%s2647 + $0x4] sm:$0xf]
      %v2650 = vld [vmem:[%s2647 + $0x8] sm:$0xf]
      %v2651 = vld [vmem:[%s2647 + $0xc] sm:$0xf]
      %v2656 = vunpack.c.l.b16 %v2648
      %v2657 = vunpack.c.l.b16 %v2649
      %v2658 = vunpack.c.l.b16 %v2650
      %v2659 = vunpack.c.l.b16 %v2651
      %v2660 = vpack.c.b16 %v2657, %v2656
      %v2661 = vpack.c.b16 %v2659, %v2658
      %v2665 = vsel %vm323, %v2643, 0
      %v2668 = vsel %vm323, %v2644, 0
      %v2671 = vsel %vm323, %v2645, 0
      %v2674 = vsel %vm323, %v2646, 0
      %2676 = vmatpush.bf16.msra.mxu0 0
      %2677 = vmatpush.bf16.msra.mxu0 0
      %2678 = vmatpush.bf16.msra.mxu0 0
      %2679 = vmatpush.bf16.msra.mxu0 0
      %2680 = vmatpush.bf16.msra.mxu0 0
      %2681 = vmatpush.bf16.msra.mxu0 0
      %2682 = vmatpush.bf16.msra.mxu0 %v2661
      %2683 = vmatpush.bf16.msra.mxu0 %v2660
      %2684 = vmatmul.bf16.gmra.mxu0 %v2665
      %v2685 = vpop.f32.mrf.mxu0
      %v2686 = vadd.f32 0.0, %v2685
      %v2687 = vpop.f32.mrf.mxu0
      %v2688 = vadd.f32 0.0, %v2687
      %2689 = vmatmul.bf16.gmra.mxu0 %v2668
      %v2690 = vpop.f32.mrf.mxu0
      %v2691 = vadd.f32 0.0, %v2690
      %v2692 = vpop.f32.mrf.mxu0
      %v2693 = vadd.f32 0.0, %v2692
      %2694 = vmatmul.bf16.gmra.mxu0 %v2671
      %v2695 = vpop.f32.mrf.mxu0
      %v2696 = vadd.f32 0.0, %v2695
      %v2697 = vpop.f32.mrf.mxu0
      %v2698 = vadd.f32 0.0, %v2697
      %2699 = vmatmul.bf16.gmra.mxu0 %v2674
      %v2700 = vpop.f32.mrf.mxu0
      %v2701 = vadd.f32 0.0, %v2700
      %v2702 = vpop.f32.mrf.mxu0
      %v2703 = vadd.f32 0.0, %v2702
      %2704 = vdwg.mxu0
      %v2705 = vadd.f32 %v2566, %v2686
      %v2706 = vadd.f32 %v2567, %v2688
      %v2707 = vadd.f32 %v2568, %v2691
      %v2708 = vadd.f32 %v2569, %v2693
      %v2709 = vadd.f32 %v2570, %v2696
      %v2710 = vadd.f32 %v2571, %v2698
      %v2711 = vadd.f32 %v2572, %v2701
      %v2712 = vadd.f32 %v2573, %v2703
      %v2713 = vld [vmem:[%s1292] sm:$0xf]
      %v2714 = vld [vmem:[%s1292 + $0x4] sm:$0xf]
      %v2715 = vld [vmem:[%s1292 + $0x8] sm:$0xf]
      %v2716 = vld [vmem:[%s1292 + $0xc] sm:$0xf]
      %v2717 = vld [vmem:[%s1292 + $0x10] sm:$0xf]
      %v2718 = vld [vmem:[%s1292 + $0x14] sm:$0xf]
      %v2719 = vld [vmem:[%s1292 + $0x18] sm:$0xf]
      %v2720 = vld [vmem:[%s1292 + $0x1c] sm:$0xf]
      %v2729 = vunpack.c.l.b16 %v2713
      %v2730 = vunpack.c.l.b16 %v2714
      %v2731 = vunpack.c.l.b16 %v2715
      %v2732 = vunpack.c.l.b16 %v2716
      %v2733 = vunpack.c.l.b16 %v2717
      %v2734 = vunpack.c.l.b16 %v2718
      %v2735 = vunpack.c.l.b16 %v2719
      %v2736 = vunpack.c.l.b16 %v2720
      %v2737 = vpack.c.b16 %v2730, %v2729
      %v2738 = vpack.c.b16 %v2732, %v2731
      %v2739 = vpack.c.b16 %v2734, %v2733
      %v2740 = vpack.c.b16 %v2736, %v2735
      %v2742 = vsel %vm497, %v2737, 0
      %v2745 = vsel %vm497, %v2738, 0
      %v2748 = vsel %vm497, %v2739, 0
      %v2751 = vsel %vm497, %v2740, 0
      %2753 = vmatpush.bf16.msra.mxu0 0
      %2754 = vmatpush.bf16.msra.mxu0 0
      %2755 = vmatpush.bf16.msra.mxu0 0
      %2756 = vmatpush.bf16.msra.mxu0 0
      %2757 = vmatpush.bf16.msra.mxu0 %v1894
      %2758 = vmatpush.bf16.msra.mxu0 %v1893
      %2759 = vmatpush.bf16.msra.mxu0 %v1892
      %2760 = vmatpush.bf16.msra.mxu0 %v1891
      %2761 = vmatmul.bf16.gmra.mxu0 %v2742
      %v2762 = vpop.f32.mrf.mxu0
      %v2763 = vadd.f32 0.0, %v2762
      %v2764 = vpop.f32.mrf.mxu0
      %v2765 = vadd.f32 0.0, %v2764
      %2766 = vmatmul.bf16.gmra.mxu0 %v2745
      %v2767 = vpop.f32.mrf.mxu0
      %v2768 = vadd.f32 0.0, %v2767
      %v2769 = vpop.f32.mrf.mxu0
      %v2770 = vadd.f32 0.0, %v2769
      %2771 = vmatmul.bf16.gmra.mxu0 %v2748
      %v2772 = vpop.f32.mrf.mxu0
      %v2773 = vadd.f32 0.0, %v2772
      %v2774 = vpop.f32.mrf.mxu0
      %v2775 = vadd.f32 0.0, %v2774
      %2776 = vmatmul.bf16.gmra.mxu0 %v2751
      %v2777 = vpop.f32.mrf.mxu0
      %v2778 = vadd.f32 0.0, %v2777
      %v2779 = vpop.f32.mrf.mxu0
      %v2780 = vadd.f32 0.0, %v2779
      %2781 = vdwg.mxu0
      %v2782 = vpack.c.bf16 %v2765, %v2763
      %v2783 = vpack.c.bf16 %v2770, %v2768
      %v2784 = vpack.c.bf16 %v2775, %v2773
      %v2785 = vpack.c.bf16 %v2780, %v2778
      %s2786 = scalar_lea.vmem %s6, 240
      %v2787 = vld [vmem:[%s2786] sm:$0xf]
      %v2788 = vld [vmem:[%s2786 + $0x4] sm:$0xf]
      %v2789 = vld [vmem:[%s2786 + $0x8] sm:$0xf]
      %v2790 = vld [vmem:[%s2786 + $0xc] sm:$0xf]
      %v2795 = vunpack.c.l.b16 %v2787
      %v2796 = vunpack.c.l.b16 %v2788
      %v2797 = vunpack.c.l.b16 %v2789
      %v2798 = vunpack.c.l.b16 %v2790
      %v2799 = vpack.c.b16 %v2796, %v2795
      %v2800 = vpack.c.b16 %v2798, %v2797
      %v2804 = vsel %vm323, %v2782, 0
      %v2807 = vsel %vm323, %v2783, 0
      %v2810 = vsel %vm323, %v2784, 0
      %v2813 = vsel %vm323, %v2785, 0
      %2815 = vmatpush.bf16.msra.mxu0 0
      %2816 = vmatpush.bf16.msra.mxu0 0
      %2817 = vmatpush.bf16.msra.mxu0 0
      %2818 = vmatpush.bf16.msra.mxu0 0
      %2819 = vmatpush.bf16.msra.mxu0 0
      %2820 = vmatpush.bf16.msra.mxu0 0
      %2821 = vmatpush.bf16.msra.mxu0 %v2800
      %2822 = vmatpush.bf16.msra.mxu0 %v2799
      %2823 = vmatmul.bf16.gmra.mxu0 %v2804
      %v2824 = vpop.f32.mrf.mxu0
      %v2825 = vadd.f32 0.0, %v2824
      %v2826 = vpop.f32.mrf.mxu0
      %v2827 = vadd.f32 0.0, %v2826
      %2828 = vmatmul.bf16.gmra.mxu0 %v2807
      %v2829 = vpop.f32.mrf.mxu0
      %v2830 = vadd.f32 0.0, %v2829
      %v2831 = vpop.f32.mrf.mxu0
      %v2832 = vadd.f32 0.0, %v2831
      %2833 = vmatmul.bf16.gmra.mxu0 %v2810
      %v2834 = vpop.f32.mrf.mxu0
      %v2835 = vadd.f32 0.0, %v2834
      %v2836 = vpop.f32.mrf.mxu0
      %v2837 = vadd.f32 0.0, %v2836
      %2838 = vmatmul.bf16.gmra.mxu0 %v2813
      %v2839 = vpop.f32.mrf.mxu0
      %v2840 = vadd.f32 0.0, %v2839
      %v2841 = vpop.f32.mrf.mxu0
      %v2842 = vadd.f32 0.0, %v2841
      %2843 = vdwg.mxu0
      %v2844 = vadd.f32 %v2705, %v2825
      %v2845 = vadd.f32 %v2706, %v2827
      %v2846 = vadd.f32 %v2707, %v2830
      %v2847 = vadd.f32 %v2708, %v2832
      %v2848 = vadd.f32 %v2709, %v2835
      %v2849 = vadd.f32 %v2710, %v2837
      %v2850 = vadd.f32 %v2711, %v2840
      %v2851 = vadd.f32 %v2712, %v2842
      %v2852 = vld [vmem:[%s1432] sm:$0xf]
      %v2853 = vld [vmem:[%s1432 + $0x4] sm:$0xf]
      %v2854 = vld [vmem:[%s1432 + $0x8] sm:$0xf]
      %v2855 = vld [vmem:[%s1432 + $0xc] sm:$0xf]
      %v2856 = vld [vmem:[%s1432 + $0x10] sm:$0xf]
      %v2857 = vld [vmem:[%s1432 + $0x14] sm:$0xf]
      %v2858 = vld [vmem:[%s1432 + $0x18] sm:$0xf]
      %v2859 = vld [vmem:[%s1432 + $0x1c] sm:$0xf]
      %v2868 = vunpack.c.l.b16 %v2852
      %v2869 = vunpack.c.l.b16 %v2853
      %v2870 = vunpack.c.l.b16 %v2854
      %v2871 = vunpack.c.l.b16 %v2855
      %v2872 = vunpack.c.l.b16 %v2856
      %v2873 = vunpack.c.l.b16 %v2857
      %v2874 = vunpack.c.l.b16 %v2858
      %v2875 = vunpack.c.l.b16 %v2859
      %v2876 = vpack.c.b16 %v2869, %v2868
      %v2877 = vpack.c.b16 %v2871, %v2870
      %v2878 = vpack.c.b16 %v2873, %v2872
      %v2879 = vpack.c.b16 %v2875, %v2874
      %v2881 = vsel %vm497, %v2876, 0
      %v2884 = vsel %vm497, %v2877, 0
      %v2887 = vsel %vm497, %v2878, 0
      %v2890 = vsel %vm497, %v2879, 0
      %2892 = vmatpush.bf16.msra.mxu0 0
      %2893 = vmatpush.bf16.msra.mxu0 0
      %2894 = vmatpush.bf16.msra.mxu0 0
      %2895 = vmatpush.bf16.msra.mxu0 0
      %2896 = vmatpush.bf16.msra.mxu0 %v1894
      %2897 = vmatpush.bf16.msra.mxu0 %v1893
      %2898 = vmatpush.bf16.msra.mxu0 %v1892
      %2899 = vmatpush.bf16.msra.mxu0 %v1891
      %2900 = vmatmul.bf16.gmra.mxu0 %v2881
      %v2901 = vpop.f32.mrf.mxu0
      %v2902 = vadd.f32 0.0, %v2901
      %v2903 = vpop.f32.mrf.mxu0
      %v2904 = vadd.f32 0.0, %v2903
      %2905 = vmatmul.bf16.gmra.mxu0 %v2884
      %v2906 = vpop.f32.mrf.mxu0
      %v2907 = vadd.f32 0.0, %v2906
      %v2908 = vpop.f32.mrf.mxu0
      %v2909 = vadd.f32 0.0, %v2908
      %2910 = vmatmul.bf16.gmra.mxu0 %v2887
      %v2911 = vpop.f32.mrf.mxu0
      %v2912 = vadd.f32 0.0, %v2911
      %v2913 = vpop.f32.mrf.mxu0
      %v2914 = vadd.f32 0.0, %v2913
      %2915 = vmatmul.bf16.gmra.mxu0 %v2890
      %v2916 = vpop.f32.mrf.mxu0
      %v2917 = vadd.f32 0.0, %v2916
      %v2918 = vpop.f32.mrf.mxu0
      %v2919 = vadd.f32 0.0, %v2918
      %2920 = vdwg.mxu0
      %v2921 = vpack.c.bf16 %v2904, %v2902
      %v2922 = vpack.c.bf16 %v2909, %v2907
      %v2923 = vpack.c.bf16 %v2914, %v2912
      %v2924 = vpack.c.bf16 %v2919, %v2917
      %s2925 = scalar_lea.vmem %s6, 256
      %v2926 = vld [vmem:[%s2925] sm:$0xf]
      %v2927 = vld [vmem:[%s2925 + $0x4] sm:$0xf]
      %v2928 = vld [vmem:[%s2925 + $0x8] sm:$0xf]
      %v2929 = vld [vmem:[%s2925 + $0xc] sm:$0xf]
      %v2934 = vunpack.c.l.b16 %v2926
      %v2935 = vunpack.c.l.b16 %v2927
      %v2936 = vunpack.c.l.b16 %v2928
      %v2937 = vunpack.c.l.b16 %v2929
      %v2938 = vpack.c.b16 %v2935, %v2934
      %v2939 = vpack.c.b16 %v2937, %v2936
      %v2943 = vsel %vm323, %v2921, 0
      %v2946 = vsel %vm323, %v2922, 0
      %v2949 = vsel %vm323, %v2923, 0
      %v2952 = vsel %vm323, %v2924, 0
      %2954 = vmatpush.bf16.msra.mxu0 0
      %2955 = vmatpush.bf16.msra.mxu0 0
      %2956 = vmatpush.bf16.msra.mxu0 0
      %2957 = vmatpush.bf16.msra.mxu0 0
      %2958 = vmatpush.bf16.msra.mxu0 0
      %2959 = vmatpush.bf16.msra.mxu0 0
      %2960 = vmatpush.bf16.msra.mxu0 %v2939
      %2961 = vmatpush.bf16.msra.mxu0 %v2938
      %2962 = vmatmul.bf16.gmra.mxu0 %v2943
      %v2963 = vpop.f32.mrf.mxu0
      %v2964 = vadd.f32 0.0, %v2963
      %v2965 = vpop.f32.mrf.mxu0
      %v2966 = vadd.f32 0.0, %v2965
      %2967 = vmatmul.bf16.gmra.mxu0 %v2946
      %v2968 = vpop.f32.mrf.mxu0
      %v2969 = vadd.f32 0.0, %v2968
      %v2970 = vpop.f32.mrf.mxu0
      %v2971 = vadd.f32 0.0, %v2970
      %2972 = vmatmul.bf16.gmra.mxu0 %v2949
      %v2973 = vpop.f32.mrf.mxu0
      %v2974 = vadd.f32 0.0, %v2973
      %v2975 = vpop.f32.mrf.mxu0
      %v2976 = vadd.f32 0.0, %v2975
      %2977 = vmatmul.bf16.gmra.mxu0 %v2952
      %v2978 = vpop.f32.mrf.mxu0
      %v2979 = vadd.f32 0.0, %v2978
      %v2980 = vpop.f32.mrf.mxu0
      %v2981 = vadd.f32 0.0, %v2980
      %2982 = vdwg.mxu0
      %v2983 = vadd.f32 %v2844, %v2964
      %v2984 = vadd.f32 %v2845, %v2966
      %v2985 = vadd.f32 %v2846, %v2969
      %v2986 = vadd.f32 %v2847, %v2971
      %v2987 = vadd.f32 %v2848, %v2974
      %v2988 = vadd.f32 %v2849, %v2976
      %v2989 = vadd.f32 %v2850, %v2979
      %v2990 = vadd.f32 %v2851, %v2981
      %v2991 = vld [vmem:[%s1572] sm:$0xf]
      %v2992 = vld [vmem:[%s1572 + $0x4] sm:$0xf]
      %v2993 = vld [vmem:[%s1572 + $0x8] sm:$0xf]
      %v2994 = vld [vmem:[%s1572 + $0xc] sm:$0xf]
      %v2995 = vld [vmem:[%s1572 + $0x10] sm:$0xf]
      %v2996 = vld [vmem:[%s1572 + $0x14] sm:$0xf]
      %v2997 = vld [vmem:[%s1572 + $0x18] sm:$0xf]
      %v2998 = vld [vmem:[%s1572 + $0x1c] sm:$0xf]
      %v3007 = vunpack.c.l.b16 %v2991
      %v3008 = vunpack.c.l.b16 %v2992
      %v3009 = vunpack.c.l.b16 %v2993
      %v3010 = vunpack.c.l.b16 %v2994
      %v3011 = vunpack.c.l.b16 %v2995
      %v3012 = vunpack.c.l.b16 %v2996
      %v3013 = vunpack.c.l.b16 %v2997
      %v3014 = vunpack.c.l.b16 %v2998
      %v3015 = vpack.c.b16 %v3008, %v3007
      %v3016 = vpack.c.b16 %v3010, %v3009
      %v3017 = vpack.c.b16 %v3012, %v3011
      %v3018 = vpack.c.b16 %v3014, %v3013
      %v3020 = vsel %vm497, %v3015, 0
      %v3023 = vsel %vm497, %v3016, 0
      %v3026 = vsel %vm497, %v3017, 0
      %v3029 = vsel %vm497, %v3018, 0
      %3031 = vmatpush.bf16.msra.mxu0 0
      %3032 = vmatpush.bf16.msra.mxu0 0
      %3033 = vmatpush.bf16.msra.mxu0 0
      %3034 = vmatpush.bf16.msra.mxu0 0
      %3035 = vmatpush.bf16.msra.mxu0 %v1894
      %3036 = vmatpush.bf16.msra.mxu0 %v1893
      %3037 = vmatpush.bf16.msra.mxu0 %v1892
      %3038 = vmatpush.bf16.msra.mxu0 %v1891
      %3039 = vmatmul.bf16.gmra.mxu0 %v3020
      %v3040 = vpop.f32.mrf.mxu0
      %v3041 = vadd.f32 0.0, %v3040
      %v3042 = vpop.f32.mrf.mxu0
      %v3043 = vadd.f32 0.0, %v3042
      %3044 = vmatmul.bf16.gmra.mxu0 %v3023
      %v3045 = vpop.f32.mrf.mxu0
      %v3046 = vadd.f32 0.0, %v3045
      %v3047 = vpop.f32.mrf.mxu0
      %v3048 = vadd.f32 0.0, %v3047
      %3049 = vmatmul.bf16.gmra.mxu0 %v3026
      %v3050 = vpop.f32.mrf.mxu0
      %v3051 = vadd.f32 0.0, %v3050
      %v3052 = vpop.f32.mrf.mxu0
      %v3053 = vadd.f32 0.0, %v3052
      %3054 = vmatmul.bf16.gmra.mxu0 %v3029
      %v3055 = vpop.f32.mrf.mxu0
      %v3056 = vadd.f32 0.0, %v3055
      %v3057 = vpop.f32.mrf.mxu0
      %v3058 = vadd.f32 0.0, %v3057
      %3059 = vdwg.mxu0
      %v3060 = vpack.c.bf16 %v3043, %v3041
      %v3061 = vpack.c.bf16 %v3048, %v3046
      %v3062 = vpack.c.bf16 %v3053, %v3051
      %v3063 = vpack.c.bf16 %v3058, %v3056
      %s3064 = scalar_lea.vmem %s6, 272
      %v3065 = vld [vmem:[%s3064] sm:$0xf]
      %v3066 = vld [vmem:[%s3064 + $0x4] sm:$0xf]
      %v3067 = vld [vmem:[%s3064 + $0x8] sm:$0xf]
      %v3068 = vld [vmem:[%s3064 + $0xc] sm:$0xf]
      %v3073 = vunpack.c.l.b16 %v3065
      %v3074 = vunpack.c.l.b16 %v3066
      %v3075 = vunpack.c.l.b16 %v3067
      %v3076 = vunpack.c.l.b16 %v3068
      %v3077 = vpack.c.b16 %v3074, %v3073
      %v3078 = vpack.c.b16 %v3076, %v3075
      %v3082 = vsel %vm323, %v3060, 0
      %v3085 = vsel %vm323, %v3061, 0
      %v3088 = vsel %vm323, %v3062, 0
      %v3091 = vsel %vm323, %v3063, 0
      %3093 = vmatpush.bf16.msra.mxu0 0
      %3094 = vmatpush.bf16.msra.mxu0 0
      %3095 = vmatpush.bf16.msra.mxu0 0
      %3096 = vmatpush.bf16.msra.mxu0 0
      %3097 = vmatpush.bf16.msra.mxu0 0
      %3098 = vmatpush.bf16.msra.mxu0 0
      %3099 = vmatpush.bf16.msra.mxu0 %v3078
      %3100 = vmatpush.bf16.msra.mxu0 %v3077
      %3101 = vmatmul.bf16.gmra.mxu0 %v3082
      %v3102 = vpop.f32.mrf.mxu0
      %v3103 = vadd.f32 0.0, %v3102
      %v3104 = vpop.f32.mrf.mxu0
      %v3105 = vadd.f32 0.0, %v3104
      %3106 = vmatmul.bf16.gmra.mxu0 %v3085
      %v3107 = vpop.f32.mrf.mxu0
      %v3108 = vadd.f32 0.0, %v3107
      %v3109 = vpop.f32.mrf.mxu0
      %v3110 = vadd.f32 0.0, %v3109
      %3111 = vmatmul.bf16.gmra.mxu0 %v3088
      %v3112 = vpop.f32.mrf.mxu0
      %v3113 = vadd.f32 0.0, %v3112
      %v3114 = vpop.f32.mrf.mxu0
      %v3115 = vadd.f32 0.0, %v3114
      %3116 = vmatmul.bf16.gmra.mxu0 %v3091
      %v3117 = vpop.f32.mrf.mxu0
      %v3118 = vadd.f32 0.0, %v3117
      %v3119 = vpop.f32.mrf.mxu0
      %v3120 = vadd.f32 0.0, %v3119
      %3121 = vdwg.mxu0
      %v3122 = vadd.f32 %v2983, %v3103
      %v3123 = vadd.f32 %v2984, %v3105
      %v3124 = vadd.f32 %v2985, %v3108
      %v3125 = vadd.f32 %v2986, %v3110
      %v3126 = vadd.f32 %v2987, %v3113
      %v3127 = vadd.f32 %v2988, %v3115
      %v3128 = vadd.f32 %v2989, %v3118
      %v3129 = vadd.f32 %v2990, %v3120
      %3138 = vrot.lane.b32.xlu0 %v3122, 24
      %v3139 = vpop.permute.xlu0 %3138
      %3140 = vrot.lane.b32.xlu0 %v3123, 24
      %v3141 = vpop.permute.xlu0 %3140
      %3142 = vrot.lane.b32.xlu0 %v3124, 24
      %v3143 = vpop.permute.xlu0 %3142
      %3144 = vrot.lane.b32.xlu0 %v3125, 24
      %v3145 = vpop.permute.xlu0 %3144
      %3146 = vrot.lane.b32.xlu0 %v3126, 24
      %v3147 = vpop.permute.xlu0 %3146
      %3148 = vrot.lane.b32.xlu0 %v3127, 24
      %v3149 = vpop.permute.xlu0 %3148
      %3150 = vrot.lane.b32.xlu0 %v3128, 24
      %v3151 = vpop.permute.xlu0 %3150
      %3152 = vrot.lane.b32.xlu0 %v3129, 24
      %v3153 = vpop.permute.xlu0 %3152
      %vm3162 = vcmask 261312
      %3163 = vst.msk [vmem:[#allocation2] sm:$0xff] %vm3162, %v3139
      %3164 = vst.msk [vmem:[#allocation2 + $0x8] sm:$0xff] %vm3162, %v3141
      %3165 = vst.msk [vmem:[#allocation2 + $0x10] sm:$0xff] %vm3162, %v3143
      %3166 = vst.msk [vmem:[#allocation2 + $0x18] sm:$0xff] %vm3162, %v3145
      %3167 = vst.msk [vmem:[#allocation2 + $0x20] sm:$0xff] %vm3162, %v3147
      %3168 = vst.msk [vmem:[#allocation2 + $0x28] sm:$0xff] %vm3162, %v3149
      %3169 = vst.msk [vmem:[#allocation2 + $0x30] sm:$0xff] %vm3162, %v3151
      %3170 = vst.msk [vmem:[#allocation2 + $0x38] sm:$0xff] %vm3162, %v3153
      %v3171 = vld [vmem:[#allocation2] sm:$0xff]
      %v3172 = vld [vmem:[#allocation2 + $0x8] sm:$0xff]
      %v3173 = vld [vmem:[#allocation2 + $0x10] sm:$0xff]
      %v3174 = vld [vmem:[#allocation2 + $0x18] sm:$0xff]
      %v3175 = vld [vmem:[#allocation2 + $0x20] sm:$0xff]
      %v3176 = vld [vmem:[#allocation2 + $0x28] sm:$0xff]
      %v3177 = vld [vmem:[#allocation2 + $0x30] sm:$0xff]
      %v3178 = vld [vmem:[#allocation2 + $0x38] sm:$0xff]
      %v3179 = vpack.c.bf16 %v3171, %v3171
      %v3180 = vpack.c.bf16 %v3172, %v3172
      %v3181 = vpack.c.bf16 %v3173, %v3173
      %v3182 = vpack.c.bf16 %v3174, %v3174
      %v3183 = vpack.c.bf16 %v3175, %v3175
      %v3184 = vpack.c.bf16 %v3176, %v3176
      %v3185 = vpack.c.bf16 %v3177, %v3177
      %v3186 = vpack.c.bf16 %v3178, %v3178
      %vm3187 = vcmask 257024
      %3188 = vst.msk [vmem:[%s305] sm:$0xf] %vm3187, %v3179
      %3189 = vst.msk [vmem:[%s305 + $0x4] sm:$0xf] %vm3187, %v3180
      %3190 = vst.msk [vmem:[%s305 + $0x8] sm:$0xf] %vm3187, %v3181
      %3191 = vst.msk [vmem:[%s305 + $0xc] sm:$0xf] %vm3187, %v3182
      %3192 = vst.msk [vmem:[%s305 + $0x10] sm:$0xf] %vm3187, %v3183
      %3193 = vst.msk [vmem:[%s305 + $0x14] sm:$0xf] %vm3187, %v3184
      %3194 = vst.msk [vmem:[%s305 + $0x18] sm:$0xf] %vm3187, %v3185
      %3195 = vst.msk [vmem:[%s305 + $0x1c] sm:$0xf] %vm3187, %v3186
      %p3196 = scmp.lt.s32.totalorder %s19, 1
      %s3197 = scalar_select %p3196, %s19, 1
      %s3198 = smul.addr %s3197, 8
      %s3199 = smul.addr %s3198, 4
      %s3200 = scalar_lea.vmem %s8, %s3199
      // Predicated region
      $region53: #{densenet_forward.6} parent=51 // pred_check
        %p3201 = pneg %p210
      $region54: #{densenet_forward.6} parent=51 // pred_check_branch
        %3203 = sbr.rel (%p3201) target = $region56
      $region55: #{densenet_forward.6} parent=51 // pred_region
        _
      $region56: #{densenet_forward.6} parent=51 // pred_fallthru
        _
    $region52: #{densenet_forward.6} parent=5 // pred_fallthru
      _
    %p3204 = scmp.le.s32.totalorder 2, %s14
    // Predicated region
    $region57: #{densenet_forward.6} parent=5 // pred_check
      %p3205 = pneg %p3204
    $region58: #{densenet_forward.6} parent=5 // pred_check_branch
      %3207 = sbr.rel (%p3205) target = $region60
    $region59: #{densenet_forward.6} parent=5 // pred_region
      %s3208 = ssub.s32 %s14, 2
      // Predicated region
      $region61: #{densenet_forward.6} parent=59 // pred_check
        %p3209 = pneg %p216
      $region62: #{densenet_forward.6} parent=59 // pred_check_branch
        %3211 = sbr.rel (%p3209) target = $region64
      $region63: #{densenet_forward.6} parent=59 // pred_region
        %p3212 = scmp.lt.s32.totalorder %s20, 1
        %s3213 = scalar_select %p3212, %s20, 1
        %s3214 = smul.addr %s3213, 8
        %s3215 = smul.addr %s3214, 4
        %s3216 = scalar_lea.vmem %s8, %s3215
      $region64: #{densenet_forward.6} parent=59 // pred_fallthru
        _
    $region60: #{densenet_forward.6} parent=5 // pred_fallthru
      _
  $region6: #{densenet_forward.6} parent=0 // loop_footer
    %s18 = sadd.s32 1, %s14
  $region7: #{densenet_forward.6} parent=0 // loop_footer_branch
    %13 = sbr.rel target = $region3
  $region8: #{densenet_forward.6} parent=0 // loop_exit
    _

// kernel: densenet_forward.9
$region0: #{densenet_forward.9}
  #allocation0 [shape = 'u32[]', space=smem, size = 0x4, offset = 0x4, fixed_abs, tag = 'smem constant byte address 0x4 - core index']
  #allocation1 [shape = 'u32[72,128]{1,0:T(1,128)}', space=vmem, size = 0x9000, scoped, tag = 'internal scratch']
  %s0 = inlined_call_operand.vmem [shape: bf16[2,16,32], index: 0, kind: input, shape index: {}]
  %s1 = inlined_call_operand.vmem [shape: f32[1,32], index: 1, kind: input, shape index: {}]
  %s2 = inlined_call_operand.vmem [shape: f32[1,32], index: 2, kind: input, shape index: {}]
  %s3 = inlined_call_operand.vmem [shape: bf16[32,24], index: 3, kind: input, shape index: {}]
  %s4 = inlined_call_operand.vmem [shape: f32[1,24], index: 4, kind: input, shape index: {}]
  %s5 = inlined_call_operand.hbm [shape: f32[2,16,32], index: 5, kind: output, shape index: {0}]
  %s6 = inlined_call_operand.hbm [shape: f32[2,1,32], index: 6, kind: output, shape index: {1}]
  %s7 = inlined_call_operand.hbm [shape: f32[2,1,24], index: 7, kind: output, shape index: {2}]
  %8 = xla_tuple %s5, %s6, %s7
  %s9 = sld [smem:[#allocation0]]
  $region69: #{densenet_forward.9} parent=0
    _
  %s11 = ssub.s32 1, %s9
  %s12 = scalar_select 0, %s11, %s9
  $region1: #{densenet_forward.9} parent=0
    #allocation2 [shape = 'u8[16384]{0}', space=vmem, size = 0x4000, scoped, tag = 'output window, operand 0']
    #allocation3 [shape = 's32[2]{0}', space=sflag, size = 0x8, scoped, tag = 'scoped memory for densenet_forward.9']
    #allocation4 [shape = 'u8[1024]{0}', space=vmem, size = 0x400, scoped, tag = 'output window, operand 1']
    #allocation5 [shape = 's32[2]{0}', space=sflag, size = 0x8, scoped, tag = 'scoped memory for densenet_forward.9']
    #allocation6 [shape = 'u8[1024]{0}', space=vmem, size = 0x400, scoped, tag = 'output window, operand 2']
    %13 = vsyncpa [#allocation3], 0
    %s14 = scalar_lea.sflag [#allocation3], 1
    %15 = vsyncpa %s14, 0
    %16 = vsyncpa [#allocation5], 0
    %s17 = scalar_lea.sflag [#allocation5], 1
    %18 = vsyncpa %s17, 0
    loop: start=0, step=1, limit=4
    $region2: #{densenet_forward.9} parent=1 // loop_pre_header
      _
    $region3: #{densenet_forward.9} parent=1 // loop_header
      %s20 = sphi 0, %s24
      %p21 = scmp.ge.s32.totalorder %s20, 4
      %s30 = sphi 0, %s32
      %s33 = sphi 0, %s30
      %s34 = sphi 0, %s33
      %s50 = sphi 0, %s34
      %s54 = sphi 0, %s54
      %s56 = sphi 0, %s54
      %s57 = sphi 0, %s56
      %s71 = sphi 0, %s57
      %s75 = sphi 0, %s75
      %s77 = sphi 0, %s75
      %s78 = sphi 0, %s77
      %s92 = sphi 0, %s78
      %s96 = sphi 0, %s96
      %s98 = sphi 0, %s96
      %s99 = sphi 0, %s98
      %s113 = sphi 0, %s99
      %s117 = sphi 0, %s117
      %s119 = sphi 0, %s117
      %s120 = sphi 0, %s119
      %s134 = sphi 0, %s120
      %s140 = sphi 0, %s142
      %s143 = sphi 0, %s140
      %s144 = sphi 0, %s143
      %s160 = sphi 0, %s144
      %s166 = sphi 0, %s168
      %s169 = sphi 0, %s166
      %s170 = sphi 0, %s169
      %s186 = sphi 0, %s170
      %s192 = sphi 0, %s194
      %s195 = sphi 0, %s192
      %s196 = sphi 0, %s195
      %s212 = sphi 0, %s196
    $region4: #{densenet_forward.9} parent=1 // loop_header_branch
      %23 = sbr.rel (%p21) target = $region8
    $region5: #{densenet_forward.9} parent=1 // loop_body
      %s25 = ssub.s32 %s20, 1
      %s26 = ssub.s32 %s20, 2
      %s27 = sadd.s32 %s20, 1
      %s28 = ssub.s32 %s20, %s27
      %p29 = scmp.eq.s32.totalorder %s28, 0
      %s31 = sadd.s32 %s30, 1
      %s32 = scalar_select %p29, %s30, %s31
      %p35 = pneg %p29
      %p36 = scmp.eq.s32.totalorder %s20, 1
      %p37 = por %p35, %p36
      %p38 = scmp.ne.s32.totalorder %s30, %s33
      %p39 = scmp.eq.s32.totalorder %s20, 0
      %p40 = por %p38, %p39
      %p41 = scmp.ne.s32.totalorder %s30, %s33
      %p42 = scmp.eq.s32.totalorder %s25, 1
      %p43 = por %p41, %p42
      %p44 = scmp.ne.s32.totalorder %s33, %s34
      %p45 = scmp.eq.s32.totalorder %s25, 0
      %p46 = por %p44, %p45
      %p47 = scmp.ne.s32.totalorder %s33, %s34
      %p48 = scmp.eq.s32.totalorder %s26, 1
      %p49 = por %p47, %p48
      %p51 = scmp.ne.s32.totalorder %s34, %s50
      %p52 = scmp.eq.s32.totalorder %s26, 0
      %p53 = por %p51, %p52
      %s55 = sadd.s32 %s54, 1
      %p58 = scmp.eq.s32.totalorder %s20, 1
      %p59 = scmp.ne.s32.totalorder %s54, %s56
      %p60 = scmp.eq.s32.totalorder %s20, 0
      %p61 = por %p59, %p60
      %p62 = scmp.ne.s32.totalorder %s54, %s56
      %p63 = scmp.eq.s32.totalorder %s25, 1
      %p64 = por %p62, %p63
      %p65 = scmp.ne.s32.totalorder %s56, %s57
      %p66 = scmp.eq.s32.totalorder %s25, 0
      %p67 = por %p65, %p66
      %p68 = scmp.ne.s32.totalorder %s56, %s57
      %p69 = scmp.eq.s32.totalorder %s26, 1
      %p70 = por %p68, %p69
      %p72 = scmp.ne.s32.totalorder %s57, %s71
      %p73 = scmp.eq.s32.totalorder %s26, 0
      %p74 = por %p72, %p73
      %s76 = sadd.s32 %s75, 1
      %p79 = scmp.eq.s32.totalorder %s20, 1
      %p80 = scmp.ne.s32.totalorder %s75, %s77
      %p81 = scmp.eq.s32.totalorder %s20, 0
      %p82 = por %p80, %p81
      %p83 = scmp.ne.s32.totalorder %s75, %s77
      %p84 = scmp.eq.s32.totalorder %s25, 1
      %p85 = por %p83, %p84
      %p86 = scmp.ne.s32.totalorder %s77, %s78
      %p87 = scmp.eq.s32.totalorder %s25, 0
      %p88 = por %p86, %p87
      %p89 = scmp.ne.s32.totalorder %s77, %s78
      %p90 = scmp.eq.s32.totalorder %s26, 1
      %p91 = por %p89, %p90
      %p93 = scmp.ne.s32.totalorder %s78, %s92
      %p94 = scmp.eq.s32.totalorder %s26, 0
      %p95 = por %p93, %p94
      %s97 = sadd.s32 %s96, 1
      %p100 = scmp.eq.s32.totalorder %s20, 1
      %p101 = scmp.ne.s32.totalorder %s96, %s98
      %p102 = scmp.eq.s32.totalorder %s20, 0
      %p103 = por %p101, %p102
      %p104 = scmp.ne.s32.totalorder %s96, %s98
      %p105 = scmp.eq.s32.totalorder %s25, 1
      %p106 = por %p104, %p105
      %p107 = scmp.ne.s32.totalorder %s98, %s99
      %p108 = scmp.eq.s32.totalorder %s25, 0
      %p109 = por %p107, %p108
      %p110 = scmp.ne.s32.totalorder %s98, %s99
      %p111 = scmp.eq.s32.totalorder %s26, 1
      %p112 = por %p110, %p111
      %p114 = scmp.ne.s32.totalorder %s99, %s113
      %p115 = scmp.eq.s32.totalorder %s26, 0
      %p116 = por %p114, %p115
      %s118 = sadd.s32 %s117, 1
      %p121 = scmp.eq.s32.totalorder %s20, 1
      %p122 = scmp.ne.s32.totalorder %s117, %s119
      %p123 = scmp.eq.s32.totalorder %s20, 0
      %p124 = por %p122, %p123
      %p125 = scmp.ne.s32.totalorder %s117, %s119
      %p126 = scmp.eq.s32.totalorder %s25, 1
      %p127 = por %p125, %p126
      %p128 = scmp.ne.s32.totalorder %s119, %s120
      %p129 = scmp.eq.s32.totalorder %s25, 0
      %p130 = por %p128, %p129
      %p131 = scmp.ne.s32.totalorder %s119, %s120
      %p132 = scmp.eq.s32.totalorder %s26, 1
      %p133 = por %p131, %p132
      %p135 = scmp.ne.s32.totalorder %s120, %s134
      %p136 = scmp.eq.s32.totalorder %s26, 0
      %p137 = por %p135, %p136
      %s138 = ssub.s32 %s20, %s27
      %p139 = scmp.eq.s32.totalorder %s138, 0
      %s141 = sadd.s32 %s140, 1
      %s142 = scalar_select %p139, %s140, %s141
      %p145 = pneg %p139
      %p146 = scmp.eq.s32.totalorder %s20, 1
      %p147 = por %p145, %p146
      %p148 = scmp.ne.s32.totalorder %s140, %s143
      %p149 = scmp.eq.s32.totalorder %s20, 0
      %p150 = por %p148, %p149
      %p151 = scmp.ne.s32.totalorder %s140, %s143
      %p152 = scmp.eq.s32.totalorder %s25, 1
      %p153 = por %p151, %p152
      %p154 = scmp.ne.s32.totalorder %s143, %s144
      %p155 = scmp.eq.s32.totalorder %s25, 0
      %p156 = por %p154, %p155
      %p157 = scmp.ne.s32.totalorder %s143, %s144
      %p158 = scmp.eq.s32.totalorder %s26, 1
      %p159 = por %p157, %p158
      %p161 = scmp.ne.s32.totalorder %s144, %s160
      %p162 = scmp.eq.s32.totalorder %s26, 0
      %p163 = por %p161, %p162
      %s164 = ssub.s32 %s20, %s27
      %p165 = scmp.eq.s32.totalorder %s164, 0
      %s167 = sadd.s32 %s166, 1
      %s168 = scalar_select %p165, %s166, %s167
      %p171 = pneg %p165
      %p172 = scmp.eq.s32.totalorder %s20, 1
      %p173 = por %p171, %p172
      %p174 = scmp.ne.s32.totalorder %s166, %s169
      %p175 = scmp.eq.s32.totalorder %s20, 0
      %p176 = por %p174, %p175
      %p177 = scmp.ne.s32.totalorder %s166, %s169
      %p178 = scmp.eq.s32.totalorder %s25, 1
      %p179 = por %p177, %p178
      %p180 = scmp.ne.s32.totalorder %s169, %s170
      %p181 = scmp.eq.s32.totalorder %s25, 0
      %p182 = por %p180, %p181
      %p183 = scmp.ne.s32.totalorder %s169, %s170
      %p184 = scmp.eq.s32.totalorder %s26, 1
      %p185 = por %p183, %p184
      %p187 = scmp.ne.s32.totalorder %s170, %s186
      %p188 = scmp.eq.s32.totalorder %s26, 0
      %p189 = por %p187, %p188
      %s190 = ssub.s32 %s20, %s27
      %p191 = scmp.eq.s32.totalorder %s190, 0
      %s193 = sadd.s32 %s192, 1
      %s194 = scalar_select %p191, %s192, %s193
      %p197 = pneg %p191
      %p198 = scmp.eq.s32.totalorder %s20, 1
      %p199 = por %p197, %p198
      %p200 = scmp.ne.s32.totalorder %s192, %s195
      %p201 = scmp.eq.s32.totalorder %s20, 0
      %p202 = por %p200, %p201
      %p203 = scmp.ne.s32.totalorder %s192, %s195
      %p204 = scmp.eq.s32.totalorder %s25, 1
      %p205 = por %p203, %p204
      %p206 = scmp.ne.s32.totalorder %s195, %s196
      %p207 = scmp.eq.s32.totalorder %s25, 0
      %p208 = por %p206, %p207
      %p209 = scmp.ne.s32.totalorder %s195, %s196
      %p210 = scmp.eq.s32.totalorder %s26, 1
      %p211 = por %p209, %p210
      %p213 = scmp.ne.s32.totalorder %s196, %s212
      %p214 = scmp.eq.s32.totalorder %s26, 0
      %p215 = por %p213, %p214
      %p216 = scmp.le.s32.totalorder 1, %s20
      %p217 = scmp.lt.s32.totalorder %s20, 3
      %p218 = pnand %p216, %p217
      %p219 = pneg %p218
      // Predicated region
      $region9: #{densenet_forward.9} parent=5 // pred_check
        _
      $region10: #{densenet_forward.9} parent=5 // pred_check_branch
        %221 = sbr.rel (%p218) target = $region12
      $region11: #{densenet_forward.9} parent=5 // pred_region
        %s222 = ssub.s32 %s20, 1
        // Predicated region
        $region13: #{densenet_forward.9} parent=11 // pred_check
          %p223 = pneg %p67
        $region14: #{densenet_forward.9} parent=11 // pred_check_branch
          %225 = sbr.rel (%p223) target = $region16
        $region15: #{densenet_forward.9} parent=11 // pred_region
          _
        $region16: #{densenet_forward.9} parent=11 // pred_fallthru
          _
        // Predicated region
        $region17: #{densenet_forward.9} parent=11 // pred_check
          %p226 = pneg %p88
        $region18: #{densenet_forward.9} parent=11 // pred_check_branch
          %228 = sbr.rel (%p226) target = $region20
        $region19: #{densenet_forward.9} parent=11 // pred_region
          _
        $region20: #{densenet_forward.9} parent=11 // pred_fallthru
          _
        // Predicated region
        $region21: #{densenet_forward.9} parent=11 // pred_check
          %p229 = pneg %p109
        $region22: #{densenet_forward.9} parent=11 // pred_check_branch
          %231 = sbr.rel (%p229) target = $region24
        $region23: #{densenet_forward.9} parent=11 // pred_region
          _
        $region24: #{densenet_forward.9} parent=11 // pred_fallthru
          _
        // Predicated region
        $region25: #{densenet_forward.9} parent=11 // pred_check
          %p232 = pneg %p130
        $region26: #{densenet_forward.9} parent=11 // pred_check_branch
          %234 = sbr.rel (%p232) target = $region28
        $region27: #{densenet_forward.9} parent=11 // pred_region
          _
        $region28: #{densenet_forward.9} parent=11 // pred_fallthru
          _
      $region12: #{densenet_forward.9} parent=5 // pred_fallthru
        _
      %p235 = scmp.lt.s32.totalorder %s20, 2
      // Predicated region
      $region29: #{densenet_forward.9} parent=5 // pred_check
        %p236 = pneg %p235
      $region30: #{densenet_forward.9} parent=5 // pred_check_branch
        %238 = sbr.rel (%p236) target = $region32
      $region31: #{densenet_forward.9} parent=5 // pred_region
        // Predicated region
        $region33: #{densenet_forward.9} parent=31 // pred_check
          %p239 = pneg %p40
        $region34: #{densenet_forward.9} parent=31 // pred_check_branch
          %241 = sbr.rel (%p239) target = $region36
        $region35: #{densenet_forward.9} parent=31 // pred_region
          %p242 = scmp.lt.s32.totalorder %s20, 1
          %s243 = scalar_select %p242, %s20, 1
          %s244 = smul.addr %s243, 2
          %s245 = smul.addr %s244, 4
          %s246 = scalar_lea.vmem %s0, %s245
        $region36: #{densenet_forward.9} parent=31 // pred_fallthru
          _
      $region32: #{densenet_forward.9} parent=5 // pred_fallthru
        _
      %p247 = scmp.le.s32.totalorder 1, %s20
      %p248 = scmp.lt.s32.totalorder %s20, 3
      %p249 = pnand %p247, %p248
      %p250 = pneg %p249
      // Predicated region
      $region37: #{densenet_forward.9} parent=5 // pred_check
        _
      $region38: #{densenet_forward.9} parent=5 // pred_check_branch
        %252 = sbr.rel (%p249) target = $region40
      $region39: #{densenet_forward.9} parent=5 // pred_region
        %s253 = ssub.s32 %s20, 1
        %p254 = scmp.lt.s32.totalorder %s25, 1
        %s255 = scalar_select %p254, %s25, 1
        %s256 = smul.addr %s255, 2
        %s257 = smul.addr %s256, 4
        %s258 = scalar_lea.vmem %s0, %s257
        %p259 = pneg %p46
        %p260 = pneg %p43
        %p261 = pneg %p67
        %p262 = pneg %p64
        %p263 = pneg %p88
        %p264 = pneg %p85
        %p265 = pneg %p109
        %p266 = pneg %p106
        %p267 = pneg %p130
        %p268 = pneg %p127
        %p269 = pneg %p156
        %p270 = pneg %p153
        %s271 = sand.u32 %s143, 1
        %s272 = scalar_lea.sflag [#allocation3], %s271
        %s273 = sand.u32 %s143, 1
        %s274 = smul.addr %s273, 16
        %s275 = scalar_lea.vmem [#allocation2], %s274
        %p276 = pneg %p182
        %p277 = pneg %p179
        %s278 = sand.u32 %s25, 1
        %s279 = scalar_lea.sflag [#allocation5], %s278
        %s280 = sand.u32 %s169, 1
        %s281 = scalar_lea.vmem [#allocation4], %s280
        %p282 = pneg %p208
        %p283 = pneg %p205
        %s284 = sand.u32 %s25, 1
        %s285 = scalar_lea.sflag [#allocation5], %s284
        %s286 = sand.u32 %s195, 1
        %s287 = scalar_lea.vmem [#allocation6], %s286
        %p288 = scmp.lt.s32.totalorder %s25, 1
        %s289 = scalar_select %p288, %s25, 1
        %s290 = smul.addr %s289, 2
        %s291 = smul.addr %s290, 4
        %s292 = scalar_lea.vmem %s0, %s291
        %v294 = vld [vmem:[%s292] sm:$0xf]
        %v295 = vld [vmem:[%s292 + $0x4] sm:$0xf]
        %v296 = vunpack.c.l.bf16 %v294
        %v297 = vunpack.c.l.bf16 %v295
        %v298 = vld [vmem:[%s1] sm:$0x1]
        %v300 = vperm.slane %v298, 0
        %v302 = vmul.f32 %v296, %v300
        %v303 = vmul.f32 %v297, %v300
        %v304 = vld [vmem:[%s2] sm:$0x1]
        %v306 = vperm.slane %v304, 0
        %v308 = vadd.f32 %v302, %v306
        %v309 = vadd.f32 %v303, %v306
        %v310 = vmax.f32 %v308, 0.0
        %v311 = vmax.f32 %v309, 0.0
        %vm312 = vcmask 261120
        %313 = vst.msk [vmem:[%s275] sm:$0xff] %vm312, %v310
        %314 = vst.msk [vmem:[%s275 + $0x8] sm:$0xff] %vm312, %v311
        %v315 = vsel %vm312, %v310, 0.0
        %v316 = vsel %vm312, %v311, 0.0
        %v317 = vadd.f32 %v315, %v316
        %v318 = vrot.slane %v317, 4
        %v319 = vadd.f32 %v317, %v318
        %v320 = vrot.slane %v319, 2
        %v321 = vadd.f32 %v319, %v320
        %v322 = vrot.slane %v321, 1
        %v323 = vadd.f32 %v321, %v322
        %v324 = vrcp.pop 16.0
        %v325 = vmul.f32 16.0, %v324
        %v326 = vsub.f32 1.0, %v325
        %v327 = vmul.f32 %v324, %v326
        %v328 = vadd.f32 %v324, %v327
        %vm329 = vweird.f32 %v324
        %v330 = vsel %vm329, %v324, %v328
        %v331 = vmul.f32 %v323, %v330
        %vm332 = vcmask 253952
        %333 = vst.msk [vmem:[%s281] sm:$0x1] %vm332, %v331
        %v334 = vpack.c.bf16 %v331, %v331
        %v335 = vld [vmem:[%s3] sm:$0xf]
        %v336 = vld [vmem:[%s3 + $0x4] sm:$0xf]
        %v337 = vld [vmem:[%s3 + $0x8] sm:$0xf]
        %v338 = vld [vmem:[%s3 + $0xc] sm:$0xf]
        %v339 = vld [vmem:[%s4] sm:$0x1]
        %v344 = vunpack.c.l.b16 %v335
        %v345 = vunpack.c.l.b16 %v336
        %v346 = vunpack.c.l.b16 %v337
        %v347 = vunpack.c.l.b16 %v338
        %v348 = vpack.c.b16 %v345, %v344
        %v349 = vpack.c.b16 %v347, %v346
        %v353 = vsel %vm312, %v334, 0
        %355 = vmatpush.bf16.msra.mxu0 0
        %356 = vmatpush.bf16.msra.mxu0 0
        %357 = vmatpush.bf16.msra.mxu0 0
        %358 = vmatpush.bf16.msra.mxu0 0
        %359 = vmatpush.bf16.msra.mxu0 0
        %360 = vmatpush.bf16.msra.mxu0 0
        %361 = vmatpush.bf16.msra.mxu0 %v349
        %362 = vmatpush.bf16.msra.mxu0 %v348
        %363 = vmatmul.bf16.gmra.mxu0 %v353
        %v364 = vpop.f32.mrf.mxu0
        %v365 = vadd.f32 %v339, %v364
        %v366 = vpop.f32.mrf.mxu0
        %367 = vdwg.mxu0
        %v368 = vmul.f32 %v365, %v365
        %vm369 = vcmask 188416
        %v370 = vsel %vm369, %v368, 0.0
        %371 = vadd.xlane.f32.xlu0 %v370
        %v372 = vpop.xlane.xlu0 %371
        %v373 = vrsqrt.pop %v372
        %v374 = vmul.f32 %v373, %v372
        %v375 = vmul.f32 %v374, %v373
        %v376 = vmul.f32 0.5, %v375
        %v377 = vsub.f32 1.5, %v376
        %v378 = vmul.f32 %v373, %v377
        %v379 = vmul.f32 %v372, %v378
        %vm380 = vcmp.eq.f32.partialorder %v372, inf
        %v381 = vsel %vm380, %v372, %v379
        %vm382 = vcmp.eq.f32.partialorder %v372, 0.0
        %v383 = vand.u32 %v372, 2147483648
        %v384 = vsel %vm382, %v383, %v381
        %v385 = vmax.f32 %v384, 1e-12
        %v386 = vrcp.pop %v385
        %v387 = vmul.f32 %v385, %v386
        %v388 = vsub.f32 1.0, %v387
        %v389 = vmul.f32 %v386, %v388
        %v390 = vadd.f32 %v386, %v389
        %vm391 = vweird.f32 %v385
        %vm392 = vweird.f32 %v386
        %vm393 = vmor %vm391, %vm392
        %v394 = vsel %vm393, %v386, %v390
        %v395 = vand.u32 2147483647, %v385
        %vm396 = vcmp.eq.f32.partialorder %v395, 8.507059e+37
        %v397 = vand.u32 %v385, 2147483648
        %v398 = vor.u32 1.1754944e-38, %v397
        %v399 = vsel %vm396, %v398, %v394
        %v400 = vmul.f32 %v365, %v399
        %401 = vst.msk [vmem:[%s287] sm:$0x1] %vm369, %v400
        %s402 = sand.u32 %s143, 1
        %s403 = scalar_lea.sflag [#allocation3], %s402
        %s404 = sand.u32 %s143, 1
        %s405 = smul.addr %s404, 16
        %s406 = scalar_lea.vmem [#allocation2], %s405
        %s407 = sand.u32 %s25, 1
        %s408 = scalar_lea.sflag [#allocation5], %s407
        %s409 = sand.u32 %s169, 1
        %s410 = scalar_lea.vmem [#allocation4], %s409
        %s411 = sand.u32 %s25, 1
        %s412 = scalar_lea.sflag [#allocation5], %s411
        %s413 = sand.u32 %s195, 1
        %s414 = scalar_lea.vmem [#allocation6], %s413
        // Predicated region
        $region41: #{densenet_forward.9} parent=39 // pred_check
          %p415 = pneg %p153
        $region42: #{densenet_forward.9} parent=39 // pred_check_branch
          %417 = sbr.rel (%p415) target = $region44
        $region43: #{densenet_forward.9} parent=39 // pred_region
          %419 = vsyncadd %s403, 0
          %s420 = smul.addr %s25, 2
          %s421 = smul.addr %s420, 8
          %s422 = scalar_lea.hbm %s5, %s421
          %s423 = sshll.u32 %s406, 4
          %s424 = int_to_ptr.vmem [resolvable:$true] %s423
          %s425 = sshll.u32 %s422, 4
          %s426 = int_to_ptr.hbm [resolvable:$true] %s425
          %431 = dma.vmem_to_hbm [thread:$0]  %s424, 256, %s426, %s403, 128, 128, 8
        $region44: #{densenet_forward.9} parent=39 // pred_fallthru
          _
        // Predicated region
        $region45: #{densenet_forward.9} parent=39 // pred_check
          %p432 = pneg %p179
        $region46: #{densenet_forward.9} parent=39 // pred_check_branch
          %434 = sbr.rel (%p432) target = $region48
        $region47: #{densenet_forward.9} parent=39 // pred_region
          %436 = vsyncadd %s408, 0
          %s437 = scalar_lea.hbm %s6, %s25
          %s439 = sshll.u32 %s410, 4
          %s440 = int_to_ptr.vmem [resolvable:$true] %s439
          %s441 = sshll.u32 %s437, 4
          %s442 = int_to_ptr.hbm [resolvable:$true] %s441
          %444 = dma.vmem_to_hbm [thread:$0]  %s440, 16, %s442, %s408
        $region48: #{densenet_forward.9} parent=39 // pred_fallthru
          _
        // Predicated region
        $region49: #{densenet_forward.9} parent=39 // pred_check
          %p445 = pneg %p205
        $region50: #{densenet_forward.9} parent=39 // pred_check_branch
          %447 = sbr.rel (%p445) target = $region52
        $region51: #{densenet_forward.9} parent=39 // pred_region
          %449 = vsyncadd %s412, 0
          %s450 = scalar_lea.hbm %s7, %s25
          %s452 = sshll.u32 %s414, 4
          %s453 = int_to_ptr.vmem [resolvable:$true] %s452
          %s454 = sshll.u32 %s450, 4
          %s455 = int_to_ptr.hbm [resolvable:$true] %s454
          %457 = dma.vmem_to_hbm [thread:$0]  %s453, 16, %s455, %s412
        $region52: #{densenet_forward.9} parent=39 // pred_fallthru
          _
      $region40: #{densenet_forward.9} parent=5 // pred_fallthru
        _
      %p458 = scmp.le.s32.totalorder 2, %s20
      // Predicated region
      $region53: #{densenet_forward.9} parent=5 // pred_check
        %p459 = pneg %p458
      $region54: #{densenet_forward.9} parent=5 // pred_check_branch
        %461 = sbr.rel (%p459) target = $region56
      $region55: #{densenet_forward.9} parent=5 // pred_region
        %s462 = ssub.s32 %s20, 2
        // Predicated region
        $region57: #{densenet_forward.9} parent=55 // pred_check
          %p463 = pneg %p159
        $region58: #{densenet_forward.9} parent=55 // pred_check_branch
          %465 = sbr.rel (%p463) target = $region60
        $region59: #{densenet_forward.9} parent=55 // pred_region
          %s466 = sand.u32 %s144, 1
          %s467 = scalar_lea.sflag [#allocation3], %s466
          %s468 = sand.u32 %s144, 1
          %s469 = smul.addr %s468, 16
          %s470 = scalar_lea.vmem [#allocation2], %s469
          %472 = dma.done %s467, 256
        $region60: #{densenet_forward.9} parent=55 // pred_fallthru
          _
        // Predicated region
        $region61: #{densenet_forward.9} parent=55 // pred_check
          %p473 = pneg %p185
        $region62: #{densenet_forward.9} parent=55 // pred_check_branch
          %475 = sbr.rel (%p473) target = $region64
        $region63: #{densenet_forward.9} parent=55 // pred_region
          %s476 = sand.u32 %s26, 1
          %s477 = scalar_lea.sflag [#allocation5], %s476
          %s478 = sand.u32 %s170, 1
          %s479 = scalar_lea.vmem [#allocation4], %s478
          %481 = dma.done %s477, 16
        $region64: #{densenet_forward.9} parent=55 // pred_fallthru
          _
        // Predicated region
        $region65: #{densenet_forward.9} parent=55 // pred_check
          %p482 = pneg %p211
        $region66: #{densenet_forward.9} parent=55 // pred_check_branch
          %484 = sbr.rel (%p482) target = $region68
        $region67: #{densenet_forward.9} parent=55 // pred_region
          %s485 = sand.u32 %s26, 1
          %s486 = scalar_lea.sflag [#allocation5], %s485
          %s487 = sand.u32 %s196, 1
          %s488 = scalar_lea.vmem [#allocation6], %s487
          %490 = dma.done %s486, 16
        $region68: #{densenet_forward.9} parent=55 // pred_fallthru
          _
      $region56: #{densenet_forward.9} parent=5 // pred_fallthru
        _
    $region6: #{densenet_forward.9} parent=1 // loop_footer
      %s24 = sadd.s32 1, %s20
    $region7: #{densenet_forward.9} parent=1 // loop_footer_branch
      %19 = sbr.rel target = $region3
    $region8: #{densenet_forward.9} parent=1 // loop_exit
      _
    %491 = vsyncpa [#allocation3], 1
    %s492 = scalar_lea.sflag [#allocation3], 1
    %493 = vsyncpa %s492, 1
    %494 = vsyncpa [#allocation5], 1
    %s495 = scalar_lea.sflag [#allocation5], 1
    %496 = vsyncpa %s495, 1

// kernel: densenet_forward.8
$region0: #{densenet_forward.8}
  #allocation0 [shape = 'u32[]', space=smem, size = 0x4, offset = 0x4, fixed_abs, tag = 'smem constant byte address 0x4 - core index']
  #allocation1 [shape = 'u32[72,128]{1,0:T(1,128)}', space=vmem, size = 0x9000, scoped, tag = 'internal scratch']
  #allocation2 [shape = 'f32[16,32]{1,0:T(8,128)}', space=vmem, size = 0x2000, scoped, tag = 'scratch operand']
  %s0 = inlined_call_operand.vmem [shape: bf16[2,16,32], index: 0, kind: input, shape index: {}]
  %s1 = inlined_call_operand.vmem [shape: f32[2,1,32], index: 1, kind: input, shape index: {}]
  %s2 = inlined_call_operand.vmem [shape: f32[2,1,32], index: 2, kind: input, shape index: {}]
  %s3 = inlined_call_operand.vmem [shape: bf16[2,32,32], index: 3, kind: input, shape index: {}]
  %s4 = inlined_call_operand.vmem [shape: f32[2,1,32], index: 4, kind: input, shape index: {}]
  %s5 = inlined_call_operand.vmem [shape: f32[2,1,32], index: 5, kind: input, shape index: {}]
  %s6 = inlined_call_operand.vmem [shape: bf16[2,9,32,8], index: 6, kind: input, shape index: {}]
  %s7 = inlined_call_operand.vmem [shape: bf16[9,16,16], index: 7, kind: input, shape index: {}]
  %s8 = inlined_call_operand.vmem [shape: bf16[2,16,32], index: 8, kind: output, shape index: {}]
  %s9 = sld [smem:[#allocation0]]
  $region65: #{densenet_forward.8} parent=0
    _
  %s11 = ssub.s32 1, %s9
  %s12 = scalar_select 0, %s11, %s9
  loop: start=0, step=1, limit=4
  $region2: #{densenet_forward.8} parent=0 // loop_pre_header
    _
  $region3: #{densenet_forward.8} parent=0 // loop_header
    %s14 = sphi 0, %s18
    %p15 = scmp.ge.s32.totalorder %s14, 4
    %s24 = sphi 0, %s26
    %s27 = sphi 0, %s24
    %s28 = sphi 0, %s27
    %s44 = sphi 0, %s28
    %s48 = sphi 0, %s48
    %s50 = sphi 0, %s48
    %s51 = sphi 0, %s50
    %s65 = sphi 0, %s51
    %s69 = sphi 0, %s69
    %s71 = sphi 0, %s69
    %s72 = sphi 0, %s71
    %s86 = sphi 0, %s72
    %s90 = sphi 0, %s90
    %s92 = sphi 0, %s90
    %s93 = sphi 0, %s92
    %s107 = sphi 0, %s93
    %s111 = sphi 0, %s111
    %s113 = sphi 0, %s111
    %s114 = sphi 0, %s113
    %s128 = sphi 0, %s114
    %s132 = sphi 0, %s132
    %s134 = sphi 0, %s132
    %s135 = sphi 0, %s134
    %s149 = sphi 0, %s135
    %s153 = sphi 0, %s153
    %s155 = sphi 0, %s153
    %s156 = sphi 0, %s155
    %s170 = sphi 0, %s156
    %s174 = sphi 0, %s174
    %s176 = sphi 0, %s174
    %s177 = sphi 0, %s176
    %s191 = sphi 0, %s177
    %s197 = sphi 0, %s199
    %s200 = sphi 0, %s197
    %s201 = sphi 0, %s200
    %s217 = sphi 0, %s201
  $region4: #{densenet_forward.8} parent=0 // loop_header_branch
    %17 = sbr.rel (%p15) target = $region8
  $region5: #{densenet_forward.8} parent=0 // loop_body
    %s19 = ssub.s32 %s14, 1
    %s20 = ssub.s32 %s14, 2
    %s21 = sadd.s32 %s14, 1
    %s22 = ssub.s32 %s14, %s21
    %p23 = scmp.eq.s32.totalorder %s22, 0
    %s25 = sadd.s32 %s24, 1
    %s26 = scalar_select %p23, %s24, %s25
    %p29 = pneg %p23
    %p30 = scmp.eq.s32.totalorder %s14, 1
    %p31 = por %p29, %p30
    %p32 = scmp.ne.s32.totalorder %s24, %s27
    %p33 = scmp.eq.s32.totalorder %s14, 0
    %p34 = por %p32, %p33
    %p35 = scmp.ne.s32.totalorder %s24, %s27
    %p36 = scmp.eq.s32.totalorder %s19, 1
    %p37 = por %p35, %p36
    %p38 = scmp.ne.s32.totalorder %s27, %s28
    %p39 = scmp.eq.s32.totalorder %s19, 0
    %p40 = por %p38, %p39
    %p41 = scmp.ne.s32.totalorder %s27, %s28
    %p42 = scmp.eq.s32.totalorder %s20, 1
    %p43 = por %p41, %p42
    %p45 = scmp.ne.s32.totalorder %s28, %s44
    %p46 = scmp.eq.s32.totalorder %s20, 0
    %p47 = por %p45, %p46
    %s49 = sadd.s32 %s48, 1
    %p52 = scmp.eq.s32.totalorder %s14, 1
    %p53 = scmp.ne.s32.totalorder %s48, %s50
    %p54 = scmp.eq.s32.totalorder %s14, 0
    %p55 = por %p53, %p54
    %p56 = scmp.ne.s32.totalorder %s48, %s50
    %p57 = scmp.eq.s32.totalorder %s19, 1
    %p58 = por %p56, %p57
    %p59 = scmp.ne.s32.totalorder %s50, %s51
    %p60 = scmp.eq.s32.totalorder %s19, 0
    %p61 = por %p59, %p60
    %p62 = scmp.ne.s32.totalorder %s50, %s51
    %p63 = scmp.eq.s32.totalorder %s20, 1
    %p64 = por %p62, %p63
    %p66 = scmp.ne.s32.totalorder %s51, %s65
    %p67 = scmp.eq.s32.totalorder %s20, 0
    %p68 = por %p66, %p67
    %s70 = sadd.s32 %s69, 1
    %p73 = scmp.eq.s32.totalorder %s14, 1
    %p74 = scmp.ne.s32.totalorder %s69, %s71
    %p75 = scmp.eq.s32.totalorder %s14, 0
    %p76 = por %p74, %p75
    %p77 = scmp.ne.s32.totalorder %s69, %s71
    %p78 = scmp.eq.s32.totalorder %s19, 1
    %p79 = por %p77, %p78
    %p80 = scmp.ne.s32.totalorder %s71, %s72
    %p81 = scmp.eq.s32.totalorder %s19, 0
    %p82 = por %p80, %p81
    %p83 = scmp.ne.s32.totalorder %s71, %s72
    %p84 = scmp.eq.s32.totalorder %s20, 1
    %p85 = por %p83, %p84
    %p87 = scmp.ne.s32.totalorder %s72, %s86
    %p88 = scmp.eq.s32.totalorder %s20, 0
    %p89 = por %p87, %p88
    %s91 = sadd.s32 %s90, 1
    %p94 = scmp.eq.s32.totalorder %s14, 1
    %p95 = scmp.ne.s32.totalorder %s90, %s92
    %p96 = scmp.eq.s32.totalorder %s14, 0
    %p97 = por %p95, %p96
    %p98 = scmp.ne.s32.totalorder %s90, %s92
    %p99 = scmp.eq.s32.totalorder %s19, 1
    %p100 = por %p98, %p99
    %p101 = scmp.ne.s32.totalorder %s92, %s93
    %p102 = scmp.eq.s32.totalorder %s19, 0
    %p103 = por %p101, %p102
    %p104 = scmp.ne.s32.totalorder %s92, %s93
    %p105 = scmp.eq.s32.totalorder %s20, 1
    %p106 = por %p104, %p105
    %p108 = scmp.ne.s32.totalorder %s93, %s107
    %p109 = scmp.eq.s32.totalorder %s20, 0
    %p110 = por %p108, %p109
    %s112 = sadd.s32 %s111, 1
    %p115 = scmp.eq.s32.totalorder %s14, 1
    %p116 = scmp.ne.s32.totalorder %s111, %s113
    %p117 = scmp.eq.s32.totalorder %s14, 0
    %p118 = por %p116, %p117
    %p119 = scmp.ne.s32.totalorder %s111, %s113
    %p120 = scmp.eq.s32.totalorder %s19, 1
    %p121 = por %p119, %p120
    %p122 = scmp.ne.s32.totalorder %s113, %s114
    %p123 = scmp.eq.s32.totalorder %s19, 0
    %p124 = por %p122, %p123
    %p125 = scmp.ne.s32.totalorder %s113, %s114
    %p126 = scmp.eq.s32.totalorder %s20, 1
    %p127 = por %p125, %p126
    %p129 = scmp.ne.s32.totalorder %s114, %s128
    %p130 = scmp.eq.s32.totalorder %s20, 0
    %p131 = por %p129, %p130
    %s133 = sadd.s32 %s132, 1
    %p136 = scmp.eq.s32.totalorder %s14, 1
    %p137 = scmp.ne.s32.totalorder %s132, %s134
    %p138 = scmp.eq.s32.totalorder %s14, 0
    %p139 = por %p137, %p138
    %p140 = scmp.ne.s32.totalorder %s132, %s134
    %p141 = scmp.eq.s32.totalorder %s19, 1
    %p142 = por %p140, %p141
    %p143 = scmp.ne.s32.totalorder %s134, %s135
    %p144 = scmp.eq.s32.totalorder %s19, 0
    %p145 = por %p143, %p144
    %p146 = scmp.ne.s32.totalorder %s134, %s135
    %p147 = scmp.eq.s32.totalorder %s20, 1
    %p148 = por %p146, %p147
    %p150 = scmp.ne.s32.totalorder %s135, %s149
    %p151 = scmp.eq.s32.totalorder %s20, 0
    %p152 = por %p150, %p151
    %s154 = sadd.s32 %s153, 1
    %p157 = scmp.eq.s32.totalorder %s14, 1
    %p158 = scmp.ne.s32.totalorder %s153, %s155
    %p159 = scmp.eq.s32.totalorder %s14, 0
    %p160 = por %p158, %p159
    %p161 = scmp.ne.s32.totalorder %s153, %s155
    %p162 = scmp.eq.s32.totalorder %s19, 1
    %p163 = por %p161, %p162
    %p164 = scmp.ne.s32.totalorder %s155, %s156
    %p165 = scmp.eq.s32.totalorder %s19, 0
    %p166 = por %p164, %p165
    %p167 = scmp.ne.s32.totalorder %s155, %s156
    %p168 = scmp.eq.s32.totalorder %s20, 1
    %p169 = por %p167, %p168
    %p171 = scmp.ne.s32.totalorder %s156, %s170
    %p172 = scmp.eq.s32.totalorder %s20, 0
    %p173 = por %p171, %p172
    %s175 = sadd.s32 %s174, 1
    %p178 = scmp.eq.s32.totalorder %s14, 1
    %p179 = scmp.ne.s32.totalorder %s174, %s176
    %p180 = scmp.eq.s32.totalorder %s14, 0
    %p181 = por %p179, %p180
    %p182 = scmp.ne.s32.totalorder %s174, %s176
    %p183 = scmp.eq.s32.totalorder %s19, 1
    %p184 = por %p182, %p183
    %p185 = scmp.ne.s32.totalorder %s176, %s177
    %p186 = scmp.eq.s32.totalorder %s19, 0
    %p187 = por %p185, %p186
    %p188 = scmp.ne.s32.totalorder %s176, %s177
    %p189 = scmp.eq.s32.totalorder %s20, 1
    %p190 = por %p188, %p189
    %p192 = scmp.ne.s32.totalorder %s177, %s191
    %p193 = scmp.eq.s32.totalorder %s20, 0
    %p194 = por %p192, %p193
    %s195 = ssub.s32 %s14, %s21
    %p196 = scmp.eq.s32.totalorder %s195, 0
    %s198 = sadd.s32 %s197, 1
    %s199 = scalar_select %p196, %s197, %s198
    %p202 = pneg %p196
    %p203 = scmp.eq.s32.totalorder %s14, 1
    %p204 = por %p202, %p203
    %p205 = scmp.ne.s32.totalorder %s197, %s200
    %p206 = scmp.eq.s32.totalorder %s14, 0
    %p207 = por %p205, %p206
    %p208 = scmp.ne.s32.totalorder %s197, %s200
    %p209 = scmp.eq.s32.totalorder %s19, 1
    %p210 = por %p208, %p209
    %p211 = scmp.ne.s32.totalorder %s200, %s201
    %p212 = scmp.eq.s32.totalorder %s19, 0
    %p213 = por %p211, %p212
    %p214 = scmp.ne.s32.totalorder %s200, %s201
    %p215 = scmp.eq.s32.totalorder %s20, 1
    %p216 = por %p214, %p215
    %p218 = scmp.ne.s32.totalorder %s201, %s217
    %p219 = scmp.eq.s32.totalorder %s20, 0
    %p220 = por %p218, %p219
    %p221 = scmp.le.s32.totalorder 1, %s14
    %p222 = scmp.lt.s32.totalorder %s14, 3
    %p223 = pnand %p221, %p222
    %p224 = pneg %p223
    // Predicated region
    $region9: #{densenet_forward.8} parent=5 // pred_check
      _
    $region10: #{densenet_forward.8} parent=5 // pred_check_branch
      %226 = sbr.rel (%p223) target = $region12
    $region11: #{densenet_forward.8} parent=5 // pred_region
      %s227 = ssub.s32 %s14, 1
      // Predicated region
      $region13: #{densenet_forward.8} parent=11 // pred_check
        %p228 = pneg %p61
      $region14: #{densenet_forward.8} parent=11 // pred_check_branch
        %230 = sbr.rel (%p228) target = $region16
      $region15: #{densenet_forward.8} parent=11 // pred_region
        _
      $region16: #{densenet_forward.8} parent=11 // pred_fallthru
        _
      // Predicated region
      $region17: #{densenet_forward.8} parent=11 // pred_check
        %p231 = pneg %p82
      $region18: #{densenet_forward.8} parent=11 // pred_check_branch
        %233 = sbr.rel (%p231) target = $region20
      $region19: #{densenet_forward.8} parent=11 // pred_region
        _
      $region20: #{densenet_forward.8} parent=11 // pred_fallthru
        _
      // Predicated region
      $region21: #{densenet_forward.8} parent=11 // pred_check
        %p234 = pneg %p103
      $region22: #{densenet_forward.8} parent=11 // pred_check_branch
        %236 = sbr.rel (%p234) target = $region24
      $region23: #{densenet_forward.8} parent=11 // pred_region
        _
      $region24: #{densenet_forward.8} parent=11 // pred_fallthru
        _
      // Predicated region
      $region25: #{densenet_forward.8} parent=11 // pred_check
        %p237 = pneg %p124
      $region26: #{densenet_forward.8} parent=11 // pred_check_branch
        %239 = sbr.rel (%p237) target = $region28
      $region27: #{densenet_forward.8} parent=11 // pred_region
        _
      $region28: #{densenet_forward.8} parent=11 // pred_fallthru
        _
      // Predicated region
      $region29: #{densenet_forward.8} parent=11 // pred_check
        %p240 = pneg %p145
      $region30: #{densenet_forward.8} parent=11 // pred_check_branch
        %242 = sbr.rel (%p240) target = $region32
      $region31: #{densenet_forward.8} parent=11 // pred_region
        _
      $region32: #{densenet_forward.8} parent=11 // pred_fallthru
        _
      // Predicated region
      $region33: #{densenet_forward.8} parent=11 // pred_check
        %p243 = pneg %p166
      $region34: #{densenet_forward.8} parent=11 // pred_check_branch
        %245 = sbr.rel (%p243) target = $region36
      $region35: #{densenet_forward.8} parent=11 // pred_region
        _
      $region36: #{densenet_forward.8} parent=11 // pred_fallthru
        _
      // Predicated region
      $region37: #{densenet_forward.8} parent=11 // pred_check
        %p246 = pneg %p187
      $region38: #{densenet_forward.8} parent=11 // pred_check_branch
        %248 = sbr.rel (%p246) target = $region40
      $region39: #{densenet_forward.8} parent=11 // pred_region
        _
      $region40: #{densenet_forward.8} parent=11 // pred_fallthru
        _
    $region12: #{densenet_forward.8} parent=5 // pred_fallthru
      _
    %p249 = scmp.lt.s32.totalorder %s14, 2
    // Predicated region
    $region41: #{densenet_forward.8} parent=5 // pred_check
      %p250 = pneg %p249
    $region42: #{densenet_forward.8} parent=5 // pred_check_branch
      %252 = sbr.rel (%p250) target = $region44
    $region43: #{densenet_forward.8} parent=5 // pred_region
      // Predicated region
      $region45: #{densenet_forward.8} parent=43 // pred_check
        %p253 = pneg %p34
      $region46: #{densenet_forward.8} parent=43 // pred_check_branch
        %255 = sbr.rel (%p253) target = $region48
      $region47: #{densenet_forward.8} parent=43 // pred_region
        %p256 = scmp.lt.s32.totalorder %s14, 1
        %s257 = scalar_select %p256, %s14, 1
        %s258 = smul.addr %s257, 2
        %s259 = smul.addr %s258, 4
        %s260 = scalar_lea.vmem %s0, %s259
      $region48: #{densenet_forward.8} parent=43 // pred_fallthru
        _
    $region44: #{densenet_forward.8} parent=5 // pred_fallthru
      _
    %p261 = scmp.le.s32.totalorder 1, %s14
    %p262 = scmp.lt.s32.totalorder %s14, 3
    %p263 = pnand %p261, %p262
    %p264 = pneg %p263
    // Predicated region
    $region49: #{densenet_forward.8} parent=5 // pred_check
      _
    $region50: #{densenet_forward.8} parent=5 // pred_check_branch
      %266 = sbr.rel (%p263) target = $region52
    $region51: #{densenet_forward.8} parent=5 // pred_region
      %s267 = ssub.s32 %s14, 1
      %p268 = scmp.lt.s32.totalorder %s19, 1
      %s269 = scalar_select %p268, %s19, 1
      %s270 = smul.addr %s269, 2
      %s271 = smul.addr %s270, 4
      %s272 = scalar_lea.vmem %s0, %s271
      %p273 = pneg %p40
      %p274 = pneg %p37
      %p275 = pneg %p61
      %p276 = pneg %p58
      %p277 = pneg %p82
      %p278 = pneg %p79
      %p279 = pneg %p103
      %p280 = pneg %p100
      %p281 = pneg %p124
      %p282 = pneg %p121
      %p283 = pneg %p145
      %p284 = pneg %p142
      %p285 = pneg %p166
      %p286 = pneg %p163
      %p287 = pneg %p187
      %p288 = pneg %p184
      %p289 = pneg %p213
      %p290 = pneg %p210
      %p291 = scmp.lt.s32.totalorder %s19, 1
      %s292 = scalar_select %p291, %s19, 1
      %s293 = smul.addr %s292, 2
      %s294 = smul.addr %s293, 4
      %s295 = scalar_lea.vmem %s8, %s294
      %p296 = scmp.lt.s32.totalorder %s19, 1
      %s297 = scalar_select %p296, %s19, 1
      %s298 = smul.addr %s297, 2
      %s299 = smul.addr %s298, 4
      %s300 = scalar_lea.vmem %s0, %s299
      %p301 = scmp.lt.s32.totalorder %s19, 1
      %s302 = scalar_select %p301, %s19, 1
      %s303 = smul.addr %s302, 2
      %s304 = smul.addr %s303, 4
      %s305 = scalar_lea.vmem %s8, %s304
      %v307 = vld [vmem:[%s300] sm:$0xf]
      %v308 = vld [vmem:[%s300 + $0x4] sm:$0xf]
      %v309 = vunpack.c.l.bf16 %v307
      %v310 = vunpack.c.l.bf16 %v308
      %vm311 = vcmask 261120
      %312 = vst.msk [vmem:[#allocation2] sm:$0xff] %vm311, %v309
      %313 = vst.msk [vmem:[#allocation2 + $0x8] sm:$0xff] %vm311, %v310
      %v314 = vld [vmem:[#allocation2] sm:$0xff]
      %v315 = vld [vmem:[#allocation2 + $0x8] sm:$0xff]
      %v316 = vld [vmem:[%s1] sm:$0x1]
      %v318 = vperm.slane %v316, 0
      %v320 = vmul.f32 %v314, %v318
      %v321 = vmul.f32 %v315, %v318
      %v322 = vld [vmem:[%s2] sm:$0x1]
      %v324 = vperm.slane %v322, 0
      %v326 = vadd.f32 %v320, %v324
      %v327 = vadd.f32 %v321, %v324
      %v328 = vmax.f32 %v326, 0.0
      %v329 = vmax.f32 %v327, 0.0
      %v330 = vpack.c.bf16 %v329, %v328
      %v331 = vld [vmem:[%s3] sm:$0xf]
      %v332 = vld [vmem:[%s3 + $0x4] sm:$0xf]
      %v333 = vld [vmem:[%s3 + $0x8] sm:$0xf]
      %v334 = vld [vmem:[%s3 + $0xc] sm:$0xf]
      %v339 = vunpack.c.l.b16 %v331
      %v340 = vunpack.c.l.b16 %v332
      %v341 = vunpack.c.l.b16 %v333
      %v342 = vunpack.c.l.b16 %v334
      %v343 = vpack.c.b16 %v340, %v339
      %v344 = vpack.c.b16 %v342, %v341
      %v348 = vsel %vm311, %v330, 0
      %350 = vmatpush.bf16.msra.mxu0 0
      %351 = vmatpush.bf16.msra.mxu0 0
      %352 = vmatpush.bf16.msra.mxu0 0
      %353 = vmatpush.bf16.msra.mxu0 0
      %354 = vmatpush.bf16.msra.mxu0 0
      %355 = vmatpush.bf16.msra.mxu0 0
      %356 = vmatpush.bf16.msra.mxu0 %v344
      %357 = vmatpush.bf16.msra.mxu0 %v343
      %358 = vmatmul.bf16.gmra.mxu0 %v348
      %v359 = vpop.f32.mrf.mxu0
      %v360 = vadd.f32 0.0, %v359
      %v361 = vpop.f32.mrf.mxu0
      %v362 = vadd.f32 0.0, %v361
      %363 = vdwg.mxu0
      %v364 = vld [vmem:[%s4] sm:$0x1]
      %v366 = vperm.slane %v364, 0
      %v368 = vmul.f32 %v360, %v366
      %v369 = vmul.f32 %v362, %v366
      %v370 = vld [vmem:[%s5] sm:$0x1]
      %v372 = vperm.slane %v370, 0
      %v374 = vadd.f32 %v368, %v372
      %v375 = vadd.f32 %v369, %v372
      %v376 = vmax.f32 %v374, 0.0
      %v377 = vmax.f32 %v375, 0.0
      %v378 = vpack.c.bf16 %v377, %v376
      %v379 = vld [vmem:[%s7] sm:$0xf]
      %v380 = vld [vmem:[%s7 + $0x4] sm:$0xf]
      %v383 = vunpack.c.l.b16 %v379
      %v384 = vunpack.c.l.b16 %v380
      %v385 = vpack.c.b16 %v384, %v383
      %vm386 = vcmask 130048
      %v388 = vsel %vm386, %v385, 0
      %390 = vmatpush.bf16.msra.mxu0 0
      %391 = vmatpush.bf16.msra.mxu0 0
      %392 = vmatpush.bf16.msra.mxu0 0
      %393 = vmatpush.bf16.msra.mxu0 0
      %394 = vmatpush.bf16.msra.mxu0 0
      %395 = vmatpush.bf16.msra.mxu0 0
      %396 = vmatpush.bf16.msra.mxu0 0
      %397 = vmatpush.bf16.msra.mxu0 %v378
      %398 = vmatmul.bf16.gmra.mxu0 %v388
      %v399 = vpop.f32.mrf.mxu0
      %v400 = vadd.f32 0.0, %v399
      %v401 = vpop.f32.mrf.mxu0
      %v402 = vadd.f32 0.0, %v401
      %403 = vdwg.mxu0
      %v404 = vpack.c.bf16 %v402, %v400
      %v405 = vld [vmem:[%s6] sm:$0xf]
      %v406 = vld [vmem:[%s6 + $0x4] sm:$0xf]
      %v407 = vld [vmem:[%s6 + $0x8] sm:$0xf]
      %v408 = vld [vmem:[%s6 + $0xc] sm:$0xf]
      %s409 = scalar_lea.vmem %s7, 8
      %v410 = vld [vmem:[%s409] sm:$0xf]
      %v411 = vld [vmem:[%s409 + $0x4] sm:$0xf]
      %v414 = vunpack.c.l.b16 %v410
      %v415 = vunpack.c.l.b16 %v411
      %v416 = vpack.c.b16 %v415, %v414
      %v418 = vsel %vm386, %v416, 0
      %420 = vmatpush.bf16.msra.mxu0 0
      %421 = vmatpush.bf16.msra.mxu0 0
      %422 = vmatpush.bf16.msra.mxu0 0
      %423 = vmatpush.bf16.msra.mxu0 0
      %424 = vmatpush.bf16.msra.mxu0 0
      %425 = vmatpush.bf16.msra.mxu0 0
      %426 = vmatpush.bf16.msra.mxu0 0
      %427 = vmatpush.bf16.msra.mxu0 %v378
      %428 = vmatmul.bf16.gmra.mxu0 %v418
      %v429 = vpop.f32.mrf.mxu0
      %v430 = vadd.f32 0.0, %v429
      %v431 = vpop.f32.mrf.mxu0
      %v432 = vadd.f32 0.0, %v431
      %433 = vdwg.mxu0
      %v434 = vpack.c.bf16 %v432, %v430
      %s435 = scalar_lea.vmem %s6, 16
      %v436 = vld [vmem:[%s435] sm:$0xf]
      %v437 = vld [vmem:[%s435 + $0x4] sm:$0xf]
      %v438 = vld [vmem:[%s435 + $0x8] sm:$0xf]
      %v439 = vld [vmem:[%s435 + $0xc] sm:$0xf]
      %v444 = vunpack.c.l.b16 %v436
      %v445 = vunpack.c.l.b16 %v437
      %v446 = vunpack.c.l.b16 %v438
      %v447 = vunpack.c.l.b16 %v439
      %v448 = vpack.c.b16 %v445, %v444
      %v449 = vpack.c.b16 %v447, %v446
      %v453 = vsel %vm311, %v434, 0
      %455 = vmatpush.bf16.msra.mxu0 0
      %456 = vmatpush.bf16.msra.mxu0 0
      %457 = vmatpush.bf16.msra.mxu0 0
      %458 = vmatpush.bf16.msra.mxu0 0
      %459 = vmatpush.bf16.msra.mxu0 0
      %460 = vmatpush.bf16.msra.mxu0 0
      %461 = vmatpush.bf16.msra.mxu0 %v449
      %462 = vmatpush.bf16.msra.mxu0 %v448
      %463 = vmatmul.bf16.gmra.mxu0 %v453
      %v464 = vpop.f32.mrf.mxu0
      %v465 = vadd.f32 0.0, %v464
      %v466 = vpop.f32.mrf.mxu0
      %v467 = vadd.f32 0.0, %v466
      %468 = vdwg.mxu0
      %v473 = vunpack.c.l.b16 %v405
      %v474 = vunpack.c.l.b16 %v406
      %v475 = vunpack.c.l.b16 %v407
      %v476 = vunpack.c.l.b16 %v408
      %v477 = vpack.c.b16 %v474, %v473
      %v478 = vpack.c.b16 %v476, %v475
      %v482 = vsel %vm311, %v404, 0
      %484 = vmatpush.bf16.msra.mxu0 0
      %485 = vmatpush.bf16.msra.mxu0 0
      %486 = vmatpush.bf16.msra.mxu0 0
      %487 = vmatpush.bf16.msra.mxu0 0
      %488 = vmatpush.bf16.msra.mxu0 0
      %489 = vmatpush.bf16.msra.mxu0 0
      %490 = vmatpush.bf16.msra.mxu0 %v478
      %491 = vmatpush.bf16.msra.mxu0 %v477
      %492 = vmatmul.bf16.gmra.mxu0 %v482
      %v493 = vpop.f32.mrf.mxu0
      %v494 = vadd.f32 %v465, %v493
      %v495 = vpop.f32.mrf.mxu0
      %v496 = vadd.f32 %v467, %v495
      %497 = vdwg.mxu0
      %s498 = scalar_lea.vmem %s7, 16
      %v499 = vld [vmem:[%s498] sm:$0xf]
      %v500 = vld [vmem:[%s498 + $0x4] sm:$0xf]
      %v503 = vunpack.c.l.b16 %v499
      %v504 = vunpack.c.l.b16 %v500
      %v505 = vpack.c.b16 %v504, %v503
      %v507 = vsel %vm386, %v505, 0
      %509 = vmatpush.bf16.msra.mxu0 0
      %510 = vmatpush.bf16.msra.mxu0 0
      %511 = vmatpush.bf16.msra.mxu0 0
      %512 = vmatpush.bf16.msra.mxu0 0
      %513 = vmatpush.bf16.msra.mxu0 0
      %514 = vmatpush.bf16.msra.mxu0 0
      %515 = vmatpush.bf16.msra.mxu0 0
      %516 = vmatpush.bf16.msra.mxu0 %v378
      %517 = vmatmul.bf16.gmra.mxu0 %v507
      %v518 = vpop.f32.mrf.mxu0
      %v519 = vadd.f32 0.0, %v518
      %v520 = vpop.f32.mrf.mxu0
      %v521 = vadd.f32 0.0, %v520
      %522 = vdwg.mxu0
      %v523 = vpack.c.bf16 %v521, %v519
      %s524 = scalar_lea.vmem %s6, 32
      %v525 = vld [vmem:[%s524] sm:$0xf]
      %v526 = vld [vmem:[%s524 + $0x4] sm:$0xf]
      %v527 = vld [vmem:[%s524 + $0x8] sm:$0xf]
      %v528 = vld [vmem:[%s524 + $0xc] sm:$0xf]
      %v533 = vunpack.c.l.b16 %v525
      %v534 = vunpack.c.l.b16 %v526
      %v535 = vunpack.c.l.b16 %v527
      %v536 = vunpack.c.l.b16 %v528
      %v537 = vpack.c.b16 %v534, %v533
      %v538 = vpack.c.b16 %v536, %v535
      %v542 = vsel %vm311, %v523, 0
      %544 = vmatpush.bf16.msra.mxu0 0
      %545 = vmatpush.bf16.msra.mxu0 0
      %546 = vmatpush.bf16.msra.mxu0 0
      %547 = vmatpush.bf16.msra.mxu0 0
      %548 = vmatpush.bf16.msra.mxu0 0
      %549 = vmatpush.bf16.msra.mxu0 0
      %550 = vmatpush.bf16.msra.mxu0 %v538
      %551 = vmatpush.bf16.msra.mxu0 %v537
      %552 = vmatmul.bf16.gmra.mxu0 %v542
      %v553 = vpop.f32.mrf.mxu0
      %v554 = vadd.f32 0.0, %v553
      %v555 = vpop.f32.mrf.mxu0
      %v556 = vadd.f32 0.0, %v555
      %557 = vdwg.mxu0
      %v558 = vadd.f32 %v494, %v554
      %v559 = vadd.f32 %v496, %v556
      %s560 = scalar_lea.vmem %s7, 24
      %v561 = vld [vmem:[%s560] sm:$0xf]
      %v562 = vld [vmem:[%s560 + $0x4] sm:$0xf]
      %v565 = vunpack.c.l.b16 %v561
      %v566 = vunpack.c.l.b16 %v562
      %v567 = vpack.c.b16 %v566, %v565
      %v569 = vsel %vm386, %v567, 0
      %571 = vmatpush.bf16.msra.mxu0 0
      %572 = vmatpush.bf16.msra.mxu0 0
      %573 = vmatpush.bf16.msra.mxu0 0
      %574 = vmatpush.bf16.msra.mxu0 0
      %575 = vmatpush.bf16.msra.mxu0 0
      %576 = vmatpush.bf16.msra.mxu0 0
      %577 = vmatpush.bf16.msra.mxu0 0
      %578 = vmatpush.bf16.msra.mxu0 %v378
      %579 = vmatmul.bf16.gmra.mxu0 %v569
      %v580 = vpop.f32.mrf.mxu0
      %v581 = vadd.f32 0.0, %v580
      %v582 = vpop.f32.mrf.mxu0
      %v583 = vadd.f32 0.0, %v582
      %584 = vdwg.mxu0
      %v585 = vpack.c.bf16 %v583, %v581
      %s586 = scalar_lea.vmem %s6, 48
      %v587 = vld [vmem:[%s586] sm:$0xf]
      %v588 = vld [vmem:[%s586 + $0x4] sm:$0xf]
      %v589 = vld [vmem:[%s586 + $0x8] sm:$0xf]
      %v590 = vld [vmem:[%s586 + $0xc] sm:$0xf]
      %v595 = vunpack.c.l.b16 %v587
      %v596 = vunpack.c.l.b16 %v588
      %v597 = vunpack.c.l.b16 %v589
      %v598 = vunpack.c.l.b16 %v590
      %v599 = vpack.c.b16 %v596, %v595
      %v600 = vpack.c.b16 %v598, %v597
      %v604 = vsel %vm311, %v585, 0
      %606 = vmatpush.bf16.msra.mxu0 0
      %607 = vmatpush.bf16.msra.mxu0 0
      %608 = vmatpush.bf16.msra.mxu0 0
      %609 = vmatpush.bf16.msra.mxu0 0
      %610 = vmatpush.bf16.msra.mxu0 0
      %611 = vmatpush.bf16.msra.mxu0 0
      %612 = vmatpush.bf16.msra.mxu0 %v600
      %613 = vmatpush.bf16.msra.mxu0 %v599
      %614 = vmatmul.bf16.gmra.mxu0 %v604
      %v615 = vpop.f32.mrf.mxu0
      %v616 = vadd.f32 0.0, %v615
      %v617 = vpop.f32.mrf.mxu0
      %v618 = vadd.f32 0.0, %v617
      %619 = vdwg.mxu0
      %v620 = vadd.f32 %v558, %v616
      %v621 = vadd.f32 %v559, %v618
      %s622 = scalar_lea.vmem %s7, 32
      %v623 = vld [vmem:[%s622] sm:$0xf]
      %v624 = vld [vmem:[%s622 + $0x4] sm:$0xf]
      %v627 = vunpack.c.l.b16 %v623
      %v628 = vunpack.c.l.b16 %v624
      %v629 = vpack.c.b16 %v628, %v627
      %v631 = vsel %vm386, %v629, 0
      %633 = vmatpush.bf16.msra.mxu0 0
      %634 = vmatpush.bf16.msra.mxu0 0
      %635 = vmatpush.bf16.msra.mxu0 0
      %636 = vmatpush.bf16.msra.mxu0 0
      %637 = vmatpush.bf16.msra.mxu0 0
      %638 = vmatpush.bf16.msra.mxu0 0
      %639 = vmatpush.bf16.msra.mxu0 0
      %640 = vmatpush.bf16.msra.mxu0 %v378
      %641 = vmatmul.bf16.gmra.mxu0 %v631
      %v642 = vpop.f32.mrf.mxu0
      %v643 = vadd.f32 0.0, %v642
      %v644 = vpop.f32.mrf.mxu0
      %v645 = vadd.f32 0.0, %v644
      %646 = vdwg.mxu0
      %v647 = vpack.c.bf16 %v645, %v643
      %s648 = scalar_lea.vmem %s6, 64
      %v649 = vld [vmem:[%s648] sm:$0xf]
      %v650 = vld [vmem:[%s648 + $0x4] sm:$0xf]
      %v651 = vld [vmem:[%s648 + $0x8] sm:$0xf]
      %v652 = vld [vmem:[%s648 + $0xc] sm:$0xf]
      %v657 = vunpack.c.l.b16 %v649
      %v658 = vunpack.c.l.b16 %v650
      %v659 = vunpack.c.l.b16 %v651
      %v660 = vunpack.c.l.b16 %v652
      %v661 = vpack.c.b16 %v658, %v657
      %v662 = vpack.c.b16 %v660, %v659
      %v666 = vsel %vm311, %v647, 0
      %668 = vmatpush.bf16.msra.mxu0 0
      %669 = vmatpush.bf16.msra.mxu0 0
      %670 = vmatpush.bf16.msra.mxu0 0
      %671 = vmatpush.bf16.msra.mxu0 0
      %672 = vmatpush.bf16.msra.mxu0 0
      %673 = vmatpush.bf16.msra.mxu0 0
      %674 = vmatpush.bf16.msra.mxu0 %v662
      %675 = vmatpush.bf16.msra.mxu0 %v661
      %676 = vmatmul.bf16.gmra.mxu0 %v666
      %v677 = vpop.f32.mrf.mxu0
      %v678 = vadd.f32 0.0, %v677
      %v679 = vpop.f32.mrf.mxu0
      %v680 = vadd.f32 0.0, %v679
      %681 = vdwg.mxu0
      %v682 = vadd.f32 %v620, %v678
      %v683 = vadd.f32 %v621, %v680
      %s684 = scalar_lea.vmem %s7, 40
      %v685 = vld [vmem:[%s684] sm:$0xf]
      %v686 = vld [vmem:[%s684 + $0x4] sm:$0xf]
      %v689 = vunpack.c.l.b16 %v685
      %v690 = vunpack.c.l.b16 %v686
      %v691 = vpack.c.b16 %v690, %v689
      %v693 = vsel %vm386, %v691, 0
      %695 = vmatpush.bf16.msra.mxu0 0
      %696 = vmatpush.bf16.msra.mxu0 0
      %697 = vmatpush.bf16.msra.mxu0 0
      %698 = vmatpush.bf16.msra.mxu0 0
      %699 = vmatpush.bf16.msra.mxu0 0
      %700 = vmatpush.bf16.msra.mxu0 0
      %701 = vmatpush.bf16.msra.mxu0 0
      %702 = vmatpush.bf16.msra.mxu0 %v378
      %703 = vmatmul.bf16.gmra.mxu0 %v693
      %v704 = vpop.f32.mrf.mxu0
      %v705 = vadd.f32 0.0, %v704
      %v706 = vpop.f32.mrf.mxu0
      %v707 = vadd.f32 0.0, %v706
      %708 = vdwg.mxu0
      %v709 = vpack.c.bf16 %v707, %v705
      %s710 = scalar_lea.vmem %s6, 80
      %v711 = vld [vmem:[%s710] sm:$0xf]
      %v712 = vld [vmem:[%s710 + $0x4] sm:$0xf]
      %v713 = vld [vmem:[%s710 + $0x8] sm:$0xf]
      %v714 = vld [vmem:[%s710 + $0xc] sm:$0xf]
      %v719 = vunpack.c.l.b16 %v711
      %v720 = vunpack.c.l.b16 %v712
      %v721 = vunpack.c.l.b16 %v713
      %v722 = vunpack.c.l.b16 %v714
      %v723 = vpack.c.b16 %v720, %v719
      %v724 = vpack.c.b16 %v722, %v721
      %v728 = vsel %vm311, %v709, 0
      %730 = vmatpush.bf16.msra.mxu0 0
      %731 = vmatpush.bf16.msra.mxu0 0
      %732 = vmatpush.bf16.msra.mxu0 0
      %733 = vmatpush.bf16.msra.mxu0 0
      %734 = vmatpush.bf16.msra.mxu0 0
      %735 = vmatpush.bf16.msra.mxu0 0
      %736 = vmatpush.bf16.msra.mxu0 %v724
      %737 = vmatpush.bf16.msra.mxu0 %v723
      %738 = vmatmul.bf16.gmra.mxu0 %v728
      %v739 = vpop.f32.mrf.mxu0
      %v740 = vadd.f32 0.0, %v739
      %v741 = vpop.f32.mrf.mxu0
      %v742 = vadd.f32 0.0, %v741
      %743 = vdwg.mxu0
      %v744 = vadd.f32 %v682, %v740
      %v745 = vadd.f32 %v683, %v742
      %s746 = scalar_lea.vmem %s7, 48
      %v747 = vld [vmem:[%s746] sm:$0xf]
      %v748 = vld [vmem:[%s746 + $0x4] sm:$0xf]
      %v751 = vunpack.c.l.b16 %v747
      %v752 = vunpack.c.l.b16 %v748
      %v753 = vpack.c.b16 %v752, %v751
      %v755 = vsel %vm386, %v753, 0
      %757 = vmatpush.bf16.msra.mxu0 0
      %758 = vmatpush.bf16.msra.mxu0 0
      %759 = vmatpush.bf16.msra.mxu0 0
      %760 = vmatpush.bf16.msra.mxu0 0
      %761 = vmatpush.bf16.msra.mxu0 0
      %762 = vmatpush.bf16.msra.mxu0 0
      %763 = vmatpush.bf16.msra.mxu0 0
      %764 = vmatpush.bf16.msra.mxu0 %v378
      %765 = vmatmul.bf16.gmra.mxu0 %v755
      %v766 = vpop.f32.mrf.mxu0
      %v767 = vadd.f32 0.0, %v766
      %v768 = vpop.f32.mrf.mxu0
      %v769 = vadd.f32 0.0, %v768
      %770 = vdwg.mxu0
      %v771 = vpack.c.bf16 %v769, %v767
      %s772 = scalar_lea.vmem %s6, 96
      %v773 = vld [vmem:[%s772] sm:$0xf]
      %v774 = vld [vmem:[%s772 + $0x4] sm:$0xf]
      %v775 = vld [vmem:[%s772 + $0x8] sm:$0xf]
      %v776 = vld [vmem:[%s772 + $0xc] sm:$0xf]
      %v781 = vunpack.c.l.b16 %v773
      %v782 = vunpack.c.l.b16 %v774
      %v783 = vunpack.c.l.b16 %v775
      %v784 = vunpack.c.l.b16 %v776
      %v785 = vpack.c.b16 %v782, %v781
      %v786 = vpack.c.b16 %v784, %v783
      %v790 = vsel %vm311, %v771, 0
      %792 = vmatpush.bf16.msra.mxu0 0
      %793 = vmatpush.bf16.msra.mxu0 0
      %794 = vmatpush.bf16.msra.mxu0 0
      %795 = vmatpush.bf16.msra.mxu0 0
      %796 = vmatpush.bf16.msra.mxu0 0
      %797 = vmatpush.bf16.msra.mxu0 0
      %798 = vmatpush.bf16.msra.mxu0 %v786
      %799 = vmatpush.bf16.msra.mxu0 %v785
      %800 = vmatmul.bf16.gmra.mxu0 %v790
      %v801 = vpop.f32.mrf.mxu0
      %v802 = vadd.f32 0.0, %v801
      %v803 = vpop.f32.mrf.mxu0
      %v804 = vadd.f32 0.0, %v803
      %805 = vdwg.mxu0
      %v806 = vadd.f32 %v744, %v802
      %v807 = vadd.f32 %v745, %v804
      %s808 = scalar_lea.vmem %s7, 56
      %v809 = vld [vmem:[%s808] sm:$0xf]
      %v810 = vld [vmem:[%s808 + $0x4] sm:$0xf]
      %v813 = vunpack.c.l.b16 %v809
      %v814 = vunpack.c.l.b16 %v810
      %v815 = vpack.c.b16 %v814, %v813
      %v817 = vsel %vm386, %v815, 0
      %819 = vmatpush.bf16.msra.mxu0 0
      %820 = vmatpush.bf16.msra.mxu0 0
      %821 = vmatpush.bf16.msra.mxu0 0
      %822 = vmatpush.bf16.msra.mxu0 0
      %823 = vmatpush.bf16.msra.mxu0 0
      %824 = vmatpush.bf16.msra.mxu0 0
      %825 = vmatpush.bf16.msra.mxu0 0
      %826 = vmatpush.bf16.msra.mxu0 %v378
      %827 = vmatmul.bf16.gmra.mxu0 %v817
      %v828 = vpop.f32.mrf.mxu0
      %v829 = vadd.f32 0.0, %v828
      %v830 = vpop.f32.mrf.mxu0
      %v831 = vadd.f32 0.0, %v830
      %832 = vdwg.mxu0
      %v833 = vpack.c.bf16 %v831, %v829
      %s834 = scalar_lea.vmem %s6, 112
      %v835 = vld [vmem:[%s834] sm:$0xf]
      %v836 = vld [vmem:[%s834 + $0x4] sm:$0xf]
      %v837 = vld [vmem:[%s834 + $0x8] sm:$0xf]
      %v838 = vld [vmem:[%s834 + $0xc] sm:$0xf]
      %v843 = vunpack.c.l.b16 %v835
      %v844 = vunpack.c.l.b16 %v836
      %v845 = vunpack.c.l.b16 %v837
      %v846 = vunpack.c.l.b16 %v838
      %v847 = vpack.c.b16 %v844, %v843
      %v848 = vpack.c.b16 %v846, %v845
      %v852 = vsel %vm311, %v833, 0
      %854 = vmatpush.bf16.msra.mxu0 0
      %855 = vmatpush.bf16.msra.mxu0 0
      %856 = vmatpush.bf16.msra.mxu0 0
      %857 = vmatpush.bf16.msra.mxu0 0
      %858 = vmatpush.bf16.msra.mxu0 0
      %859 = vmatpush.bf16.msra.mxu0 0
      %860 = vmatpush.bf16.msra.mxu0 %v848
      %861 = vmatpush.bf16.msra.mxu0 %v847
      %862 = vmatmul.bf16.gmra.mxu0 %v852
      %v863 = vpop.f32.mrf.mxu0
      %v864 = vadd.f32 0.0, %v863
      %v865 = vpop.f32.mrf.mxu0
      %v866 = vadd.f32 0.0, %v865
      %867 = vdwg.mxu0
      %v868 = vadd.f32 %v806, %v864
      %v869 = vadd.f32 %v807, %v866
      %s870 = scalar_lea.vmem %s7, 64
      %v871 = vld [vmem:[%s870] sm:$0xf]
      %v872 = vld [vmem:[%s870 + $0x4] sm:$0xf]
      %v875 = vunpack.c.l.b16 %v871
      %v876 = vunpack.c.l.b16 %v872
      %v877 = vpack.c.b16 %v876, %v875
      %v879 = vsel %vm386, %v877, 0
      %881 = vmatpush.bf16.msra.mxu0 0
      %882 = vmatpush.bf16.msra.mxu0 0
      %883 = vmatpush.bf16.msra.mxu0 0
      %884 = vmatpush.bf16.msra.mxu0 0
      %885 = vmatpush.bf16.msra.mxu0 0
      %886 = vmatpush.bf16.msra.mxu0 0
      %887 = vmatpush.bf16.msra.mxu0 0
      %888 = vmatpush.bf16.msra.mxu0 %v378
      %889 = vmatmul.bf16.gmra.mxu0 %v879
      %v890 = vpop.f32.mrf.mxu0
      %v891 = vadd.f32 0.0, %v890
      %v892 = vpop.f32.mrf.mxu0
      %v893 = vadd.f32 0.0, %v892
      %894 = vdwg.mxu0
      %v895 = vpack.c.bf16 %v893, %v891
      %s896 = scalar_lea.vmem %s6, 128
      %v897 = vld [vmem:[%s896] sm:$0xf]
      %v898 = vld [vmem:[%s896 + $0x4] sm:$0xf]
      %v899 = vld [vmem:[%s896 + $0x8] sm:$0xf]
      %v900 = vld [vmem:[%s896 + $0xc] sm:$0xf]
      %v905 = vunpack.c.l.b16 %v897
      %v906 = vunpack.c.l.b16 %v898
      %v907 = vunpack.c.l.b16 %v899
      %v908 = vunpack.c.l.b16 %v900
      %v909 = vpack.c.b16 %v906, %v905
      %v910 = vpack.c.b16 %v908, %v907
      %v914 = vsel %vm311, %v895, 0
      %916 = vmatpush.bf16.msra.mxu0 0
      %917 = vmatpush.bf16.msra.mxu0 0
      %918 = vmatpush.bf16.msra.mxu0 0
      %919 = vmatpush.bf16.msra.mxu0 0
      %920 = vmatpush.bf16.msra.mxu0 0
      %921 = vmatpush.bf16.msra.mxu0 0
      %922 = vmatpush.bf16.msra.mxu0 %v910
      %923 = vmatpush.bf16.msra.mxu0 %v909
      %924 = vmatmul.bf16.gmra.mxu0 %v914
      %v925 = vpop.f32.mrf.mxu0
      %v926 = vadd.f32 0.0, %v925
      %v927 = vpop.f32.mrf.mxu0
      %v928 = vadd.f32 0.0, %v927
      %929 = vdwg.mxu0
      %v930 = vadd.f32 %v868, %v926
      %v931 = vadd.f32 %v869, %v928
      %934 = vrot.lane.b32.xlu0 %v930, 16
      %v935 = vpop.permute.xlu0 %934
      %936 = vrot.lane.b32.xlu0 %v931, 16
      %v937 = vpop.permute.xlu0 %936
      %vm940 = vcmask 195712
      %941 = vst.msk [vmem:[#allocation2] sm:$0xff] %vm940, %v935
      %942 = vst.msk [vmem:[#allocation2 + $0x8] sm:$0xff] %vm940, %v937
      %v943 = vld [vmem:[#allocation2] sm:$0xff]
      %v944 = vld [vmem:[#allocation2 + $0x8] sm:$0xff]
      %s945 = scalar_lea.vmem %s1, 1
      %v946 = vld [vmem:[%s945] sm:$0x1]
      %v948 = vperm.slane %v946, 0
      %v950 = vmul.f32 %v943, %v948
      %v951 = vmul.f32 %v944, %v948
      %s952 = scalar_lea.vmem %s2, 1
      %v953 = vld [vmem:[%s952] sm:$0x1]
      %v955 = vperm.slane %v953, 0
      %v957 = vadd.f32 %v950, %v955
      %v958 = vadd.f32 %v951, %v955
      %v959 = vmax.f32 %v957, 0.0
      %v960 = vmax.f32 %v958, 0.0
      %v961 = vpack.c.bf16 %v960, %v959
      %s962 = scalar_lea.vmem %s3, 16
      %v963 = vld [vmem:[%s962] sm:$0xf]
      %v964 = vld [vmem:[%s962 + $0x4] sm:$0xf]
      %v965 = vld [vmem:[%s962 + $0x8] sm:$0xf]
      %v966 = vld [vmem:[%s962 + $0xc] sm:$0xf]
      %v971 = vunpack.c.l.b16 %v963
      %v972 = vunpack.c.l.b16 %v964
      %v973 = vunpack.c.l.b16 %v965
      %v974 = vunpack.c.l.b16 %v966
      %v975 = vpack.c.b16 %v972, %v971
      %v976 = vpack.c.b16 %v974, %v973
      %v980 = vsel %vm311, %v961, 0
      %982 = vmatpush.bf16.msra.mxu0 0
      %983 = vmatpush.bf16.msra.mxu0 0
      %984 = vmatpush.bf16.msra.mxu0 0
      %985 = vmatpush.bf16.msra.mxu0 0
      %986 = vmatpush.bf16.msra.mxu0 0
      %987 = vmatpush.bf16.msra.mxu0 0
      %988 = vmatpush.bf16.msra.mxu0 %v976
      %989 = vmatpush.bf16.msra.mxu0 %v975
      %990 = vmatmul.bf16.gmra.mxu0 %v980
      %v991 = vpop.f32.mrf.mxu0
      %v992 = vadd.f32 0.0, %v991
      %v993 = vpop.f32.mrf.mxu0
      %v994 = vadd.f32 0.0, %v993
      %995 = vdwg.mxu0
      %s996 = scalar_lea.vmem %s4, 1
      %v997 = vld [vmem:[%s996] sm:$0x1]
      %v999 = vperm.slane %v997, 0
      %v1001 = vmul.f32 %v992, %v999
      %v1002 = vmul.f32 %v994, %v999
      %s1003 = scalar_lea.vmem %s5, 1
      %v1004 = vld [vmem:[%s1003] sm:$0x1]
      %v1006 = vperm.slane %v1004, 0
      %v1008 = vadd.f32 %v1001, %v1006
      %v1009 = vadd.f32 %v1002, %v1006
      %v1010 = vmax.f32 %v1008, 0.0
      %v1011 = vmax.f32 %v1009, 0.0
      %v1012 = vpack.c.bf16 %v1011, %v1010
      %v1013 = vld [vmem:[%s7] sm:$0xf]
      %v1014 = vld [vmem:[%s7 + $0x4] sm:$0xf]
      %v1017 = vunpack.c.l.b16 %v1013
      %v1018 = vunpack.c.l.b16 %v1014
      %v1019 = vpack.c.b16 %v1018, %v1017
      %v1021 = vsel %vm386, %v1019, 0
      %1023 = vmatpush.bf16.msra.mxu0 0
      %1024 = vmatpush.bf16.msra.mxu0 0
      %1025 = vmatpush.bf16.msra.mxu0 0
      %1026 = vmatpush.bf16.msra.mxu0 0
      %1027 = vmatpush.bf16.msra.mxu0 0
      %1028 = vmatpush.bf16.msra.mxu0 0
      %1029 = vmatpush.bf16.msra.mxu0 0
      %1030 = vmatpush.bf16.msra.mxu0 %v1012
      %1031 = vmatmul.bf16.gmra.mxu0 %v1021
      %v1032 = vpop.f32.mrf.mxu0
      %v1033 = vadd.f32 0.0, %v1032
      %v1034 = vpop.f32.mrf.mxu0
      %v1035 = vadd.f32 0.0, %v1034
      %1036 = vdwg.mxu0
      %v1037 = vpack.c.bf16 %v1035, %v1033
      %s1038 = scalar_lea.vmem %s6, 144
      %v1039 = vld [vmem:[%s1038] sm:$0xf]
      %v1040 = vld [vmem:[%s1038 + $0x4] sm:$0xf]
      %v1041 = vld [vmem:[%s1038 + $0x8] sm:$0xf]
      %v1042 = vld [vmem:[%s1038 + $0xc] sm:$0xf]
      %v1043 = vld [vmem:[%s409] sm:$0xf]
      %v1044 = vld [vmem:[%s409 + $0x4] sm:$0xf]
      %v1047 = vunpack.c.l.b16 %v1043
      %v1048 = vunpack.c.l.b16 %v1044
      %v1049 = vpack.c.b16 %v1048, %v1047
      %v1051 = vsel %vm386, %v1049, 0
      %1053 = vmatpush.bf16.msra.mxu0 0
      %1054 = vmatpush.bf16.msra.mxu0 0
      %1055 = vmatpush.bf16.msra.mxu0 0
      %1056 = vmatpush.bf16.msra.mxu0 0
      %1057 = vmatpush.bf16.msra.mxu0 0
      %1058 = vmatpush.bf16.msra.mxu0 0
      %1059 = vmatpush.bf16.msra.mxu0 0
      %1060 = vmatpush.bf16.msra.mxu0 %v1012
      %1061 = vmatmul.bf16.gmra.mxu0 %v1051
      %v1062 = vpop.f32.mrf.mxu0
      %v1063 = vadd.f32 0.0, %v1062
      %v1064 = vpop.f32.mrf.mxu0
      %v1065 = vadd.f32 0.0, %v1064
      %1066 = vdwg.mxu0
      %v1067 = vpack.c.bf16 %v1065, %v1063
      %s1068 = scalar_lea.vmem %s6, 160
      %v1069 = vld [vmem:[%s1068] sm:$0xf]
      %v1070 = vld [vmem:[%s1068 + $0x4] sm:$0xf]
      %v1071 = vld [vmem:[%s1068 + $0x8] sm:$0xf]
      %v1072 = vld [vmem:[%s1068 + $0xc] sm:$0xf]
      %v1077 = vunpack.c.l.b16 %v1069
      %v1078 = vunpack.c.l.b16 %v1070
      %v1079 = vunpack.c.l.b16 %v1071
      %v1080 = vunpack.c.l.b16 %v1072
      %v1081 = vpack.c.b16 %v1078, %v1077
      %v1082 = vpack.c.b16 %v1080, %v1079
      %v1086 = vsel %vm311, %v1067, 0
      %1088 = vmatpush.bf16.msra.mxu0 0
      %1089 = vmatpush.bf16.msra.mxu0 0
      %1090 = vmatpush.bf16.msra.mxu0 0
      %1091 = vmatpush.bf16.msra.mxu0 0
      %1092 = vmatpush.bf16.msra.mxu0 0
      %1093 = vmatpush.bf16.msra.mxu0 0
      %1094 = vmatpush.bf16.msra.mxu0 %v1082
      %1095 = vmatpush.bf16.msra.mxu0 %v1081
      %1096 = vmatmul.bf16.gmra.mxu0 %v1086
      %v1097 = vpop.f32.mrf.mxu0
      %v1098 = vadd.f32 0.0, %v1097
      %v1099 = vpop.f32.mrf.mxu0
      %v1100 = vadd.f32 0.0, %v1099
      %1101 = vdwg.mxu0
      %v1106 = vunpack.c.l.b16 %v1039
      %v1107 = vunpack.c.l.b16 %v1040
      %v1108 = vunpack.c.l.b16 %v1041
      %v1109 = vunpack.c.l.b16 %v1042
      %v1110 = vpack.c.b16 %v1107, %v1106
      %v1111 = vpack.c.b16 %v1109, %v1108
      %v1115 = vsel %vm311, %v1037, 0
      %1117 = vmatpush.bf16.msra.mxu0 0
      %1118 = vmatpush.bf16.msra.mxu0 0
      %1119 = vmatpush.bf16.msra.mxu0 0
      %1120 = vmatpush.bf16.msra.mxu0 0
      %1121 = vmatpush.bf16.msra.mxu0 0
      %1122 = vmatpush.bf16.msra.mxu0 0
      %1123 = vmatpush.bf16.msra.mxu0 %v1111
      %1124 = vmatpush.bf16.msra.mxu0 %v1110
      %1125 = vmatmul.bf16.gmra.mxu0 %v1115
      %v1126 = vpop.f32.mrf.mxu0
      %v1127 = vadd.f32 %v1098, %v1126
      %v1128 = vpop.f32.mrf.mxu0
      %v1129 = vadd.f32 %v1100, %v1128
      %1130 = vdwg.mxu0
      %v1131 = vld [vmem:[%s498] sm:$0xf]
      %v1132 = vld [vmem:[%s498 + $0x4] sm:$0xf]
      %v1135 = vunpack.c.l.b16 %v1131
      %v1136 = vunpack.c.l.b16 %v1132
      %v1137 = vpack.c.b16 %v1136, %v1135
      %v1139 = vsel %vm386, %v1137, 0
      %1141 = vmatpush.bf16.msra.mxu0 0
      %1142 = vmatpush.bf16.msra.mxu0 0
      %1143 = vmatpush.bf16.msra.mxu0 0
      %1144 = vmatpush.bf16.msra.mxu0 0
      %1145 = vmatpush.bf16.msra.mxu0 0
      %1146 = vmatpush.bf16.msra.mxu0 0
      %1147 = vmatpush.bf16.msra.mxu0 0
      %1148 = vmatpush.bf16.msra.mxu0 %v1012
      %1149 = vmatmul.bf16.gmra.mxu0 %v1139
      %v1150 = vpop.f32.mrf.mxu0
      %v1151 = vadd.f32 0.0, %v1150
      %v1152 = vpop.f32.mrf.mxu0
      %v1153 = vadd.f32 0.0, %v1152
      %1154 = vdwg.mxu0
      %v1155 = vpack.c.bf16 %v1153, %v1151
      %s1156 = scalar_lea.vmem %s6, 176
      %v1157 = vld [vmem:[%s1156] sm:$0xf]
      %v1158 = vld [vmem:[%s1156 + $0x4] sm:$0xf]
      %v1159 = vld [vmem:[%s1156 + $0x8] sm:$0xf]
      %v1160 = vld [vmem:[%s1156 + $0xc] sm:$0xf]
      %v1165 = vunpack.c.l.b16 %v1157
      %v1166 = vunpack.c.l.b16 %v1158
      %v1167 = vunpack.c.l.b16 %v1159
      %v1168 = vunpack.c.l.b16 %v1160
      %v1169 = vpack.c.b16 %v1166, %v1165
      %v1170 = vpack.c.b16 %v1168, %v1167
      %v1174 = vsel %vm311, %v1155, 0
      %1176 = vmatpush.bf16.msra.mxu0 0
      %1177 = vmatpush.bf16.msra.mxu0 0
      %1178 = vmatpush.bf16.msra.mxu0 0
      %1179 = vmatpush.bf16.msra.mxu0 0
      %1180 = vmatpush.bf16.msra.mxu0 0
      %1181 = vmatpush.bf16.msra.mxu0 0
      %1182 = vmatpush.bf16.msra.mxu0 %v1170
      %1183 = vmatpush.bf16.msra.mxu0 %v1169
      %1184 = vmatmul.bf16.gmra.mxu0 %v1174
      %v1185 = vpop.f32.mrf.mxu0
      %v1186 = vadd.f32 0.0, %v1185
      %v1187 = vpop.f32.mrf.mxu0
      %v1188 = vadd.f32 0.0, %v1187
      %1189 = vdwg.mxu0
      %v1190 = vadd.f32 %v1127, %v1186
      %v1191 = vadd.f32 %v1129, %v1188
      %v1192 = vld [vmem:[%s560] sm:$0xf]
      %v1193 = vld [vmem:[%s560 + $0x4] sm:$0xf]
      %v1196 = vunpack.c.l.b16 %v1192
      %v1197 = vunpack.c.l.b16 %v1193
      %v1198 = vpack.c.b16 %v1197, %v1196
      %v1200 = vsel %vm386, %v1198, 0
      %1202 = vmatpush.bf16.msra.mxu0 0
      %1203 = vmatpush.bf16.msra.mxu0 0
      %1204 = vmatpush.bf16.msra.mxu0 0
      %1205 = vmatpush.bf16.msra.mxu0 0
      %1206 = vmatpush.bf16.msra.mxu0 0
      %1207 = vmatpush.bf16.msra.mxu0 0
      %1208 = vmatpush.bf16.msra.mxu0 0
      %1209 = vmatpush.bf16.msra.mxu0 %v1012
      %1210 = vmatmul.bf16.gmra.mxu0 %v1200
      %v1211 = vpop.f32.mrf.mxu0
      %v1212 = vadd.f32 0.0, %v1211
      %v1213 = vpop.f32.mrf.mxu0
      %v1214 = vadd.f32 0.0, %v1213
      %1215 = vdwg.mxu0
      %v1216 = vpack.c.bf16 %v1214, %v1212
      %s1217 = scalar_lea.vmem %s6, 192
      %v1218 = vld [vmem:[%s1217] sm:$0xf]
      %v1219 = vld [vmem:[%s1217 + $0x4] sm:$0xf]
      %v1220 = vld [vmem:[%s1217 + $0x8] sm:$0xf]
      %v1221 = vld [vmem:[%s1217 + $0xc] sm:$0xf]
      %v1226 = vunpack.c.l.b16 %v1218
      %v1227 = vunpack.c.l.b16 %v1219
      %v1228 = vunpack.c.l.b16 %v1220
      %v1229 = vunpack.c.l.b16 %v1221
      %v1230 = vpack.c.b16 %v1227, %v1226
      %v1231 = vpack.c.b16 %v1229, %v1228
      %v1235 = vsel %vm311, %v1216, 0
      %1237 = vmatpush.bf16.msra.mxu0 0
      %1238 = vmatpush.bf16.msra.mxu0 0
      %1239 = vmatpush.bf16.msra.mxu0 0
      %1240 = vmatpush.bf16.msra.mxu0 0
      %1241 = vmatpush.bf16.msra.mxu0 0
      %1242 = vmatpush.bf16.msra.mxu0 0
      %1243 = vmatpush.bf16.msra.mxu0 %v1231
      %1244 = vmatpush.bf16.msra.mxu0 %v1230
      %1245 = vmatmul.bf16.gmra.mxu0 %v1235
      %v1246 = vpop.f32.mrf.mxu0
      %v1247 = vadd.f32 0.0, %v1246
      %v1248 = vpop.f32.mrf.mxu0
      %v1249 = vadd.f32 0.0, %v1248
      %1250 = vdwg.mxu0
      %v1251 = vadd.f32 %v1190, %v1247
      %v1252 = vadd.f32 %v1191, %v1249
      %v1253 = vld [vmem:[%s622] sm:$0xf]
      %v1254 = vld [vmem:[%s622 + $0x4] sm:$0xf]
      %v1257 = vunpack.c.l.b16 %v1253
      %v1258 = vunpack.c.l.b16 %v1254
      %v1259 = vpack.c.b16 %v1258, %v1257
      %v1261 = vsel %vm386, %v1259, 0
      %1263 = vmatpush.bf16.msra.mxu0 0
      %1264 = vmatpush.bf16.msra.mxu0 0
      %1265 = vmatpush.bf16.msra.mxu0 0
      %1266 = vmatpush.bf16.msra.mxu0 0
      %1267 = vmatpush.bf16.msra.mxu0 0
      %1268 = vmatpush.bf16.msra.mxu0 0
      %1269 = vmatpush.bf16.msra.mxu0 0
      %1270 = vmatpush.bf16.msra.mxu0 %v1012
      %1271 = vmatmul.bf16.gmra.mxu0 %v1261
      %v1272 = vpop.f32.mrf.mxu0
      %v1273 = vadd.f32 0.0, %v1272
      %v1274 = vpop.f32.mrf.mxu0
      %v1275 = vadd.f32 0.0, %v1274
      %1276 = vdwg.mxu0
      %v1277 = vpack.c.bf16 %v1275, %v1273
      %s1278 = scalar_lea.vmem %s6, 208
      %v1279 = vld [vmem:[%s1278] sm:$0xf]
      %v1280 = vld [vmem:[%s1278 + $0x4] sm:$0xf]
      %v1281 = vld [vmem:[%s1278 + $0x8] sm:$0xf]
      %v1282 = vld [vmem:[%s1278 + $0xc] sm:$0xf]
      %v1287 = vunpack.c.l.b16 %v1279
      %v1288 = vunpack.c.l.b16 %v1280
      %v1289 = vunpack.c.l.b16 %v1281
      %v1290 = vunpack.c.l.b16 %v1282
      %v1291 = vpack.c.b16 %v1288, %v1287
      %v1292 = vpack.c.b16 %v1290, %v1289
      %v1296 = vsel %vm311, %v1277, 0
      %1298 = vmatpush.bf16.msra.mxu0 0
      %1299 = vmatpush.bf16.msra.mxu0 0
      %1300 = vmatpush.bf16.msra.mxu0 0
      %1301 = vmatpush.bf16.msra.mxu0 0
      %1302 = vmatpush.bf16.msra.mxu0 0
      %1303 = vmatpush.bf16.msra.mxu0 0
      %1304 = vmatpush.bf16.msra.mxu0 %v1292
      %1305 = vmatpush.bf16.msra.mxu0 %v1291
      %1306 = vmatmul.bf16.gmra.mxu0 %v1296
      %v1307 = vpop.f32.mrf.mxu0
      %v1308 = vadd.f32 0.0, %v1307
      %v1309 = vpop.f32.mrf.mxu0
      %v1310 = vadd.f32 0.0, %v1309
      %1311 = vdwg.mxu0
      %v1312 = vadd.f32 %v1251, %v1308
      %v1313 = vadd.f32 %v1252, %v1310
      %v1314 = vld [vmem:[%s684] sm:$0xf]
      %v1315 = vld [vmem:[%s684 + $0x4] sm:$0xf]
      %v1318 = vunpack.c.l.b16 %v1314
      %v1319 = vunpack.c.l.b16 %v1315
      %v1320 = vpack.c.b16 %v1319, %v1318
      %v1322 = vsel %vm386, %v1320, 0
      %1324 = vmatpush.bf16.msra.mxu0 0
      %1325 = vmatpush.bf16.msra.mxu0 0
      %1326 = vmatpush.bf16.msra.mxu0 0
      %1327 = vmatpush.bf16.msra.mxu0 0
      %1328 = vmatpush.bf16.msra.mxu0 0
      %1329 = vmatpush.bf16.msra.mxu0 0
      %1330 = vmatpush.bf16.msra.mxu0 0
      %1331 = vmatpush.bf16.msra.mxu0 %v1012
      %1332 = vmatmul.bf16.gmra.mxu0 %v1322
      %v1333 = vpop.f32.mrf.mxu0
      %v1334 = vadd.f32 0.0, %v1333
      %v1335 = vpop.f32.mrf.mxu0
      %v1336 = vadd.f32 0.0, %v1335
      %1337 = vdwg.mxu0
      %v1338 = vpack.c.bf16 %v1336, %v1334
      %s1339 = scalar_lea.vmem %s6, 224
      %v1340 = vld [vmem:[%s1339] sm:$0xf]
      %v1341 = vld [vmem:[%s1339 + $0x4] sm:$0xf]
      %v1342 = vld [vmem:[%s1339 + $0x8] sm:$0xf]
      %v1343 = vld [vmem:[%s1339 + $0xc] sm:$0xf]
      %v1348 = vunpack.c.l.b16 %v1340
      %v1349 = vunpack.c.l.b16 %v1341
      %v1350 = vunpack.c.l.b16 %v1342
      %v1351 = vunpack.c.l.b16 %v1343
      %v1352 = vpack.c.b16 %v1349, %v1348
      %v1353 = vpack.c.b16 %v1351, %v1350
      %v1357 = vsel %vm311, %v1338, 0
      %1359 = vmatpush.bf16.msra.mxu0 0
      %1360 = vmatpush.bf16.msra.mxu0 0
      %1361 = vmatpush.bf16.msra.mxu0 0
      %1362 = vmatpush.bf16.msra.mxu0 0
      %1363 = vmatpush.bf16.msra.mxu0 0
      %1364 = vmatpush.bf16.msra.mxu0 0
      %1365 = vmatpush.bf16.msra.mxu0 %v1353
      %1366 = vmatpush.bf16.msra.mxu0 %v1352
      %1367 = vmatmul.bf16.gmra.mxu0 %v1357
      %v1368 = vpop.f32.mrf.mxu0
      %v1369 = vadd.f32 0.0, %v1368
      %v1370 = vpop.f32.mrf.mxu0
      %v1371 = vadd.f32 0.0, %v1370
      %1372 = vdwg.mxu0
      %v1373 = vadd.f32 %v1312, %v1369
      %v1374 = vadd.f32 %v1313, %v1371
      %v1375 = vld [vmem:[%s746] sm:$0xf]
      %v1376 = vld [vmem:[%s746 + $0x4] sm:$0xf]
      %v1379 = vunpack.c.l.b16 %v1375
      %v1380 = vunpack.c.l.b16 %v1376
      %v1381 = vpack.c.b16 %v1380, %v1379
      %v1383 = vsel %vm386, %v1381, 0
      %1385 = vmatpush.bf16.msra.mxu0 0
      %1386 = vmatpush.bf16.msra.mxu0 0
      %1387 = vmatpush.bf16.msra.mxu0 0
      %1388 = vmatpush.bf16.msra.mxu0 0
      %1389 = vmatpush.bf16.msra.mxu0 0
      %1390 = vmatpush.bf16.msra.mxu0 0
      %1391 = vmatpush.bf16.msra.mxu0 0
      %1392 = vmatpush.bf16.msra.mxu0 %v1012
      %1393 = vmatmul.bf16.gmra.mxu0 %v1383
      %v1394 = vpop.f32.mrf.mxu0
      %v1395 = vadd.f32 0.0, %v1394
      %v1396 = vpop.f32.mrf.mxu0
      %v1397 = vadd.f32 0.0, %v1396
      %1398 = vdwg.mxu0
      %v1399 = vpack.c.bf16 %v1397, %v1395
      %s1400 = scalar_lea.vmem %s6, 240
      %v1401 = vld [vmem:[%s1400] sm:$0xf]
      %v1402 = vld [vmem:[%s1400 + $0x4] sm:$0xf]
      %v1403 = vld [vmem:[%s1400 + $0x8] sm:$0xf]
      %v1404 = vld [vmem:[%s1400 + $0xc] sm:$0xf]
      %v1409 = vunpack.c.l.b16 %v1401
      %v1410 = vunpack.c.l.b16 %v1402
      %v1411 = vunpack.c.l.b16 %v1403
      %v1412 = vunpack.c.l.b16 %v1404
      %v1413 = vpack.c.b16 %v1410, %v1409
      %v1414 = vpack.c.b16 %v1412, %v1411
      %v1418 = vsel %vm311, %v1399, 0
      %1420 = vmatpush.bf16.msra.mxu0 0
      %1421 = vmatpush.bf16.msra.mxu0 0
      %1422 = vmatpush.bf16.msra.mxu0 0
      %1423 = vmatpush.bf16.msra.mxu0 0
      %1424 = vmatpush.bf16.msra.mxu0 0
      %1425 = vmatpush.bf16.msra.mxu0 0
      %1426 = vmatpush.bf16.msra.mxu0 %v1414
      %1427 = vmatpush.bf16.msra.mxu0 %v1413
      %1428 = vmatmul.bf16.gmra.mxu0 %v1418
      %v1429 = vpop.f32.mrf.mxu0
      %v1430 = vadd.f32 0.0, %v1429
      %v1431 = vpop.f32.mrf.mxu0
      %v1432 = vadd.f32 0.0, %v1431
      %1433 = vdwg.mxu0
      %v1434 = vadd.f32 %v1373, %v1430
      %v1435 = vadd.f32 %v1374, %v1432
      %v1436 = vld [vmem:[%s808] sm:$0xf]
      %v1437 = vld [vmem:[%s808 + $0x4] sm:$0xf]
      %v1440 = vunpack.c.l.b16 %v1436
      %v1441 = vunpack.c.l.b16 %v1437
      %v1442 = vpack.c.b16 %v1441, %v1440
      %v1444 = vsel %vm386, %v1442, 0
      %1446 = vmatpush.bf16.msra.mxu0 0
      %1447 = vmatpush.bf16.msra.mxu0 0
      %1448 = vmatpush.bf16.msra.mxu0 0
      %1449 = vmatpush.bf16.msra.mxu0 0
      %1450 = vmatpush.bf16.msra.mxu0 0
      %1451 = vmatpush.bf16.msra.mxu0 0
      %1452 = vmatpush.bf16.msra.mxu0 0
      %1453 = vmatpush.bf16.msra.mxu0 %v1012
      %1454 = vmatmul.bf16.gmra.mxu0 %v1444
      %v1455 = vpop.f32.mrf.mxu0
      %v1456 = vadd.f32 0.0, %v1455
      %v1457 = vpop.f32.mrf.mxu0
      %v1458 = vadd.f32 0.0, %v1457
      %1459 = vdwg.mxu0
      %v1460 = vpack.c.bf16 %v1458, %v1456
      %s1461 = scalar_lea.vmem %s6, 256
      %v1462 = vld [vmem:[%s1461] sm:$0xf]
      %v1463 = vld [vmem:[%s1461 + $0x4] sm:$0xf]
      %v1464 = vld [vmem:[%s1461 + $0x8] sm:$0xf]
      %v1465 = vld [vmem:[%s1461 + $0xc] sm:$0xf]
      %v1470 = vunpack.c.l.b16 %v1462
      %v1471 = vunpack.c.l.b16 %v1463
      %v1472 = vunpack.c.l.b16 %v1464
      %v1473 = vunpack.c.l.b16 %v1465
      %v1474 = vpack.c.b16 %v1471, %v1470
      %v1475 = vpack.c.b16 %v1473, %v1472
      %v1479 = vsel %vm311, %v1460, 0
      %1481 = vmatpush.bf16.msra.mxu0 0
      %1482 = vmatpush.bf16.msra.mxu0 0
      %1483 = vmatpush.bf16.msra.mxu0 0
      %1484 = vmatpush.bf16.msra.mxu0 0
      %1485 = vmatpush.bf16.msra.mxu0 0
      %1486 = vmatpush.bf16.msra.mxu0 0
      %1487 = vmatpush.bf16.msra.mxu0 %v1475
      %1488 = vmatpush.bf16.msra.mxu0 %v1474
      %1489 = vmatmul.bf16.gmra.mxu0 %v1479
      %v1490 = vpop.f32.mrf.mxu0
      %v1491 = vadd.f32 0.0, %v1490
      %v1492 = vpop.f32.mrf.mxu0
      %v1493 = vadd.f32 0.0, %v1492
      %1494 = vdwg.mxu0
      %v1495 = vadd.f32 %v1434, %v1491
      %v1496 = vadd.f32 %v1435, %v1493
      %v1497 = vld [vmem:[%s870] sm:$0xf]
      %v1498 = vld [vmem:[%s870 + $0x4] sm:$0xf]
      %v1501 = vunpack.c.l.b16 %v1497
      %v1502 = vunpack.c.l.b16 %v1498
      %v1503 = vpack.c.b16 %v1502, %v1501
      %v1505 = vsel %vm386, %v1503, 0
      %1507 = vmatpush.bf16.msra.mxu0 0
      %1508 = vmatpush.bf16.msra.mxu0 0
      %1509 = vmatpush.bf16.msra.mxu0 0
      %1510 = vmatpush.bf16.msra.mxu0 0
      %1511 = vmatpush.bf16.msra.mxu0 0
      %1512 = vmatpush.bf16.msra.mxu0 0
      %1513 = vmatpush.bf16.msra.mxu0 0
      %1514 = vmatpush.bf16.msra.mxu0 %v1012
      %1515 = vmatmul.bf16.gmra.mxu0 %v1505
      %v1516 = vpop.f32.mrf.mxu0
      %v1517 = vadd.f32 0.0, %v1516
      %v1518 = vpop.f32.mrf.mxu0
      %v1519 = vadd.f32 0.0, %v1518
      %1520 = vdwg.mxu0
      %v1521 = vpack.c.bf16 %v1519, %v1517
      %s1522 = scalar_lea.vmem %s6, 272
      %v1523 = vld [vmem:[%s1522] sm:$0xf]
      %v1524 = vld [vmem:[%s1522 + $0x4] sm:$0xf]
      %v1525 = vld [vmem:[%s1522 + $0x8] sm:$0xf]
      %v1526 = vld [vmem:[%s1522 + $0xc] sm:$0xf]
      %v1531 = vunpack.c.l.b16 %v1523
      %v1532 = vunpack.c.l.b16 %v1524
      %v1533 = vunpack.c.l.b16 %v1525
      %v1534 = vunpack.c.l.b16 %v1526
      %v1535 = vpack.c.b16 %v1532, %v1531
      %v1536 = vpack.c.b16 %v1534, %v1533
      %v1540 = vsel %vm311, %v1521, 0
      %1542 = vmatpush.bf16.msra.mxu0 0
      %1543 = vmatpush.bf16.msra.mxu0 0
      %1544 = vmatpush.bf16.msra.mxu0 0
      %1545 = vmatpush.bf16.msra.mxu0 0
      %1546 = vmatpush.bf16.msra.mxu0 0
      %1547 = vmatpush.bf16.msra.mxu0 0
      %1548 = vmatpush.bf16.msra.mxu0 %v1536
      %1549 = vmatpush.bf16.msra.mxu0 %v1535
      %1550 = vmatmul.bf16.gmra.mxu0 %v1540
      %v1551 = vpop.f32.mrf.mxu0
      %v1552 = vadd.f32 0.0, %v1551
      %v1553 = vpop.f32.mrf.mxu0
      %v1554 = vadd.f32 0.0, %v1553
      %1555 = vdwg.mxu0
      %v1556 = vadd.f32 %v1495, %v1552
      %v1557 = vadd.f32 %v1496, %v1554
      %1560 = vrot.lane.b32.xlu0 %v1556, 24
      %v1561 = vpop.permute.xlu0 %1560
      %1562 = vrot.lane.b32.xlu0 %v1557, 24
      %v1563 = vpop.permute.xlu0 %1562
      %vm1566 = vcmask 261312
      %1567 = vst.msk [vmem:[#allocation2] sm:$0xff] %vm1566, %v1561
      %1568 = vst.msk [vmem:[#allocation2 + $0x8] sm:$0xff] %vm1566, %v1563
      %v1569 = vld [vmem:[#allocation2] sm:$0xff]
      %v1570 = vld [vmem:[#allocation2 + $0x8] sm:$0xff]
      %v1571 = vpack.c.bf16 %v1569, %v1569
      %v1572 = vpack.c.bf16 %v1570, %v1570
      %vm1573 = vcmask 257024
      %1574 = vst.msk [vmem:[%s305] sm:$0xf] %vm1573, %v1571
      %1575 = vst.msk [vmem:[%s305 + $0x4] sm:$0xf] %vm1573, %v1572
      %p1576 = scmp.lt.s32.totalorder %s19, 1
      %s1577 = scalar_select %p1576, %s19, 1
      %s1578 = smul.addr %s1577, 2
      %s1579 = smul.addr %s1578, 4
      %s1580 = scalar_lea.vmem %s8, %s1579
      // Predicated region
      $region53: #{densenet_forward.8} parent=51 // pred_check
        %p1581 = pneg %p210
      $region54: #{densenet_forward.8} parent=51 // pred_check_branch
        %1583 = sbr.rel (%p1581) target = $region56
      $region55: #{densenet_forward.8} parent=51 // pred_region
        _
      $region56: #{densenet_forward.8} parent=51 // pred_fallthru
        _
    $region52: #{densenet_forward.8} parent=5 // pred_fallthru
      _
    %p1584 = scmp.le.s32.totalorder 2, %s14
    // Predicated region
    $region57: #{densenet_forward.8} parent=5 // pred_check
      %p1585 = pneg %p1584
    $region58: #{densenet_forward.8} parent=5 // pred_check_branch
      %1587 = sbr.rel (%p1585) target = $region60
    $region59: #{densenet_forward.8} parent=5 // pred_region
      %s1588 = ssub.s32 %s14, 2
      // Predicated region
      $region61: #{densenet_forward.8} parent=59 // pred_check
        %p1589 = pneg %p216
      $region62: #{densenet_forward.8} parent=59 // pred_check_branch
        %1591 = sbr.rel (%p1589) target = $region64
      $region63: #{densenet_forward.8} parent=59 // pred_region
        %p1592 = scmp.lt.s32.totalorder %s20, 1
        %s1593 = scalar_select %p1592, %s20, 1
        %s1594 = smul.addr %s1593, 2
        %s1595 = smul.addr %s1594, 4
        %s1596 = scalar_lea.vmem %s8, %s1595
      $region64: #{densenet_forward.8} parent=59 // pred_fallthru
        _
    $region60: #{densenet_forward.8} parent=5 // pred_fallthru
      _
  $region6: #{densenet_forward.8} parent=0 // loop_footer
    %s18 = sadd.s32 1, %s14
  $region7: #{densenet_forward.8} parent=0 // loop_footer_branch
    %13 = sbr.rel target = $region3
  $region8: #{densenet_forward.8} parent=0 // loop_exit
    _

</llo_original>
